<compile_context>
chip_gen: v7x
topology: tpu7x:2x2x1
jax: 0.10.0
libtpu: 0.0.40
codegen_flags: <defaults>
</compile_context>

<pallas_src>
import functools

import jax
import jax.numpy as jnp
from jax.experimental import pallas as pl
from jax.experimental.pallas import tpu as pltpu


# ----------------------------------------------------------------------------
# Pallas kernel: adaptive-avg-pool + Linear + ReLU + Dropout(0.5, train mode)
# ----------------------------------------------------------------------------
def encoder_head_kernel(feat_ref, w_ref, b_ref, bits_ref, out_ref, *, hw, c, train):
    # feat_ref: (tb, hw*c) bf16    w_ref: (c, E_pad) f32    b_ref: (1, E_pad) f32
    # bits_ref: (tb, E_pad) u32    out_ref: (tb, E_pad) f32
    # Global average pool: unrolled lane-aligned adds with an f32 accumulator.
    # Each slice start h*c is a static multiple of 128 (c = 2048), so loads stay
    # lane-aligned; the bf16->f32 convert fuses into the accumulate (no full-tile
    # f32 temporary) and no cross-sublane XLU reduce is needed.
    acc = feat_ref[:, 0:c].astype(jnp.float32)
    for h in range(1, hw):
        acc = acc + feat_ref[:, h * c:(h + 1) * c].astype(jnp.float32)
    pooled = acc * (1.0 / hw)                                  # f32, == AdaptiveAvgPool2d

    y = jnp.dot(pooled, w_ref[...], preferred_element_type=jnp.float32)   # MXU, f32 acc
    y = y + b_ref[...]                                         # bias
    y = jnp.maximum(y, 0.0)                                    # ReLU

    if train:
        # Inverted dropout p=0.5: keep iff the high PRNG bit is set, scale kept by 2.
        keep = bits_ref[...] >= jnp.uint32(1 << 31)
        y = jnp.where(keep, y * 2.0, 0.0)

    out_ref[...] = y.astype(out_ref.dtype)


def _pick_batch_tile(B, HWC, vmem_cap):
    """Largest batch tile whose double-buffered bf16 feature slab fits VMEM."""
    if B <= 16:
        # TODO(synk): for v7x (2 TCs) a grid of 1 leaves one core idle at tiny
        # batches; splitting HW across a second grid axis would fix that.
        return B
    budget = int(0.55 * vmem_cap)                 # feat double-buffer budget
    for tb in (128, 64, 32, 16):                  # v6e -> 128, v7x -> 64, ...
        if tb <= B and 2 * tb * HWC * 2 <= budget:
            return tb
    return 8


def encoder_head(feat2d, hw, fc_w, fc_b, dropout_key, *, train=True):
    """feat2d: (B, hw*2048) bf16.  fc_w: (E, 2048) (PyTorch layout).  fc_b: (E,)."""
    B, HWC = feat2d.shape
    C = HWC // hw
    E = fc_w.shape[0]
    E_pad = pl.cdiv(E, 128) * 128

    # Keep the head weights in f32 (tiny) so the Linear matches the reference; the
    # only reduced-precision data is the bf16 feature stream.
    w = fc_w.T.astype(jnp.float32)                              # (2048, E)
    b = fc_b.astype(jnp.float32).reshape(1, E)
    if E_pad != E:                                              # lane-dense out store
        w = jnp.pad(w, ((0, 0), (0, E_pad - E)))
        b = jnp.pad(b, ((0, 0), (0, E_pad - E)))

    # Dropout bits generated outside the kernel (portable; no pltpu.prng_* needed).
    if train:
        bits = jax.random.bits(dropout_key, (B, E_pad), dtype=jnp.uint32)
    else:
        bits = jnp.zeros((B, E_pad), jnp.uint32)

    # Generation-aware tiling: query VMEM capacity (128 MiB on v5e/v6e, 64 MiB/TC on
    # v7x) and raise the scoped-VMEM limit explicitly past the 16/32 MiB defaults.
    try:
        vmem_cap = pltpu.get_tpu_info().vmem_capacity_bytes
    except Exception:
        vmem_cap = 64 << 20                                     # tightest case (v7x)
    tb = _pick_batch_tile(B, HWC, vmem_cap)
    grid = (pl.cdiv(B, tb),)   # ragged last block handled by Pallas partial blocks

    feat_tile = tb * HWC * 2                                    # bf16 tile bytes
    w_tile = C * E_pad * 4
    small = (8 + 2 * tb) * E_pad * 4                            # bias + bits + out tiles
    vmem_limit = 2 * feat_tile + 2 * w_tile + 2 * small + (8 << 20)
    vmem_limit = int(min(vmem_limit, int(0.9 * vmem_cap)))

    out = pl.pallas_call(
        functools.partial(encoder_head_kernel, hw=hw, c=C, train=train),
        out_shape=jax.ShapeDtypeStruct((B, E_pad), jnp.float32),
        grid=grid,
        in_specs=[
            pl.BlockSpec((tb, HWC), lambda i: (i, 0)),     # streamed feature tile
            pl.BlockSpec((C, E_pad), lambda i: (0, 0)),    # weight, constant block index
            pl.BlockSpec((1, E_pad), lambda i: (0, 0)),    # bias, resident
            pl.BlockSpec((tb, E_pad), lambda i: (i, 0)),   # per-tile dropout bits
        ],
        out_specs=pl.BlockSpec((tb, E_pad), lambda i: (i, 0)),
        compiler_params=pltpu.CompilerParams(
            dimension_semantics=("parallel",),             # batch tiles across TCs
            vmem_limit_bytes=vmem_limit),
    )(feat2d, w, b, bits)
    return out[:, :E]


# ----------------------------------------------------------------------------
# ResNet50 backbone (plain XLA glue, NHWC, eval-mode BN folded into convs)
# TODO(synk): the conv/maxpool backbone stays in XLA (lax.conv) — a full Pallas
# port of ResNet50's convolution stack is out of scope here.
# ----------------------------------------------------------------------------
def conv2d(x, w, b, stride=1, pad=0):
    y = jax.lax.conv_general_dilated(
        x, w, (stride, stride), ((pad, pad), (pad, pad)),
        dimension_numbers=("NHWC", "HWIO", "NHWC"))
    return y + b  # folded-BN bias, broadcast over channel axis


def maxpool3x3s2(x):
    return jax.lax.reduce_window(
        x, -jnp.inf, jax.lax.max,
        (1, 3, 3, 1), (1, 2, 2, 1),
        ((0, 0), (1, 1), (1, 1), (0, 0)))


def bottleneck(x, blk, stride, has_downsample):
    identity = x
    out = jax.nn.relu(conv2d(x, blk["w1"], blk["b1"]))
    out = jax.nn.relu(conv2d(out, blk["w2"], blk["b2"], stride, 1))
    out = conv2d(out, blk["w3"], blk["b3"])
    if has_downsample:
        identity = conv2d(x, blk["wd"], blk["bd"], stride)
    return jax.nn.relu(out + identity)


def resnet50_features(x_nhwc, params):
    x = jax.nn.relu(conv2d(x_nhwc, params["conv1_w"], params["conv1_b"], 2, 3))
    x = maxpool3x3s2(x)
    strides = [1, 2, 2, 2]
    for li, blocks in enumerate(params["layers"]):
        for bi, blk in enumerate(blocks):
            s = strides[li] if bi == 0 else 1
            x = bottleneck(x, blk, s, bi == 0)
    return x  # (B, h, w, 2048)


def init_encoder_params(key, embed_size):
    counter = [0]

    def nxt(shape, scale):
        counter[0] += 1
        k = jax.random.fold_in(key, counter[0])
        return jax.random.normal(k, shape, jnp.float32) * scale

    def bn_p(c):
        return dict(gamma=jnp.ones((c,), jnp.float32),
                    beta=jnp.zeros((c,), jnp.float32),
                    mean=jnp.zeros((c,), jnp.float32),
                    var=jnp.ones((c,), jnp.float32))

    def fold_bn(w_hwio, bn, eps=1e-5):
        s = bn["gamma"] * jax.lax.rsqrt(bn["var"] + eps)
        return w_hwio * s[None, None, None, :], bn["beta"] - bn["mean"] * s

    def conv_bn(out_c, in_c, k):
        w = nxt((k, k, in_c, out_c), (in_c * k * k) ** -0.5)   # HWIO
        return fold_bn(w, bn_p(out_c))

    params = {}
    params["conv1_w"], params["conv1_b"] = conv_bn(64, 3, 7)
    layers_cfg = [(64, 3), (128, 4), (256, 6), (512, 3)]
    inplanes = 64
    layers = []
    for planes, nblocks in layers_cfg:
        blocks = []
        for bidx in range(nblocks):
            blk = {}
            blk["w1"], blk["b1"] = conv_bn(planes, inplanes, 1)
            blk["w2"], blk["b2"] = conv_bn(planes, planes, 3)
            blk["w3"], blk["b3"] = conv_bn(planes * 4, planes, 1)
            if bidx == 0:
                blk["wd"], blk["bd"] = conv_bn(planes * 4, inplanes, 1)
            blocks.append(blk)
            inplanes = planes * 4
        layers.append(blocks)
    params["layers"] = layers
    # replaced fc: nn.Linear(2048, embed_size)  (PyTorch stores weight as (out, in))
    params["fc_w"] = nxt((embed_size, 2048), 2048 ** -0.5)
    params["fc_b"] = nxt((embed_size,), 2048 ** -0.5)
    return params


@functools.partial(jax.jit, static_argnames=("train",))
def encoder_cnn_forward(images, params, dropout_key, train=True):
    """images: (B, 3, H, W) NCHW f32 -> (B, embed_size) f32."""
    x = jnp.transpose(images, (0, 2, 3, 1))       # one cheap 3-channel transpose
    feat = resnet50_features(x, params)           # (B, h, w, 2048) NHWC
    # bf16 at the source: under jit this convert fuses into the backbone's final
    # residual-add+ReLU fusion, so the (B, h*w*2048) slab hits HBM once, in bf16.
    feat = feat.astype(jnp.bfloat16)
    B, H, W, C = feat.shape
    feat2d = feat.reshape(B, H * W * C)           # free reshape, lane-dense slab
    # Dropout key is caller-supplied so each training step can use a fresh mask.
    return encoder_head(feat2d, H * W, params["fc_w"], params["fc_b"],
                        dropout_key, train=train)


if __name__ == "__main__":
    key = jax.random.PRNGKey(0)
    embed_size = 256
    params = init_encoder_params(jax.random.fold_in(key, 1), embed_size)
    # small but structure-consistent input: 64x64 -> 2x2x2048 feature map
    images = jax.random.normal(jax.random.fold_in(key, 2), (2, 3, 64, 64), jnp.float32)

    out = encoder_cnn_forward(images, params, jax.random.fold_in(key, 3), train=True)
    out = jax.block_until_ready(out)
    assert out.shape == (2, embed_size), out.shape
    assert bool(jnp.all(out >= 0.0))  # post-ReLU/dropout outputs are non-negative
    print("KERNEL_OK")
</pallas_src>

<mosaic_0001>
module attributes {stable_mosaic.version = 11 : i64} {
  func.func @encoder_head_kernel(%arg0: i32, %arg1: memref<2x8192xbf16, #tpu.memory_space<vmem>>, %arg2: memref<2048x256xf32, #tpu.memory_space<vmem>>, %arg3: memref<1x256xf32, #tpu.memory_space<vmem>>, %arg4: memref<2x256xi32, #tpu.memory_space<vmem>>, %arg5: memref<2x256xf32, #tpu.memory_space<vmem>>) attributes {dimension_semantics = [#tpu.dimension_semantics<parallel>], iteration_bounds = array<i64: 1>, scalar_prefetch = 0 : i64, scratch_operands = 0 : i64, tpu.core_type = #tpu.core_type<tc>, window_params = [{transform_indices = @transform_0, window_bounds = array<i64: 2, 8192>}, {pipeline_mode = #tpu.pipeline_mode<synchronous>, transform_indices = @transform_1, window_bounds = array<i64: 2048, 256>}, {pipeline_mode = #tpu.pipeline_mode<synchronous>, transform_indices = @transform_2, window_bounds = array<i64: 1, 256>}, {transform_indices = @transform_3, window_bounds = array<i64: 2, 256>}, {transform_indices = @transform_4, window_bounds = array<i64: 2, 256>}]} {
    %c0 = arith.constant 0 : index
    %c0_0 = arith.constant 0 : index
    %0 = vector.load %arg1[%c0, %c0_0] : memref<2x8192xbf16, #tpu.memory_space<vmem>>, vector<2x2048xbf16>
    %1 = arith.extf %0 : vector<2x2048xbf16> to vector<2x2048xf32>
    %c0_1 = arith.constant 0 : index
    %c2048 = arith.constant 2048 : index
    %2 = vector.load %arg1[%c0_1, %c2048] : memref<2x8192xbf16, #tpu.memory_space<vmem>>, vector<2x2048xbf16>
    %3 = arith.extf %2 : vector<2x2048xbf16> to vector<2x2048xf32>
    %4 = arith.addf %1, %3 : vector<2x2048xf32>
    %c0_2 = arith.constant 0 : index
    %c4096 = arith.constant 4096 : index
    %5 = vector.load %arg1[%c0_2, %c4096] : memref<2x8192xbf16, #tpu.memory_space<vmem>>, vector<2x2048xbf16>
    %6 = arith.extf %5 : vector<2x2048xbf16> to vector<2x2048xf32>
    %7 = arith.addf %4, %6 : vector<2x2048xf32>
    %c0_3 = arith.constant 0 : index
    %c6144 = arith.constant 6144 : index
    %8 = vector.load %arg1[%c0_3, %c6144] : memref<2x8192xbf16, #tpu.memory_space<vmem>>, vector<2x2048xbf16>
    %9 = arith.extf %8 : vector<2x2048xbf16> to vector<2x2048xf32>
    %10 = arith.addf %7, %9 : vector<2x2048xf32>
    %cst = arith.constant 2.500000e-01 : f32
    %11 = vector.broadcast %cst : f32 to vector<2x2048xf32>
    %12 = arith.mulf %10, %11 : vector<2x2048xf32>
    %c0_4 = arith.constant 0 : index
    %c0_5 = arith.constant 0 : index
    %13 = vector.load %arg2[%c0_4, %c0_5] : memref<2048x256xf32, #tpu.memory_space<vmem>>, vector<2048x256xf32>
    %cst_6 = arith.constant dense<0.000000e+00> : vector<2x256xf32>
    %14 = tpu.matmul %12, %13, %cst_6 {dimension_numbers = #tpu.dot_dimension_numbers<[1], [0], [0], [1], [0, 0, 1, 1], [], []>} : vector<2x2048xf32>, vector<2048x256xf32>, vector<2x256xf32> -> vector<2x256xf32>
    %c0_7 = arith.constant 0 : index
    %c0_8 = arith.constant 0 : index
    %15 = vector.load %arg3[%c0_7, %c0_8] : memref<1x256xf32, #tpu.memory_space<vmem>>, vector<1x256xf32>
    %16 = vector.broadcast %15 : vector<1x256xf32> to vector<2x256xf32>
    %17 = arith.addf %14, %16 : vector<2x256xf32>
    %cst_9 = arith.constant 0.000000e+00 : f32
    %18 = vector.broadcast %cst_9 : f32 to vector<2x256xf32>
    %19 = arith.maximumf %17, %18 : vector<2x256xf32>
    %c0_10 = arith.constant 0 : index
    %c0_11 = arith.constant 0 : index
    %20 = vector.load %arg4[%c0_10, %c0_11] : memref<2x256xi32, #tpu.memory_space<vmem>>, vector<2x256xi32>
    %c-2147483648_i32 = arith.constant -2147483648 : i32
    %21 = vector.broadcast %c-2147483648_i32 : i32 to vector<2x256xi32>
    %22 = arith.cmpi uge, %20, %21 : vector<2x256xi32>
    %cst_12 = arith.constant 2.000000e+00 : f32
    %23 = vector.broadcast %cst_12 : f32 to vector<2x256xf32>
    %24 = arith.mulf %19, %23 : vector<2x256xf32>
    %cst_13 = arith.constant 0.000000e+00 : f32
    %25 = vector.broadcast %cst_13 : f32 to vector<2x256xf32>
    %26 = arith.select %22, %24, %25 : vector<2x256xi1>, vector<2x256xf32>
    %c0_14 = arith.constant 0 : index
    %c0_15 = arith.constant 0 : index
    %27 = vector.load %arg5[%c0_14, %c0_15] : memref<2x256xf32, #tpu.memory_space<vmem>>, vector<2x256xf32>
    tpu.vector_store %arg5[%c0_14, %c0_15], %26 {strides = array<i32>} : memref<2x256xf32, #tpu.memory_space<vmem>>, vector<2x256xf32>,
    return
  }
  func.func @transform_0(%arg0: i32) -> (i32, i32) {
    %c0_i32 = arith.constant 0 : i32
    %c0_i32_0 = arith.constant 0 : i32
    return %arg0, %c0_i32 : i32, i32
  }
  func.func @transform_1(%arg0: i32) -> (i32, i32) {
    %c0_i32 = arith.constant 0 : i32
    %c0_i32_0 = arith.constant 0 : i32
    %c0_i32_1 = arith.constant 0 : i32
    return %c0_i32, %c0_i32_0 : i32, i32
  }
  func.func @transform_2(%arg0: i32) -> (i32, i32) {
    %c0_i32 = arith.constant 0 : i32
    %c0_i32_0 = arith.constant 0 : i32
    %c0_i32_1 = arith.constant 0 : i32
    return %c0_i32, %c0_i32_0 : i32, i32
  }
  func.func @transform_3(%arg0: i32) -> (i32, i32) {
    %c0_i32 = arith.constant 0 : i32
    %c0_i32_0 = arith.constant 0 : i32
    return %arg0, %c0_i32 : i32, i32
  }
  func.func @transform_4(%arg0: i32) -> (i32, i32) {
    %c0_i32 = arith.constant 0 : i32
    %c0_i32_0 = arith.constant 0 : i32
    return %arg0, %c0_i32 : i32, i32
  }
}

</mosaic_0001>

<llo_original>
// kernel: reverse
$region0: #{reverse}
  #allocation0 [shape = 's32[1]{0}', space=sflag, size = 0x4, scoped, tag = 'scoped memory for reverse']
  %s0 = inlined_call_operand.vmem [shape: f32[3,3,512,512], index: 0, kind: input, shape index: {}]
  %s1 = inlined_call_operand.vmem [shape: bf16[3,3,512,512], index: 1, kind: output, shape index: {}]
  loop: start=0, step=1, limit=4
  $region2: #{reverse} parent=0 // loop_pre_header
    _
  $region3: #{reverse} parent=0 // loop_header
    %s3 = sphi 0, %s7
    %p4 = scmp.ge.s32.totalorder %s3, 4
    %s10 = sphi 0, %s36
    %s11 = sphi 0, %s32
    %s12 = sphi 0, %s28
    %s13 = sphi 0, %s24
    %s14 = sphi 0, %s10
    %s15 = sphi 0, %s11
    %s16 = sphi 0, %s12
    %s17 = sphi 0, %s13
    %s18 = sphi 0, %s14
    %s19 = sphi 0, %s15
    %s20 = sphi 0, %s16
    %s21 = sphi 0, %s17
  $region4: #{reverse} parent=0 // loop_header_branch
    %6 = sbr.rel (%p4) target = $region8
  $region5: #{reverse} parent=0 // loop_body
    %s8 = ssub.s32 %s3, 1
    %s9 = ssub.s32 %s3, 2
    %s22 = sadd.s32 1, %s13
    %p23 = scmp.ge.s32.totalorder %s22, 1
    %s24 = scalar_select %p23, 0, %s22
    %s25 = sadd.s32 1, %s12
    %s26 = scalar_select %p23, %s25, %s12
    %p27 = scmp.ge.s32.totalorder %s26, 2
    %s28 = scalar_select %p27, 0, %s26
    %s29 = sadd.s32 1, %s11
    %s30 = scalar_select %p27, %s29, %s11
    %p31 = scmp.ge.s32.totalorder %s30, 1
    %s32 = scalar_select %p31, 0, %s30
    %s33 = sadd.s32 1, %s10
    %s34 = scalar_select %p31, %s33, %s10
    %p35 = scmp.ge.s32.totalorder %s34, 1
    %s36 = scalar_select %p35, 0, %s34
    %p37 = scmp.le.s32.totalorder 1, %s3
    %p38 = scmp.lt.s32.totalorder %s3, 3
    %p39 = pnand %p37, %p38
    %p40 = pneg %p39
    // Predicated region
    $region9: #{reverse} parent=5 // pred_check
      _
    $region10: #{reverse} parent=5 // pred_check_branch
      %42 = sbr.rel (%p39) target = $region12
    $region11: #{reverse} parent=5 // pred_region
      %s43 = ssub.s32 %s3, 1
    $region12: #{reverse} parent=5 // pred_fallthru
      _
    %p44 = scmp.lt.s32.totalorder %s3, 2
    // Predicated region
    $region13: #{reverse} parent=5 // pred_check
      %p45 = pneg %p44
    $region14: #{reverse} parent=5 // pred_check_branch
      %47 = sbr.rel (%p45) target = $region16
    $region15: #{reverse} parent=5 // pred_region
      %s48 = ssub.s32 0, %s10
      %s49 = ssub.s32 0, %s11
      %s50 = smul.u32 3, %s48
      %s51 = smul.u32 3, %s49
      %s52 = smul.u32 32, %s12
      %s53 = smul.u32 4, %s13
      %p54 = scmp.lt.s32.totalorder %s50, 2
      %s55 = scalar_select %p54, %s50, 2
      %p56 = scmp.lt.s32.totalorder %s51, 2
      %s57 = scalar_select %p56, %s51, 2
      %p58 = scmp.lt.s32.totalorder %s52, 63
      %s59 = scalar_select %p58, %s52, 63
      %p60 = scmp.lt.s32.totalorder %s53, 3
      %s61 = scalar_select %p60, %s53, 3
      %s62 = smul.addr %s59, 4
      %s63 = sadd.s32 %s61, %s62
      %s64 = smul.addr %s57, 256
      %s65 = sadd.s32 %s63, %s64
      %s66 = smul.addr %s55, 768
      %s67 = sadd.s32 %s65, %s66
      %s68 = smul.addr %s67, 8
      %s69 = scalar_lea.vmem %s0, %s68
      %s70 = ssub.s32 0, %s10
      %s71 = ssub.s32 0, %s11
      %s72 = smul.u32 3, %s70
      %s73 = smul.u32 3, %s71
      %s74 = smul.u32 32, %s12
      %s75 = smul.u32 4, %s13
    $region16: #{reverse} parent=5 // pred_fallthru
      _
    %p76 = scmp.le.s32.totalorder 1, %s3
    %p77 = scmp.lt.s32.totalorder %s3, 3
    %p78 = pnand %p76, %p77
    %p79 = pneg %p78
    // Predicated region
    $region17: #{reverse} parent=5 // pred_check
      _
    $region18: #{reverse} parent=5 // pred_check_branch
      %81 = sbr.rel (%p78) target = $region20
    $region19: #{reverse} parent=5 // pred_region
      %s82 = ssub.s32 %s3, 1
      %s83 = ssub.s32 0, %s14
      %s84 = ssub.s32 0, %s15
      %s85 = smul.u32 3, %s83
      %s86 = smul.u32 3, %s84
      %s87 = smul.u32 32, %s16
      %s88 = smul.u32 4, %s17
      %p89 = scmp.lt.s32.totalorder %s85, 2
      %s90 = scalar_select %p89, %s85, 2
      %p91 = scmp.lt.s32.totalorder %s86, 2
      %s92 = scalar_select %p91, %s86, 2
      %p93 = scmp.lt.s32.totalorder %s87, 63
      %s94 = scalar_select %p93, %s87, 63
      %p95 = scmp.lt.s32.totalorder %s88, 3
      %s96 = scalar_select %p95, %s88, 3
      %s97 = smul.addr %s94, 4
      %s98 = sadd.s32 %s96, %s97
      %s99 = smul.addr %s92, 256
      %s100 = sadd.s32 %s98, %s99
      %s101 = smul.addr %s90, 768
      %s102 = sadd.s32 %s100, %s101
      %s103 = smul.addr %s102, 8
      %s104 = scalar_lea.vmem %s0, %s103
      %s105 = smul.u32 3, %s14
      %s106 = smul.u32 3, %s15
      %s107 = smul.u32 32, %s16
      %s108 = smul.u32 4, %s17
      %p109 = scmp.lt.s32.totalorder %s105, 2
      %s110 = scalar_select %p109, %s105, 2
      %p111 = scmp.lt.s32.totalorder %s106, 2
      %s112 = scalar_select %p111, %s106, 2
      %p113 = scmp.lt.s32.totalorder %s107, 63
      %s114 = scalar_select %p113, %s107, 63
      %p115 = scmp.lt.s32.totalorder %s108, 3
      %s116 = scalar_select %p115, %s108, 3
      %s117 = smul.addr %s114, 4
      %s118 = sadd.s32 %s116, %s117
      %s119 = smul.addr %s112, 256
      %s120 = sadd.s32 %s118, %s119
      %s121 = smul.addr %s110, 768
      %s122 = sadd.s32 %s120, %s121
      %s123 = smul.addr %s122, 4
      %s124 = scalar_lea.vmem %s1, %s123
      %s125 = smul.u32 3, %s14
      %s126 = smul.u32 3, %s15
      %s127 = smul.u32 32, %s16
      %s128 = smul.u32 4, %s17
      %s129 = ssub.s32 0, %s14
      %s130 = ssub.s32 0, %s15
      %s131 = smul.u32 3, %s129
      %s132 = smul.u32 3, %s130
      %s133 = smul.u32 32, %s16
      %s134 = smul.u32 4, %s17
      %p135 = scmp.lt.s32.totalorder %s131, 2
      %s136 = scalar_select %p135, %s131, 2
      %p137 = scmp.lt.s32.totalorder %s132, 2
      %s138 = scalar_select %p137, %s132, 2
      %p139 = scmp.lt.s32.totalorder %s133, 63
      %s140 = scalar_select %p139, %s133, 63
      %p141 = scmp.lt.s32.totalorder %s134, 3
      %s142 = scalar_select %p141, %s134, 3
      %s143 = smul.addr %s140, 4
      %s144 = sadd.s32 %s142, %s143
      %s145 = smul.addr %s138, 256
      %s146 = sadd.s32 %s144, %s145
      %s147 = smul.addr %s136, 768
      %s148 = sadd.s32 %s146, %s147
      %s149 = smul.addr %s148, 8
      %s150 = scalar_lea.vmem %s0, %s149
      %s151 = ssub.s32 0, %s14
      %s152 = ssub.s32 0, %s15
      %s153 = smul.u32 3, %s151
      %s154 = smul.u32 3, %s152
      %s155 = smul.u32 32, %s16
      %s156 = smul.u32 4, %s17
      %s157 = smul.u32 3, %s14
      %s158 = smul.u32 3, %s15
      %s159 = smul.u32 32, %s16
      %s160 = smul.u32 4, %s17
      %p161 = scmp.lt.s32.totalorder %s157, 2
      %s162 = scalar_select %p161, %s157, 2
      %p163 = scmp.lt.s32.totalorder %s158, 2
      %s164 = scalar_select %p163, %s158, 2
      %p165 = scmp.lt.s32.totalorder %s159, 63
      %s166 = scalar_select %p165, %s159, 63
      %p167 = scmp.lt.s32.totalorder %s160, 3
      %s168 = scalar_select %p167, %s160, 3
      %s169 = smul.addr %s166, 4
      %s170 = sadd.s32 %s168, %s169
      %s171 = smul.addr %s164, 256
      %s172 = sadd.s32 %s170, %s171
      %s173 = smul.addr %s162, 768
      %s174 = sadd.s32 %s172, %s173
      %s175 = smul.addr %s174, 4
      %s176 = scalar_lea.vmem %s1, %s175
      %s177 = smul.u32 3, %s14
      %s178 = smul.u32 3, %s15
      %s179 = smul.u32 32, %s16
      %s180 = smul.u32 4, %s17
      %s181 = scalar_lea.vmem %s150, 16384
      %v182 = vld [vmem:[%s181] sm:$0xff]
      %s183 = scalar_lea.vmem %s150, 10240
      %v184 = vld [vmem:[%s183] sm:$0xff]
      %s185 = scalar_lea.vmem %s176, 3072
      %s186 = scalar_lea.vmem %s150, 4096
      %v187 = vld [vmem:[%s186] sm:$0xff]
      %s188 = scalar_lea.vmem %s176, 6144
      %s189 = scalar_lea.vmem %s150, 14336
      %v190 = vld [vmem:[%s189] sm:$0xff]
      %s191 = scalar_lea.vmem %s176, 1024
      %s192 = scalar_lea.vmem %s150, 8192
      %v193 = vld [vmem:[%s192] sm:$0xff]
      %s194 = scalar_lea.vmem %s176, 4096
      %s195 = scalar_lea.vmem %s150, 2048
      %v196 = vld [vmem:[%s195] sm:$0xff]
      %s197 = scalar_lea.vmem %s176, 7168
      %s198 = scalar_lea.vmem %s150, 12288
      %v199 = vld [vmem:[%s198] sm:$0xff]
      %s200 = scalar_lea.vmem %s176, 2048
      %s201 = scalar_lea.vmem %s150, 6144
      %v202 = vld [vmem:[%s201] sm:$0xff]
      %s203 = scalar_lea.vmem %s176, 5120
      %v204 = vld [vmem:[%s150] sm:$0xff]
      %s205 = scalar_lea.vmem %s176, 8192
      %s206 = scalar_lea.vmem %s150, 16416
      %v207 = vld [vmem:[%s206] sm:$0xff]
      %s208 = scalar_lea.vmem %s176, 16
      %s209 = scalar_lea.vmem %s150, 10272
      %v210 = vld [vmem:[%s209] sm:$0xff]
      %s211 = scalar_lea.vmem %s176, 3088
      %s212 = scalar_lea.vmem %s150, 4128
      %v213 = vld [vmem:[%s212] sm:$0xff]
      %s214 = scalar_lea.vmem %s176, 6160
      %s215 = scalar_lea.vmem %s150, 14368
      %v216 = vld [vmem:[%s215] sm:$0xff]
      %s217 = scalar_lea.vmem %s176, 1040
      %s218 = scalar_lea.vmem %s150, 8224
      %v219 = vld [vmem:[%s218] sm:$0xff]
      %s220 = scalar_lea.vmem %s176, 4112
      %s221 = scalar_lea.vmem %s150, 2080
      %v222 = vld [vmem:[%s221] sm:$0xff]
      %s223 = scalar_lea.vmem %s176, 7184
      %s224 = scalar_lea.vmem %s150, 12320
      %v225 = vld [vmem:[%s224] sm:$0xff]
      %s226 = scalar_lea.vmem %s176, 2064
      %s227 = scalar_lea.vmem %s150, 6176
      %v228 = vld [vmem:[%s227] sm:$0xff]
      %s229 = scalar_lea.vmem %s176, 5136
      %s230 = scalar_lea.vmem %s150, 32
      %v231 = vld [vmem:[%s230] sm:$0xff]
      %s232 = scalar_lea.vmem %s176, 8208
      %s233 = scalar_lea.vmem %s150, 16448
      %v234 = vld [vmem:[%s233] sm:$0xff]
      %s235 = scalar_lea.vmem %s176, 32
      %s236 = scalar_lea.vmem %s150, 10304
      %v237 = vld [vmem:[%s236] sm:$0xff]
      %s238 = scalar_lea.vmem %s176, 3104
      %s239 = scalar_lea.vmem %s150, 4160
      %v240 = vld [vmem:[%s239] sm:$0xff]
      %s241 = scalar_lea.vmem %s176, 6176
      %s242 = scalar_lea.vmem %s150, 14400
      %v243 = vld [vmem:[%s242] sm:$0xff]
      %s244 = scalar_lea.vmem %s176, 1056
      %s245 = scalar_lea.vmem %s150, 8256
      %v246 = vld [vmem:[%s245] sm:$0xff]
      %s247 = scalar_lea.vmem %s176, 4128
      %s248 = scalar_lea.vmem %s150, 2112
      %v249 = vld [vmem:[%s248] sm:$0xff]
      %s250 = scalar_lea.vmem %s176, 7200
      %s251 = scalar_lea.vmem %s150, 12352
      %v252 = vld [vmem:[%s251] sm:$0xff]
      %s253 = scalar_lea.vmem %s176, 2080
      %s254 = scalar_lea.vmem %s150, 6208
      %v255 = vld [vmem:[%s254] sm:$0xff]
      %s256 = scalar_lea.vmem %s176, 5152
      %s257 = scalar_lea.vmem %s150, 64
      %v258 = vld [vmem:[%s257] sm:$0xff]
      %s259 = scalar_lea.vmem %s176, 8224
      %s260 = scalar_lea.vmem %s150, 16480
      %v261 = vld [vmem:[%s260] sm:$0xff]
      %s262 = scalar_lea.vmem %s176, 48
      %s263 = scalar_lea.vmem %s150, 10336
      %v264 = vld [vmem:[%s263] sm:$0xff]
      %s265 = scalar_lea.vmem %s176, 3120
      %s266 = scalar_lea.vmem %s150, 4192
      %v267 = vld [vmem:[%s266] sm:$0xff]
      %s268 = scalar_lea.vmem %s176, 6192
      %s269 = scalar_lea.vmem %s150, 14432
      %v270 = vld [vmem:[%s269] sm:$0xff]
      %s271 = scalar_lea.vmem %s176, 1072
      %s272 = scalar_lea.vmem %s150, 8288
      %v273 = vld [vmem:[%s272] sm:$0xff]
      %s274 = scalar_lea.vmem %s176, 4144
      %s275 = scalar_lea.vmem %s150, 2144
      %v276 = vld [vmem:[%s275] sm:$0xff]
      %s277 = scalar_lea.vmem %s176, 7216
      %s278 = scalar_lea.vmem %s150, 12384
      %v279 = vld [vmem:[%s278] sm:$0xff]
      %s280 = scalar_lea.vmem %s176, 2096
      %s281 = scalar_lea.vmem %s150, 6240
      %v282 = vld [vmem:[%s281] sm:$0xff]
      %s283 = scalar_lea.vmem %s176, 5168
      %s284 = scalar_lea.vmem %s150, 96
      %v285 = vld [vmem:[%s284] sm:$0xff]
      %s286 = scalar_lea.vmem %s176, 8240
      %s287 = scalar_lea.vmem %s150, 16512
      %v288 = vld [vmem:[%s287] sm:$0xff]
      %s289 = scalar_lea.vmem %s176, 64
      %s290 = scalar_lea.vmem %s150, 10368
      %v291 = vld [vmem:[%s290] sm:$0xff]
      %s292 = scalar_lea.vmem %s176, 3136
      %s293 = scalar_lea.vmem %s150, 4224
      %v294 = vld [vmem:[%s293] sm:$0xff]
      %s295 = scalar_lea.vmem %s176, 6208
      %s296 = scalar_lea.vmem %s150, 14464
      %v297 = vld [vmem:[%s296] sm:$0xff]
      %s298 = scalar_lea.vmem %s176, 1088
      %s299 = scalar_lea.vmem %s150, 8320
      %v300 = vld [vmem:[%s299] sm:$0xff]
      %s301 = scalar_lea.vmem %s176, 4160
      %s302 = scalar_lea.vmem %s150, 2176
      %v303 = vld [vmem:[%s302] sm:$0xff]
      %s304 = scalar_lea.vmem %s176, 7232
      %s305 = scalar_lea.vmem %s150, 12416
      %v306 = vld [vmem:[%s305] sm:$0xff]
      %s307 = scalar_lea.vmem %s176, 2112
      %s308 = scalar_lea.vmem %s150, 6272
      %v309 = vld [vmem:[%s308] sm:$0xff]
      %s310 = scalar_lea.vmem %s176, 5184
      %s311 = scalar_lea.vmem %s150, 128
      %v312 = vld [vmem:[%s311] sm:$0xff]
      %s313 = scalar_lea.vmem %s176, 8256
      %s314 = scalar_lea.vmem %s150, 16544
      %v315 = vld [vmem:[%s314] sm:$0xff]
      %s316 = scalar_lea.vmem %s176, 80
      %s317 = scalar_lea.vmem %s150, 10400
      %v318 = vld [vmem:[%s317] sm:$0xff]
      %s319 = scalar_lea.vmem %s176, 3152
      %s320 = scalar_lea.vmem %s150, 4256
      %v321 = vld [vmem:[%s320] sm:$0xff]
      %s322 = scalar_lea.vmem %s176, 6224
      %s323 = scalar_lea.vmem %s150, 14496
      %v324 = vld [vmem:[%s323] sm:$0xff]
      %s325 = scalar_lea.vmem %s176, 1104
      %s326 = scalar_lea.vmem %s150, 8352
      %v327 = vld [vmem:[%s326] sm:$0xff]
      %s328 = scalar_lea.vmem %s176, 4176
      %s329 = scalar_lea.vmem %s150, 2208
      %v330 = vld [vmem:[%s329] sm:$0xff]
      %s331 = scalar_lea.vmem %s176, 7248
      %s332 = scalar_lea.vmem %s150, 12448
      %v333 = vld [vmem:[%s332] sm:$0xff]
      %s334 = scalar_lea.vmem %s176, 2128
      %s335 = scalar_lea.vmem %s150, 6304
      %v336 = vld [vmem:[%s335] sm:$0xff]
      %s337 = scalar_lea.vmem %s176, 5200
      %s338 = scalar_lea.vmem %s150, 160
      %v339 = vld [vmem:[%s338] sm:$0xff]
      %s340 = scalar_lea.vmem %s176, 8272
      %s341 = scalar_lea.vmem %s150, 16576
      %v342 = vld [vmem:[%s341] sm:$0xff]
      %s343 = scalar_lea.vmem %s176, 96
      %s344 = scalar_lea.vmem %s150, 10432
      %v345 = vld [vmem:[%s344] sm:$0xff]
      %s346 = scalar_lea.vmem %s176, 3168
      %s347 = scalar_lea.vmem %s150, 4288
      %v348 = vld [vmem:[%s347] sm:$0xff]
      %s349 = scalar_lea.vmem %s176, 6240
      %s350 = scalar_lea.vmem %s150, 14528
      %v351 = vld [vmem:[%s350] sm:$0xff]
      %s352 = scalar_lea.vmem %s176, 1120
      %s353 = scalar_lea.vmem %s150, 8384
      %v354 = vld [vmem:[%s353] sm:$0xff]
      %s355 = scalar_lea.vmem %s176, 4192
      %s356 = scalar_lea.vmem %s150, 2240
      %v357 = vld [vmem:[%s356] sm:$0xff]
      %s358 = scalar_lea.vmem %s176, 7264
      %s359 = scalar_lea.vmem %s150, 12480
      %v360 = vld [vmem:[%s359] sm:$0xff]
      %s361 = scalar_lea.vmem %s176, 2144
      %s362 = scalar_lea.vmem %s150, 6336
      %v363 = vld [vmem:[%s362] sm:$0xff]
      %s364 = scalar_lea.vmem %s176, 5216
      %s365 = scalar_lea.vmem %s150, 192
      %v366 = vld [vmem:[%s365] sm:$0xff]
      %s367 = scalar_lea.vmem %s176, 8288
      %s368 = scalar_lea.vmem %s150, 16608
      %v369 = vld [vmem:[%s368] sm:$0xff]
      %s370 = scalar_lea.vmem %s176, 112
      %s371 = scalar_lea.vmem %s150, 10464
      %v372 = vld [vmem:[%s371] sm:$0xff]
      %s373 = scalar_lea.vmem %s176, 3184
      %s374 = scalar_lea.vmem %s150, 4320
      %v375 = vld [vmem:[%s374] sm:$0xff]
      %s376 = scalar_lea.vmem %s176, 6256
      %s377 = scalar_lea.vmem %s150, 14560
      %v378 = vld [vmem:[%s377] sm:$0xff]
      %s379 = scalar_lea.vmem %s176, 1136
      %s380 = scalar_lea.vmem %s150, 8416
      %v381 = vld [vmem:[%s380] sm:$0xff]
      %s382 = scalar_lea.vmem %s176, 4208
      %s383 = scalar_lea.vmem %s150, 2272
      %v384 = vld [vmem:[%s383] sm:$0xff]
      %s385 = scalar_lea.vmem %s176, 7280
      %s386 = scalar_lea.vmem %s150, 12512
      %v387 = vld [vmem:[%s386] sm:$0xff]
      %s388 = scalar_lea.vmem %s176, 2160
      %s389 = scalar_lea.vmem %s150, 6368
      %v390 = vld [vmem:[%s389] sm:$0xff]
      %s391 = scalar_lea.vmem %s176, 5232
      %s392 = scalar_lea.vmem %s150, 224
      %v393 = vld [vmem:[%s392] sm:$0xff]
      %s394 = scalar_lea.vmem %s176, 8304
      %s395 = scalar_lea.vmem %s150, 16640
      %v396 = vld [vmem:[%s395] sm:$0xff]
      %s397 = scalar_lea.vmem %s176, 128
      %s398 = scalar_lea.vmem %s150, 10496
      %v399 = vld [vmem:[%s398] sm:$0xff]
      %s400 = scalar_lea.vmem %s176, 3200
      %s401 = scalar_lea.vmem %s150, 4352
      %v402 = vld [vmem:[%s401] sm:$0xff]
      %s403 = scalar_lea.vmem %s176, 6272
      %s404 = scalar_lea.vmem %s150, 14592
      %v405 = vld [vmem:[%s404] sm:$0xff]
      %s406 = scalar_lea.vmem %s176, 1152
      %s407 = scalar_lea.vmem %s150, 8448
      %v408 = vld [vmem:[%s407] sm:$0xff]
      %s409 = scalar_lea.vmem %s176, 4224
      %s410 = scalar_lea.vmem %s150, 2304
      %v411 = vld [vmem:[%s410] sm:$0xff]
      %s412 = scalar_lea.vmem %s176, 7296
      %s413 = scalar_lea.vmem %s150, 12544
      %v414 = vld [vmem:[%s413] sm:$0xff]
      %s415 = scalar_lea.vmem %s176, 2176
      %s416 = scalar_lea.vmem %s150, 6400
      %v417 = vld [vmem:[%s416] sm:$0xff]
      %s418 = scalar_lea.vmem %s176, 5248
      %s419 = scalar_lea.vmem %s150, 256
      %v420 = vld [vmem:[%s419] sm:$0xff]
      %s421 = scalar_lea.vmem %s176, 8320
      %s422 = scalar_lea.vmem %s150, 16672
      %v423 = vld [vmem:[%s422] sm:$0xff]
      %s424 = scalar_lea.vmem %s176, 144
      %s425 = scalar_lea.vmem %s150, 10528
      %v426 = vld [vmem:[%s425] sm:$0xff]
      %s427 = scalar_lea.vmem %s176, 3216
      %s428 = scalar_lea.vmem %s150, 4384
      %v429 = vld [vmem:[%s428] sm:$0xff]
      %s430 = scalar_lea.vmem %s176, 6288
      %s431 = scalar_lea.vmem %s150, 14624
      %v432 = vld [vmem:[%s431] sm:$0xff]
      %s433 = scalar_lea.vmem %s176, 1168
      %s434 = scalar_lea.vmem %s150, 8480
      %v435 = vld [vmem:[%s434] sm:$0xff]
      %s436 = scalar_lea.vmem %s176, 4240
      %s437 = scalar_lea.vmem %s150, 2336
      %v438 = vld [vmem:[%s437] sm:$0xff]
      %s439 = scalar_lea.vmem %s176, 7312
      %s440 = scalar_lea.vmem %s150, 12576
      %v441 = vld [vmem:[%s440] sm:$0xff]
      %s442 = scalar_lea.vmem %s176, 2192
      %s443 = scalar_lea.vmem %s150, 6432
      %v444 = vld [vmem:[%s443] sm:$0xff]
      %s445 = scalar_lea.vmem %s176, 5264
      %s446 = scalar_lea.vmem %s150, 288
      %v447 = vld [vmem:[%s446] sm:$0xff]
      %s448 = scalar_lea.vmem %s176, 8336
      %s449 = scalar_lea.vmem %s150, 16704
      %v450 = vld [vmem:[%s449] sm:$0xff]
      %s451 = scalar_lea.vmem %s176, 160
      %s452 = scalar_lea.vmem %s150, 10560
      %v453 = vld [vmem:[%s452] sm:$0xff]
      %s454 = scalar_lea.vmem %s176, 3232
      %s455 = scalar_lea.vmem %s150, 4416
      %v456 = vld [vmem:[%s455] sm:$0xff]
      %s457 = scalar_lea.vmem %s176, 6304
      %s458 = scalar_lea.vmem %s150, 14656
      %v459 = vld [vmem:[%s458] sm:$0xff]
      %s460 = scalar_lea.vmem %s176, 1184
      %s461 = scalar_lea.vmem %s150, 8512
      %v462 = vld [vmem:[%s461] sm:$0xff]
      %s463 = scalar_lea.vmem %s176, 4256
      %s464 = scalar_lea.vmem %s150, 2368
      %v465 = vld [vmem:[%s464] sm:$0xff]
      %s466 = scalar_lea.vmem %s176, 7328
      %s467 = scalar_lea.vmem %s150, 12608
      %v468 = vld [vmem:[%s467] sm:$0xff]
      %s469 = scalar_lea.vmem %s176, 2208
      %s470 = scalar_lea.vmem %s150, 6464
      %v471 = vld [vmem:[%s470] sm:$0xff]
      %s472 = scalar_lea.vmem %s176, 5280
      %s473 = scalar_lea.vmem %s150, 320
      %v474 = vld [vmem:[%s473] sm:$0xff]
      %s475 = scalar_lea.vmem %s176, 8352
      %s476 = scalar_lea.vmem %s150, 16736
      %v477 = vld [vmem:[%s476] sm:$0xff]
      %s478 = scalar_lea.vmem %s176, 176
      %s479 = scalar_lea.vmem %s150, 10592
      %v480 = vld [vmem:[%s479] sm:$0xff]
      %s481 = scalar_lea.vmem %s176, 3248
      %s482 = scalar_lea.vmem %s150, 4448
      %v483 = vld [vmem:[%s482] sm:$0xff]
      %s484 = scalar_lea.vmem %s176, 6320
      %s485 = scalar_lea.vmem %s150, 14688
      %v486 = vld [vmem:[%s485] sm:$0xff]
      %s487 = scalar_lea.vmem %s176, 1200
      %s488 = scalar_lea.vmem %s150, 8544
      %v489 = vld [vmem:[%s488] sm:$0xff]
      %s490 = scalar_lea.vmem %s176, 4272
      %s491 = scalar_lea.vmem %s150, 2400
      %v492 = vld [vmem:[%s491] sm:$0xff]
      %s493 = scalar_lea.vmem %s176, 7344
      %s494 = scalar_lea.vmem %s150, 12640
      %v495 = vld [vmem:[%s494] sm:$0xff]
      %s496 = scalar_lea.vmem %s176, 2224
      %s497 = scalar_lea.vmem %s150, 6496
      %v498 = vld [vmem:[%s497] sm:$0xff]
      %s499 = scalar_lea.vmem %s176, 5296
      %s500 = scalar_lea.vmem %s150, 352
      %v501 = vld [vmem:[%s500] sm:$0xff]
      %s502 = scalar_lea.vmem %s176, 8368
      %s503 = scalar_lea.vmem %s150, 16768
      %v504 = vld [vmem:[%s503] sm:$0xff]
      %s505 = scalar_lea.vmem %s176, 192
      %s506 = scalar_lea.vmem %s150, 10624
      %v507 = vld [vmem:[%s506] sm:$0xff]
      %s508 = scalar_lea.vmem %s176, 3264
      %s509 = scalar_lea.vmem %s150, 4480
      %v510 = vld [vmem:[%s509] sm:$0xff]
      %s511 = scalar_lea.vmem %s176, 6336
      %s512 = scalar_lea.vmem %s150, 14720
      %v513 = vld [vmem:[%s512] sm:$0xff]
      %s514 = scalar_lea.vmem %s176, 1216
      %s515 = scalar_lea.vmem %s150, 8576
      %v516 = vld [vmem:[%s515] sm:$0xff]
      %s517 = scalar_lea.vmem %s176, 4288
      %s518 = scalar_lea.vmem %s150, 2432
      %v519 = vld [vmem:[%s518] sm:$0xff]
      %s520 = scalar_lea.vmem %s176, 7360
      %s521 = scalar_lea.vmem %s150, 12672
      %v522 = vld [vmem:[%s521] sm:$0xff]
      %s523 = scalar_lea.vmem %s176, 2240
      %s524 = scalar_lea.vmem %s150, 6528
      %v525 = vld [vmem:[%s524] sm:$0xff]
      %s526 = scalar_lea.vmem %s176, 5312
      %s527 = scalar_lea.vmem %s150, 384
      %v528 = vld [vmem:[%s527] sm:$0xff]
      %s529 = scalar_lea.vmem %s176, 8384
      %s530 = scalar_lea.vmem %s150, 16800
      %v531 = vld [vmem:[%s530] sm:$0xff]
      %s532 = scalar_lea.vmem %s176, 208
      %s533 = scalar_lea.vmem %s150, 10656
      %v534 = vld [vmem:[%s533] sm:$0xff]
      %s535 = scalar_lea.vmem %s176, 3280
      %s536 = scalar_lea.vmem %s150, 4512
      %v537 = vld [vmem:[%s536] sm:$0xff]
      %s538 = scalar_lea.vmem %s176, 6352
      %s539 = scalar_lea.vmem %s150, 14752
      %v540 = vld [vmem:[%s539] sm:$0xff]
      %s541 = scalar_lea.vmem %s176, 1232
      %s542 = scalar_lea.vmem %s150, 8608
      %v543 = vld [vmem:[%s542] sm:$0xff]
      %s544 = scalar_lea.vmem %s176, 4304
      %s545 = scalar_lea.vmem %s150, 2464
      %v546 = vld [vmem:[%s545] sm:$0xff]
      %s547 = scalar_lea.vmem %s176, 7376
      %s548 = scalar_lea.vmem %s150, 12704
      %v549 = vld [vmem:[%s548] sm:$0xff]
      %s550 = scalar_lea.vmem %s176, 2256
      %s551 = scalar_lea.vmem %s150, 6560
      %v552 = vld [vmem:[%s551] sm:$0xff]
      %s553 = scalar_lea.vmem %s176, 5328
      %s554 = scalar_lea.vmem %s150, 416
      %v555 = vld [vmem:[%s554] sm:$0xff]
      %s556 = scalar_lea.vmem %s176, 8400
      %s557 = scalar_lea.vmem %s150, 16832
      %v558 = vld [vmem:[%s557] sm:$0xff]
      %s559 = scalar_lea.vmem %s176, 224
      %s560 = scalar_lea.vmem %s150, 10688
      %v561 = vld [vmem:[%s560] sm:$0xff]
      %s562 = scalar_lea.vmem %s176, 3296
      %s563 = scalar_lea.vmem %s150, 4544
      %v564 = vld [vmem:[%s563] sm:$0xff]
      %s565 = scalar_lea.vmem %s176, 6368
      %s566 = scalar_lea.vmem %s150, 14784
      %v567 = vld [vmem:[%s566] sm:$0xff]
      %s568 = scalar_lea.vmem %s176, 1248
      %s569 = scalar_lea.vmem %s150, 8640
      %v570 = vld [vmem:[%s569] sm:$0xff]
      %s571 = scalar_lea.vmem %s176, 4320
      %s572 = scalar_lea.vmem %s150, 2496
      %v573 = vld [vmem:[%s572] sm:$0xff]
      %s574 = scalar_lea.vmem %s176, 7392
      %s575 = scalar_lea.vmem %s150, 12736
      %v576 = vld [vmem:[%s575] sm:$0xff]
      %s577 = scalar_lea.vmem %s176, 2272
      %s578 = scalar_lea.vmem %s150, 6592
      %v579 = vld [vmem:[%s578] sm:$0xff]
      %s580 = scalar_lea.vmem %s176, 5344
      %s581 = scalar_lea.vmem %s150, 448
      %v582 = vld [vmem:[%s581] sm:$0xff]
      %s583 = scalar_lea.vmem %s176, 8416
      %s584 = scalar_lea.vmem %s150, 16864
      %v585 = vld [vmem:[%s584] sm:$0xff]
      %s586 = scalar_lea.vmem %s176, 240
      %s587 = scalar_lea.vmem %s150, 10720
      %v588 = vld [vmem:[%s587] sm:$0xff]
      %s589 = scalar_lea.vmem %s176, 3312
      %s590 = scalar_lea.vmem %s150, 4576
      %v591 = vld [vmem:[%s590] sm:$0xff]
      %s592 = scalar_lea.vmem %s176, 6384
      %s593 = scalar_lea.vmem %s150, 14816
      %v594 = vld [vmem:[%s593] sm:$0xff]
      %s595 = scalar_lea.vmem %s176, 1264
      %s596 = scalar_lea.vmem %s150, 8672
      %v597 = vld [vmem:[%s596] sm:$0xff]
      %s598 = scalar_lea.vmem %s176, 4336
      %s599 = scalar_lea.vmem %s150, 2528
      %v600 = vld [vmem:[%s599] sm:$0xff]
      %s601 = scalar_lea.vmem %s176, 7408
      %s602 = scalar_lea.vmem %s150, 12768
      %v603 = vld [vmem:[%s602] sm:$0xff]
      %s604 = scalar_lea.vmem %s176, 2288
      %s605 = scalar_lea.vmem %s150, 6624
      %v606 = vld [vmem:[%s605] sm:$0xff]
      %s607 = scalar_lea.vmem %s176, 5360
      %s608 = scalar_lea.vmem %s150, 480
      %v609 = vld [vmem:[%s608] sm:$0xff]
      %s610 = scalar_lea.vmem %s176, 8432
      %s611 = scalar_lea.vmem %s150, 16896
      %v612 = vld [vmem:[%s611] sm:$0xff]
      %s613 = scalar_lea.vmem %s176, 256
      %s614 = scalar_lea.vmem %s150, 10752
      %v615 = vld [vmem:[%s614] sm:$0xff]
      %s616 = scalar_lea.vmem %s176, 3328
      %s617 = scalar_lea.vmem %s150, 4608
      %v618 = vld [vmem:[%s617] sm:$0xff]
      %s619 = scalar_lea.vmem %s176, 6400
      %s620 = scalar_lea.vmem %s150, 14848
      %v621 = vld [vmem:[%s620] sm:$0xff]
      %s622 = scalar_lea.vmem %s176, 1280
      %s623 = scalar_lea.vmem %s150, 8704
      %v624 = vld [vmem:[%s623] sm:$0xff]
      %s625 = scalar_lea.vmem %s176, 4352
      %s626 = scalar_lea.vmem %s150, 2560
      %v627 = vld [vmem:[%s626] sm:$0xff]
      %s628 = scalar_lea.vmem %s176, 7424
      %s629 = scalar_lea.vmem %s150, 12800
      %v630 = vld [vmem:[%s629] sm:$0xff]
      %s631 = scalar_lea.vmem %s176, 2304
      %s632 = scalar_lea.vmem %s150, 6656
      %v633 = vld [vmem:[%s632] sm:$0xff]
      %s634 = scalar_lea.vmem %s176, 5376
      %s635 = scalar_lea.vmem %s150, 512
      %v636 = vld [vmem:[%s635] sm:$0xff]
      %s637 = scalar_lea.vmem %s176, 8448
      %s638 = scalar_lea.vmem %s150, 16928
      %v639 = vld [vmem:[%s638] sm:$0xff]
      %s640 = scalar_lea.vmem %s176, 272
      %s641 = scalar_lea.vmem %s150, 10784
      %v642 = vld [vmem:[%s641] sm:$0xff]
      %s643 = scalar_lea.vmem %s176, 3344
      %s644 = scalar_lea.vmem %s150, 4640
      %v645 = vld [vmem:[%s644] sm:$0xff]
      %s646 = scalar_lea.vmem %s176, 6416
      %s647 = scalar_lea.vmem %s150, 14880
      %v648 = vld [vmem:[%s647] sm:$0xff]
      %s649 = scalar_lea.vmem %s176, 1296
      %s650 = scalar_lea.vmem %s150, 8736
      %v651 = vld [vmem:[%s650] sm:$0xff]
      %s652 = scalar_lea.vmem %s176, 4368
      %s653 = scalar_lea.vmem %s150, 2592
      %v654 = vld [vmem:[%s653] sm:$0xff]
      %s655 = scalar_lea.vmem %s176, 7440
      %s656 = scalar_lea.vmem %s150, 12832
      %v657 = vld [vmem:[%s656] sm:$0xff]
      %s658 = scalar_lea.vmem %s176, 2320
      %s659 = scalar_lea.vmem %s150, 6688
      %v660 = vld [vmem:[%s659] sm:$0xff]
      %s661 = scalar_lea.vmem %s176, 5392
      %s662 = scalar_lea.vmem %s150, 544
      %v663 = vld [vmem:[%s662] sm:$0xff]
      %s664 = scalar_lea.vmem %s176, 8464
      %s665 = scalar_lea.vmem %s150, 16960
      %v666 = vld [vmem:[%s665] sm:$0xff]
      %s667 = scalar_lea.vmem %s176, 288
      %s668 = scalar_lea.vmem %s150, 10816
      %v669 = vld [vmem:[%s668] sm:$0xff]
      %s670 = scalar_lea.vmem %s176, 3360
      %s671 = scalar_lea.vmem %s150, 4672
      %v672 = vld [vmem:[%s671] sm:$0xff]
      %s673 = scalar_lea.vmem %s176, 6432
      %s674 = scalar_lea.vmem %s150, 14912
      %v675 = vld [vmem:[%s674] sm:$0xff]
      %s676 = scalar_lea.vmem %s176, 1312
      %s677 = scalar_lea.vmem %s150, 8768
      %v678 = vld [vmem:[%s677] sm:$0xff]
      %s679 = scalar_lea.vmem %s176, 4384
      %s680 = scalar_lea.vmem %s150, 2624
      %v681 = vld [vmem:[%s680] sm:$0xff]
      %s682 = scalar_lea.vmem %s176, 7456
      %s683 = scalar_lea.vmem %s150, 12864
      %v684 = vld [vmem:[%s683] sm:$0xff]
      %s685 = scalar_lea.vmem %s176, 2336
      %s686 = scalar_lea.vmem %s150, 6720
      %v687 = vld [vmem:[%s686] sm:$0xff]
      %s688 = scalar_lea.vmem %s176, 5408
      %s689 = scalar_lea.vmem %s150, 576
      %v690 = vld [vmem:[%s689] sm:$0xff]
      %s691 = scalar_lea.vmem %s176, 8480
      %s692 = scalar_lea.vmem %s150, 16992
      %v693 = vld [vmem:[%s692] sm:$0xff]
      %s694 = scalar_lea.vmem %s176, 304
      %s695 = scalar_lea.vmem %s150, 10848
      %v696 = vld [vmem:[%s695] sm:$0xff]
      %s697 = scalar_lea.vmem %s176, 3376
      %s698 = scalar_lea.vmem %s150, 4704
      %v699 = vld [vmem:[%s698] sm:$0xff]
      %s700 = scalar_lea.vmem %s176, 6448
      %s701 = scalar_lea.vmem %s150, 14944
      %v702 = vld [vmem:[%s701] sm:$0xff]
      %s703 = scalar_lea.vmem %s176, 1328
      %s704 = scalar_lea.vmem %s150, 8800
      %v705 = vld [vmem:[%s704] sm:$0xff]
      %s706 = scalar_lea.vmem %s176, 4400
      %s707 = scalar_lea.vmem %s150, 2656
      %v708 = vld [vmem:[%s707] sm:$0xff]
      %s709 = scalar_lea.vmem %s176, 7472
      %s710 = scalar_lea.vmem %s150, 12896
      %v711 = vld [vmem:[%s710] sm:$0xff]
      %s712 = scalar_lea.vmem %s176, 2352
      %s713 = scalar_lea.vmem %s150, 6752
      %v714 = vld [vmem:[%s713] sm:$0xff]
      %s715 = scalar_lea.vmem %s176, 5424
      %s716 = scalar_lea.vmem %s150, 608
      %v717 = vld [vmem:[%s716] sm:$0xff]
      %s718 = scalar_lea.vmem %s176, 8496
      %s719 = scalar_lea.vmem %s150, 17024
      %v720 = vld [vmem:[%s719] sm:$0xff]
      %s721 = scalar_lea.vmem %s176, 320
      %s722 = scalar_lea.vmem %s150, 10880
      %v723 = vld [vmem:[%s722] sm:$0xff]
      %s724 = scalar_lea.vmem %s176, 3392
      %s725 = scalar_lea.vmem %s150, 4736
      %v726 = vld [vmem:[%s725] sm:$0xff]
      %s727 = scalar_lea.vmem %s176, 6464
      %s728 = scalar_lea.vmem %s150, 14976
      %v729 = vld [vmem:[%s728] sm:$0xff]
      %s730 = scalar_lea.vmem %s176, 1344
      %s731 = scalar_lea.vmem %s150, 8832
      %v732 = vld [vmem:[%s731] sm:$0xff]
      %s733 = scalar_lea.vmem %s176, 4416
      %s734 = scalar_lea.vmem %s150, 2688
      %v735 = vld [vmem:[%s734] sm:$0xff]
      %s736 = scalar_lea.vmem %s176, 7488
      %s737 = scalar_lea.vmem %s150, 12928
      %v738 = vld [vmem:[%s737] sm:$0xff]
      %s739 = scalar_lea.vmem %s176, 2368
      %s740 = scalar_lea.vmem %s150, 6784
      %v741 = vld [vmem:[%s740] sm:$0xff]
      %s742 = scalar_lea.vmem %s176, 5440
      %s743 = scalar_lea.vmem %s150, 640
      %v744 = vld [vmem:[%s743] sm:$0xff]
      %s745 = scalar_lea.vmem %s176, 8512
      %s746 = scalar_lea.vmem %s150, 17056
      %v747 = vld [vmem:[%s746] sm:$0xff]
      %s748 = scalar_lea.vmem %s176, 336
      %s749 = scalar_lea.vmem %s150, 10912
      %v750 = vld [vmem:[%s749] sm:$0xff]
      %s751 = scalar_lea.vmem %s176, 3408
      %s752 = scalar_lea.vmem %s150, 4768
      %v753 = vld [vmem:[%s752] sm:$0xff]
      %s754 = scalar_lea.vmem %s176, 6480
      %s755 = scalar_lea.vmem %s150, 15008
      %v756 = vld [vmem:[%s755] sm:$0xff]
      %s757 = scalar_lea.vmem %s176, 1360
      %s758 = scalar_lea.vmem %s150, 8864
      %v759 = vld [vmem:[%s758] sm:$0xff]
      %s760 = scalar_lea.vmem %s176, 4432
      %s761 = scalar_lea.vmem %s150, 2720
      %v762 = vld [vmem:[%s761] sm:$0xff]
      %s763 = scalar_lea.vmem %s176, 7504
      %s764 = scalar_lea.vmem %s150, 12960
      %v765 = vld [vmem:[%s764] sm:$0xff]
      %s766 = scalar_lea.vmem %s176, 2384
      %s767 = scalar_lea.vmem %s150, 6816
      %v768 = vld [vmem:[%s767] sm:$0xff]
      %s769 = scalar_lea.vmem %s176, 5456
      %s770 = scalar_lea.vmem %s150, 672
      %v771 = vld [vmem:[%s770] sm:$0xff]
      %s772 = scalar_lea.vmem %s176, 8528
      %s773 = scalar_lea.vmem %s150, 17088
      %v774 = vld [vmem:[%s773] sm:$0xff]
      %s775 = scalar_lea.vmem %s176, 352
      %s776 = scalar_lea.vmem %s150, 10944
      %v777 = vld [vmem:[%s776] sm:$0xff]
      %s778 = scalar_lea.vmem %s176, 3424
      %s779 = scalar_lea.vmem %s150, 4800
      %v780 = vld [vmem:[%s779] sm:$0xff]
      %s781 = scalar_lea.vmem %s176, 6496
      %s782 = scalar_lea.vmem %s150, 15040
      %v783 = vld [vmem:[%s782] sm:$0xff]
      %s784 = scalar_lea.vmem %s176, 1376
      %s785 = scalar_lea.vmem %s150, 8896
      %v786 = vld [vmem:[%s785] sm:$0xff]
      %s787 = scalar_lea.vmem %s176, 4448
      %s788 = scalar_lea.vmem %s150, 2752
      %v789 = vld [vmem:[%s788] sm:$0xff]
      %s790 = scalar_lea.vmem %s176, 7520
      %s791 = scalar_lea.vmem %s150, 12992
      %v792 = vld [vmem:[%s791] sm:$0xff]
      %s793 = scalar_lea.vmem %s176, 2400
      %s794 = scalar_lea.vmem %s150, 6848
      %v795 = vld [vmem:[%s794] sm:$0xff]
      %s796 = scalar_lea.vmem %s176, 5472
      %s797 = scalar_lea.vmem %s150, 704
      %v798 = vld [vmem:[%s797] sm:$0xff]
      %s799 = scalar_lea.vmem %s176, 8544
      %s800 = scalar_lea.vmem %s150, 17120
      %v801 = vld [vmem:[%s800] sm:$0xff]
      %s802 = scalar_lea.vmem %s176, 368
      %s803 = scalar_lea.vmem %s150, 10976
      %v804 = vld [vmem:[%s803] sm:$0xff]
      %s805 = scalar_lea.vmem %s176, 3440
      %s806 = scalar_lea.vmem %s150, 4832
      %v807 = vld [vmem:[%s806] sm:$0xff]
      %s808 = scalar_lea.vmem %s176, 6512
      %s809 = scalar_lea.vmem %s150, 15072
      %v810 = vld [vmem:[%s809] sm:$0xff]
      %s811 = scalar_lea.vmem %s176, 1392
      %s812 = scalar_lea.vmem %s150, 8928
      %v813 = vld [vmem:[%s812] sm:$0xff]
      %s814 = scalar_lea.vmem %s176, 4464
      %s815 = scalar_lea.vmem %s150, 2784
      %v816 = vld [vmem:[%s815] sm:$0xff]
      %s817 = scalar_lea.vmem %s176, 7536
      %s818 = scalar_lea.vmem %s150, 13024
      %v819 = vld [vmem:[%s818] sm:$0xff]
      %s820 = scalar_lea.vmem %s176, 2416
      %s821 = scalar_lea.vmem %s150, 6880
      %v822 = vld [vmem:[%s821] sm:$0xff]
      %s823 = scalar_lea.vmem %s176, 5488
      %s824 = scalar_lea.vmem %s150, 736
      %v825 = vld [vmem:[%s824] sm:$0xff]
      %s826 = scalar_lea.vmem %s176, 8560
      %s827 = scalar_lea.vmem %s150, 17152
      %v828 = vld [vmem:[%s827] sm:$0xff]
      %s829 = scalar_lea.vmem %s176, 384
      %s830 = scalar_lea.vmem %s150, 11008
      %v831 = vld [vmem:[%s830] sm:$0xff]
      %s832 = scalar_lea.vmem %s176, 3456
      %s833 = scalar_lea.vmem %s150, 4864
      %v834 = vld [vmem:[%s833] sm:$0xff]
      %s835 = scalar_lea.vmem %s176, 6528
      %s836 = scalar_lea.vmem %s150, 15104
      %v837 = vld [vmem:[%s836] sm:$0xff]
      %s838 = scalar_lea.vmem %s176, 1408
      %s839 = scalar_lea.vmem %s150, 8960
      %v840 = vld [vmem:[%s839] sm:$0xff]
      %s841 = scalar_lea.vmem %s176, 4480
      %s842 = scalar_lea.vmem %s150, 2816
      %v843 = vld [vmem:[%s842] sm:$0xff]
      %s844 = scalar_lea.vmem %s176, 7552
      %s845 = scalar_lea.vmem %s150, 13056
      %v846 = vld [vmem:[%s845] sm:$0xff]
      %s847 = scalar_lea.vmem %s176, 2432
      %s848 = scalar_lea.vmem %s150, 6912
      %v849 = vld [vmem:[%s848] sm:$0xff]
      %s850 = scalar_lea.vmem %s176, 5504
      %s851 = scalar_lea.vmem %s150, 768
      %v852 = vld [vmem:[%s851] sm:$0xff]
      %s853 = scalar_lea.vmem %s176, 8576
      %s854 = scalar_lea.vmem %s150, 17184
      %v855 = vld [vmem:[%s854] sm:$0xff]
      %s856 = scalar_lea.vmem %s176, 400
      %s857 = scalar_lea.vmem %s150, 11040
      %v858 = vld [vmem:[%s857] sm:$0xff]
      %s859 = scalar_lea.vmem %s176, 3472
      %s860 = scalar_lea.vmem %s150, 4896
      %v861 = vld [vmem:[%s860] sm:$0xff]
      %s862 = scalar_lea.vmem %s176, 6544
      %s863 = scalar_lea.vmem %s150, 15136
      %v864 = vld [vmem:[%s863] sm:$0xff]
      %s865 = scalar_lea.vmem %s176, 1424
      %s866 = scalar_lea.vmem %s150, 8992
      %v867 = vld [vmem:[%s866] sm:$0xff]
      %s868 = scalar_lea.vmem %s176, 4496
      %s869 = scalar_lea.vmem %s150, 2848
      %v870 = vld [vmem:[%s869] sm:$0xff]
      %s871 = scalar_lea.vmem %s176, 7568
      %s872 = scalar_lea.vmem %s150, 13088
      %v873 = vld [vmem:[%s872] sm:$0xff]
      %s874 = scalar_lea.vmem %s176, 2448
      %s875 = scalar_lea.vmem %s150, 6944
      %v876 = vld [vmem:[%s875] sm:$0xff]
      %s877 = scalar_lea.vmem %s176, 5520
      %s878 = scalar_lea.vmem %s150, 800
      %v879 = vld [vmem:[%s878] sm:$0xff]
      %s880 = scalar_lea.vmem %s176, 8592
      %s881 = scalar_lea.vmem %s150, 17216
      %v882 = vld [vmem:[%s881] sm:$0xff]
      %s883 = scalar_lea.vmem %s176, 416
      %s884 = scalar_lea.vmem %s150, 11072
      %v885 = vld [vmem:[%s884] sm:$0xff]
      %s886 = scalar_lea.vmem %s176, 3488
      %s887 = scalar_lea.vmem %s150, 4928
      %v888 = vld [vmem:[%s887] sm:$0xff]
      %s889 = scalar_lea.vmem %s176, 6560
      %s890 = scalar_lea.vmem %s150, 15168
      %v891 = vld [vmem:[%s890] sm:$0xff]
      %s892 = scalar_lea.vmem %s176, 1440
      %s893 = scalar_lea.vmem %s150, 9024
      %v894 = vld [vmem:[%s893] sm:$0xff]
      %s895 = scalar_lea.vmem %s176, 4512
      %s896 = scalar_lea.vmem %s150, 2880
      %v897 = vld [vmem:[%s896] sm:$0xff]
      %s898 = scalar_lea.vmem %s176, 7584
      %s899 = scalar_lea.vmem %s150, 13120
      %v900 = vld [vmem:[%s899] sm:$0xff]
      %s901 = scalar_lea.vmem %s176, 2464
      %s902 = scalar_lea.vmem %s150, 6976
      %v903 = vld [vmem:[%s902] sm:$0xff]
      %s904 = scalar_lea.vmem %s176, 5536
      %s905 = scalar_lea.vmem %s150, 832
      %v906 = vld [vmem:[%s905] sm:$0xff]
      %s907 = scalar_lea.vmem %s176, 8608
      %s908 = scalar_lea.vmem %s150, 17248
      %v909 = vld [vmem:[%s908] sm:$0xff]
      %s910 = scalar_lea.vmem %s176, 432
      %s911 = scalar_lea.vmem %s150, 11104
      %v912 = vld [vmem:[%s911] sm:$0xff]
      %s913 = scalar_lea.vmem %s176, 3504
      %s914 = scalar_lea.vmem %s150, 4960
      %v915 = vld [vmem:[%s914] sm:$0xff]
      %s916 = scalar_lea.vmem %s176, 6576
      %s917 = scalar_lea.vmem %s150, 15200
      %v918 = vld [vmem:[%s917] sm:$0xff]
      %s919 = scalar_lea.vmem %s176, 1456
      %s920 = scalar_lea.vmem %s150, 9056
      %v921 = vld [vmem:[%s920] sm:$0xff]
      %s922 = scalar_lea.vmem %s176, 4528
      %s923 = scalar_lea.vmem %s150, 2912
      %v924 = vld [vmem:[%s923] sm:$0xff]
      %s925 = scalar_lea.vmem %s176, 7600
      %s926 = scalar_lea.vmem %s150, 13152
      %v927 = vld [vmem:[%s926] sm:$0xff]
      %s928 = scalar_lea.vmem %s176, 2480
      %s929 = scalar_lea.vmem %s150, 7008
      %v930 = vld [vmem:[%s929] sm:$0xff]
      %s931 = scalar_lea.vmem %s176, 5552
      %s932 = scalar_lea.vmem %s150, 864
      %v933 = vld [vmem:[%s932] sm:$0xff]
      %s934 = scalar_lea.vmem %s176, 8624
      %s935 = scalar_lea.vmem %s150, 17280
      %v936 = vld [vmem:[%s935] sm:$0xff]
      %s937 = scalar_lea.vmem %s176, 448
      %s938 = scalar_lea.vmem %s150, 11136
      %v939 = vld [vmem:[%s938] sm:$0xff]
      %s940 = scalar_lea.vmem %s176, 3520
      %s941 = scalar_lea.vmem %s150, 4992
      %v942 = vld [vmem:[%s941] sm:$0xff]
      %s943 = scalar_lea.vmem %s176, 6592
      %s944 = scalar_lea.vmem %s150, 15232
      %v945 = vld [vmem:[%s944] sm:$0xff]
      %s946 = scalar_lea.vmem %s176, 1472
      %s947 = scalar_lea.vmem %s150, 9088
      %v948 = vld [vmem:[%s947] sm:$0xff]
      %s949 = scalar_lea.vmem %s176, 4544
      %s950 = scalar_lea.vmem %s150, 2944
      %v951 = vld [vmem:[%s950] sm:$0xff]
      %s952 = scalar_lea.vmem %s176, 7616
      %s953 = scalar_lea.vmem %s150, 13184
      %v954 = vld [vmem:[%s953] sm:$0xff]
      %s955 = scalar_lea.vmem %s176, 2496
      %s956 = scalar_lea.vmem %s150, 7040
      %v957 = vld [vmem:[%s956] sm:$0xff]
      %s958 = scalar_lea.vmem %s176, 5568
      %s959 = scalar_lea.vmem %s150, 896
      %v960 = vld [vmem:[%s959] sm:$0xff]
      %s961 = scalar_lea.vmem %s176, 8640
      %s962 = scalar_lea.vmem %s150, 17312
      %v963 = vld [vmem:[%s962] sm:$0xff]
      %s964 = scalar_lea.vmem %s176, 464
      %s965 = scalar_lea.vmem %s150, 11168
      %v966 = vld [vmem:[%s965] sm:$0xff]
      %s967 = scalar_lea.vmem %s176, 3536
      %s968 = scalar_lea.vmem %s150, 5024
      %v969 = vld [vmem:[%s968] sm:$0xff]
      %s970 = scalar_lea.vmem %s176, 6608
      %s971 = scalar_lea.vmem %s150, 15264
      %v972 = vld [vmem:[%s971] sm:$0xff]
      %s973 = scalar_lea.vmem %s176, 1488
      %s974 = scalar_lea.vmem %s150, 9120
      %v975 = vld [vmem:[%s974] sm:$0xff]
      %s976 = scalar_lea.vmem %s176, 4560
      %s977 = scalar_lea.vmem %s150, 2976
      %v978 = vld [vmem:[%s977] sm:$0xff]
      %s979 = scalar_lea.vmem %s176, 7632
      %s980 = scalar_lea.vmem %s150, 13216
      %v981 = vld [vmem:[%s980] sm:$0xff]
      %s982 = scalar_lea.vmem %s176, 2512
      %s983 = scalar_lea.vmem %s150, 7072
      %v984 = vld [vmem:[%s983] sm:$0xff]
      %s985 = scalar_lea.vmem %s176, 5584
      %s986 = scalar_lea.vmem %s150, 928
      %v987 = vld [vmem:[%s986] sm:$0xff]
      %s988 = scalar_lea.vmem %s176, 8656
      %s989 = scalar_lea.vmem %s150, 17344
      %v990 = vld [vmem:[%s989] sm:$0xff]
      %s991 = scalar_lea.vmem %s176, 480
      %s992 = scalar_lea.vmem %s150, 11200
      %v993 = vld [vmem:[%s992] sm:$0xff]
      %s994 = scalar_lea.vmem %s176, 3552
      %s995 = scalar_lea.vmem %s150, 5056
      %v996 = vld [vmem:[%s995] sm:$0xff]
      %s997 = scalar_lea.vmem %s176, 6624
      %s998 = scalar_lea.vmem %s150, 15296
      %v999 = vld [vmem:[%s998] sm:$0xff]
      %s1000 = scalar_lea.vmem %s176, 1504
      %s1001 = scalar_lea.vmem %s150, 9152
      %v1002 = vld [vmem:[%s1001] sm:$0xff]
      %s1003 = scalar_lea.vmem %s176, 4576
      %s1004 = scalar_lea.vmem %s150, 3008
      %v1005 = vld [vmem:[%s1004] sm:$0xff]
      %s1006 = scalar_lea.vmem %s176, 7648
      %s1007 = scalar_lea.vmem %s150, 13248
      %v1008 = vld [vmem:[%s1007] sm:$0xff]
      %s1009 = scalar_lea.vmem %s176, 2528
      %s1010 = scalar_lea.vmem %s150, 7104
      %v1011 = vld [vmem:[%s1010] sm:$0xff]
      %s1012 = scalar_lea.vmem %s176, 5600
      %s1013 = scalar_lea.vmem %s150, 960
      %v1014 = vld [vmem:[%s1013] sm:$0xff]
      %s1015 = scalar_lea.vmem %s176, 8672
      %s1016 = scalar_lea.vmem %s150, 17376
      %v1017 = vld [vmem:[%s1016] sm:$0xff]
      %s1018 = scalar_lea.vmem %s176, 496
      %s1019 = scalar_lea.vmem %s150, 11232
      %v1020 = vld [vmem:[%s1019] sm:$0xff]
      %s1021 = scalar_lea.vmem %s176, 3568
      %s1022 = scalar_lea.vmem %s150, 5088
      %v1023 = vld [vmem:[%s1022] sm:$0xff]
      %s1024 = scalar_lea.vmem %s176, 6640
      %s1025 = scalar_lea.vmem %s150, 15328
      %v1026 = vld [vmem:[%s1025] sm:$0xff]
      %s1027 = scalar_lea.vmem %s176, 1520
      %s1028 = scalar_lea.vmem %s150, 9184
      %v1029 = vld [vmem:[%s1028] sm:$0xff]
      %s1030 = scalar_lea.vmem %s176, 4592
      %s1031 = scalar_lea.vmem %s150, 3040
      %v1032 = vld [vmem:[%s1031] sm:$0xff]
      %s1033 = scalar_lea.vmem %s176, 7664
      %s1034 = scalar_lea.vmem %s150, 13280
      %v1035 = vld [vmem:[%s1034] sm:$0xff]
      %s1036 = scalar_lea.vmem %s176, 2544
      %s1037 = scalar_lea.vmem %s150, 7136
      %v1038 = vld [vmem:[%s1037] sm:$0xff]
      %s1039 = scalar_lea.vmem %s176, 5616
      %s1040 = scalar_lea.vmem %s150, 992
      %v1041 = vld [vmem:[%s1040] sm:$0xff]
      %s1042 = scalar_lea.vmem %s176, 8688
      %s1043 = scalar_lea.vmem %s150, 16392
      %v1044 = vld [vmem:[%s1043] sm:$0xff]
      %s1045 = scalar_lea.vmem %s176, 4
      %s1047 = ssub.s32 0, 4
      %s1048 = scalar_lea.vmem %s1045, %s1047
      %v1049 = vpack.c.bf16 %v1044, %v182
      %1050 = vst [vmem:[%s1048] sm:$0xff] %v1049
      %s1051 = scalar_lea.vmem %s150, 10248
      %v1052 = vld [vmem:[%s1051] sm:$0xff]
      %s1053 = scalar_lea.vmem %s176, 3076
      %s1055 = ssub.s32 0, 4
      %s1056 = scalar_lea.vmem %s1053, %s1055
      %v1057 = vpack.c.bf16 %v1052, %v184
      %1058 = vst [vmem:[%s1056] sm:$0xff] %v1057
      %s1059 = scalar_lea.vmem %s150, 4104
      %v1060 = vld [vmem:[%s1059] sm:$0xff]
      %s1061 = scalar_lea.vmem %s176, 6148
      %s1063 = ssub.s32 0, 4
      %s1064 = scalar_lea.vmem %s1061, %s1063
      %v1065 = vpack.c.bf16 %v1060, %v187
      %1066 = vst [vmem:[%s1064] sm:$0xff] %v1065
      %s1067 = scalar_lea.vmem %s150, 14344
      %v1068 = vld [vmem:[%s1067] sm:$0xff]
      %s1069 = scalar_lea.vmem %s176, 1028
      %s1071 = ssub.s32 0, 4
      %s1072 = scalar_lea.vmem %s1069, %s1071
      %v1073 = vpack.c.bf16 %v1068, %v190
      %1074 = vst [vmem:[%s1072] sm:$0xff] %v1073
      %s1075 = scalar_lea.vmem %s150, 8200
      %v1076 = vld [vmem:[%s1075] sm:$0xff]
      %s1077 = scalar_lea.vmem %s176, 4100
      %s1079 = ssub.s32 0, 4
      %s1080 = scalar_lea.vmem %s1077, %s1079
      %v1081 = vpack.c.bf16 %v1076, %v193
      %1082 = vst [vmem:[%s1080] sm:$0xff] %v1081
      %s1083 = scalar_lea.vmem %s150, 2056
      %v1084 = vld [vmem:[%s1083] sm:$0xff]
      %s1085 = scalar_lea.vmem %s176, 7172
      %s1087 = ssub.s32 0, 4
      %s1088 = scalar_lea.vmem %s1085, %s1087
      %v1089 = vpack.c.bf16 %v1084, %v196
      %1090 = vst [vmem:[%s1088] sm:$0xff] %v1089
      %s1091 = scalar_lea.vmem %s150, 12296
      %v1092 = vld [vmem:[%s1091] sm:$0xff]
      %s1093 = scalar_lea.vmem %s176, 2052
      %s1095 = ssub.s32 0, 4
      %s1096 = scalar_lea.vmem %s1093, %s1095
      %v1097 = vpack.c.bf16 %v1092, %v199
      %1098 = vst [vmem:[%s1096] sm:$0xff] %v1097
      %s1099 = scalar_lea.vmem %s150, 6152
      %v1100 = vld [vmem:[%s1099] sm:$0xff]
      %s1101 = scalar_lea.vmem %s176, 5124
      %s1103 = ssub.s32 0, 4
      %s1104 = scalar_lea.vmem %s1101, %s1103
      %v1105 = vpack.c.bf16 %v1100, %v202
      %1106 = vst [vmem:[%s1104] sm:$0xff] %v1105
      %s1107 = scalar_lea.vmem %s150, 8
      %v1108 = vld [vmem:[%s1107] sm:$0xff]
      %s1109 = scalar_lea.vmem %s176, 8196
      %s1111 = ssub.s32 0, 4
      %s1112 = scalar_lea.vmem %s1109, %s1111
      %v1113 = vpack.c.bf16 %v1108, %v204
      %1114 = vst [vmem:[%s1112] sm:$0xff] %v1113
      %s1115 = scalar_lea.vmem %s150, 16424
      %v1116 = vld [vmem:[%s1115] sm:$0xff]
      %s1117 = scalar_lea.vmem %s176, 20
      %s1119 = ssub.s32 0, 4
      %s1120 = scalar_lea.vmem %s1117, %s1119
      %v1121 = vpack.c.bf16 %v1116, %v207
      %1122 = vst [vmem:[%s1120] sm:$0xff] %v1121
      %s1123 = scalar_lea.vmem %s150, 10280
      %v1124 = vld [vmem:[%s1123] sm:$0xff]
      %s1125 = scalar_lea.vmem %s176, 3092
      %s1127 = ssub.s32 0, 4
      %s1128 = scalar_lea.vmem %s1125, %s1127
      %v1129 = vpack.c.bf16 %v1124, %v210
      %1130 = vst [vmem:[%s1128] sm:$0xff] %v1129
      %s1131 = scalar_lea.vmem %s150, 4136
      %v1132 = vld [vmem:[%s1131] sm:$0xff]
      %s1133 = scalar_lea.vmem %s176, 6164
      %s1135 = ssub.s32 0, 4
      %s1136 = scalar_lea.vmem %s1133, %s1135
      %v1137 = vpack.c.bf16 %v1132, %v213
      %1138 = vst [vmem:[%s1136] sm:$0xff] %v1137
      %s1139 = scalar_lea.vmem %s150, 14376
      %v1140 = vld [vmem:[%s1139] sm:$0xff]
      %s1141 = scalar_lea.vmem %s176, 1044
      %s1143 = ssub.s32 0, 4
      %s1144 = scalar_lea.vmem %s1141, %s1143
      %v1145 = vpack.c.bf16 %v1140, %v216
      %1146 = vst [vmem:[%s1144] sm:$0xff] %v1145
      %s1147 = scalar_lea.vmem %s150, 8232
      %v1148 = vld [vmem:[%s1147] sm:$0xff]
      %s1149 = scalar_lea.vmem %s176, 4116
      %s1151 = ssub.s32 0, 4
      %s1152 = scalar_lea.vmem %s1149, %s1151
      %v1153 = vpack.c.bf16 %v1148, %v219
      %1154 = vst [vmem:[%s1152] sm:$0xff] %v1153
      %s1155 = scalar_lea.vmem %s150, 2088
      %v1156 = vld [vmem:[%s1155] sm:$0xff]
      %s1157 = scalar_lea.vmem %s176, 7188
      %s1159 = ssub.s32 0, 4
      %s1160 = scalar_lea.vmem %s1157, %s1159
      %v1161 = vpack.c.bf16 %v1156, %v222
      %1162 = vst [vmem:[%s1160] sm:$0xff] %v1161
      %s1163 = scalar_lea.vmem %s150, 12328
      %v1164 = vld [vmem:[%s1163] sm:$0xff]
      %s1165 = scalar_lea.vmem %s176, 2068
      %s1167 = ssub.s32 0, 4
      %s1168 = scalar_lea.vmem %s1165, %s1167
      %v1169 = vpack.c.bf16 %v1164, %v225
      %1170 = vst [vmem:[%s1168] sm:$0xff] %v1169
      %s1171 = scalar_lea.vmem %s150, 6184
      %v1172 = vld [vmem:[%s1171] sm:$0xff]
      %s1173 = scalar_lea.vmem %s176, 5140
      %s1175 = ssub.s32 0, 4
      %s1176 = scalar_lea.vmem %s1173, %s1175
      %v1177 = vpack.c.bf16 %v1172, %v228
      %1178 = vst [vmem:[%s1176] sm:$0xff] %v1177
      %s1179 = scalar_lea.vmem %s150, 40
      %v1180 = vld [vmem:[%s1179] sm:$0xff]
      %s1181 = scalar_lea.vmem %s176, 8212
      %s1183 = ssub.s32 0, 4
      %s1184 = scalar_lea.vmem %s1181, %s1183
      %v1185 = vpack.c.bf16 %v1180, %v231
      %1186 = vst [vmem:[%s1184] sm:$0xff] %v1185
      %s1187 = scalar_lea.vmem %s150, 16456
      %v1188 = vld [vmem:[%s1187] sm:$0xff]
      %s1189 = scalar_lea.vmem %s176, 36
      %s1191 = ssub.s32 0, 4
      %s1192 = scalar_lea.vmem %s1189, %s1191
      %v1193 = vpack.c.bf16 %v1188, %v234
      %1194 = vst [vmem:[%s1192] sm:$0xff] %v1193
      %s1195 = scalar_lea.vmem %s150, 10312
      %v1196 = vld [vmem:[%s1195] sm:$0xff]
      %s1197 = scalar_lea.vmem %s176, 3108
      %s1199 = ssub.s32 0, 4
      %s1200 = scalar_lea.vmem %s1197, %s1199
      %v1201 = vpack.c.bf16 %v1196, %v237
      %1202 = vst [vmem:[%s1200] sm:$0xff] %v1201
      %s1203 = scalar_lea.vmem %s150, 4168
      %v1204 = vld [vmem:[%s1203] sm:$0xff]
      %s1205 = scalar_lea.vmem %s176, 6180
      %s1207 = ssub.s32 0, 4
      %s1208 = scalar_lea.vmem %s1205, %s1207
      %v1209 = vpack.c.bf16 %v1204, %v240
      %1210 = vst [vmem:[%s1208] sm:$0xff] %v1209
      %s1211 = scalar_lea.vmem %s150, 14408
      %v1212 = vld [vmem:[%s1211] sm:$0xff]
      %s1213 = scalar_lea.vmem %s176, 1060
      %s1215 = ssub.s32 0, 4
      %s1216 = scalar_lea.vmem %s1213, %s1215
      %v1217 = vpack.c.bf16 %v1212, %v243
      %1218 = vst [vmem:[%s1216] sm:$0xff] %v1217
      %s1219 = scalar_lea.vmem %s150, 8264
      %v1220 = vld [vmem:[%s1219] sm:$0xff]
      %s1221 = scalar_lea.vmem %s176, 4132
      %s1223 = ssub.s32 0, 4
      %s1224 = scalar_lea.vmem %s1221, %s1223
      %v1225 = vpack.c.bf16 %v1220, %v246
      %1226 = vst [vmem:[%s1224] sm:$0xff] %v1225
      %s1227 = scalar_lea.vmem %s150, 2120
      %v1228 = vld [vmem:[%s1227] sm:$0xff]
      %s1229 = scalar_lea.vmem %s176, 7204
      %s1231 = ssub.s32 0, 4
      %s1232 = scalar_lea.vmem %s1229, %s1231
      %v1233 = vpack.c.bf16 %v1228, %v249
      %1234 = vst [vmem:[%s1232] sm:$0xff] %v1233
      %s1235 = scalar_lea.vmem %s150, 12360
      %v1236 = vld [vmem:[%s1235] sm:$0xff]
      %s1237 = scalar_lea.vmem %s176, 2084
      %s1239 = ssub.s32 0, 4
      %s1240 = scalar_lea.vmem %s1237, %s1239
      %v1241 = vpack.c.bf16 %v1236, %v252
      %1242 = vst [vmem:[%s1240] sm:$0xff] %v1241
      %s1243 = scalar_lea.vmem %s150, 6216
      %v1244 = vld [vmem:[%s1243] sm:$0xff]
      %s1245 = scalar_lea.vmem %s176, 5156
      %s1247 = ssub.s32 0, 4
      %s1248 = scalar_lea.vmem %s1245, %s1247
      %v1249 = vpack.c.bf16 %v1244, %v255
      %1250 = vst [vmem:[%s1248] sm:$0xff] %v1249
      %s1251 = scalar_lea.vmem %s150, 72
      %v1252 = vld [vmem:[%s1251] sm:$0xff]
      %s1253 = scalar_lea.vmem %s176, 8228
      %s1255 = ssub.s32 0, 4
      %s1256 = scalar_lea.vmem %s1253, %s1255
      %v1257 = vpack.c.bf16 %v1252, %v258
      %1258 = vst [vmem:[%s1256] sm:$0xff] %v1257
      %s1259 = scalar_lea.vmem %s150, 16488
      %v1260 = vld [vmem:[%s1259] sm:$0xff]
      %s1261 = scalar_lea.vmem %s176, 52
      %s1263 = ssub.s32 0, 4
      %s1264 = scalar_lea.vmem %s1261, %s1263
      %v1265 = vpack.c.bf16 %v1260, %v261
      %1266 = vst [vmem:[%s1264] sm:$0xff] %v1265
      %s1267 = scalar_lea.vmem %s150, 10344
      %v1268 = vld [vmem:[%s1267] sm:$0xff]
      %s1269 = scalar_lea.vmem %s176, 3124
      %s1271 = ssub.s32 0, 4
      %s1272 = scalar_lea.vmem %s1269, %s1271
      %v1273 = vpack.c.bf16 %v1268, %v264
      %1274 = vst [vmem:[%s1272] sm:$0xff] %v1273
      %s1275 = scalar_lea.vmem %s150, 4200
      %v1276 = vld [vmem:[%s1275] sm:$0xff]
      %s1277 = scalar_lea.vmem %s176, 6196
      %s1279 = ssub.s32 0, 4
      %s1280 = scalar_lea.vmem %s1277, %s1279
      %v1281 = vpack.c.bf16 %v1276, %v267
      %1282 = vst [vmem:[%s1280] sm:$0xff] %v1281
      %s1283 = scalar_lea.vmem %s150, 14440
      %v1284 = vld [vmem:[%s1283] sm:$0xff]
      %s1285 = scalar_lea.vmem %s176, 1076
      %s1287 = ssub.s32 0, 4
      %s1288 = scalar_lea.vmem %s1285, %s1287
      %v1289 = vpack.c.bf16 %v1284, %v270
      %1290 = vst [vmem:[%s1288] sm:$0xff] %v1289
      %s1291 = scalar_lea.vmem %s150, 8296
      %v1292 = vld [vmem:[%s1291] sm:$0xff]
      %s1293 = scalar_lea.vmem %s176, 4148
      %s1295 = ssub.s32 0, 4
      %s1296 = scalar_lea.vmem %s1293, %s1295
      %v1297 = vpack.c.bf16 %v1292, %v273
      %1298 = vst [vmem:[%s1296] sm:$0xff] %v1297
      %s1299 = scalar_lea.vmem %s150, 2152
      %v1300 = vld [vmem:[%s1299] sm:$0xff]
      %s1301 = scalar_lea.vmem %s176, 7220
      %s1303 = ssub.s32 0, 4
      %s1304 = scalar_lea.vmem %s1301, %s1303
      %v1305 = vpack.c.bf16 %v1300, %v276
      %1306 = vst [vmem:[%s1304] sm:$0xff] %v1305
      %s1307 = scalar_lea.vmem %s150, 12392
      %v1308 = vld [vmem:[%s1307] sm:$0xff]
      %s1309 = scalar_lea.vmem %s176, 2100
      %s1311 = ssub.s32 0, 4
      %s1312 = scalar_lea.vmem %s1309, %s1311
      %v1313 = vpack.c.bf16 %v1308, %v279
      %1314 = vst [vmem:[%s1312] sm:$0xff] %v1313
      %s1315 = scalar_lea.vmem %s150, 6248
      %v1316 = vld [vmem:[%s1315] sm:$0xff]
      %s1317 = scalar_lea.vmem %s176, 5172
      %s1319 = ssub.s32 0, 4
      %s1320 = scalar_lea.vmem %s1317, %s1319
      %v1321 = vpack.c.bf16 %v1316, %v282
      %1322 = vst [vmem:[%s1320] sm:$0xff] %v1321
      %s1323 = scalar_lea.vmem %s150, 104
      %v1324 = vld [vmem:[%s1323] sm:$0xff]
      %s1325 = scalar_lea.vmem %s176, 8244
      %s1327 = ssub.s32 0, 4
      %s1328 = scalar_lea.vmem %s1325, %s1327
      %v1329 = vpack.c.bf16 %v1324, %v285
      %1330 = vst [vmem:[%s1328] sm:$0xff] %v1329
      %s1331 = scalar_lea.vmem %s150, 16520
      %v1332 = vld [vmem:[%s1331] sm:$0xff]
      %s1333 = scalar_lea.vmem %s176, 68
      %s1335 = ssub.s32 0, 4
      %s1336 = scalar_lea.vmem %s1333, %s1335
      %v1337 = vpack.c.bf16 %v1332, %v288
      %1338 = vst [vmem:[%s1336] sm:$0xff] %v1337
      %s1339 = scalar_lea.vmem %s150, 10376
      %v1340 = vld [vmem:[%s1339] sm:$0xff]
      %s1341 = scalar_lea.vmem %s176, 3140
      %s1343 = ssub.s32 0, 4
      %s1344 = scalar_lea.vmem %s1341, %s1343
      %v1345 = vpack.c.bf16 %v1340, %v291
      %1346 = vst [vmem:[%s1344] sm:$0xff] %v1345
      %s1347 = scalar_lea.vmem %s150, 4232
      %v1348 = vld [vmem:[%s1347] sm:$0xff]
      %s1349 = scalar_lea.vmem %s176, 6212
      %s1351 = ssub.s32 0, 4
      %s1352 = scalar_lea.vmem %s1349, %s1351
      %v1353 = vpack.c.bf16 %v1348, %v294
      %1354 = vst [vmem:[%s1352] sm:$0xff] %v1353
      %s1355 = scalar_lea.vmem %s150, 14472
      %v1356 = vld [vmem:[%s1355] sm:$0xff]
      %s1357 = scalar_lea.vmem %s176, 1092
      %s1359 = ssub.s32 0, 4
      %s1360 = scalar_lea.vmem %s1357, %s1359
      %v1361 = vpack.c.bf16 %v1356, %v297
      %1362 = vst [vmem:[%s1360] sm:$0xff] %v1361
      %s1363 = scalar_lea.vmem %s150, 8328
      %v1364 = vld [vmem:[%s1363] sm:$0xff]
      %s1365 = scalar_lea.vmem %s176, 4164
      %s1367 = ssub.s32 0, 4
      %s1368 = scalar_lea.vmem %s1365, %s1367
      %v1369 = vpack.c.bf16 %v1364, %v300
      %1370 = vst [vmem:[%s1368] sm:$0xff] %v1369
      %s1371 = scalar_lea.vmem %s150, 2184
      %v1372 = vld [vmem:[%s1371] sm:$0xff]
      %s1373 = scalar_lea.vmem %s176, 7236
      %s1375 = ssub.s32 0, 4
      %s1376 = scalar_lea.vmem %s1373, %s1375
      %v1377 = vpack.c.bf16 %v1372, %v303
      %1378 = vst [vmem:[%s1376] sm:$0xff] %v1377
      %s1379 = scalar_lea.vmem %s150, 12424
      %v1380 = vld [vmem:[%s1379] sm:$0xff]
      %s1381 = scalar_lea.vmem %s176, 2116
      %s1383 = ssub.s32 0, 4
      %s1384 = scalar_lea.vmem %s1381, %s1383
      %v1385 = vpack.c.bf16 %v1380, %v306
      %1386 = vst [vmem:[%s1384] sm:$0xff] %v1385
      %s1387 = scalar_lea.vmem %s150, 6280
      %v1388 = vld [vmem:[%s1387] sm:$0xff]
      %s1389 = scalar_lea.vmem %s176, 5188
      %s1391 = ssub.s32 0, 4
      %s1392 = scalar_lea.vmem %s1389, %s1391
      %v1393 = vpack.c.bf16 %v1388, %v309
      %1394 = vst [vmem:[%s1392] sm:$0xff] %v1393
      %s1395 = scalar_lea.vmem %s150, 136
      %v1396 = vld [vmem:[%s1395] sm:$0xff]
      %s1397 = scalar_lea.vmem %s176, 8260
      %s1399 = ssub.s32 0, 4
      %s1400 = scalar_lea.vmem %s1397, %s1399
      %v1401 = vpack.c.bf16 %v1396, %v312
      %1402 = vst [vmem:[%s1400] sm:$0xff] %v1401
      %s1403 = scalar_lea.vmem %s150, 16552
      %v1404 = vld [vmem:[%s1403] sm:$0xff]
      %s1405 = scalar_lea.vmem %s176, 84
      %s1407 = ssub.s32 0, 4
      %s1408 = scalar_lea.vmem %s1405, %s1407
      %v1409 = vpack.c.bf16 %v1404, %v315
      %1410 = vst [vmem:[%s1408] sm:$0xff] %v1409
      %s1411 = scalar_lea.vmem %s150, 10408
      %v1412 = vld [vmem:[%s1411] sm:$0xff]
      %s1413 = scalar_lea.vmem %s176, 3156
      %s1415 = ssub.s32 0, 4
      %s1416 = scalar_lea.vmem %s1413, %s1415
      %v1417 = vpack.c.bf16 %v1412, %v318
      %1418 = vst [vmem:[%s1416] sm:$0xff] %v1417
      %s1419 = scalar_lea.vmem %s150, 4264
      %v1420 = vld [vmem:[%s1419] sm:$0xff]
      %s1421 = scalar_lea.vmem %s176, 6228
      %s1423 = ssub.s32 0, 4
      %s1424 = scalar_lea.vmem %s1421, %s1423
      %v1425 = vpack.c.bf16 %v1420, %v321
      %1426 = vst [vmem:[%s1424] sm:$0xff] %v1425
      %s1427 = scalar_lea.vmem %s150, 14504
      %v1428 = vld [vmem:[%s1427] sm:$0xff]
      %s1429 = scalar_lea.vmem %s176, 1108
      %s1431 = ssub.s32 0, 4
      %s1432 = scalar_lea.vmem %s1429, %s1431
      %v1433 = vpack.c.bf16 %v1428, %v324
      %1434 = vst [vmem:[%s1432] sm:$0xff] %v1433
      %s1435 = scalar_lea.vmem %s150, 8360
      %v1436 = vld [vmem:[%s1435] sm:$0xff]
      %s1437 = scalar_lea.vmem %s176, 4180
      %s1439 = ssub.s32 0, 4
      %s1440 = scalar_lea.vmem %s1437, %s1439
      %v1441 = vpack.c.bf16 %v1436, %v327
      %1442 = vst [vmem:[%s1440] sm:$0xff] %v1441
      %s1443 = scalar_lea.vmem %s150, 2216
      %v1444 = vld [vmem:[%s1443] sm:$0xff]
      %s1445 = scalar_lea.vmem %s176, 7252
      %s1447 = ssub.s32 0, 4
      %s1448 = scalar_lea.vmem %s1445, %s1447
      %v1449 = vpack.c.bf16 %v1444, %v330
      %1450 = vst [vmem:[%s1448] sm:$0xff] %v1449
      %s1451 = scalar_lea.vmem %s150, 12456
      %v1452 = vld [vmem:[%s1451] sm:$0xff]
      %s1453 = scalar_lea.vmem %s176, 2132
      %s1455 = ssub.s32 0, 4
      %s1456 = scalar_lea.vmem %s1453, %s1455
      %v1457 = vpack.c.bf16 %v1452, %v333
      %1458 = vst [vmem:[%s1456] sm:$0xff] %v1457
      %s1459 = scalar_lea.vmem %s150, 6312
      %v1460 = vld [vmem:[%s1459] sm:$0xff]
      %s1461 = scalar_lea.vmem %s176, 5204
      %s1463 = ssub.s32 0, 4
      %s1464 = scalar_lea.vmem %s1461, %s1463
      %v1465 = vpack.c.bf16 %v1460, %v336
      %1466 = vst [vmem:[%s1464] sm:$0xff] %v1465
      %s1467 = scalar_lea.vmem %s150, 168
      %v1468 = vld [vmem:[%s1467] sm:$0xff]
      %s1469 = scalar_lea.vmem %s176, 8276
      %s1471 = ssub.s32 0, 4
      %s1472 = scalar_lea.vmem %s1469, %s1471
      %v1473 = vpack.c.bf16 %v1468, %v339
      %1474 = vst [vmem:[%s1472] sm:$0xff] %v1473
      %s1475 = scalar_lea.vmem %s150, 16584
      %v1476 = vld [vmem:[%s1475] sm:$0xff]
      %s1477 = scalar_lea.vmem %s176, 100
      %s1479 = ssub.s32 0, 4
      %s1480 = scalar_lea.vmem %s1477, %s1479
      %v1481 = vpack.c.bf16 %v1476, %v342
      %1482 = vst [vmem:[%s1480] sm:$0xff] %v1481
      %s1483 = scalar_lea.vmem %s150, 10440
      %v1484 = vld [vmem:[%s1483] sm:$0xff]
      %s1485 = scalar_lea.vmem %s176, 3172
      %s1487 = ssub.s32 0, 4
      %s1488 = scalar_lea.vmem %s1485, %s1487
      %v1489 = vpack.c.bf16 %v1484, %v345
      %1490 = vst [vmem:[%s1488] sm:$0xff] %v1489
      %s1491 = scalar_lea.vmem %s150, 4296
      %v1492 = vld [vmem:[%s1491] sm:$0xff]
      %s1493 = scalar_lea.vmem %s176, 6244
      %s1495 = ssub.s32 0, 4
      %s1496 = scalar_lea.vmem %s1493, %s1495
      %v1497 = vpack.c.bf16 %v1492, %v348
      %1498 = vst [vmem:[%s1496] sm:$0xff] %v1497
      %s1499 = scalar_lea.vmem %s150, 14536
      %v1500 = vld [vmem:[%s1499] sm:$0xff]
      %s1501 = scalar_lea.vmem %s176, 1124
      %s1503 = ssub.s32 0, 4
      %s1504 = scalar_lea.vmem %s1501, %s1503
      %v1505 = vpack.c.bf16 %v1500, %v351
      %1506 = vst [vmem:[%s1504] sm:$0xff] %v1505
      %s1507 = scalar_lea.vmem %s150, 8392
      %v1508 = vld [vmem:[%s1507] sm:$0xff]
      %s1509 = scalar_lea.vmem %s176, 4196
      %s1511 = ssub.s32 0, 4
      %s1512 = scalar_lea.vmem %s1509, %s1511
      %v1513 = vpack.c.bf16 %v1508, %v354
      %1514 = vst [vmem:[%s1512] sm:$0xff] %v1513
      %s1515 = scalar_lea.vmem %s150, 2248
      %v1516 = vld [vmem:[%s1515] sm:$0xff]
      %s1517 = scalar_lea.vmem %s176, 7268
      %s1519 = ssub.s32 0, 4
      %s1520 = scalar_lea.vmem %s1517, %s1519
      %v1521 = vpack.c.bf16 %v1516, %v357
      %1522 = vst [vmem:[%s1520] sm:$0xff] %v1521
      %s1523 = scalar_lea.vmem %s150, 12488
      %v1524 = vld [vmem:[%s1523] sm:$0xff]
      %s1525 = scalar_lea.vmem %s176, 2148
      %s1527 = ssub.s32 0, 4
      %s1528 = scalar_lea.vmem %s1525, %s1527
      %v1529 = vpack.c.bf16 %v1524, %v360
      %1530 = vst [vmem:[%s1528] sm:$0xff] %v1529
      %s1531 = scalar_lea.vmem %s150, 6344
      %v1532 = vld [vmem:[%s1531] sm:$0xff]
      %s1533 = scalar_lea.vmem %s176, 5220
      %s1535 = ssub.s32 0, 4
      %s1536 = scalar_lea.vmem %s1533, %s1535
      %v1537 = vpack.c.bf16 %v1532, %v363
      %1538 = vst [vmem:[%s1536] sm:$0xff] %v1537
      %s1539 = scalar_lea.vmem %s150, 200
      %v1540 = vld [vmem:[%s1539] sm:$0xff]
      %s1541 = scalar_lea.vmem %s176, 8292
      %s1543 = ssub.s32 0, 4
      %s1544 = scalar_lea.vmem %s1541, %s1543
      %v1545 = vpack.c.bf16 %v1540, %v366
      %1546 = vst [vmem:[%s1544] sm:$0xff] %v1545
      %s1547 = scalar_lea.vmem %s150, 16616
      %v1548 = vld [vmem:[%s1547] sm:$0xff]
      %s1549 = scalar_lea.vmem %s176, 116
      %s1551 = ssub.s32 0, 4
      %s1552 = scalar_lea.vmem %s1549, %s1551
      %v1553 = vpack.c.bf16 %v1548, %v369
      %1554 = vst [vmem:[%s1552] sm:$0xff] %v1553
      %s1555 = scalar_lea.vmem %s150, 10472
      %v1556 = vld [vmem:[%s1555] sm:$0xff]
      %s1557 = scalar_lea.vmem %s176, 3188
      %s1559 = ssub.s32 0, 4
      %s1560 = scalar_lea.vmem %s1557, %s1559
      %v1561 = vpack.c.bf16 %v1556, %v372
      %1562 = vst [vmem:[%s1560] sm:$0xff] %v1561
      %s1563 = scalar_lea.vmem %s150, 4328
      %v1564 = vld [vmem:[%s1563] sm:$0xff]
      %s1565 = scalar_lea.vmem %s176, 6260
      %s1567 = ssub.s32 0, 4
      %s1568 = scalar_lea.vmem %s1565, %s1567
      %v1569 = vpack.c.bf16 %v1564, %v375
      %1570 = vst [vmem:[%s1568] sm:$0xff] %v1569
      %s1571 = scalar_lea.vmem %s150, 14568
      %v1572 = vld [vmem:[%s1571] sm:$0xff]
      %s1573 = scalar_lea.vmem %s176, 1140
      %s1575 = ssub.s32 0, 4
      %s1576 = scalar_lea.vmem %s1573, %s1575
      %v1577 = vpack.c.bf16 %v1572, %v378
      %1578 = vst [vmem:[%s1576] sm:$0xff] %v1577
      %s1579 = scalar_lea.vmem %s150, 8424
      %v1580 = vld [vmem:[%s1579] sm:$0xff]
      %s1581 = scalar_lea.vmem %s176, 4212
      %s1583 = ssub.s32 0, 4
      %s1584 = scalar_lea.vmem %s1581, %s1583
      %v1585 = vpack.c.bf16 %v1580, %v381
      %1586 = vst [vmem:[%s1584] sm:$0xff] %v1585
      %s1587 = scalar_lea.vmem %s150, 2280
      %v1588 = vld [vmem:[%s1587] sm:$0xff]
      %s1589 = scalar_lea.vmem %s176, 7284
      %s1591 = ssub.s32 0, 4
      %s1592 = scalar_lea.vmem %s1589, %s1591
      %v1593 = vpack.c.bf16 %v1588, %v384
      %1594 = vst [vmem:[%s1592] sm:$0xff] %v1593
      %s1595 = scalar_lea.vmem %s150, 12520
      %v1596 = vld [vmem:[%s1595] sm:$0xff]
      %s1597 = scalar_lea.vmem %s176, 2164
      %s1599 = ssub.s32 0, 4
      %s1600 = scalar_lea.vmem %s1597, %s1599
      %v1601 = vpack.c.bf16 %v1596, %v387
      %1602 = vst [vmem:[%s1600] sm:$0xff] %v1601
      %s1603 = scalar_lea.vmem %s150, 6376
      %v1604 = vld [vmem:[%s1603] sm:$0xff]
      %s1605 = scalar_lea.vmem %s176, 5236
      %s1607 = ssub.s32 0, 4
      %s1608 = scalar_lea.vmem %s1605, %s1607
      %v1609 = vpack.c.bf16 %v1604, %v390
      %1610 = vst [vmem:[%s1608] sm:$0xff] %v1609
      %s1611 = scalar_lea.vmem %s150, 232
      %v1612 = vld [vmem:[%s1611] sm:$0xff]
      %s1613 = scalar_lea.vmem %s176, 8308
      %s1615 = ssub.s32 0, 4
      %s1616 = scalar_lea.vmem %s1613, %s1615
      %v1617 = vpack.c.bf16 %v1612, %v393
      %1618 = vst [vmem:[%s1616] sm:$0xff] %v1617
      %s1619 = scalar_lea.vmem %s150, 16648
      %v1620 = vld [vmem:[%s1619] sm:$0xff]
      %s1621 = scalar_lea.vmem %s176, 132
      %s1623 = ssub.s32 0, 4
      %s1624 = scalar_lea.vmem %s1621, %s1623
      %v1625 = vpack.c.bf16 %v1620, %v396
      %1626 = vst [vmem:[%s1624] sm:$0xff] %v1625
      %s1627 = scalar_lea.vmem %s150, 10504
      %v1628 = vld [vmem:[%s1627] sm:$0xff]
      %s1629 = scalar_lea.vmem %s176, 3204
      %s1631 = ssub.s32 0, 4
      %s1632 = scalar_lea.vmem %s1629, %s1631
      %v1633 = vpack.c.bf16 %v1628, %v399
      %1634 = vst [vmem:[%s1632] sm:$0xff] %v1633
      %s1635 = scalar_lea.vmem %s150, 4360
      %v1636 = vld [vmem:[%s1635] sm:$0xff]
      %s1637 = scalar_lea.vmem %s176, 6276
      %s1639 = ssub.s32 0, 4
      %s1640 = scalar_lea.vmem %s1637, %s1639
      %v1641 = vpack.c.bf16 %v1636, %v402
      %1642 = vst [vmem:[%s1640] sm:$0xff] %v1641
      %s1643 = scalar_lea.vmem %s150, 14600
      %v1644 = vld [vmem:[%s1643] sm:$0xff]
      %s1645 = scalar_lea.vmem %s176, 1156
      %s1647 = ssub.s32 0, 4
      %s1648 = scalar_lea.vmem %s1645, %s1647
      %v1649 = vpack.c.bf16 %v1644, %v405
      %1650 = vst [vmem:[%s1648] sm:$0xff] %v1649
      %s1651 = scalar_lea.vmem %s150, 8456
      %v1652 = vld [vmem:[%s1651] sm:$0xff]
      %s1653 = scalar_lea.vmem %s176, 4228
      %s1655 = ssub.s32 0, 4
      %s1656 = scalar_lea.vmem %s1653, %s1655
      %v1657 = vpack.c.bf16 %v1652, %v408
      %1658 = vst [vmem:[%s1656] sm:$0xff] %v1657
      %s1659 = scalar_lea.vmem %s150, 2312
      %v1660 = vld [vmem:[%s1659] sm:$0xff]
      %s1661 = scalar_lea.vmem %s176, 7300
      %s1663 = ssub.s32 0, 4
      %s1664 = scalar_lea.vmem %s1661, %s1663
      %v1665 = vpack.c.bf16 %v1660, %v411
      %1666 = vst [vmem:[%s1664] sm:$0xff] %v1665
      %s1667 = scalar_lea.vmem %s150, 12552
      %v1668 = vld [vmem:[%s1667] sm:$0xff]
      %s1669 = scalar_lea.vmem %s176, 2180
      %s1671 = ssub.s32 0, 4
      %s1672 = scalar_lea.vmem %s1669, %s1671
      %v1673 = vpack.c.bf16 %v1668, %v414
      %1674 = vst [vmem:[%s1672] sm:$0xff] %v1673
      %s1675 = scalar_lea.vmem %s150, 6408
      %v1676 = vld [vmem:[%s1675] sm:$0xff]
      %s1677 = scalar_lea.vmem %s176, 5252
      %s1679 = ssub.s32 0, 4
      %s1680 = scalar_lea.vmem %s1677, %s1679
      %v1681 = vpack.c.bf16 %v1676, %v417
      %1682 = vst [vmem:[%s1680] sm:$0xff] %v1681
      %s1683 = scalar_lea.vmem %s150, 264
      %v1684 = vld [vmem:[%s1683] sm:$0xff]
      %s1685 = scalar_lea.vmem %s176, 8324
      %s1687 = ssub.s32 0, 4
      %s1688 = scalar_lea.vmem %s1685, %s1687
      %v1689 = vpack.c.bf16 %v1684, %v420
      %1690 = vst [vmem:[%s1688] sm:$0xff] %v1689
      %s1691 = scalar_lea.vmem %s150, 16680
      %v1692 = vld [vmem:[%s1691] sm:$0xff]
      %s1693 = scalar_lea.vmem %s176, 148
      %s1695 = ssub.s32 0, 4
      %s1696 = scalar_lea.vmem %s1693, %s1695
      %v1697 = vpack.c.bf16 %v1692, %v423
      %1698 = vst [vmem:[%s1696] sm:$0xff] %v1697
      %s1699 = scalar_lea.vmem %s150, 10536
      %v1700 = vld [vmem:[%s1699] sm:$0xff]
      %s1701 = scalar_lea.vmem %s176, 3220
      %s1703 = ssub.s32 0, 4
      %s1704 = scalar_lea.vmem %s1701, %s1703
      %v1705 = vpack.c.bf16 %v1700, %v426
      %1706 = vst [vmem:[%s1704] sm:$0xff] %v1705
      %s1707 = scalar_lea.vmem %s150, 4392
      %v1708 = vld [vmem:[%s1707] sm:$0xff]
      %s1709 = scalar_lea.vmem %s176, 6292
      %s1711 = ssub.s32 0, 4
      %s1712 = scalar_lea.vmem %s1709, %s1711
      %v1713 = vpack.c.bf16 %v1708, %v429
      %1714 = vst [vmem:[%s1712] sm:$0xff] %v1713
      %s1715 = scalar_lea.vmem %s150, 14632
      %v1716 = vld [vmem:[%s1715] sm:$0xff]
      %s1717 = scalar_lea.vmem %s176, 1172
      %s1719 = ssub.s32 0, 4
      %s1720 = scalar_lea.vmem %s1717, %s1719
      %v1721 = vpack.c.bf16 %v1716, %v432
      %1722 = vst [vmem:[%s1720] sm:$0xff] %v1721
      %s1723 = scalar_lea.vmem %s150, 8488
      %v1724 = vld [vmem:[%s1723] sm:$0xff]
      %s1725 = scalar_lea.vmem %s176, 4244
      %s1727 = ssub.s32 0, 4
      %s1728 = scalar_lea.vmem %s1725, %s1727
      %v1729 = vpack.c.bf16 %v1724, %v435
      %1730 = vst [vmem:[%s1728] sm:$0xff] %v1729
      %s1731 = scalar_lea.vmem %s150, 2344
      %v1732 = vld [vmem:[%s1731] sm:$0xff]
      %s1733 = scalar_lea.vmem %s176, 7316
      %s1735 = ssub.s32 0, 4
      %s1736 = scalar_lea.vmem %s1733, %s1735
      %v1737 = vpack.c.bf16 %v1732, %v438
      %1738 = vst [vmem:[%s1736] sm:$0xff] %v1737
      %s1739 = scalar_lea.vmem %s150, 12584
      %v1740 = vld [vmem:[%s1739] sm:$0xff]
      %s1741 = scalar_lea.vmem %s176, 2196
      %s1743 = ssub.s32 0, 4
      %s1744 = scalar_lea.vmem %s1741, %s1743
      %v1745 = vpack.c.bf16 %v1740, %v441
      %1746 = vst [vmem:[%s1744] sm:$0xff] %v1745
      %s1747 = scalar_lea.vmem %s150, 6440
      %v1748 = vld [vmem:[%s1747] sm:$0xff]
      %s1749 = scalar_lea.vmem %s176, 5268
      %s1751 = ssub.s32 0, 4
      %s1752 = scalar_lea.vmem %s1749, %s1751
      %v1753 = vpack.c.bf16 %v1748, %v444
      %1754 = vst [vmem:[%s1752] sm:$0xff] %v1753
      %s1755 = scalar_lea.vmem %s150, 296
      %v1756 = vld [vmem:[%s1755] sm:$0xff]
      %s1757 = scalar_lea.vmem %s176, 8340
      %s1759 = ssub.s32 0, 4
      %s1760 = scalar_lea.vmem %s1757, %s1759
      %v1761 = vpack.c.bf16 %v1756, %v447
      %1762 = vst [vmem:[%s1760] sm:$0xff] %v1761
      %s1763 = scalar_lea.vmem %s150, 16712
      %v1764 = vld [vmem:[%s1763] sm:$0xff]
      %s1765 = scalar_lea.vmem %s176, 164
      %s1767 = ssub.s32 0, 4
      %s1768 = scalar_lea.vmem %s1765, %s1767
      %v1769 = vpack.c.bf16 %v1764, %v450
      %1770 = vst [vmem:[%s1768] sm:$0xff] %v1769
      %s1771 = scalar_lea.vmem %s150, 10568
      %v1772 = vld [vmem:[%s1771] sm:$0xff]
      %s1773 = scalar_lea.vmem %s176, 3236
      %s1775 = ssub.s32 0, 4
      %s1776 = scalar_lea.vmem %s1773, %s1775
      %v1777 = vpack.c.bf16 %v1772, %v453
      %1778 = vst [vmem:[%s1776] sm:$0xff] %v1777
      %s1779 = scalar_lea.vmem %s150, 4424
      %v1780 = vld [vmem:[%s1779] sm:$0xff]
      %s1781 = scalar_lea.vmem %s176, 6308
      %s1783 = ssub.s32 0, 4
      %s1784 = scalar_lea.vmem %s1781, %s1783
      %v1785 = vpack.c.bf16 %v1780, %v456
      %1786 = vst [vmem:[%s1784] sm:$0xff] %v1785
      %s1787 = scalar_lea.vmem %s150, 14664
      %v1788 = vld [vmem:[%s1787] sm:$0xff]
      %s1789 = scalar_lea.vmem %s176, 1188
      %s1791 = ssub.s32 0, 4
      %s1792 = scalar_lea.vmem %s1789, %s1791
      %v1793 = vpack.c.bf16 %v1788, %v459
      %1794 = vst [vmem:[%s1792] sm:$0xff] %v1793
      %s1795 = scalar_lea.vmem %s150, 8520
      %v1796 = vld [vmem:[%s1795] sm:$0xff]
      %s1797 = scalar_lea.vmem %s176, 4260
      %s1799 = ssub.s32 0, 4
      %s1800 = scalar_lea.vmem %s1797, %s1799
      %v1801 = vpack.c.bf16 %v1796, %v462
      %1802 = vst [vmem:[%s1800] sm:$0xff] %v1801
      %s1803 = scalar_lea.vmem %s150, 2376
      %v1804 = vld [vmem:[%s1803] sm:$0xff]
      %s1805 = scalar_lea.vmem %s176, 7332
      %s1807 = ssub.s32 0, 4
      %s1808 = scalar_lea.vmem %s1805, %s1807
      %v1809 = vpack.c.bf16 %v1804, %v465
      %1810 = vst [vmem:[%s1808] sm:$0xff] %v1809
      %s1811 = scalar_lea.vmem %s150, 12616
      %v1812 = vld [vmem:[%s1811] sm:$0xff]
      %s1813 = scalar_lea.vmem %s176, 2212
      %s1815 = ssub.s32 0, 4
      %s1816 = scalar_lea.vmem %s1813, %s1815
      %v1817 = vpack.c.bf16 %v1812, %v468
      %1818 = vst [vmem:[%s1816] sm:$0xff] %v1817
      %s1819 = scalar_lea.vmem %s150, 6472
      %v1820 = vld [vmem:[%s1819] sm:$0xff]
      %s1821 = scalar_lea.vmem %s176, 5284
      %s1823 = ssub.s32 0, 4
      %s1824 = scalar_lea.vmem %s1821, %s1823
      %v1825 = vpack.c.bf16 %v1820, %v471
      %1826 = vst [vmem:[%s1824] sm:$0xff] %v1825
      %s1827 = scalar_lea.vmem %s150, 328
      %v1828 = vld [vmem:[%s1827] sm:$0xff]
      %s1829 = scalar_lea.vmem %s176, 8356
      %s1831 = ssub.s32 0, 4
      %s1832 = scalar_lea.vmem %s1829, %s1831
      %v1833 = vpack.c.bf16 %v1828, %v474
      %1834 = vst [vmem:[%s1832] sm:$0xff] %v1833
      %s1835 = scalar_lea.vmem %s150, 16744
      %v1836 = vld [vmem:[%s1835] sm:$0xff]
      %s1837 = scalar_lea.vmem %s176, 180
      %s1839 = ssub.s32 0, 4
      %s1840 = scalar_lea.vmem %s1837, %s1839
      %v1841 = vpack.c.bf16 %v1836, %v477
      %1842 = vst [vmem:[%s1840] sm:$0xff] %v1841
      %s1843 = scalar_lea.vmem %s150, 10600
      %v1844 = vld [vmem:[%s1843] sm:$0xff]
      %s1845 = scalar_lea.vmem %s176, 3252
      %s1847 = ssub.s32 0, 4
      %s1848 = scalar_lea.vmem %s1845, %s1847
      %v1849 = vpack.c.bf16 %v1844, %v480
      %1850 = vst [vmem:[%s1848] sm:$0xff] %v1849
      %s1851 = scalar_lea.vmem %s150, 4456
      %v1852 = vld [vmem:[%s1851] sm:$0xff]
      %s1853 = scalar_lea.vmem %s176, 6324
      %s1855 = ssub.s32 0, 4
      %s1856 = scalar_lea.vmem %s1853, %s1855
      %v1857 = vpack.c.bf16 %v1852, %v483
      %1858 = vst [vmem:[%s1856] sm:$0xff] %v1857
      %s1859 = scalar_lea.vmem %s150, 14696
      %v1860 = vld [vmem:[%s1859] sm:$0xff]
      %s1861 = scalar_lea.vmem %s176, 1204
      %s1863 = ssub.s32 0, 4
      %s1864 = scalar_lea.vmem %s1861, %s1863
      %v1865 = vpack.c.bf16 %v1860, %v486
      %1866 = vst [vmem:[%s1864] sm:$0xff] %v1865
      %s1867 = scalar_lea.vmem %s150, 8552
      %v1868 = vld [vmem:[%s1867] sm:$0xff]
      %s1869 = scalar_lea.vmem %s176, 4276
      %s1871 = ssub.s32 0, 4
      %s1872 = scalar_lea.vmem %s1869, %s1871
      %v1873 = vpack.c.bf16 %v1868, %v489
      %1874 = vst [vmem:[%s1872] sm:$0xff] %v1873
      %s1875 = scalar_lea.vmem %s150, 2408
      %v1876 = vld [vmem:[%s1875] sm:$0xff]
      %s1877 = scalar_lea.vmem %s176, 7348
      %s1879 = ssub.s32 0, 4
      %s1880 = scalar_lea.vmem %s1877, %s1879
      %v1881 = vpack.c.bf16 %v1876, %v492
      %1882 = vst [vmem:[%s1880] sm:$0xff] %v1881
      %s1883 = scalar_lea.vmem %s150, 12648
      %v1884 = vld [vmem:[%s1883] sm:$0xff]
      %s1885 = scalar_lea.vmem %s176, 2228
      %s1887 = ssub.s32 0, 4
      %s1888 = scalar_lea.vmem %s1885, %s1887
      %v1889 = vpack.c.bf16 %v1884, %v495
      %1890 = vst [vmem:[%s1888] sm:$0xff] %v1889
      %s1891 = scalar_lea.vmem %s150, 6504
      %v1892 = vld [vmem:[%s1891] sm:$0xff]
      %s1893 = scalar_lea.vmem %s176, 5300
      %s1895 = ssub.s32 0, 4
      %s1896 = scalar_lea.vmem %s1893, %s1895
      %v1897 = vpack.c.bf16 %v1892, %v498
      %1898 = vst [vmem:[%s1896] sm:$0xff] %v1897
      %s1899 = scalar_lea.vmem %s150, 360
      %v1900 = vld [vmem:[%s1899] sm:$0xff]
      %s1901 = scalar_lea.vmem %s176, 8372
      %s1903 = ssub.s32 0, 4
      %s1904 = scalar_lea.vmem %s1901, %s1903
      %v1905 = vpack.c.bf16 %v1900, %v501
      %1906 = vst [vmem:[%s1904] sm:$0xff] %v1905
      %s1907 = scalar_lea.vmem %s150, 16776
      %v1908 = vld [vmem:[%s1907] sm:$0xff]
      %s1909 = scalar_lea.vmem %s176, 196
      %s1911 = ssub.s32 0, 4
      %s1912 = scalar_lea.vmem %s1909, %s1911
      %v1913 = vpack.c.bf16 %v1908, %v504
      %1914 = vst [vmem:[%s1912] sm:$0xff] %v1913
      %s1915 = scalar_lea.vmem %s150, 10632
      %v1916 = vld [vmem:[%s1915] sm:$0xff]
      %s1917 = scalar_lea.vmem %s176, 3268
      %s1919 = ssub.s32 0, 4
      %s1920 = scalar_lea.vmem %s1917, %s1919
      %v1921 = vpack.c.bf16 %v1916, %v507
      %1922 = vst [vmem:[%s1920] sm:$0xff] %v1921
      %s1923 = scalar_lea.vmem %s150, 4488
      %v1924 = vld [vmem:[%s1923] sm:$0xff]
      %s1925 = scalar_lea.vmem %s176, 6340
      %s1927 = ssub.s32 0, 4
      %s1928 = scalar_lea.vmem %s1925, %s1927
      %v1929 = vpack.c.bf16 %v1924, %v510
      %1930 = vst [vmem:[%s1928] sm:$0xff] %v1929
      %s1931 = scalar_lea.vmem %s150, 14728
      %v1932 = vld [vmem:[%s1931] sm:$0xff]
      %s1933 = scalar_lea.vmem %s176, 1220
      %s1935 = ssub.s32 0, 4
      %s1936 = scalar_lea.vmem %s1933, %s1935
      %v1937 = vpack.c.bf16 %v1932, %v513
      %1938 = vst [vmem:[%s1936] sm:$0xff] %v1937
      %s1939 = scalar_lea.vmem %s150, 8584
      %v1940 = vld [vmem:[%s1939] sm:$0xff]
      %s1941 = scalar_lea.vmem %s176, 4292
      %s1943 = ssub.s32 0, 4
      %s1944 = scalar_lea.vmem %s1941, %s1943
      %v1945 = vpack.c.bf16 %v1940, %v516
      %1946 = vst [vmem:[%s1944] sm:$0xff] %v1945
      %s1947 = scalar_lea.vmem %s150, 2440
      %v1948 = vld [vmem:[%s1947] sm:$0xff]
      %s1949 = scalar_lea.vmem %s176, 7364
      %s1951 = ssub.s32 0, 4
      %s1952 = scalar_lea.vmem %s1949, %s1951
      %v1953 = vpack.c.bf16 %v1948, %v519
      %1954 = vst [vmem:[%s1952] sm:$0xff] %v1953
      %s1955 = scalar_lea.vmem %s150, 12680
      %v1956 = vld [vmem:[%s1955] sm:$0xff]
      %s1957 = scalar_lea.vmem %s176, 2244
      %s1959 = ssub.s32 0, 4
      %s1960 = scalar_lea.vmem %s1957, %s1959
      %v1961 = vpack.c.bf16 %v1956, %v522
      %1962 = vst [vmem:[%s1960] sm:$0xff] %v1961
      %s1963 = scalar_lea.vmem %s150, 6536
      %v1964 = vld [vmem:[%s1963] sm:$0xff]
      %s1965 = scalar_lea.vmem %s176, 5316
      %s1967 = ssub.s32 0, 4
      %s1968 = scalar_lea.vmem %s1965, %s1967
      %v1969 = vpack.c.bf16 %v1964, %v525
      %1970 = vst [vmem:[%s1968] sm:$0xff] %v1969
      %s1971 = scalar_lea.vmem %s150, 392
      %v1972 = vld [vmem:[%s1971] sm:$0xff]
      %s1973 = scalar_lea.vmem %s176, 8388
      %s1975 = ssub.s32 0, 4
      %s1976 = scalar_lea.vmem %s1973, %s1975
      %v1977 = vpack.c.bf16 %v1972, %v528
      %1978 = vst [vmem:[%s1976] sm:$0xff] %v1977
      %s1979 = scalar_lea.vmem %s150, 16808
      %v1980 = vld [vmem:[%s1979] sm:$0xff]
      %s1981 = scalar_lea.vmem %s176, 212
      %s1983 = ssub.s32 0, 4
      %s1984 = scalar_lea.vmem %s1981, %s1983
      %v1985 = vpack.c.bf16 %v1980, %v531
      %1986 = vst [vmem:[%s1984] sm:$0xff] %v1985
      %s1987 = scalar_lea.vmem %s150, 10664
      %v1988 = vld [vmem:[%s1987] sm:$0xff]
      %s1989 = scalar_lea.vmem %s176, 3284
      %s1991 = ssub.s32 0, 4
      %s1992 = scalar_lea.vmem %s1989, %s1991
      %v1993 = vpack.c.bf16 %v1988, %v534
      %1994 = vst [vmem:[%s1992] sm:$0xff] %v1993
      %s1995 = scalar_lea.vmem %s150, 4520
      %v1996 = vld [vmem:[%s1995] sm:$0xff]
      %s1997 = scalar_lea.vmem %s176, 6356
      %s1999 = ssub.s32 0, 4
      %s2000 = scalar_lea.vmem %s1997, %s1999
      %v2001 = vpack.c.bf16 %v1996, %v537
      %2002 = vst [vmem:[%s2000] sm:$0xff] %v2001
      %s2003 = scalar_lea.vmem %s150, 14760
      %v2004 = vld [vmem:[%s2003] sm:$0xff]
      %s2005 = scalar_lea.vmem %s176, 1236
      %s2007 = ssub.s32 0, 4
      %s2008 = scalar_lea.vmem %s2005, %s2007
      %v2009 = vpack.c.bf16 %v2004, %v540
      %2010 = vst [vmem:[%s2008] sm:$0xff] %v2009
      %s2011 = scalar_lea.vmem %s150, 8616
      %v2012 = vld [vmem:[%s2011] sm:$0xff]
      %s2013 = scalar_lea.vmem %s176, 4308
      %s2015 = ssub.s32 0, 4
      %s2016 = scalar_lea.vmem %s2013, %s2015
      %v2017 = vpack.c.bf16 %v2012, %v543
      %2018 = vst [vmem:[%s2016] sm:$0xff] %v2017
      %s2019 = scalar_lea.vmem %s150, 2472
      %v2020 = vld [vmem:[%s2019] sm:$0xff]
      %s2021 = scalar_lea.vmem %s176, 7380
      %s2023 = ssub.s32 0, 4
      %s2024 = scalar_lea.vmem %s2021, %s2023
      %v2025 = vpack.c.bf16 %v2020, %v546
      %2026 = vst [vmem:[%s2024] sm:$0xff] %v2025
      %s2027 = scalar_lea.vmem %s150, 12712
      %v2028 = vld [vmem:[%s2027] sm:$0xff]
      %s2029 = scalar_lea.vmem %s176, 2260
      %s2031 = ssub.s32 0, 4
      %s2032 = scalar_lea.vmem %s2029, %s2031
      %v2033 = vpack.c.bf16 %v2028, %v549
      %2034 = vst [vmem:[%s2032] sm:$0xff] %v2033
      %s2035 = scalar_lea.vmem %s150, 6568
      %v2036 = vld [vmem:[%s2035] sm:$0xff]
      %s2037 = scalar_lea.vmem %s176, 5332
      %s2039 = ssub.s32 0, 4
      %s2040 = scalar_lea.vmem %s2037, %s2039
      %v2041 = vpack.c.bf16 %v2036, %v552
      %2042 = vst [vmem:[%s2040] sm:$0xff] %v2041
      %s2043 = scalar_lea.vmem %s150, 424
      %v2044 = vld [vmem:[%s2043] sm:$0xff]
      %s2045 = scalar_lea.vmem %s176, 8404
      %s2047 = ssub.s32 0, 4
      %s2048 = scalar_lea.vmem %s2045, %s2047
      %v2049 = vpack.c.bf16 %v2044, %v555
      %2050 = vst [vmem:[%s2048] sm:$0xff] %v2049
      %s2051 = scalar_lea.vmem %s150, 16840
      %v2052 = vld [vmem:[%s2051] sm:$0xff]
      %s2053 = scalar_lea.vmem %s176, 228
      %s2055 = ssub.s32 0, 4
      %s2056 = scalar_lea.vmem %s2053, %s2055
      %v2057 = vpack.c.bf16 %v2052, %v558
      %2058 = vst [vmem:[%s2056] sm:$0xff] %v2057
      %s2059 = scalar_lea.vmem %s150, 10696
      %v2060 = vld [vmem:[%s2059] sm:$0xff]
      %s2061 = scalar_lea.vmem %s176, 3300
      %s2063 = ssub.s32 0, 4
      %s2064 = scalar_lea.vmem %s2061, %s2063
      %v2065 = vpack.c.bf16 %v2060, %v561
      %2066 = vst [vmem:[%s2064] sm:$0xff] %v2065
      %s2067 = scalar_lea.vmem %s150, 4552
      %v2068 = vld [vmem:[%s2067] sm:$0xff]
      %s2069 = scalar_lea.vmem %s176, 6372
      %s2071 = ssub.s32 0, 4
      %s2072 = scalar_lea.vmem %s2069, %s2071
      %v2073 = vpack.c.bf16 %v2068, %v564
      %2074 = vst [vmem:[%s2072] sm:$0xff] %v2073
      %s2075 = scalar_lea.vmem %s150, 14792
      %v2076 = vld [vmem:[%s2075] sm:$0xff]
      %s2077 = scalar_lea.vmem %s176, 1252
      %s2079 = ssub.s32 0, 4
      %s2080 = scalar_lea.vmem %s2077, %s2079
      %v2081 = vpack.c.bf16 %v2076, %v567
      %2082 = vst [vmem:[%s2080] sm:$0xff] %v2081
      %s2083 = scalar_lea.vmem %s150, 8648
      %v2084 = vld [vmem:[%s2083] sm:$0xff]
      %s2085 = scalar_lea.vmem %s176, 4324
      %s2087 = ssub.s32 0, 4
      %s2088 = scalar_lea.vmem %s2085, %s2087
      %v2089 = vpack.c.bf16 %v2084, %v570
      %2090 = vst [vmem:[%s2088] sm:$0xff] %v2089
      %s2091 = scalar_lea.vmem %s150, 2504
      %v2092 = vld [vmem:[%s2091] sm:$0xff]
      %s2093 = scalar_lea.vmem %s176, 7396
      %s2095 = ssub.s32 0, 4
      %s2096 = scalar_lea.vmem %s2093, %s2095
      %v2097 = vpack.c.bf16 %v2092, %v573
      %2098 = vst [vmem:[%s2096] sm:$0xff] %v2097
      %s2099 = scalar_lea.vmem %s150, 12744
      %v2100 = vld [vmem:[%s2099] sm:$0xff]
      %s2101 = scalar_lea.vmem %s176, 2276
      %s2103 = ssub.s32 0, 4
      %s2104 = scalar_lea.vmem %s2101, %s2103
      %v2105 = vpack.c.bf16 %v2100, %v576
      %2106 = vst [vmem:[%s2104] sm:$0xff] %v2105
      %s2107 = scalar_lea.vmem %s150, 6600
      %v2108 = vld [vmem:[%s2107] sm:$0xff]
      %s2109 = scalar_lea.vmem %s176, 5348
      %s2111 = ssub.s32 0, 4
      %s2112 = scalar_lea.vmem %s2109, %s2111
      %v2113 = vpack.c.bf16 %v2108, %v579
      %2114 = vst [vmem:[%s2112] sm:$0xff] %v2113
      %s2115 = scalar_lea.vmem %s150, 456
      %v2116 = vld [vmem:[%s2115] sm:$0xff]
      %s2117 = scalar_lea.vmem %s176, 8420
      %s2119 = ssub.s32 0, 4
      %s2120 = scalar_lea.vmem %s2117, %s2119
      %v2121 = vpack.c.bf16 %v2116, %v582
      %2122 = vst [vmem:[%s2120] sm:$0xff] %v2121
      %s2123 = scalar_lea.vmem %s150, 16872
      %v2124 = vld [vmem:[%s2123] sm:$0xff]
      %s2125 = scalar_lea.vmem %s176, 244
      %s2127 = ssub.s32 0, 4
      %s2128 = scalar_lea.vmem %s2125, %s2127
      %v2129 = vpack.c.bf16 %v2124, %v585
      %2130 = vst [vmem:[%s2128] sm:$0xff] %v2129
      %s2131 = scalar_lea.vmem %s150, 10728
      %v2132 = vld [vmem:[%s2131] sm:$0xff]
      %s2133 = scalar_lea.vmem %s176, 3316
      %s2135 = ssub.s32 0, 4
      %s2136 = scalar_lea.vmem %s2133, %s2135
      %v2137 = vpack.c.bf16 %v2132, %v588
      %2138 = vst [vmem:[%s2136] sm:$0xff] %v2137
      %s2139 = scalar_lea.vmem %s150, 4584
      %v2140 = vld [vmem:[%s2139] sm:$0xff]
      %s2141 = scalar_lea.vmem %s176, 6388
      %s2143 = ssub.s32 0, 4
      %s2144 = scalar_lea.vmem %s2141, %s2143
      %v2145 = vpack.c.bf16 %v2140, %v591
      %2146 = vst [vmem:[%s2144] sm:$0xff] %v2145
      %s2147 = scalar_lea.vmem %s150, 14824
      %v2148 = vld [vmem:[%s2147] sm:$0xff]
      %s2149 = scalar_lea.vmem %s176, 1268
      %s2151 = ssub.s32 0, 4
      %s2152 = scalar_lea.vmem %s2149, %s2151
      %v2153 = vpack.c.bf16 %v2148, %v594
      %2154 = vst [vmem:[%s2152] sm:$0xff] %v2153
      %s2155 = scalar_lea.vmem %s150, 8680
      %v2156 = vld [vmem:[%s2155] sm:$0xff]
      %s2157 = scalar_lea.vmem %s176, 4340
      %s2159 = ssub.s32 0, 4
      %s2160 = scalar_lea.vmem %s2157, %s2159
      %v2161 = vpack.c.bf16 %v2156, %v597
      %2162 = vst [vmem:[%s2160] sm:$0xff] %v2161
      %s2163 = scalar_lea.vmem %s150, 2536
      %v2164 = vld [vmem:[%s2163] sm:$0xff]
      %s2165 = scalar_lea.vmem %s176, 7412
      %s2167 = ssub.s32 0, 4
      %s2168 = scalar_lea.vmem %s2165, %s2167
      %v2169 = vpack.c.bf16 %v2164, %v600
      %2170 = vst [vmem:[%s2168] sm:$0xff] %v2169
      %s2171 = scalar_lea.vmem %s150, 12776
      %v2172 = vld [vmem:[%s2171] sm:$0xff]
      %s2173 = scalar_lea.vmem %s176, 2292
      %s2175 = ssub.s32 0, 4
      %s2176 = scalar_lea.vmem %s2173, %s2175
      %v2177 = vpack.c.bf16 %v2172, %v603
      %2178 = vst [vmem:[%s2176] sm:$0xff] %v2177
      %s2179 = scalar_lea.vmem %s150, 6632
      %v2180 = vld [vmem:[%s2179] sm:$0xff]
      %s2181 = scalar_lea.vmem %s176, 5364
      %s2183 = ssub.s32 0, 4
      %s2184 = scalar_lea.vmem %s2181, %s2183
      %v2185 = vpack.c.bf16 %v2180, %v606
      %2186 = vst [vmem:[%s2184] sm:$0xff] %v2185
      %s2187 = scalar_lea.vmem %s150, 488
      %v2188 = vld [vmem:[%s2187] sm:$0xff]
      %s2189 = scalar_lea.vmem %s176, 8436
      %s2191 = ssub.s32 0, 4
      %s2192 = scalar_lea.vmem %s2189, %s2191
      %v2193 = vpack.c.bf16 %v2188, %v609
      %2194 = vst [vmem:[%s2192] sm:$0xff] %v2193
      %s2195 = scalar_lea.vmem %s150, 16904
      %v2196 = vld [vmem:[%s2195] sm:$0xff]
      %s2197 = scalar_lea.vmem %s176, 260
      %s2199 = ssub.s32 0, 4
      %s2200 = scalar_lea.vmem %s2197, %s2199
      %v2201 = vpack.c.bf16 %v2196, %v612
      %2202 = vst [vmem:[%s2200] sm:$0xff] %v2201
      %s2203 = scalar_lea.vmem %s150, 10760
      %v2204 = vld [vmem:[%s2203] sm:$0xff]
      %s2205 = scalar_lea.vmem %s176, 3332
      %s2207 = ssub.s32 0, 4
      %s2208 = scalar_lea.vmem %s2205, %s2207
      %v2209 = vpack.c.bf16 %v2204, %v615
      %2210 = vst [vmem:[%s2208] sm:$0xff] %v2209
      %s2211 = scalar_lea.vmem %s150, 4616
      %v2212 = vld [vmem:[%s2211] sm:$0xff]
      %s2213 = scalar_lea.vmem %s176, 6404
      %s2215 = ssub.s32 0, 4
      %s2216 = scalar_lea.vmem %s2213, %s2215
      %v2217 = vpack.c.bf16 %v2212, %v618
      %2218 = vst [vmem:[%s2216] sm:$0xff] %v2217
      %s2219 = scalar_lea.vmem %s150, 14856
      %v2220 = vld [vmem:[%s2219] sm:$0xff]
      %s2221 = scalar_lea.vmem %s176, 1284
      %s2223 = ssub.s32 0, 4
      %s2224 = scalar_lea.vmem %s2221, %s2223
      %v2225 = vpack.c.bf16 %v2220, %v621
      %2226 = vst [vmem:[%s2224] sm:$0xff] %v2225
      %s2227 = scalar_lea.vmem %s150, 8712
      %v2228 = vld [vmem:[%s2227] sm:$0xff]
      %s2229 = scalar_lea.vmem %s176, 4356
      %s2231 = ssub.s32 0, 4
      %s2232 = scalar_lea.vmem %s2229, %s2231
      %v2233 = vpack.c.bf16 %v2228, %v624
      %2234 = vst [vmem:[%s2232] sm:$0xff] %v2233
      %s2235 = scalar_lea.vmem %s150, 2568
      %v2236 = vld [vmem:[%s2235] sm:$0xff]
      %s2237 = scalar_lea.vmem %s176, 7428
      %s2239 = ssub.s32 0, 4
      %s2240 = scalar_lea.vmem %s2237, %s2239
      %v2241 = vpack.c.bf16 %v2236, %v627
      %2242 = vst [vmem:[%s2240] sm:$0xff] %v2241
      %s2243 = scalar_lea.vmem %s150, 12808
      %v2244 = vld [vmem:[%s2243] sm:$0xff]
      %s2245 = scalar_lea.vmem %s176, 2308
      %s2247 = ssub.s32 0, 4
      %s2248 = scalar_lea.vmem %s2245, %s2247
      %v2249 = vpack.c.bf16 %v2244, %v630
      %2250 = vst [vmem:[%s2248] sm:$0xff] %v2249
      %s2251 = scalar_lea.vmem %s150, 6664
      %v2252 = vld [vmem:[%s2251] sm:$0xff]
      %s2253 = scalar_lea.vmem %s176, 5380
      %s2255 = ssub.s32 0, 4
      %s2256 = scalar_lea.vmem %s2253, %s2255
      %v2257 = vpack.c.bf16 %v2252, %v633
      %2258 = vst [vmem:[%s2256] sm:$0xff] %v2257
      %s2259 = scalar_lea.vmem %s150, 520
      %v2260 = vld [vmem:[%s2259] sm:$0xff]
      %s2261 = scalar_lea.vmem %s176, 8452
      %s2263 = ssub.s32 0, 4
      %s2264 = scalar_lea.vmem %s2261, %s2263
      %v2265 = vpack.c.bf16 %v2260, %v636
      %2266 = vst [vmem:[%s2264] sm:$0xff] %v2265
      %s2267 = scalar_lea.vmem %s150, 16936
      %v2268 = vld [vmem:[%s2267] sm:$0xff]
      %s2269 = scalar_lea.vmem %s176, 276
      %s2271 = ssub.s32 0, 4
      %s2272 = scalar_lea.vmem %s2269, %s2271
      %v2273 = vpack.c.bf16 %v2268, %v639
      %2274 = vst [vmem:[%s2272] sm:$0xff] %v2273
      %s2275 = scalar_lea.vmem %s150, 10792
      %v2276 = vld [vmem:[%s2275] sm:$0xff]
      %s2277 = scalar_lea.vmem %s176, 3348
      %s2279 = ssub.s32 0, 4
      %s2280 = scalar_lea.vmem %s2277, %s2279
      %v2281 = vpack.c.bf16 %v2276, %v642
      %2282 = vst [vmem:[%s2280] sm:$0xff] %v2281
      %s2283 = scalar_lea.vmem %s150, 4648
      %v2284 = vld [vmem:[%s2283] sm:$0xff]
      %s2285 = scalar_lea.vmem %s176, 6420
      %s2287 = ssub.s32 0, 4
      %s2288 = scalar_lea.vmem %s2285, %s2287
      %v2289 = vpack.c.bf16 %v2284, %v645
      %2290 = vst [vmem:[%s2288] sm:$0xff] %v2289
      %s2291 = scalar_lea.vmem %s150, 14888
      %v2292 = vld [vmem:[%s2291] sm:$0xff]
      %s2293 = scalar_lea.vmem %s176, 1300
      %s2295 = ssub.s32 0, 4
      %s2296 = scalar_lea.vmem %s2293, %s2295
      %v2297 = vpack.c.bf16 %v2292, %v648
      %2298 = vst [vmem:[%s2296] sm:$0xff] %v2297
      %s2299 = scalar_lea.vmem %s150, 8744
      %v2300 = vld [vmem:[%s2299] sm:$0xff]
      %s2301 = scalar_lea.vmem %s176, 4372
      %s2303 = ssub.s32 0, 4
      %s2304 = scalar_lea.vmem %s2301, %s2303
      %v2305 = vpack.c.bf16 %v2300, %v651
      %2306 = vst [vmem:[%s2304] sm:$0xff] %v2305
      %s2307 = scalar_lea.vmem %s150, 2600
      %v2308 = vld [vmem:[%s2307] sm:$0xff]
      %s2309 = scalar_lea.vmem %s176, 7444
      %s2311 = ssub.s32 0, 4
      %s2312 = scalar_lea.vmem %s2309, %s2311
      %v2313 = vpack.c.bf16 %v2308, %v654
      %2314 = vst [vmem:[%s2312] sm:$0xff] %v2313
      %s2315 = scalar_lea.vmem %s150, 12840
      %v2316 = vld [vmem:[%s2315] sm:$0xff]
      %s2317 = scalar_lea.vmem %s176, 2324
      %s2319 = ssub.s32 0, 4
      %s2320 = scalar_lea.vmem %s2317, %s2319
      %v2321 = vpack.c.bf16 %v2316, %v657
      %2322 = vst [vmem:[%s2320] sm:$0xff] %v2321
      %s2323 = scalar_lea.vmem %s150, 6696
      %v2324 = vld [vmem:[%s2323] sm:$0xff]
      %s2325 = scalar_lea.vmem %s176, 5396
      %s2327 = ssub.s32 0, 4
      %s2328 = scalar_lea.vmem %s2325, %s2327
      %v2329 = vpack.c.bf16 %v2324, %v660
      %2330 = vst [vmem:[%s2328] sm:$0xff] %v2329
      %s2331 = scalar_lea.vmem %s150, 552
      %v2332 = vld [vmem:[%s2331] sm:$0xff]
      %s2333 = scalar_lea.vmem %s176, 8468
      %s2335 = ssub.s32 0, 4
      %s2336 = scalar_lea.vmem %s2333, %s2335
      %v2337 = vpack.c.bf16 %v2332, %v663
      %2338 = vst [vmem:[%s2336] sm:$0xff] %v2337
      %s2339 = scalar_lea.vmem %s150, 16968
      %v2340 = vld [vmem:[%s2339] sm:$0xff]
      %s2341 = scalar_lea.vmem %s176, 292
      %s2343 = ssub.s32 0, 4
      %s2344 = scalar_lea.vmem %s2341, %s2343
      %v2345 = vpack.c.bf16 %v2340, %v666
      %2346 = vst [vmem:[%s2344] sm:$0xff] %v2345
      %s2347 = scalar_lea.vmem %s150, 10824
      %v2348 = vld [vmem:[%s2347] sm:$0xff]
      %s2349 = scalar_lea.vmem %s176, 3364
      %s2351 = ssub.s32 0, 4
      %s2352 = scalar_lea.vmem %s2349, %s2351
      %v2353 = vpack.c.bf16 %v2348, %v669
      %2354 = vst [vmem:[%s2352] sm:$0xff] %v2353
      %s2355 = scalar_lea.vmem %s150, 4680
      %v2356 = vld [vmem:[%s2355] sm:$0xff]
      %s2357 = scalar_lea.vmem %s176, 6436
      %s2359 = ssub.s32 0, 4
      %s2360 = scalar_lea.vmem %s2357, %s2359
      %v2361 = vpack.c.bf16 %v2356, %v672
      %2362 = vst [vmem:[%s2360] sm:$0xff] %v2361
      %s2363 = scalar_lea.vmem %s150, 14920
      %v2364 = vld [vmem:[%s2363] sm:$0xff]
      %s2365 = scalar_lea.vmem %s176, 1316
      %s2367 = ssub.s32 0, 4
      %s2368 = scalar_lea.vmem %s2365, %s2367
      %v2369 = vpack.c.bf16 %v2364, %v675
      %2370 = vst [vmem:[%s2368] sm:$0xff] %v2369
      %s2371 = scalar_lea.vmem %s150, 8776
      %v2372 = vld [vmem:[%s2371] sm:$0xff]
      %s2373 = scalar_lea.vmem %s176, 4388
      %s2375 = ssub.s32 0, 4
      %s2376 = scalar_lea.vmem %s2373, %s2375
      %v2377 = vpack.c.bf16 %v2372, %v678
      %2378 = vst [vmem:[%s2376] sm:$0xff] %v2377
      %s2379 = scalar_lea.vmem %s150, 2632
      %v2380 = vld [vmem:[%s2379] sm:$0xff]
      %s2381 = scalar_lea.vmem %s176, 7460
      %s2383 = ssub.s32 0, 4
      %s2384 = scalar_lea.vmem %s2381, %s2383
      %v2385 = vpack.c.bf16 %v2380, %v681
      %2386 = vst [vmem:[%s2384] sm:$0xff] %v2385
      %s2387 = scalar_lea.vmem %s150, 12872
      %v2388 = vld [vmem:[%s2387] sm:$0xff]
      %s2389 = scalar_lea.vmem %s176, 2340
      %s2391 = ssub.s32 0, 4
      %s2392 = scalar_lea.vmem %s2389, %s2391
      %v2393 = vpack.c.bf16 %v2388, %v684
      %2394 = vst [vmem:[%s2392] sm:$0xff] %v2393
      %s2395 = scalar_lea.vmem %s150, 6728
      %v2396 = vld [vmem:[%s2395] sm:$0xff]
      %s2397 = scalar_lea.vmem %s176, 5412
      %s2399 = ssub.s32 0, 4
      %s2400 = scalar_lea.vmem %s2397, %s2399
      %v2401 = vpack.c.bf16 %v2396, %v687
      %2402 = vst [vmem:[%s2400] sm:$0xff] %v2401
      %s2403 = scalar_lea.vmem %s150, 584
      %v2404 = vld [vmem:[%s2403] sm:$0xff]
      %s2405 = scalar_lea.vmem %s176, 8484
      %s2407 = ssub.s32 0, 4
      %s2408 = scalar_lea.vmem %s2405, %s2407
      %v2409 = vpack.c.bf16 %v2404, %v690
      %2410 = vst [vmem:[%s2408] sm:$0xff] %v2409
      %s2411 = scalar_lea.vmem %s150, 17000
      %v2412 = vld [vmem:[%s2411] sm:$0xff]
      %s2413 = scalar_lea.vmem %s176, 308
      %s2415 = ssub.s32 0, 4
      %s2416 = scalar_lea.vmem %s2413, %s2415
      %v2417 = vpack.c.bf16 %v2412, %v693
      %2418 = vst [vmem:[%s2416] sm:$0xff] %v2417
      %s2419 = scalar_lea.vmem %s150, 10856
      %v2420 = vld [vmem:[%s2419] sm:$0xff]
      %s2421 = scalar_lea.vmem %s176, 3380
      %s2423 = ssub.s32 0, 4
      %s2424 = scalar_lea.vmem %s2421, %s2423
      %v2425 = vpack.c.bf16 %v2420, %v696
      %2426 = vst [vmem:[%s2424] sm:$0xff] %v2425
      %s2427 = scalar_lea.vmem %s150, 4712
      %v2428 = vld [vmem:[%s2427] sm:$0xff]
      %s2429 = scalar_lea.vmem %s176, 6452
      %s2431 = ssub.s32 0, 4
      %s2432 = scalar_lea.vmem %s2429, %s2431
      %v2433 = vpack.c.bf16 %v2428, %v699
      %2434 = vst [vmem:[%s2432] sm:$0xff] %v2433
      %s2435 = scalar_lea.vmem %s150, 14952
      %v2436 = vld [vmem:[%s2435] sm:$0xff]
      %s2437 = scalar_lea.vmem %s176, 1332
      %s2439 = ssub.s32 0, 4
      %s2440 = scalar_lea.vmem %s2437, %s2439
      %v2441 = vpack.c.bf16 %v2436, %v702
      %2442 = vst [vmem:[%s2440] sm:$0xff] %v2441
      %s2443 = scalar_lea.vmem %s150, 8808
      %v2444 = vld [vmem:[%s2443] sm:$0xff]
      %s2445 = scalar_lea.vmem %s176, 4404
      %s2447 = ssub.s32 0, 4
      %s2448 = scalar_lea.vmem %s2445, %s2447
      %v2449 = vpack.c.bf16 %v2444, %v705
      %2450 = vst [vmem:[%s2448] sm:$0xff] %v2449
      %s2451 = scalar_lea.vmem %s150, 2664
      %v2452 = vld [vmem:[%s2451] sm:$0xff]
      %s2453 = scalar_lea.vmem %s176, 7476
      %s2455 = ssub.s32 0, 4
      %s2456 = scalar_lea.vmem %s2453, %s2455
      %v2457 = vpack.c.bf16 %v2452, %v708
      %2458 = vst [vmem:[%s2456] sm:$0xff] %v2457
      %s2459 = scalar_lea.vmem %s150, 12904
      %v2460 = vld [vmem:[%s2459] sm:$0xff]
      %s2461 = scalar_lea.vmem %s176, 2356
      %s2463 = ssub.s32 0, 4
      %s2464 = scalar_lea.vmem %s2461, %s2463
      %v2465 = vpack.c.bf16 %v2460, %v711
      %2466 = vst [vmem:[%s2464] sm:$0xff] %v2465
      %s2467 = scalar_lea.vmem %s150, 6760
      %v2468 = vld [vmem:[%s2467] sm:$0xff]
      %s2469 = scalar_lea.vmem %s176, 5428
      %s2471 = ssub.s32 0, 4
      %s2472 = scalar_lea.vmem %s2469, %s2471
      %v2473 = vpack.c.bf16 %v2468, %v714
      %2474 = vst [vmem:[%s2472] sm:$0xff] %v2473
      %s2475 = scalar_lea.vmem %s150, 616
      %v2476 = vld [vmem:[%s2475] sm:$0xff]
      %s2477 = scalar_lea.vmem %s176, 8500
      %s2479 = ssub.s32 0, 4
      %s2480 = scalar_lea.vmem %s2477, %s2479
      %v2481 = vpack.c.bf16 %v2476, %v717
      %2482 = vst [vmem:[%s2480] sm:$0xff] %v2481
      %s2483 = scalar_lea.vmem %s150, 17032
      %v2484 = vld [vmem:[%s2483] sm:$0xff]
      %s2485 = scalar_lea.vmem %s176, 324
      %s2487 = ssub.s32 0, 4
      %s2488 = scalar_lea.vmem %s2485, %s2487
      %v2489 = vpack.c.bf16 %v2484, %v720
      %2490 = vst [vmem:[%s2488] sm:$0xff] %v2489
      %s2491 = scalar_lea.vmem %s150, 10888
      %v2492 = vld [vmem:[%s2491] sm:$0xff]
      %s2493 = scalar_lea.vmem %s176, 3396
      %s2495 = ssub.s32 0, 4
      %s2496 = scalar_lea.vmem %s2493, %s2495
      %v2497 = vpack.c.bf16 %v2492, %v723
      %2498 = vst [vmem:[%s2496] sm:$0xff] %v2497
      %s2499 = scalar_lea.vmem %s150, 4744
      %v2500 = vld [vmem:[%s2499] sm:$0xff]
      %s2501 = scalar_lea.vmem %s176, 6468
      %s2503 = ssub.s32 0, 4
      %s2504 = scalar_lea.vmem %s2501, %s2503
      %v2505 = vpack.c.bf16 %v2500, %v726
      %2506 = vst [vmem:[%s2504] sm:$0xff] %v2505
      %s2507 = scalar_lea.vmem %s150, 14984
      %v2508 = vld [vmem:[%s2507] sm:$0xff]
      %s2509 = scalar_lea.vmem %s176, 1348
      %s2511 = ssub.s32 0, 4
      %s2512 = scalar_lea.vmem %s2509, %s2511
      %v2513 = vpack.c.bf16 %v2508, %v729
      %2514 = vst [vmem:[%s2512] sm:$0xff] %v2513
      %s2515 = scalar_lea.vmem %s150, 8840
      %v2516 = vld [vmem:[%s2515] sm:$0xff]
      %s2517 = scalar_lea.vmem %s176, 4420
      %s2519 = ssub.s32 0, 4
      %s2520 = scalar_lea.vmem %s2517, %s2519
      %v2521 = vpack.c.bf16 %v2516, %v732
      %2522 = vst [vmem:[%s2520] sm:$0xff] %v2521
      %s2523 = scalar_lea.vmem %s150, 2696
      %v2524 = vld [vmem:[%s2523] sm:$0xff]
      %s2525 = scalar_lea.vmem %s176, 7492
      %s2527 = ssub.s32 0, 4
      %s2528 = scalar_lea.vmem %s2525, %s2527
      %v2529 = vpack.c.bf16 %v2524, %v735
      %2530 = vst [vmem:[%s2528] sm:$0xff] %v2529
      %s2531 = scalar_lea.vmem %s150, 12936
      %v2532 = vld [vmem:[%s2531] sm:$0xff]
      %s2533 = scalar_lea.vmem %s176, 2372
      %s2535 = ssub.s32 0, 4
      %s2536 = scalar_lea.vmem %s2533, %s2535
      %v2537 = vpack.c.bf16 %v2532, %v738
      %2538 = vst [vmem:[%s2536] sm:$0xff] %v2537
      %s2539 = scalar_lea.vmem %s150, 6792
      %v2540 = vld [vmem:[%s2539] sm:$0xff]
      %s2541 = scalar_lea.vmem %s176, 5444
      %s2543 = ssub.s32 0, 4
      %s2544 = scalar_lea.vmem %s2541, %s2543
      %v2545 = vpack.c.bf16 %v2540, %v741
      %2546 = vst [vmem:[%s2544] sm:$0xff] %v2545
      %s2547 = scalar_lea.vmem %s150, 648
      %v2548 = vld [vmem:[%s2547] sm:$0xff]
      %s2549 = scalar_lea.vmem %s176, 8516
      %s2551 = ssub.s32 0, 4
      %s2552 = scalar_lea.vmem %s2549, %s2551
      %v2553 = vpack.c.bf16 %v2548, %v744
      %2554 = vst [vmem:[%s2552] sm:$0xff] %v2553
      %s2555 = scalar_lea.vmem %s150, 17064
      %v2556 = vld [vmem:[%s2555] sm:$0xff]
      %s2557 = scalar_lea.vmem %s176, 340
      %s2559 = ssub.s32 0, 4
      %s2560 = scalar_lea.vmem %s2557, %s2559
      %v2561 = vpack.c.bf16 %v2556, %v747
      %2562 = vst [vmem:[%s2560] sm:$0xff] %v2561
      %s2563 = scalar_lea.vmem %s150, 10920
      %v2564 = vld [vmem:[%s2563] sm:$0xff]
      %s2565 = scalar_lea.vmem %s176, 3412
      %s2567 = ssub.s32 0, 4
      %s2568 = scalar_lea.vmem %s2565, %s2567
      %v2569 = vpack.c.bf16 %v2564, %v750
      %2570 = vst [vmem:[%s2568] sm:$0xff] %v2569
      %s2571 = scalar_lea.vmem %s150, 4776
      %v2572 = vld [vmem:[%s2571] sm:$0xff]
      %s2573 = scalar_lea.vmem %s176, 6484
      %s2575 = ssub.s32 0, 4
      %s2576 = scalar_lea.vmem %s2573, %s2575
      %v2577 = vpack.c.bf16 %v2572, %v753
      %2578 = vst [vmem:[%s2576] sm:$0xff] %v2577
      %s2579 = scalar_lea.vmem %s150, 15016
      %v2580 = vld [vmem:[%s2579] sm:$0xff]
      %s2581 = scalar_lea.vmem %s176, 1364
      %s2583 = ssub.s32 0, 4
      %s2584 = scalar_lea.vmem %s2581, %s2583
      %v2585 = vpack.c.bf16 %v2580, %v756
      %2586 = vst [vmem:[%s2584] sm:$0xff] %v2585
      %s2587 = scalar_lea.vmem %s150, 8872
      %v2588 = vld [vmem:[%s2587] sm:$0xff]
      %s2589 = scalar_lea.vmem %s176, 4436
      %s2591 = ssub.s32 0, 4
      %s2592 = scalar_lea.vmem %s2589, %s2591
      %v2593 = vpack.c.bf16 %v2588, %v759
      %2594 = vst [vmem:[%s2592] sm:$0xff] %v2593
      %s2595 = scalar_lea.vmem %s150, 2728
      %v2596 = vld [vmem:[%s2595] sm:$0xff]
      %s2597 = scalar_lea.vmem %s176, 7508
      %s2599 = ssub.s32 0, 4
      %s2600 = scalar_lea.vmem %s2597, %s2599
      %v2601 = vpack.c.bf16 %v2596, %v762
      %2602 = vst [vmem:[%s2600] sm:$0xff] %v2601
      %s2603 = scalar_lea.vmem %s150, 12968
      %v2604 = vld [vmem:[%s2603] sm:$0xff]
      %s2605 = scalar_lea.vmem %s176, 2388
      %s2607 = ssub.s32 0, 4
      %s2608 = scalar_lea.vmem %s2605, %s2607
      %v2609 = vpack.c.bf16 %v2604, %v765
      %2610 = vst [vmem:[%s2608] sm:$0xff] %v2609
      %s2611 = scalar_lea.vmem %s150, 6824
      %v2612 = vld [vmem:[%s2611] sm:$0xff]
      %s2613 = scalar_lea.vmem %s176, 5460
      %s2615 = ssub.s32 0, 4
      %s2616 = scalar_lea.vmem %s2613, %s2615
      %v2617 = vpack.c.bf16 %v2612, %v768
      %2618 = vst [vmem:[%s2616] sm:$0xff] %v2617
      %s2619 = scalar_lea.vmem %s150, 680
      %v2620 = vld [vmem:[%s2619] sm:$0xff]
      %s2621 = scalar_lea.vmem %s176, 8532
      %s2623 = ssub.s32 0, 4
      %s2624 = scalar_lea.vmem %s2621, %s2623
      %v2625 = vpack.c.bf16 %v2620, %v771
      %2626 = vst [vmem:[%s2624] sm:$0xff] %v2625
      %s2627 = scalar_lea.vmem %s150, 17096
      %v2628 = vld [vmem:[%s2627] sm:$0xff]
      %s2629 = scalar_lea.vmem %s176, 356
      %s2631 = ssub.s32 0, 4
      %s2632 = scalar_lea.vmem %s2629, %s2631
      %v2633 = vpack.c.bf16 %v2628, %v774
      %2634 = vst [vmem:[%s2632] sm:$0xff] %v2633
      %s2635 = scalar_lea.vmem %s150, 10952
      %v2636 = vld [vmem:[%s2635] sm:$0xff]
      %s2637 = scalar_lea.vmem %s176, 3428
      %s2639 = ssub.s32 0, 4
      %s2640 = scalar_lea.vmem %s2637, %s2639
      %v2641 = vpack.c.bf16 %v2636, %v777
      %2642 = vst [vmem:[%s2640] sm:$0xff] %v2641
      %s2643 = scalar_lea.vmem %s150, 4808
      %v2644 = vld [vmem:[%s2643] sm:$0xff]
      %s2645 = scalar_lea.vmem %s176, 6500
      %s2647 = ssub.s32 0, 4
      %s2648 = scalar_lea.vmem %s2645, %s2647
      %v2649 = vpack.c.bf16 %v2644, %v780
      %2650 = vst [vmem:[%s2648] sm:$0xff] %v2649
      %s2651 = scalar_lea.vmem %s150, 15048
      %v2652 = vld [vmem:[%s2651] sm:$0xff]
      %s2653 = scalar_lea.vmem %s176, 1380
      %s2655 = ssub.s32 0, 4
      %s2656 = scalar_lea.vmem %s2653, %s2655
      %v2657 = vpack.c.bf16 %v2652, %v783
      %2658 = vst [vmem:[%s2656] sm:$0xff] %v2657
      %s2659 = scalar_lea.vmem %s150, 8904
      %v2660 = vld [vmem:[%s2659] sm:$0xff]
      %s2661 = scalar_lea.vmem %s176, 4452
      %s2663 = ssub.s32 0, 4
      %s2664 = scalar_lea.vmem %s2661, %s2663
      %v2665 = vpack.c.bf16 %v2660, %v786
      %2666 = vst [vmem:[%s2664] sm:$0xff] %v2665
      %s2667 = scalar_lea.vmem %s150, 2760
      %v2668 = vld [vmem:[%s2667] sm:$0xff]
      %s2669 = scalar_lea.vmem %s176, 7524
      %s2671 = ssub.s32 0, 4
      %s2672 = scalar_lea.vmem %s2669, %s2671
      %v2673 = vpack.c.bf16 %v2668, %v789
      %2674 = vst [vmem:[%s2672] sm:$0xff] %v2673
      %s2675 = scalar_lea.vmem %s150, 13000
      %v2676 = vld [vmem:[%s2675] sm:$0xff]
      %s2677 = scalar_lea.vmem %s176, 2404
      %s2679 = ssub.s32 0, 4
      %s2680 = scalar_lea.vmem %s2677, %s2679
      %v2681 = vpack.c.bf16 %v2676, %v792
      %2682 = vst [vmem:[%s2680] sm:$0xff] %v2681
      %s2683 = scalar_lea.vmem %s150, 6856
      %v2684 = vld [vmem:[%s2683] sm:$0xff]
      %s2685 = scalar_lea.vmem %s176, 5476
      %s2687 = ssub.s32 0, 4
      %s2688 = scalar_lea.vmem %s2685, %s2687
      %v2689 = vpack.c.bf16 %v2684, %v795
      %2690 = vst [vmem:[%s2688] sm:$0xff] %v2689
      %s2691 = scalar_lea.vmem %s150, 712
      %v2692 = vld [vmem:[%s2691] sm:$0xff]
      %s2693 = scalar_lea.vmem %s176, 8548
      %s2695 = ssub.s32 0, 4
      %s2696 = scalar_lea.vmem %s2693, %s2695
      %v2697 = vpack.c.bf16 %v2692, %v798
      %2698 = vst [vmem:[%s2696] sm:$0xff] %v2697
      %s2699 = scalar_lea.vmem %s150, 17128
      %v2700 = vld [vmem:[%s2699] sm:$0xff]
      %s2701 = scalar_lea.vmem %s176, 372
      %s2703 = ssub.s32 0, 4
      %s2704 = scalar_lea.vmem %s2701, %s2703
      %v2705 = vpack.c.bf16 %v2700, %v801
      %2706 = vst [vmem:[%s2704] sm:$0xff] %v2705
      %s2707 = scalar_lea.vmem %s150, 10984
      %v2708 = vld [vmem:[%s2707] sm:$0xff]
      %s2709 = scalar_lea.vmem %s176, 3444
      %s2711 = ssub.s32 0, 4
      %s2712 = scalar_lea.vmem %s2709, %s2711
      %v2713 = vpack.c.bf16 %v2708, %v804
      %2714 = vst [vmem:[%s2712] sm:$0xff] %v2713
      %s2715 = scalar_lea.vmem %s150, 4840
      %v2716 = vld [vmem:[%s2715] sm:$0xff]
      %s2717 = scalar_lea.vmem %s176, 6516
      %s2719 = ssub.s32 0, 4
      %s2720 = scalar_lea.vmem %s2717, %s2719
      %v2721 = vpack.c.bf16 %v2716, %v807
      %2722 = vst [vmem:[%s2720] sm:$0xff] %v2721
      %s2723 = scalar_lea.vmem %s150, 15080
      %v2724 = vld [vmem:[%s2723] sm:$0xff]
      %s2725 = scalar_lea.vmem %s176, 1396
      %s2727 = ssub.s32 0, 4
      %s2728 = scalar_lea.vmem %s2725, %s2727
      %v2729 = vpack.c.bf16 %v2724, %v810
      %2730 = vst [vmem:[%s2728] sm:$0xff] %v2729
      %s2731 = scalar_lea.vmem %s150, 8936
      %v2732 = vld [vmem:[%s2731] sm:$0xff]
      %s2733 = scalar_lea.vmem %s176, 4468
      %s2735 = ssub.s32 0, 4
      %s2736 = scalar_lea.vmem %s2733, %s2735
      %v2737 = vpack.c.bf16 %v2732, %v813
      %2738 = vst [vmem:[%s2736] sm:$0xff] %v2737
      %s2739 = scalar_lea.vmem %s150, 2792
      %v2740 = vld [vmem:[%s2739] sm:$0xff]
      %s2741 = scalar_lea.vmem %s176, 7540
      %s2743 = ssub.s32 0, 4
      %s2744 = scalar_lea.vmem %s2741, %s2743
      %v2745 = vpack.c.bf16 %v2740, %v816
      %2746 = vst [vmem:[%s2744] sm:$0xff] %v2745
      %s2747 = scalar_lea.vmem %s150, 13032
      %v2748 = vld [vmem:[%s2747] sm:$0xff]
      %s2749 = scalar_lea.vmem %s176, 2420
      %s2751 = ssub.s32 0, 4
      %s2752 = scalar_lea.vmem %s2749, %s2751
      %v2753 = vpack.c.bf16 %v2748, %v819
      %2754 = vst [vmem:[%s2752] sm:$0xff] %v2753
      %s2755 = scalar_lea.vmem %s150, 6888
      %v2756 = vld [vmem:[%s2755] sm:$0xff]
      %s2757 = scalar_lea.vmem %s176, 5492
      %s2759 = ssub.s32 0, 4
      %s2760 = scalar_lea.vmem %s2757, %s2759
      %v2761 = vpack.c.bf16 %v2756, %v822
      %2762 = vst [vmem:[%s2760] sm:$0xff] %v2761
      %s2763 = scalar_lea.vmem %s150, 744
      %v2764 = vld [vmem:[%s2763] sm:$0xff]
      %s2765 = scalar_lea.vmem %s176, 8564
      %s2767 = ssub.s32 0, 4
      %s2768 = scalar_lea.vmem %s2765, %s2767
      %v2769 = vpack.c.bf16 %v2764, %v825
      %2770 = vst [vmem:[%s2768] sm:$0xff] %v2769
      %s2771 = scalar_lea.vmem %s150, 17160
      %v2772 = vld [vmem:[%s2771] sm:$0xff]
      %s2773 = scalar_lea.vmem %s176, 388
      %s2775 = ssub.s32 0, 4
      %s2776 = scalar_lea.vmem %s2773, %s2775
      %v2777 = vpack.c.bf16 %v2772, %v828
      %2778 = vst [vmem:[%s2776] sm:$0xff] %v2777
      %s2779 = scalar_lea.vmem %s150, 11016
      %v2780 = vld [vmem:[%s2779] sm:$0xff]
      %s2781 = scalar_lea.vmem %s176, 3460
      %s2783 = ssub.s32 0, 4
      %s2784 = scalar_lea.vmem %s2781, %s2783
      %v2785 = vpack.c.bf16 %v2780, %v831
      %2786 = vst [vmem:[%s2784] sm:$0xff] %v2785
      %s2787 = scalar_lea.vmem %s150, 4872
      %v2788 = vld [vmem:[%s2787] sm:$0xff]
      %s2789 = scalar_lea.vmem %s176, 6532
      %s2791 = ssub.s32 0, 4
      %s2792 = scalar_lea.vmem %s2789, %s2791
      %v2793 = vpack.c.bf16 %v2788, %v834
      %2794 = vst [vmem:[%s2792] sm:$0xff] %v2793
      %s2795 = scalar_lea.vmem %s150, 15112
      %v2796 = vld [vmem:[%s2795] sm:$0xff]
      %s2797 = scalar_lea.vmem %s176, 1412
      %s2799 = ssub.s32 0, 4
      %s2800 = scalar_lea.vmem %s2797, %s2799
      %v2801 = vpack.c.bf16 %v2796, %v837
      %2802 = vst [vmem:[%s2800] sm:$0xff] %v2801
      %s2803 = scalar_lea.vmem %s150, 8968
      %v2804 = vld [vmem:[%s2803] sm:$0xff]
      %s2805 = scalar_lea.vmem %s176, 4484
      %s2807 = ssub.s32 0, 4
      %s2808 = scalar_lea.vmem %s2805, %s2807
      %v2809 = vpack.c.bf16 %v2804, %v840
      %2810 = vst [vmem:[%s2808] sm:$0xff] %v2809
      %s2811 = scalar_lea.vmem %s150, 2824
      %v2812 = vld [vmem:[%s2811] sm:$0xff]
      %s2813 = scalar_lea.vmem %s176, 7556
      %s2815 = ssub.s32 0, 4
      %s2816 = scalar_lea.vmem %s2813, %s2815
      %v2817 = vpack.c.bf16 %v2812, %v843
      %2818 = vst [vmem:[%s2816] sm:$0xff] %v2817
      %s2819 = scalar_lea.vmem %s150, 13064
      %v2820 = vld [vmem:[%s2819] sm:$0xff]
      %s2821 = scalar_lea.vmem %s176, 2436
      %s2823 = ssub.s32 0, 4
      %s2824 = scalar_lea.vmem %s2821, %s2823
      %v2825 = vpack.c.bf16 %v2820, %v846
      %2826 = vst [vmem:[%s2824] sm:$0xff] %v2825
      %s2827 = scalar_lea.vmem %s150, 6920
      %v2828 = vld [vmem:[%s2827] sm:$0xff]
      %s2829 = scalar_lea.vmem %s176, 5508
      %s2831 = ssub.s32 0, 4
      %s2832 = scalar_lea.vmem %s2829, %s2831
      %v2833 = vpack.c.bf16 %v2828, %v849
      %2834 = vst [vmem:[%s2832] sm:$0xff] %v2833
      %s2835 = scalar_lea.vmem %s150, 776
      %v2836 = vld [vmem:[%s2835] sm:$0xff]
      %s2837 = scalar_lea.vmem %s176, 8580
      %s2839 = ssub.s32 0, 4
      %s2840 = scalar_lea.vmem %s2837, %s2839
      %v2841 = vpack.c.bf16 %v2836, %v852
      %2842 = vst [vmem:[%s2840] sm:$0xff] %v2841
      %s2843 = scalar_lea.vmem %s150, 17192
      %v2844 = vld [vmem:[%s2843] sm:$0xff]
      %s2845 = scalar_lea.vmem %s176, 404
      %s2847 = ssub.s32 0, 4
      %s2848 = scalar_lea.vmem %s2845, %s2847
      %v2849 = vpack.c.bf16 %v2844, %v855
      %2850 = vst [vmem:[%s2848] sm:$0xff] %v2849
      %s2851 = scalar_lea.vmem %s150, 11048
      %v2852 = vld [vmem:[%s2851] sm:$0xff]
      %s2853 = scalar_lea.vmem %s176, 3476
      %s2855 = ssub.s32 0, 4
      %s2856 = scalar_lea.vmem %s2853, %s2855
      %v2857 = vpack.c.bf16 %v2852, %v858
      %2858 = vst [vmem:[%s2856] sm:$0xff] %v2857
      %s2859 = scalar_lea.vmem %s150, 4904
      %v2860 = vld [vmem:[%s2859] sm:$0xff]
      %s2861 = scalar_lea.vmem %s176, 6548
      %s2863 = ssub.s32 0, 4
      %s2864 = scalar_lea.vmem %s2861, %s2863
      %v2865 = vpack.c.bf16 %v2860, %v861
      %2866 = vst [vmem:[%s2864] sm:$0xff] %v2865
      %s2867 = scalar_lea.vmem %s150, 15144
      %v2868 = vld [vmem:[%s2867] sm:$0xff]
      %s2869 = scalar_lea.vmem %s176, 1428
      %s2871 = ssub.s32 0, 4
      %s2872 = scalar_lea.vmem %s2869, %s2871
      %v2873 = vpack.c.bf16 %v2868, %v864
      %2874 = vst [vmem:[%s2872] sm:$0xff] %v2873
      %s2875 = scalar_lea.vmem %s150, 9000
      %v2876 = vld [vmem:[%s2875] sm:$0xff]
      %s2877 = scalar_lea.vmem %s176, 4500
      %s2879 = ssub.s32 0, 4
      %s2880 = scalar_lea.vmem %s2877, %s2879
      %v2881 = vpack.c.bf16 %v2876, %v867
      %2882 = vst [vmem:[%s2880] sm:$0xff] %v2881
      %s2883 = scalar_lea.vmem %s150, 2856
      %v2884 = vld [vmem:[%s2883] sm:$0xff]
      %s2885 = scalar_lea.vmem %s176, 7572
      %s2887 = ssub.s32 0, 4
      %s2888 = scalar_lea.vmem %s2885, %s2887
      %v2889 = vpack.c.bf16 %v2884, %v870
      %2890 = vst [vmem:[%s2888] sm:$0xff] %v2889
      %s2891 = scalar_lea.vmem %s150, 13096
      %v2892 = vld [vmem:[%s2891] sm:$0xff]
      %s2893 = scalar_lea.vmem %s176, 2452
      %s2895 = ssub.s32 0, 4
      %s2896 = scalar_lea.vmem %s2893, %s2895
      %v2897 = vpack.c.bf16 %v2892, %v873
      %2898 = vst [vmem:[%s2896] sm:$0xff] %v2897
      %s2899 = scalar_lea.vmem %s150, 6952
      %v2900 = vld [vmem:[%s2899] sm:$0xff]
      %s2901 = scalar_lea.vmem %s176, 5524
      %s2903 = ssub.s32 0, 4
      %s2904 = scalar_lea.vmem %s2901, %s2903
      %v2905 = vpack.c.bf16 %v2900, %v876
      %2906 = vst [vmem:[%s2904] sm:$0xff] %v2905
      %s2907 = scalar_lea.vmem %s150, 808
      %v2908 = vld [vmem:[%s2907] sm:$0xff]
      %s2909 = scalar_lea.vmem %s176, 8596
      %s2911 = ssub.s32 0, 4
      %s2912 = scalar_lea.vmem %s2909, %s2911
      %v2913 = vpack.c.bf16 %v2908, %v879
      %2914 = vst [vmem:[%s2912] sm:$0xff] %v2913
      %s2915 = scalar_lea.vmem %s150, 17224
      %v2916 = vld [vmem:[%s2915] sm:$0xff]
      %s2917 = scalar_lea.vmem %s176, 420
      %s2919 = ssub.s32 0, 4
      %s2920 = scalar_lea.vmem %s2917, %s2919
      %v2921 = vpack.c.bf16 %v2916, %v882
      %2922 = vst [vmem:[%s2920] sm:$0xff] %v2921
      %s2923 = scalar_lea.vmem %s150, 11080
      %v2924 = vld [vmem:[%s2923] sm:$0xff]
      %s2925 = scalar_lea.vmem %s176, 3492
      %s2927 = ssub.s32 0, 4
      %s2928 = scalar_lea.vmem %s2925, %s2927
      %v2929 = vpack.c.bf16 %v2924, %v885
      %2930 = vst [vmem:[%s2928] sm:$0xff] %v2929
      %s2931 = scalar_lea.vmem %s150, 4936
      %v2932 = vld [vmem:[%s2931] sm:$0xff]
      %s2933 = scalar_lea.vmem %s176, 6564
      %s2935 = ssub.s32 0, 4
      %s2936 = scalar_lea.vmem %s2933, %s2935
      %v2937 = vpack.c.bf16 %v2932, %v888
      %2938 = vst [vmem:[%s2936] sm:$0xff] %v2937
      %s2939 = scalar_lea.vmem %s150, 15176
      %v2940 = vld [vmem:[%s2939] sm:$0xff]
      %s2941 = scalar_lea.vmem %s176, 1444
      %s2943 = ssub.s32 0, 4
      %s2944 = scalar_lea.vmem %s2941, %s2943
      %v2945 = vpack.c.bf16 %v2940, %v891
      %2946 = vst [vmem:[%s2944] sm:$0xff] %v2945
      %s2947 = scalar_lea.vmem %s150, 9032
      %v2948 = vld [vmem:[%s2947] sm:$0xff]
      %s2949 = scalar_lea.vmem %s176, 4516
      %s2951 = ssub.s32 0, 4
      %s2952 = scalar_lea.vmem %s2949, %s2951
      %v2953 = vpack.c.bf16 %v2948, %v894
      %2954 = vst [vmem:[%s2952] sm:$0xff] %v2953
      %s2955 = scalar_lea.vmem %s150, 2888
      %v2956 = vld [vmem:[%s2955] sm:$0xff]
      %s2957 = scalar_lea.vmem %s176, 7588
      %s2959 = ssub.s32 0, 4
      %s2960 = scalar_lea.vmem %s2957, %s2959
      %v2961 = vpack.c.bf16 %v2956, %v897
      %2962 = vst [vmem:[%s2960] sm:$0xff] %v2961
      %s2963 = scalar_lea.vmem %s150, 13128
      %v2964 = vld [vmem:[%s2963] sm:$0xff]
      %s2965 = scalar_lea.vmem %s176, 2468
      %s2967 = ssub.s32 0, 4
      %s2968 = scalar_lea.vmem %s2965, %s2967
      %v2969 = vpack.c.bf16 %v2964, %v900
      %2970 = vst [vmem:[%s2968] sm:$0xff] %v2969
      %s2971 = scalar_lea.vmem %s150, 6984
      %v2972 = vld [vmem:[%s2971] sm:$0xff]
      %s2973 = scalar_lea.vmem %s176, 5540
      %s2975 = ssub.s32 0, 4
      %s2976 = scalar_lea.vmem %s2973, %s2975
      %v2977 = vpack.c.bf16 %v2972, %v903
      %2978 = vst [vmem:[%s2976] sm:$0xff] %v2977
      %s2979 = scalar_lea.vmem %s150, 840
      %v2980 = vld [vmem:[%s2979] sm:$0xff]
      %s2981 = scalar_lea.vmem %s176, 8612
      %s2983 = ssub.s32 0, 4
      %s2984 = scalar_lea.vmem %s2981, %s2983
      %v2985 = vpack.c.bf16 %v2980, %v906
      %2986 = vst [vmem:[%s2984] sm:$0xff] %v2985
      %s2987 = scalar_lea.vmem %s150, 17256
      %v2988 = vld [vmem:[%s2987] sm:$0xff]
      %s2989 = scalar_lea.vmem %s176, 436
      %s2991 = ssub.s32 0, 4
      %s2992 = scalar_lea.vmem %s2989, %s2991
      %v2993 = vpack.c.bf16 %v2988, %v909
      %2994 = vst [vmem:[%s2992] sm:$0xff] %v2993
      %s2995 = scalar_lea.vmem %s150, 11112
      %v2996 = vld [vmem:[%s2995] sm:$0xff]
      %s2997 = scalar_lea.vmem %s176, 3508
      %s2999 = ssub.s32 0, 4
      %s3000 = scalar_lea.vmem %s2997, %s2999
      %v3001 = vpack.c.bf16 %v2996, %v912
      %3002 = vst [vmem:[%s3000] sm:$0xff] %v3001
      %s3003 = scalar_lea.vmem %s150, 4968
      %v3004 = vld [vmem:[%s3003] sm:$0xff]
      %s3005 = scalar_lea.vmem %s176, 6580
      %s3007 = ssub.s32 0, 4
      %s3008 = scalar_lea.vmem %s3005, %s3007
      %v3009 = vpack.c.bf16 %v3004, %v915
      %3010 = vst [vmem:[%s3008] sm:$0xff] %v3009
      %s3011 = scalar_lea.vmem %s150, 15208
      %v3012 = vld [vmem:[%s3011] sm:$0xff]
      %s3013 = scalar_lea.vmem %s176, 1460
      %s3015 = ssub.s32 0, 4
      %s3016 = scalar_lea.vmem %s3013, %s3015
      %v3017 = vpack.c.bf16 %v3012, %v918
      %3018 = vst [vmem:[%s3016] sm:$0xff] %v3017
      %s3019 = scalar_lea.vmem %s150, 9064
      %v3020 = vld [vmem:[%s3019] sm:$0xff]
      %s3021 = scalar_lea.vmem %s176, 4532
      %s3023 = ssub.s32 0, 4
      %s3024 = scalar_lea.vmem %s3021, %s3023
      %v3025 = vpack.c.bf16 %v3020, %v921
      %3026 = vst [vmem:[%s3024] sm:$0xff] %v3025
      %s3027 = scalar_lea.vmem %s150, 2920
      %v3028 = vld [vmem:[%s3027] sm:$0xff]
      %s3029 = scalar_lea.vmem %s176, 7604
      %s3031 = ssub.s32 0, 4
      %s3032 = scalar_lea.vmem %s3029, %s3031
      %v3033 = vpack.c.bf16 %v3028, %v924
      %3034 = vst [vmem:[%s3032] sm:$0xff] %v3033
      %s3035 = scalar_lea.vmem %s150, 13160
      %v3036 = vld [vmem:[%s3035] sm:$0xff]
      %s3037 = scalar_lea.vmem %s176, 2484
      %s3039 = ssub.s32 0, 4
      %s3040 = scalar_lea.vmem %s3037, %s3039
      %v3041 = vpack.c.bf16 %v3036, %v927
      %3042 = vst [vmem:[%s3040] sm:$0xff] %v3041
      %s3043 = scalar_lea.vmem %s150, 7016
      %v3044 = vld [vmem:[%s3043] sm:$0xff]
      %s3045 = scalar_lea.vmem %s176, 5556
      %s3047 = ssub.s32 0, 4
      %s3048 = scalar_lea.vmem %s3045, %s3047
      %v3049 = vpack.c.bf16 %v3044, %v930
      %3050 = vst [vmem:[%s3048] sm:$0xff] %v3049
      %s3051 = scalar_lea.vmem %s150, 872
      %v3052 = vld [vmem:[%s3051] sm:$0xff]
      %s3053 = scalar_lea.vmem %s176, 8628
      %s3055 = ssub.s32 0, 4
      %s3056 = scalar_lea.vmem %s3053, %s3055
      %v3057 = vpack.c.bf16 %v3052, %v933
      %3058 = vst [vmem:[%s3056] sm:$0xff] %v3057
      %s3059 = scalar_lea.vmem %s150, 17288
      %v3060 = vld [vmem:[%s3059] sm:$0xff]
      %s3061 = scalar_lea.vmem %s176, 452
      %s3063 = ssub.s32 0, 4
      %s3064 = scalar_lea.vmem %s3061, %s3063
      %v3065 = vpack.c.bf16 %v3060, %v936
      %3066 = vst [vmem:[%s3064] sm:$0xff] %v3065
      %s3067 = scalar_lea.vmem %s150, 11144
      %v3068 = vld [vmem:[%s3067] sm:$0xff]
      %s3069 = scalar_lea.vmem %s176, 3524
      %s3071 = ssub.s32 0, 4
      %s3072 = scalar_lea.vmem %s3069, %s3071
      %v3073 = vpack.c.bf16 %v3068, %v939
      %3074 = vst [vmem:[%s3072] sm:$0xff] %v3073
      %s3075 = scalar_lea.vmem %s150, 5000
      %v3076 = vld [vmem:[%s3075] sm:$0xff]
      %s3077 = scalar_lea.vmem %s176, 6596
      %s3079 = ssub.s32 0, 4
      %s3080 = scalar_lea.vmem %s3077, %s3079
      %v3081 = vpack.c.bf16 %v3076, %v942
      %3082 = vst [vmem:[%s3080] sm:$0xff] %v3081
      %s3083 = scalar_lea.vmem %s150, 15240
      %v3084 = vld [vmem:[%s3083] sm:$0xff]
      %s3085 = scalar_lea.vmem %s176, 1476
      %s3087 = ssub.s32 0, 4
      %s3088 = scalar_lea.vmem %s3085, %s3087
      %v3089 = vpack.c.bf16 %v3084, %v945
      %3090 = vst [vmem:[%s3088] sm:$0xff] %v3089
      %s3091 = scalar_lea.vmem %s150, 9096
      %v3092 = vld [vmem:[%s3091] sm:$0xff]
      %s3093 = scalar_lea.vmem %s176, 4548
      %s3095 = ssub.s32 0, 4
      %s3096 = scalar_lea.vmem %s3093, %s3095
      %v3097 = vpack.c.bf16 %v3092, %v948
      %3098 = vst [vmem:[%s3096] sm:$0xff] %v3097
      %s3099 = scalar_lea.vmem %s150, 2952
      %v3100 = vld [vmem:[%s3099] sm:$0xff]
      %s3101 = scalar_lea.vmem %s176, 7620
      %s3103 = ssub.s32 0, 4
      %s3104 = scalar_lea.vmem %s3101, %s3103
      %v3105 = vpack.c.bf16 %v3100, %v951
      %3106 = vst [vmem:[%s3104] sm:$0xff] %v3105
      %s3107 = scalar_lea.vmem %s150, 13192
      %v3108 = vld [vmem:[%s3107] sm:$0xff]
      %s3109 = scalar_lea.vmem %s176, 2500
      %s3111 = ssub.s32 0, 4
      %s3112 = scalar_lea.vmem %s3109, %s3111
      %v3113 = vpack.c.bf16 %v3108, %v954
      %3114 = vst [vmem:[%s3112] sm:$0xff] %v3113
      %s3115 = scalar_lea.vmem %s150, 7048
      %v3116 = vld [vmem:[%s3115] sm:$0xff]
      %s3117 = scalar_lea.vmem %s176, 5572
      %s3119 = ssub.s32 0, 4
      %s3120 = scalar_lea.vmem %s3117, %s3119
      %v3121 = vpack.c.bf16 %v3116, %v957
      %3122 = vst [vmem:[%s3120] sm:$0xff] %v3121
      %s3123 = scalar_lea.vmem %s150, 904
      %v3124 = vld [vmem:[%s3123] sm:$0xff]
      %s3125 = scalar_lea.vmem %s176, 8644
      %s3127 = ssub.s32 0, 4
      %s3128 = scalar_lea.vmem %s3125, %s3127
      %v3129 = vpack.c.bf16 %v3124, %v960
      %3130 = vst [vmem:[%s3128] sm:$0xff] %v3129
      %s3131 = scalar_lea.vmem %s150, 17320
      %v3132 = vld [vmem:[%s3131] sm:$0xff]
      %s3133 = scalar_lea.vmem %s176, 468
      %s3135 = ssub.s32 0, 4
      %s3136 = scalar_lea.vmem %s3133, %s3135
      %v3137 = vpack.c.bf16 %v3132, %v963
      %3138 = vst [vmem:[%s3136] sm:$0xff] %v3137
      %s3139 = scalar_lea.vmem %s150, 11176
      %v3140 = vld [vmem:[%s3139] sm:$0xff]
      %s3141 = scalar_lea.vmem %s176, 3540
      %s3143 = ssub.s32 0, 4
      %s3144 = scalar_lea.vmem %s3141, %s3143
      %v3145 = vpack.c.bf16 %v3140, %v966
      %3146 = vst [vmem:[%s3144] sm:$0xff] %v3145
      %s3147 = scalar_lea.vmem %s150, 5032
      %v3148 = vld [vmem:[%s3147] sm:$0xff]
      %s3149 = scalar_lea.vmem %s176, 6612
      %s3151 = ssub.s32 0, 4
      %s3152 = scalar_lea.vmem %s3149, %s3151
      %v3153 = vpack.c.bf16 %v3148, %v969
      %3154 = vst [vmem:[%s3152] sm:$0xff] %v3153
      %s3155 = scalar_lea.vmem %s150, 15272
      %v3156 = vld [vmem:[%s3155] sm:$0xff]
      %s3157 = scalar_lea.vmem %s176, 1492
      %s3159 = ssub.s32 0, 4
      %s3160 = scalar_lea.vmem %s3157, %s3159
      %v3161 = vpack.c.bf16 %v3156, %v972
      %3162 = vst [vmem:[%s3160] sm:$0xff] %v3161
      %s3163 = scalar_lea.vmem %s150, 9128
      %v3164 = vld [vmem:[%s3163] sm:$0xff]
      %s3165 = scalar_lea.vmem %s176, 4564
      %s3167 = ssub.s32 0, 4
      %s3168 = scalar_lea.vmem %s3165, %s3167
      %v3169 = vpack.c.bf16 %v3164, %v975
      %3170 = vst [vmem:[%s3168] sm:$0xff] %v3169
      %s3171 = scalar_lea.vmem %s150, 2984
      %v3172 = vld [vmem:[%s3171] sm:$0xff]
      %s3173 = scalar_lea.vmem %s176, 7636
      %s3175 = ssub.s32 0, 4
      %s3176 = scalar_lea.vmem %s3173, %s3175
      %v3177 = vpack.c.bf16 %v3172, %v978
      %3178 = vst [vmem:[%s3176] sm:$0xff] %v3177
      %s3179 = scalar_lea.vmem %s150, 13224
      %v3180 = vld [vmem:[%s3179] sm:$0xff]
      %s3181 = scalar_lea.vmem %s176, 2516
      %s3183 = ssub.s32 0, 4
      %s3184 = scalar_lea.vmem %s3181, %s3183
      %v3185 = vpack.c.bf16 %v3180, %v981
      %3186 = vst [vmem:[%s3184] sm:$0xff] %v3185
      %s3187 = scalar_lea.vmem %s150, 7080
      %v3188 = vld [vmem:[%s3187] sm:$0xff]
      %s3189 = scalar_lea.vmem %s176, 5588
      %s3191 = ssub.s32 0, 4
      %s3192 = scalar_lea.vmem %s3189, %s3191
      %v3193 = vpack.c.bf16 %v3188, %v984
      %3194 = vst [vmem:[%s3192] sm:$0xff] %v3193
      %s3195 = scalar_lea.vmem %s150, 936
      %v3196 = vld [vmem:[%s3195] sm:$0xff]
      %s3197 = scalar_lea.vmem %s176, 8660
      %s3199 = ssub.s32 0, 4
      %s3200 = scalar_lea.vmem %s3197, %s3199
      %v3201 = vpack.c.bf16 %v3196, %v987
      %3202 = vst [vmem:[%s3200] sm:$0xff] %v3201
      %s3203 = scalar_lea.vmem %s150, 17352
      %v3204 = vld [vmem:[%s3203] sm:$0xff]
      %s3205 = scalar_lea.vmem %s176, 484
      %s3207 = ssub.s32 0, 4
      %s3208 = scalar_lea.vmem %s3205, %s3207
      %v3209 = vpack.c.bf16 %v3204, %v990
      %3210 = vst [vmem:[%s3208] sm:$0xff] %v3209
      %s3211 = scalar_lea.vmem %s150, 11208
      %v3212 = vld [vmem:[%s3211] sm:$0xff]
      %s3213 = scalar_lea.vmem %s176, 3556
      %s3215 = ssub.s32 0, 4
      %s3216 = scalar_lea.vmem %s3213, %s3215
      %v3217 = vpack.c.bf16 %v3212, %v993
      %3218 = vst [vmem:[%s3216] sm:$0xff] %v3217
      %s3219 = scalar_lea.vmem %s150, 5064
      %v3220 = vld [vmem:[%s3219] sm:$0xff]
      %s3221 = scalar_lea.vmem %s176, 6628
      %s3223 = ssub.s32 0, 4
      %s3224 = scalar_lea.vmem %s3221, %s3223
      %v3225 = vpack.c.bf16 %v3220, %v996
      %3226 = vst [vmem:[%s3224] sm:$0xff] %v3225
      %s3227 = scalar_lea.vmem %s150, 15304
      %v3228 = vld [vmem:[%s3227] sm:$0xff]
      %s3229 = scalar_lea.vmem %s176, 1508
      %s3231 = ssub.s32 0, 4
      %s3232 = scalar_lea.vmem %s3229, %s3231
      %v3233 = vpack.c.bf16 %v3228, %v999
      %3234 = vst [vmem:[%s3232] sm:$0xff] %v3233
      %s3235 = scalar_lea.vmem %s150, 9160
      %v3236 = vld [vmem:[%s3235] sm:$0xff]
      %s3237 = scalar_lea.vmem %s176, 4580
      %s3239 = ssub.s32 0, 4
      %s3240 = scalar_lea.vmem %s3237, %s3239
      %v3241 = vpack.c.bf16 %v3236, %v1002
      %3242 = vst [vmem:[%s3240] sm:$0xff] %v3241
      %s3243 = scalar_lea.vmem %s150, 3016
      %v3244 = vld [vmem:[%s3243] sm:$0xff]
      %s3245 = scalar_lea.vmem %s176, 7652
      %s3247 = ssub.s32 0, 4
      %s3248 = scalar_lea.vmem %s3245, %s3247
      %v3249 = vpack.c.bf16 %v3244, %v1005
      %3250 = vst [vmem:[%s3248] sm:$0xff] %v3249
      %s3251 = scalar_lea.vmem %s150, 13256
      %v3252 = vld [vmem:[%s3251] sm:$0xff]
      %s3253 = scalar_lea.vmem %s176, 2532
      %s3255 = ssub.s32 0, 4
      %s3256 = scalar_lea.vmem %s3253, %s3255
      %v3257 = vpack.c.bf16 %v3252, %v1008
      %3258 = vst [vmem:[%s3256] sm:$0xff] %v3257
      %s3259 = scalar_lea.vmem %s150, 7112
      %v3260 = vld [vmem:[%s3259] sm:$0xff]
      %s3261 = scalar_lea.vmem %s176, 5604
      %s3263 = ssub.s32 0, 4
      %s3264 = scalar_lea.vmem %s3261, %s3263
      %v3265 = vpack.c.bf16 %v3260, %v1011
      %3266 = vst [vmem:[%s3264] sm:$0xff] %v3265
      %s3267 = scalar_lea.vmem %s150, 968
      %v3268 = vld [vmem:[%s3267] sm:$0xff]
      %s3269 = scalar_lea.vmem %s176, 8676
      %s3271 = ssub.s32 0, 4
      %s3272 = scalar_lea.vmem %s3269, %s3271
      %v3273 = vpack.c.bf16 %v3268, %v1014
      %3274 = vst [vmem:[%s3272] sm:$0xff] %v3273
      %s3275 = scalar_lea.vmem %s150, 17384
      %v3276 = vld [vmem:[%s3275] sm:$0xff]
      %s3277 = scalar_lea.vmem %s176, 500
      %s3279 = ssub.s32 0, 4
      %s3280 = scalar_lea.vmem %s3277, %s3279
      %v3281 = vpack.c.bf16 %v3276, %v1017
      %3282 = vst [vmem:[%s3280] sm:$0xff] %v3281
      %s3283 = scalar_lea.vmem %s150, 11240
      %v3284 = vld [vmem:[%s3283] sm:$0xff]
      %s3285 = scalar_lea.vmem %s176, 3572
      %s3287 = ssub.s32 0, 4
      %s3288 = scalar_lea.vmem %s3285, %s3287
      %v3289 = vpack.c.bf16 %v3284, %v1020
      %3290 = vst [vmem:[%s3288] sm:$0xff] %v3289
      %s3291 = scalar_lea.vmem %s150, 5096
      %v3292 = vld [vmem:[%s3291] sm:$0xff]
      %s3293 = scalar_lea.vmem %s176, 6644
      %s3295 = ssub.s32 0, 4
      %s3296 = scalar_lea.vmem %s3293, %s3295
      %v3297 = vpack.c.bf16 %v3292, %v1023
      %3298 = vst [vmem:[%s3296] sm:$0xff] %v3297
      %s3299 = scalar_lea.vmem %s150, 15336
      %v3300 = vld [vmem:[%s3299] sm:$0xff]
      %s3301 = scalar_lea.vmem %s176, 1524
      %s3303 = ssub.s32 0, 4
      %s3304 = scalar_lea.vmem %s3301, %s3303
      %v3305 = vpack.c.bf16 %v3300, %v1026
      %3306 = vst [vmem:[%s3304] sm:$0xff] %v3305
      %s3307 = scalar_lea.vmem %s150, 9192
      %v3308 = vld [vmem:[%s3307] sm:$0xff]
      %s3309 = scalar_lea.vmem %s176, 4596
      %s3311 = ssub.s32 0, 4
      %s3312 = scalar_lea.vmem %s3309, %s3311
      %v3313 = vpack.c.bf16 %v3308, %v1029
      %3314 = vst [vmem:[%s3312] sm:$0xff] %v3313
      %s3315 = scalar_lea.vmem %s150, 3048
      %v3316 = vld [vmem:[%s3315] sm:$0xff]
      %s3317 = scalar_lea.vmem %s176, 7668
      %s3319 = ssub.s32 0, 4
      %s3320 = scalar_lea.vmem %s3317, %s3319
      %v3321 = vpack.c.bf16 %v3316, %v1032
      %3322 = vst [vmem:[%s3320] sm:$0xff] %v3321
      %s3323 = scalar_lea.vmem %s150, 13288
      %v3324 = vld [vmem:[%s3323] sm:$0xff]
      %s3325 = scalar_lea.vmem %s176, 2548
      %s3327 = ssub.s32 0, 4
      %s3328 = scalar_lea.vmem %s3325, %s3327
      %v3329 = vpack.c.bf16 %v3324, %v1035
      %3330 = vst [vmem:[%s3328] sm:$0xff] %v3329
      %s3331 = scalar_lea.vmem %s150, 7144
      %v3332 = vld [vmem:[%s3331] sm:$0xff]
      %s3333 = scalar_lea.vmem %s176, 5620
      %s3335 = ssub.s32 0, 4
      %s3336 = scalar_lea.vmem %s3333, %s3335
      %v3337 = vpack.c.bf16 %v3332, %v1038
      %3338 = vst [vmem:[%s3336] sm:$0xff] %v3337
      %s3339 = scalar_lea.vmem %s150, 1000
      %v3340 = vld [vmem:[%s3339] sm:$0xff]
      %s3341 = scalar_lea.vmem %s176, 8692
      %s3343 = ssub.s32 0, 4
      %s3344 = scalar_lea.vmem %s3341, %s3343
      %v3345 = vpack.c.bf16 %v3340, %v1041
      %3346 = vst [vmem:[%s3344] sm:$0xff] %v3345
      %s3347 = scalar_lea.vmem %s150, 16400
      %v3348 = vld [vmem:[%s3347] sm:$0xff]
      %s3349 = scalar_lea.vmem %s176, 8
      %s3350 = scalar_lea.vmem %s150, 10256
      %v3351 = vld [vmem:[%s3350] sm:$0xff]
      %s3352 = scalar_lea.vmem %s176, 3080
      %s3353 = scalar_lea.vmem %s150, 4112
      %v3354 = vld [vmem:[%s3353] sm:$0xff]
      %s3355 = scalar_lea.vmem %s176, 6152
      %s3356 = scalar_lea.vmem %s150, 14352
      %v3357 = vld [vmem:[%s3356] sm:$0xff]
      %s3358 = scalar_lea.vmem %s176, 1032
      %s3359 = scalar_lea.vmem %s150, 8208
      %v3360 = vld [vmem:[%s3359] sm:$0xff]
      %s3361 = scalar_lea.vmem %s176, 4104
      %s3362 = scalar_lea.vmem %s150, 2064
      %v3363 = vld [vmem:[%s3362] sm:$0xff]
      %s3364 = scalar_lea.vmem %s176, 7176
      %s3365 = scalar_lea.vmem %s150, 12304
      %v3366 = vld [vmem:[%s3365] sm:$0xff]
      %s3367 = scalar_lea.vmem %s176, 2056
      %s3368 = scalar_lea.vmem %s150, 6160
      %v3369 = vld [vmem:[%s3368] sm:$0xff]
      %s3370 = scalar_lea.vmem %s176, 5128
      %s3371 = scalar_lea.vmem %s150, 16
      %v3372 = vld [vmem:[%s3371] sm:$0xff]
      %s3373 = scalar_lea.vmem %s176, 8200
      %s3374 = scalar_lea.vmem %s150, 16432
      %v3375 = vld [vmem:[%s3374] sm:$0xff]
      %s3376 = scalar_lea.vmem %s176, 24
      %s3377 = scalar_lea.vmem %s150, 10288
      %v3378 = vld [vmem:[%s3377] sm:$0xff]
      %s3379 = scalar_lea.vmem %s176, 3096
      %s3380 = scalar_lea.vmem %s150, 4144
      %v3381 = vld [vmem:[%s3380] sm:$0xff]
      %s3382 = scalar_lea.vmem %s176, 6168
      %s3383 = scalar_lea.vmem %s150, 14384
      %v3384 = vld [vmem:[%s3383] sm:$0xff]
      %s3385 = scalar_lea.vmem %s176, 1048
      %s3386 = scalar_lea.vmem %s150, 8240
      %v3387 = vld [vmem:[%s3386] sm:$0xff]
      %s3388 = scalar_lea.vmem %s176, 4120
      %s3389 = scalar_lea.vmem %s150, 2096
      %v3390 = vld [vmem:[%s3389] sm:$0xff]
      %s3391 = scalar_lea.vmem %s176, 7192
      %s3392 = scalar_lea.vmem %s150, 12336
      %v3393 = vld [vmem:[%s3392] sm:$0xff]
      %s3394 = scalar_lea.vmem %s176, 2072
      %s3395 = scalar_lea.vmem %s150, 6192
      %v3396 = vld [vmem:[%s3395] sm:$0xff]
      %s3397 = scalar_lea.vmem %s176, 5144
      %s3398 = scalar_lea.vmem %s150, 48
      %v3399 = vld [vmem:[%s3398] sm:$0xff]
      %s3400 = scalar_lea.vmem %s176, 8216
      %s3401 = scalar_lea.vmem %s150, 16464
      %v3402 = vld [vmem:[%s3401] sm:$0xff]
      %s3403 = scalar_lea.vmem %s176, 40
      %s3404 = scalar_lea.vmem %s150, 10320
      %v3405 = vld [vmem:[%s3404] sm:$0xff]
      %s3406 = scalar_lea.vmem %s176, 3112
      %s3407 = scalar_lea.vmem %s150, 4176
      %v3408 = vld [vmem:[%s3407] sm:$0xff]
      %s3409 = scalar_lea.vmem %s176, 6184
      %s3410 = scalar_lea.vmem %s150, 14416
      %v3411 = vld [vmem:[%s3410] sm:$0xff]
      %s3412 = scalar_lea.vmem %s176, 1064
      %s3413 = scalar_lea.vmem %s150, 8272
      %v3414 = vld [vmem:[%s3413] sm:$0xff]
      %s3415 = scalar_lea.vmem %s176, 4136
      %s3416 = scalar_lea.vmem %s150, 2128
      %v3417 = vld [vmem:[%s3416] sm:$0xff]
      %s3418 = scalar_lea.vmem %s176, 7208
      %s3419 = scalar_lea.vmem %s150, 12368
      %v3420 = vld [vmem:[%s3419] sm:$0xff]
      %s3421 = scalar_lea.vmem %s176, 2088
      %s3422 = scalar_lea.vmem %s150, 6224
      %v3423 = vld [vmem:[%s3422] sm:$0xff]
      %s3424 = scalar_lea.vmem %s176, 5160
      %s3425 = scalar_lea.vmem %s150, 80
      %v3426 = vld [vmem:[%s3425] sm:$0xff]
      %s3427 = scalar_lea.vmem %s176, 8232
      %s3428 = scalar_lea.vmem %s150, 16496
      %v3429 = vld [vmem:[%s3428] sm:$0xff]
      %s3430 = scalar_lea.vmem %s176, 56
      %s3431 = scalar_lea.vmem %s150, 10352
      %v3432 = vld [vmem:[%s3431] sm:$0xff]
      %s3433 = scalar_lea.vmem %s176, 3128
      %s3434 = scalar_lea.vmem %s150, 4208
      %v3435 = vld [vmem:[%s3434] sm:$0xff]
      %s3436 = scalar_lea.vmem %s176, 6200
      %s3437 = scalar_lea.vmem %s150, 14448
      %v3438 = vld [vmem:[%s3437] sm:$0xff]
      %s3439 = scalar_lea.vmem %s176, 1080
      %s3440 = scalar_lea.vmem %s150, 8304
      %v3441 = vld [vmem:[%s3440] sm:$0xff]
      %s3442 = scalar_lea.vmem %s176, 4152
      %s3443 = scalar_lea.vmem %s150, 2160
      %v3444 = vld [vmem:[%s3443] sm:$0xff]
      %s3445 = scalar_lea.vmem %s176, 7224
      %s3446 = scalar_lea.vmem %s150, 12400
      %v3447 = vld [vmem:[%s3446] sm:$0xff]
      %s3448 = scalar_lea.vmem %s176, 2104
      %s3449 = scalar_lea.vmem %s150, 6256
      %v3450 = vld [vmem:[%s3449] sm:$0xff]
      %s3451 = scalar_lea.vmem %s176, 5176
      %s3452 = scalar_lea.vmem %s150, 112
      %v3453 = vld [vmem:[%s3452] sm:$0xff]
      %s3454 = scalar_lea.vmem %s176, 8248
      %s3455 = scalar_lea.vmem %s150, 16528
      %v3456 = vld [vmem:[%s3455] sm:$0xff]
      %s3457 = scalar_lea.vmem %s176, 72
      %s3458 = scalar_lea.vmem %s150, 10384
      %v3459 = vld [vmem:[%s3458] sm:$0xff]
      %s3460 = scalar_lea.vmem %s176, 3144
      %s3461 = scalar_lea.vmem %s150, 4240
      %v3462 = vld [vmem:[%s3461] sm:$0xff]
      %s3463 = scalar_lea.vmem %s176, 6216
      %s3464 = scalar_lea.vmem %s150, 14480
      %v3465 = vld [vmem:[%s3464] sm:$0xff]
      %s3466 = scalar_lea.vmem %s176, 1096
      %s3467 = scalar_lea.vmem %s150, 8336
      %v3468 = vld [vmem:[%s3467] sm:$0xff]
      %s3469 = scalar_lea.vmem %s176, 4168
      %s3470 = scalar_lea.vmem %s150, 2192
      %v3471 = vld [vmem:[%s3470] sm:$0xff]
      %s3472 = scalar_lea.vmem %s176, 7240
      %s3473 = scalar_lea.vmem %s150, 12432
      %v3474 = vld [vmem:[%s3473] sm:$0xff]
      %s3475 = scalar_lea.vmem %s176, 2120
      %s3476 = scalar_lea.vmem %s150, 6288
      %v3477 = vld [vmem:[%s3476] sm:$0xff]
      %s3478 = scalar_lea.vmem %s176, 5192
      %s3479 = scalar_lea.vmem %s150, 144
      %v3480 = vld [vmem:[%s3479] sm:$0xff]
      %s3481 = scalar_lea.vmem %s176, 8264
      %s3482 = scalar_lea.vmem %s150, 16560
      %v3483 = vld [vmem:[%s3482] sm:$0xff]
      %s3484 = scalar_lea.vmem %s176, 88
      %s3485 = scalar_lea.vmem %s150, 10416
      %v3486 = vld [vmem:[%s3485] sm:$0xff]
      %s3487 = scalar_lea.vmem %s176, 3160
      %s3488 = scalar_lea.vmem %s150, 4272
      %v3489 = vld [vmem:[%s3488] sm:$0xff]
      %s3490 = scalar_lea.vmem %s176, 6232
      %s3491 = scalar_lea.vmem %s150, 14512
      %v3492 = vld [vmem:[%s3491] sm:$0xff]
      %s3493 = scalar_lea.vmem %s176, 1112
      %s3494 = scalar_lea.vmem %s150, 8368
      %v3495 = vld [vmem:[%s3494] sm:$0xff]
      %s3496 = scalar_lea.vmem %s176, 4184
      %s3497 = scalar_lea.vmem %s150, 2224
      %v3498 = vld [vmem:[%s3497] sm:$0xff]
      %s3499 = scalar_lea.vmem %s176, 7256
      %s3500 = scalar_lea.vmem %s150, 12464
      %v3501 = vld [vmem:[%s3500] sm:$0xff]
      %s3502 = scalar_lea.vmem %s176, 2136
      %s3503 = scalar_lea.vmem %s150, 6320
      %v3504 = vld [vmem:[%s3503] sm:$0xff]
      %s3505 = scalar_lea.vmem %s176, 5208
      %s3506 = scalar_lea.vmem %s150, 176
      %v3507 = vld [vmem:[%s3506] sm:$0xff]
      %s3508 = scalar_lea.vmem %s176, 8280
      %s3509 = scalar_lea.vmem %s150, 16592
      %v3510 = vld [vmem:[%s3509] sm:$0xff]
      %s3511 = scalar_lea.vmem %s176, 104
      %s3512 = scalar_lea.vmem %s150, 10448
      %v3513 = vld [vmem:[%s3512] sm:$0xff]
      %s3514 = scalar_lea.vmem %s176, 3176
      %s3515 = scalar_lea.vmem %s150, 4304
      %v3516 = vld [vmem:[%s3515] sm:$0xff]
      %s3517 = scalar_lea.vmem %s176, 6248
      %s3518 = scalar_lea.vmem %s150, 14544
      %v3519 = vld [vmem:[%s3518] sm:$0xff]
      %s3520 = scalar_lea.vmem %s176, 1128
      %s3521 = scalar_lea.vmem %s150, 8400
      %v3522 = vld [vmem:[%s3521] sm:$0xff]
      %s3523 = scalar_lea.vmem %s176, 4200
      %s3524 = scalar_lea.vmem %s150, 2256
      %v3525 = vld [vmem:[%s3524] sm:$0xff]
      %s3526 = scalar_lea.vmem %s176, 7272
      %s3527 = scalar_lea.vmem %s150, 12496
      %v3528 = vld [vmem:[%s3527] sm:$0xff]
      %s3529 = scalar_lea.vmem %s176, 2152
      %s3530 = scalar_lea.vmem %s150, 6352
      %v3531 = vld [vmem:[%s3530] sm:$0xff]
      %s3532 = scalar_lea.vmem %s176, 5224
      %s3533 = scalar_lea.vmem %s150, 208
      %v3534 = vld [vmem:[%s3533] sm:$0xff]
      %s3535 = scalar_lea.vmem %s176, 8296
      %s3536 = scalar_lea.vmem %s150, 16624
      %v3537 = vld [vmem:[%s3536] sm:$0xff]
      %s3538 = scalar_lea.vmem %s176, 120
      %s3539 = scalar_lea.vmem %s150, 10480
      %v3540 = vld [vmem:[%s3539] sm:$0xff]
      %s3541 = scalar_lea.vmem %s176, 3192
      %s3542 = scalar_lea.vmem %s150, 4336
      %v3543 = vld [vmem:[%s3542] sm:$0xff]
      %s3544 = scalar_lea.vmem %s176, 6264
      %s3545 = scalar_lea.vmem %s150, 14576
      %v3546 = vld [vmem:[%s3545] sm:$0xff]
      %s3547 = scalar_lea.vmem %s176, 1144
      %s3548 = scalar_lea.vmem %s150, 8432
      %v3549 = vld [vmem:[%s3548] sm:$0xff]
      %s3550 = scalar_lea.vmem %s176, 4216
      %s3551 = scalar_lea.vmem %s150, 2288
      %v3552 = vld [vmem:[%s3551] sm:$0xff]
      %s3553 = scalar_lea.vmem %s176, 7288
      %s3554 = scalar_lea.vmem %s150, 12528
      %v3555 = vld [vmem:[%s3554] sm:$0xff]
      %s3556 = scalar_lea.vmem %s176, 2168
      %s3557 = scalar_lea.vmem %s150, 6384
      %v3558 = vld [vmem:[%s3557] sm:$0xff]
      %s3559 = scalar_lea.vmem %s176, 5240
      %s3560 = scalar_lea.vmem %s150, 240
      %v3561 = vld [vmem:[%s3560] sm:$0xff]
      %s3562 = scalar_lea.vmem %s176, 8312
      %s3563 = scalar_lea.vmem %s150, 16656
      %v3564 = vld [vmem:[%s3563] sm:$0xff]
      %s3565 = scalar_lea.vmem %s176, 136
      %s3566 = scalar_lea.vmem %s150, 10512
      %v3567 = vld [vmem:[%s3566] sm:$0xff]
      %s3568 = scalar_lea.vmem %s176, 3208
      %s3569 = scalar_lea.vmem %s150, 4368
      %v3570 = vld [vmem:[%s3569] sm:$0xff]
      %s3571 = scalar_lea.vmem %s176, 6280
      %s3572 = scalar_lea.vmem %s150, 14608
      %v3573 = vld [vmem:[%s3572] sm:$0xff]
      %s3574 = scalar_lea.vmem %s176, 1160
      %s3575 = scalar_lea.vmem %s150, 8464
      %v3576 = vld [vmem:[%s3575] sm:$0xff]
      %s3577 = scalar_lea.vmem %s176, 4232
      %s3578 = scalar_lea.vmem %s150, 2320
      %v3579 = vld [vmem:[%s3578] sm:$0xff]
      %s3580 = scalar_lea.vmem %s176, 7304
      %s3581 = scalar_lea.vmem %s150, 12560
      %v3582 = vld [vmem:[%s3581] sm:$0xff]
      %s3583 = scalar_lea.vmem %s176, 2184
      %s3584 = scalar_lea.vmem %s150, 6416
      %v3585 = vld [vmem:[%s3584] sm:$0xff]
      %s3586 = scalar_lea.vmem %s176, 5256
      %s3587 = scalar_lea.vmem %s150, 272
      %v3588 = vld [vmem:[%s3587] sm:$0xff]
      %s3589 = scalar_lea.vmem %s176, 8328
      %s3590 = scalar_lea.vmem %s150, 16688
      %v3591 = vld [vmem:[%s3590] sm:$0xff]
      %s3592 = scalar_lea.vmem %s176, 152
      %s3593 = scalar_lea.vmem %s150, 10544
      %v3594 = vld [vmem:[%s3593] sm:$0xff]
      %s3595 = scalar_lea.vmem %s176, 3224
      %s3596 = scalar_lea.vmem %s150, 4400
      %v3597 = vld [vmem:[%s3596] sm:$0xff]
      %s3598 = scalar_lea.vmem %s176, 6296
      %s3599 = scalar_lea.vmem %s150, 14640
      %v3600 = vld [vmem:[%s3599] sm:$0xff]
      %s3601 = scalar_lea.vmem %s176, 1176
      %s3602 = scalar_lea.vmem %s150, 8496
      %v3603 = vld [vmem:[%s3602] sm:$0xff]
      %s3604 = scalar_lea.vmem %s176, 4248
      %s3605 = scalar_lea.vmem %s150, 2352
      %v3606 = vld [vmem:[%s3605] sm:$0xff]
      %s3607 = scalar_lea.vmem %s176, 7320
      %s3608 = scalar_lea.vmem %s150, 12592
      %v3609 = vld [vmem:[%s3608] sm:$0xff]
      %s3610 = scalar_lea.vmem %s176, 2200
      %s3611 = scalar_lea.vmem %s150, 6448
      %v3612 = vld [vmem:[%s3611] sm:$0xff]
      %s3613 = scalar_lea.vmem %s176, 5272
      %s3614 = scalar_lea.vmem %s150, 304
      %v3615 = vld [vmem:[%s3614] sm:$0xff]
      %s3616 = scalar_lea.vmem %s176, 8344
      %s3617 = scalar_lea.vmem %s150, 16720
      %v3618 = vld [vmem:[%s3617] sm:$0xff]
      %s3619 = scalar_lea.vmem %s176, 168
      %s3620 = scalar_lea.vmem %s150, 10576
      %v3621 = vld [vmem:[%s3620] sm:$0xff]
      %s3622 = scalar_lea.vmem %s176, 3240
      %s3623 = scalar_lea.vmem %s150, 4432
      %v3624 = vld [vmem:[%s3623] sm:$0xff]
      %s3625 = scalar_lea.vmem %s176, 6312
      %s3626 = scalar_lea.vmem %s150, 14672
      %v3627 = vld [vmem:[%s3626] sm:$0xff]
      %s3628 = scalar_lea.vmem %s176, 1192
      %s3629 = scalar_lea.vmem %s150, 8528
      %v3630 = vld [vmem:[%s3629] sm:$0xff]
      %s3631 = scalar_lea.vmem %s176, 4264
      %s3632 = scalar_lea.vmem %s150, 2384
      %v3633 = vld [vmem:[%s3632] sm:$0xff]
      %s3634 = scalar_lea.vmem %s176, 7336
      %s3635 = scalar_lea.vmem %s150, 12624
      %v3636 = vld [vmem:[%s3635] sm:$0xff]
      %s3637 = scalar_lea.vmem %s176, 2216
      %s3638 = scalar_lea.vmem %s150, 6480
      %v3639 = vld [vmem:[%s3638] sm:$0xff]
      %s3640 = scalar_lea.vmem %s176, 5288
      %s3641 = scalar_lea.vmem %s150, 336
      %v3642 = vld [vmem:[%s3641] sm:$0xff]
      %s3643 = scalar_lea.vmem %s176, 8360
      %s3644 = scalar_lea.vmem %s150, 16752
      %v3645 = vld [vmem:[%s3644] sm:$0xff]
      %s3646 = scalar_lea.vmem %s176, 184
      %s3647 = scalar_lea.vmem %s150, 10608
      %v3648 = vld [vmem:[%s3647] sm:$0xff]
      %s3649 = scalar_lea.vmem %s176, 3256
      %s3650 = scalar_lea.vmem %s150, 4464
      %v3651 = vld [vmem:[%s3650] sm:$0xff]
      %s3652 = scalar_lea.vmem %s176, 6328
      %s3653 = scalar_lea.vmem %s150, 14704
      %v3654 = vld [vmem:[%s3653] sm:$0xff]
      %s3655 = scalar_lea.vmem %s176, 1208
      %s3656 = scalar_lea.vmem %s150, 8560
      %v3657 = vld [vmem:[%s3656] sm:$0xff]
      %s3658 = scalar_lea.vmem %s176, 4280
      %s3659 = scalar_lea.vmem %s150, 2416
      %v3660 = vld [vmem:[%s3659] sm:$0xff]
      %s3661 = scalar_lea.vmem %s176, 7352
      %s3662 = scalar_lea.vmem %s150, 12656
      %v3663 = vld [vmem:[%s3662] sm:$0xff]
      %s3664 = scalar_lea.vmem %s176, 2232
      %s3665 = scalar_lea.vmem %s150, 6512
      %v3666 = vld [vmem:[%s3665] sm:$0xff]
      %s3667 = scalar_lea.vmem %s176, 5304
      %s3668 = scalar_lea.vmem %s150, 368
      %v3669 = vld [vmem:[%s3668] sm:$0xff]
      %s3670 = scalar_lea.vmem %s176, 8376
      %s3671 = scalar_lea.vmem %s150, 16784
      %v3672 = vld [vmem:[%s3671] sm:$0xff]
      %s3673 = scalar_lea.vmem %s176, 200
      %s3674 = scalar_lea.vmem %s150, 10640
      %v3675 = vld [vmem:[%s3674] sm:$0xff]
      %s3676 = scalar_lea.vmem %s176, 3272
      %s3677 = scalar_lea.vmem %s150, 4496
      %v3678 = vld [vmem:[%s3677] sm:$0xff]
      %s3679 = scalar_lea.vmem %s176, 6344
      %s3680 = scalar_lea.vmem %s150, 14736
      %v3681 = vld [vmem:[%s3680] sm:$0xff]
      %s3682 = scalar_lea.vmem %s176, 1224
      %s3683 = scalar_lea.vmem %s150, 8592
      %v3684 = vld [vmem:[%s3683] sm:$0xff]
      %s3685 = scalar_lea.vmem %s176, 4296
      %s3686 = scalar_lea.vmem %s150, 2448
      %v3687 = vld [vmem:[%s3686] sm:$0xff]
      %s3688 = scalar_lea.vmem %s176, 7368
      %s3689 = scalar_lea.vmem %s150, 12688
      %v3690 = vld [vmem:[%s3689] sm:$0xff]
      %s3691 = scalar_lea.vmem %s176, 2248
      %s3692 = scalar_lea.vmem %s150, 6544
      %v3693 = vld [vmem:[%s3692] sm:$0xff]
      %s3694 = scalar_lea.vmem %s176, 5320
      %s3695 = scalar_lea.vmem %s150, 400
      %v3696 = vld [vmem:[%s3695] sm:$0xff]
      %s3697 = scalar_lea.vmem %s176, 8392
      %s3698 = scalar_lea.vmem %s150, 16816
      %v3699 = vld [vmem:[%s3698] sm:$0xff]
      %s3700 = scalar_lea.vmem %s176, 216
      %s3701 = scalar_lea.vmem %s150, 10672
      %v3702 = vld [vmem:[%s3701] sm:$0xff]
      %s3703 = scalar_lea.vmem %s176, 3288
      %s3704 = scalar_lea.vmem %s150, 4528
      %v3705 = vld [vmem:[%s3704] sm:$0xff]
      %s3706 = scalar_lea.vmem %s176, 6360
      %s3707 = scalar_lea.vmem %s150, 14768
      %v3708 = vld [vmem:[%s3707] sm:$0xff]
      %s3709 = scalar_lea.vmem %s176, 1240
      %s3710 = scalar_lea.vmem %s150, 8624
      %v3711 = vld [vmem:[%s3710] sm:$0xff]
      %s3712 = scalar_lea.vmem %s176, 4312
      %s3713 = scalar_lea.vmem %s150, 2480
      %v3714 = vld [vmem:[%s3713] sm:$0xff]
      %s3715 = scalar_lea.vmem %s176, 7384
      %s3716 = scalar_lea.vmem %s150, 12720
      %v3717 = vld [vmem:[%s3716] sm:$0xff]
      %s3718 = scalar_lea.vmem %s176, 2264
      %s3719 = scalar_lea.vmem %s150, 6576
      %v3720 = vld [vmem:[%s3719] sm:$0xff]
      %s3721 = scalar_lea.vmem %s176, 5336
      %s3722 = scalar_lea.vmem %s150, 432
      %v3723 = vld [vmem:[%s3722] sm:$0xff]
      %s3724 = scalar_lea.vmem %s176, 8408
      %s3725 = scalar_lea.vmem %s150, 16848
      %v3726 = vld [vmem:[%s3725] sm:$0xff]
      %s3727 = scalar_lea.vmem %s176, 232
      %s3728 = scalar_lea.vmem %s150, 10704
      %v3729 = vld [vmem:[%s3728] sm:$0xff]
      %s3730 = scalar_lea.vmem %s176, 3304
      %s3731 = scalar_lea.vmem %s150, 4560
      %v3732 = vld [vmem:[%s3731] sm:$0xff]
      %s3733 = scalar_lea.vmem %s176, 6376
      %s3734 = scalar_lea.vmem %s150, 14800
      %v3735 = vld [vmem:[%s3734] sm:$0xff]
      %s3736 = scalar_lea.vmem %s176, 1256
      %s3737 = scalar_lea.vmem %s150, 8656
      %v3738 = vld [vmem:[%s3737] sm:$0xff]
      %s3739 = scalar_lea.vmem %s176, 4328
      %s3740 = scalar_lea.vmem %s150, 2512
      %v3741 = vld [vmem:[%s3740] sm:$0xff]
      %s3742 = scalar_lea.vmem %s176, 7400
      %s3743 = scalar_lea.vmem %s150, 12752
      %v3744 = vld [vmem:[%s3743] sm:$0xff]
      %s3745 = scalar_lea.vmem %s176, 2280
      %s3746 = scalar_lea.vmem %s150, 6608
      %v3747 = vld [vmem:[%s3746] sm:$0xff]
      %s3748 = scalar_lea.vmem %s176, 5352
      %s3749 = scalar_lea.vmem %s150, 464
      %v3750 = vld [vmem:[%s3749] sm:$0xff]
      %s3751 = scalar_lea.vmem %s176, 8424
      %s3752 = scalar_lea.vmem %s150, 16880
      %v3753 = vld [vmem:[%s3752] sm:$0xff]
      %s3754 = scalar_lea.vmem %s176, 248
      %s3755 = scalar_lea.vmem %s150, 10736
      %v3756 = vld [vmem:[%s3755] sm:$0xff]
      %s3757 = scalar_lea.vmem %s176, 3320
      %s3758 = scalar_lea.vmem %s150, 4592
      %v3759 = vld [vmem:[%s3758] sm:$0xff]
      %s3760 = scalar_lea.vmem %s176, 6392
      %s3761 = scalar_lea.vmem %s150, 14832
      %v3762 = vld [vmem:[%s3761] sm:$0xff]
      %s3763 = scalar_lea.vmem %s176, 1272
      %s3764 = scalar_lea.vmem %s150, 8688
      %v3765 = vld [vmem:[%s3764] sm:$0xff]
      %s3766 = scalar_lea.vmem %s176, 4344
      %s3767 = scalar_lea.vmem %s150, 2544
      %v3768 = vld [vmem:[%s3767] sm:$0xff]
      %s3769 = scalar_lea.vmem %s176, 7416
      %s3770 = scalar_lea.vmem %s150, 12784
      %v3771 = vld [vmem:[%s3770] sm:$0xff]
      %s3772 = scalar_lea.vmem %s176, 2296
      %s3773 = scalar_lea.vmem %s150, 6640
      %v3774 = vld [vmem:[%s3773] sm:$0xff]
      %s3775 = scalar_lea.vmem %s176, 5368
      %s3776 = scalar_lea.vmem %s150, 496
      %v3777 = vld [vmem:[%s3776] sm:$0xff]
      %s3778 = scalar_lea.vmem %s176, 8440
      %s3779 = scalar_lea.vmem %s150, 16912
      %v3780 = vld [vmem:[%s3779] sm:$0xff]
      %s3781 = scalar_lea.vmem %s176, 264
      %s3782 = scalar_lea.vmem %s150, 10768
      %v3783 = vld [vmem:[%s3782] sm:$0xff]
      %s3784 = scalar_lea.vmem %s176, 3336
      %s3785 = scalar_lea.vmem %s150, 4624
      %v3786 = vld [vmem:[%s3785] sm:$0xff]
      %s3787 = scalar_lea.vmem %s176, 6408
      %s3788 = scalar_lea.vmem %s150, 14864
      %v3789 = vld [vmem:[%s3788] sm:$0xff]
      %s3790 = scalar_lea.vmem %s176, 1288
      %s3791 = scalar_lea.vmem %s150, 8720
      %v3792 = vld [vmem:[%s3791] sm:$0xff]
      %s3793 = scalar_lea.vmem %s176, 4360
      %s3794 = scalar_lea.vmem %s150, 2576
      %v3795 = vld [vmem:[%s3794] sm:$0xff]
      %s3796 = scalar_lea.vmem %s176, 7432
      %s3797 = scalar_lea.vmem %s150, 12816
      %v3798 = vld [vmem:[%s3797] sm:$0xff]
      %s3799 = scalar_lea.vmem %s176, 2312
      %s3800 = scalar_lea.vmem %s150, 6672
      %v3801 = vld [vmem:[%s3800] sm:$0xff]
      %s3802 = scalar_lea.vmem %s176, 5384
      %s3803 = scalar_lea.vmem %s150, 528
      %v3804 = vld [vmem:[%s3803] sm:$0xff]
      %s3805 = scalar_lea.vmem %s176, 8456
      %s3806 = scalar_lea.vmem %s150, 16944
      %v3807 = vld [vmem:[%s3806] sm:$0xff]
      %s3808 = scalar_lea.vmem %s176, 280
      %s3809 = scalar_lea.vmem %s150, 10800
      %v3810 = vld [vmem:[%s3809] sm:$0xff]
      %s3811 = scalar_lea.vmem %s176, 3352
      %s3812 = scalar_lea.vmem %s150, 4656
      %v3813 = vld [vmem:[%s3812] sm:$0xff]
      %s3814 = scalar_lea.vmem %s176, 6424
      %s3815 = scalar_lea.vmem %s150, 14896
      %v3816 = vld [vmem:[%s3815] sm:$0xff]
      %s3817 = scalar_lea.vmem %s176, 1304
      %s3818 = scalar_lea.vmem %s150, 8752
      %v3819 = vld [vmem:[%s3818] sm:$0xff]
      %s3820 = scalar_lea.vmem %s176, 4376
      %s3821 = scalar_lea.vmem %s150, 2608
      %v3822 = vld [vmem:[%s3821] sm:$0xff]
      %s3823 = scalar_lea.vmem %s176, 7448
      %s3824 = scalar_lea.vmem %s150, 12848
      %v3825 = vld [vmem:[%s3824] sm:$0xff]
      %s3826 = scalar_lea.vmem %s176, 2328
      %s3827 = scalar_lea.vmem %s150, 6704
      %v3828 = vld [vmem:[%s3827] sm:$0xff]
      %s3829 = scalar_lea.vmem %s176, 5400
      %s3830 = scalar_lea.vmem %s150, 560
      %v3831 = vld [vmem:[%s3830] sm:$0xff]
      %s3832 = scalar_lea.vmem %s176, 8472
      %s3833 = scalar_lea.vmem %s150, 16976
      %v3834 = vld [vmem:[%s3833] sm:$0xff]
      %s3835 = scalar_lea.vmem %s176, 296
      %s3836 = scalar_lea.vmem %s150, 10832
      %v3837 = vld [vmem:[%s3836] sm:$0xff]
      %s3838 = scalar_lea.vmem %s176, 3368
      %s3839 = scalar_lea.vmem %s150, 4688
      %v3840 = vld [vmem:[%s3839] sm:$0xff]
      %s3841 = scalar_lea.vmem %s176, 6440
      %s3842 = scalar_lea.vmem %s150, 14928
      %v3843 = vld [vmem:[%s3842] sm:$0xff]
      %s3844 = scalar_lea.vmem %s176, 1320
      %s3845 = scalar_lea.vmem %s150, 8784
      %v3846 = vld [vmem:[%s3845] sm:$0xff]
      %s3847 = scalar_lea.vmem %s176, 4392
      %s3848 = scalar_lea.vmem %s150, 2640
      %v3849 = vld [vmem:[%s3848] sm:$0xff]
      %s3850 = scalar_lea.vmem %s176, 7464
      %s3851 = scalar_lea.vmem %s150, 12880
      %v3852 = vld [vmem:[%s3851] sm:$0xff]
      %s3853 = scalar_lea.vmem %s176, 2344
      %s3854 = scalar_lea.vmem %s150, 6736
      %v3855 = vld [vmem:[%s3854] sm:$0xff]
      %s3856 = scalar_lea.vmem %s176, 5416
      %s3857 = scalar_lea.vmem %s150, 592
      %v3858 = vld [vmem:[%s3857] sm:$0xff]
      %s3859 = scalar_lea.vmem %s176, 8488
      %s3860 = scalar_lea.vmem %s150, 17008
      %v3861 = vld [vmem:[%s3860] sm:$0xff]
      %s3862 = scalar_lea.vmem %s176, 312
      %s3863 = scalar_lea.vmem %s150, 10864
      %v3864 = vld [vmem:[%s3863] sm:$0xff]
      %s3865 = scalar_lea.vmem %s176, 3384
      %s3866 = scalar_lea.vmem %s150, 4720
      %v3867 = vld [vmem:[%s3866] sm:$0xff]
      %s3868 = scalar_lea.vmem %s176, 6456
      %s3869 = scalar_lea.vmem %s150, 14960
      %v3870 = vld [vmem:[%s3869] sm:$0xff]
      %s3871 = scalar_lea.vmem %s176, 1336
      %s3872 = scalar_lea.vmem %s150, 8816
      %v3873 = vld [vmem:[%s3872] sm:$0xff]
      %s3874 = scalar_lea.vmem %s176, 4408
      %s3875 = scalar_lea.vmem %s150, 2672
      %v3876 = vld [vmem:[%s3875] sm:$0xff]
      %s3877 = scalar_lea.vmem %s176, 7480
      %s3878 = scalar_lea.vmem %s150, 12912
      %v3879 = vld [vmem:[%s3878] sm:$0xff]
      %s3880 = scalar_lea.vmem %s176, 2360
      %s3881 = scalar_lea.vmem %s150, 6768
      %v3882 = vld [vmem:[%s3881] sm:$0xff]
      %s3883 = scalar_lea.vmem %s176, 5432
      %s3884 = scalar_lea.vmem %s150, 624
      %v3885 = vld [vmem:[%s3884] sm:$0xff]
      %s3886 = scalar_lea.vmem %s176, 8504
      %s3887 = scalar_lea.vmem %s150, 17040
      %v3888 = vld [vmem:[%s3887] sm:$0xff]
      %s3889 = scalar_lea.vmem %s176, 328
      %s3890 = scalar_lea.vmem %s150, 10896
      %v3891 = vld [vmem:[%s3890] sm:$0xff]
      %s3892 = scalar_lea.vmem %s176, 3400
      %s3893 = scalar_lea.vmem %s150, 4752
      %v3894 = vld [vmem:[%s3893] sm:$0xff]
      %s3895 = scalar_lea.vmem %s176, 6472
      %s3896 = scalar_lea.vmem %s150, 14992
      %v3897 = vld [vmem:[%s3896] sm:$0xff]
      %s3898 = scalar_lea.vmem %s176, 1352
      %s3899 = scalar_lea.vmem %s150, 8848
      %v3900 = vld [vmem:[%s3899] sm:$0xff]
      %s3901 = scalar_lea.vmem %s176, 4424
      %s3902 = scalar_lea.vmem %s150, 2704
      %v3903 = vld [vmem:[%s3902] sm:$0xff]
      %s3904 = scalar_lea.vmem %s176, 7496
      %s3905 = scalar_lea.vmem %s150, 12944
      %v3906 = vld [vmem:[%s3905] sm:$0xff]
      %s3907 = scalar_lea.vmem %s176, 2376
      %s3908 = scalar_lea.vmem %s150, 6800
      %v3909 = vld [vmem:[%s3908] sm:$0xff]
      %s3910 = scalar_lea.vmem %s176, 5448
      %s3911 = scalar_lea.vmem %s150, 656
      %v3912 = vld [vmem:[%s3911] sm:$0xff]
      %s3913 = scalar_lea.vmem %s176, 8520
      %s3914 = scalar_lea.vmem %s150, 17072
      %v3915 = vld [vmem:[%s3914] sm:$0xff]
      %s3916 = scalar_lea.vmem %s176, 344
      %s3917 = scalar_lea.vmem %s150, 10928
      %v3918 = vld [vmem:[%s3917] sm:$0xff]
      %s3919 = scalar_lea.vmem %s176, 3416
      %s3920 = scalar_lea.vmem %s150, 4784
      %v3921 = vld [vmem:[%s3920] sm:$0xff]
      %s3922 = scalar_lea.vmem %s176, 6488
      %s3923 = scalar_lea.vmem %s150, 15024
      %v3924 = vld [vmem:[%s3923] sm:$0xff]
      %s3925 = scalar_lea.vmem %s176, 1368
      %s3926 = scalar_lea.vmem %s150, 8880
      %v3927 = vld [vmem:[%s3926] sm:$0xff]
      %s3928 = scalar_lea.vmem %s176, 4440
      %s3929 = scalar_lea.vmem %s150, 2736
      %v3930 = vld [vmem:[%s3929] sm:$0xff]
      %s3931 = scalar_lea.vmem %s176, 7512
      %s3932 = scalar_lea.vmem %s150, 12976
      %v3933 = vld [vmem:[%s3932] sm:$0xff]
      %s3934 = scalar_lea.vmem %s176, 2392
      %s3935 = scalar_lea.vmem %s150, 6832
      %v3936 = vld [vmem:[%s3935] sm:$0xff]
      %s3937 = scalar_lea.vmem %s176, 5464
      %s3938 = scalar_lea.vmem %s150, 688
      %v3939 = vld [vmem:[%s3938] sm:$0xff]
      %s3940 = scalar_lea.vmem %s176, 8536
      %s3941 = scalar_lea.vmem %s150, 17104
      %v3942 = vld [vmem:[%s3941] sm:$0xff]
      %s3943 = scalar_lea.vmem %s176, 360
      %s3944 = scalar_lea.vmem %s150, 10960
      %v3945 = vld [vmem:[%s3944] sm:$0xff]
      %s3946 = scalar_lea.vmem %s176, 3432
      %s3947 = scalar_lea.vmem %s150, 4816
      %v3948 = vld [vmem:[%s3947] sm:$0xff]
      %s3949 = scalar_lea.vmem %s176, 6504
      %s3950 = scalar_lea.vmem %s150, 15056
      %v3951 = vld [vmem:[%s3950] sm:$0xff]
      %s3952 = scalar_lea.vmem %s176, 1384
      %s3953 = scalar_lea.vmem %s150, 8912
      %v3954 = vld [vmem:[%s3953] sm:$0xff]
      %s3955 = scalar_lea.vmem %s176, 4456
      %s3956 = scalar_lea.vmem %s150, 2768
      %v3957 = vld [vmem:[%s3956] sm:$0xff]
      %s3958 = scalar_lea.vmem %s176, 7528
      %s3959 = scalar_lea.vmem %s150, 13008
      %v3960 = vld [vmem:[%s3959] sm:$0xff]
      %s3961 = scalar_lea.vmem %s176, 2408
      %s3962 = scalar_lea.vmem %s150, 6864
      %v3963 = vld [vmem:[%s3962] sm:$0xff]
      %s3964 = scalar_lea.vmem %s176, 5480
      %s3965 = scalar_lea.vmem %s150, 720
      %v3966 = vld [vmem:[%s3965] sm:$0xff]
      %s3967 = scalar_lea.vmem %s176, 8552
      %s3968 = scalar_lea.vmem %s150, 17136
      %v3969 = vld [vmem:[%s3968] sm:$0xff]
      %s3970 = scalar_lea.vmem %s176, 376
      %s3971 = scalar_lea.vmem %s150, 10992
      %v3972 = vld [vmem:[%s3971] sm:$0xff]
      %s3973 = scalar_lea.vmem %s176, 3448
      %s3974 = scalar_lea.vmem %s150, 4848
      %v3975 = vld [vmem:[%s3974] sm:$0xff]
      %s3976 = scalar_lea.vmem %s176, 6520
      %s3977 = scalar_lea.vmem %s150, 15088
      %v3978 = vld [vmem:[%s3977] sm:$0xff]
      %s3979 = scalar_lea.vmem %s176, 1400
      %s3980 = scalar_lea.vmem %s150, 8944
      %v3981 = vld [vmem:[%s3980] sm:$0xff]
      %s3982 = scalar_lea.vmem %s176, 4472
      %s3983 = scalar_lea.vmem %s150, 2800
      %v3984 = vld [vmem:[%s3983] sm:$0xff]
      %s3985 = scalar_lea.vmem %s176, 7544
      %s3986 = scalar_lea.vmem %s150, 13040
      %v3987 = vld [vmem:[%s3986] sm:$0xff]
      %s3988 = scalar_lea.vmem %s176, 2424
      %s3989 = scalar_lea.vmem %s150, 6896
      %v3990 = vld [vmem:[%s3989] sm:$0xff]
      %s3991 = scalar_lea.vmem %s176, 5496
      %s3992 = scalar_lea.vmem %s150, 752
      %v3993 = vld [vmem:[%s3992] sm:$0xff]
      %s3994 = scalar_lea.vmem %s176, 8568
      %s3995 = scalar_lea.vmem %s150, 17168
      %v3996 = vld [vmem:[%s3995] sm:$0xff]
      %s3997 = scalar_lea.vmem %s176, 392
      %s3998 = scalar_lea.vmem %s150, 11024
      %v3999 = vld [vmem:[%s3998] sm:$0xff]
      %s4000 = scalar_lea.vmem %s176, 3464
      %s4001 = scalar_lea.vmem %s150, 4880
      %v4002 = vld [vmem:[%s4001] sm:$0xff]
      %s4003 = scalar_lea.vmem %s176, 6536
      %s4004 = scalar_lea.vmem %s150, 15120
      %v4005 = vld [vmem:[%s4004] sm:$0xff]
      %s4006 = scalar_lea.vmem %s176, 1416
      %s4007 = scalar_lea.vmem %s150, 8976
      %v4008 = vld [vmem:[%s4007] sm:$0xff]
      %s4009 = scalar_lea.vmem %s176, 4488
      %s4010 = scalar_lea.vmem %s150, 2832
      %v4011 = vld [vmem:[%s4010] sm:$0xff]
      %s4012 = scalar_lea.vmem %s176, 7560
      %s4013 = scalar_lea.vmem %s150, 13072
      %v4014 = vld [vmem:[%s4013] sm:$0xff]
      %s4015 = scalar_lea.vmem %s176, 2440
      %s4016 = scalar_lea.vmem %s150, 6928
      %v4017 = vld [vmem:[%s4016] sm:$0xff]
      %s4018 = scalar_lea.vmem %s176, 5512
      %s4019 = scalar_lea.vmem %s150, 784
      %v4020 = vld [vmem:[%s4019] sm:$0xff]
      %s4021 = scalar_lea.vmem %s176, 8584
      %s4022 = scalar_lea.vmem %s150, 17200
      %v4023 = vld [vmem:[%s4022] sm:$0xff]
      %s4024 = scalar_lea.vmem %s176, 408
      %s4025 = scalar_lea.vmem %s150, 11056
      %v4026 = vld [vmem:[%s4025] sm:$0xff]
      %s4027 = scalar_lea.vmem %s176, 3480
      %s4028 = scalar_lea.vmem %s150, 4912
      %v4029 = vld [vmem:[%s4028] sm:$0xff]
      %s4030 = scalar_lea.vmem %s176, 6552
      %s4031 = scalar_lea.vmem %s150, 15152
      %v4032 = vld [vmem:[%s4031] sm:$0xff]
      %s4033 = scalar_lea.vmem %s176, 1432
      %s4034 = scalar_lea.vmem %s150, 9008
      %v4035 = vld [vmem:[%s4034] sm:$0xff]
      %s4036 = scalar_lea.vmem %s176, 4504
      %s4037 = scalar_lea.vmem %s150, 2864
      %v4038 = vld [vmem:[%s4037] sm:$0xff]
      %s4039 = scalar_lea.vmem %s176, 7576
      %s4040 = scalar_lea.vmem %s150, 13104
      %v4041 = vld [vmem:[%s4040] sm:$0xff]
      %s4042 = scalar_lea.vmem %s176, 2456
      %s4043 = scalar_lea.vmem %s150, 6960
      %v4044 = vld [vmem:[%s4043] sm:$0xff]
      %s4045 = scalar_lea.vmem %s176, 5528
      %s4046 = scalar_lea.vmem %s150, 816
      %v4047 = vld [vmem:[%s4046] sm:$0xff]
      %s4048 = scalar_lea.vmem %s176, 8600
      %s4049 = scalar_lea.vmem %s150, 17232
      %v4050 = vld [vmem:[%s4049] sm:$0xff]
      %s4051 = scalar_lea.vmem %s176, 424
      %s4052 = scalar_lea.vmem %s150, 11088
      %v4053 = vld [vmem:[%s4052] sm:$0xff]
      %s4054 = scalar_lea.vmem %s176, 3496
      %s4055 = scalar_lea.vmem %s150, 4944
      %v4056 = vld [vmem:[%s4055] sm:$0xff]
      %s4057 = scalar_lea.vmem %s176, 6568
      %s4058 = scalar_lea.vmem %s150, 15184
      %v4059 = vld [vmem:[%s4058] sm:$0xff]
      %s4060 = scalar_lea.vmem %s176, 1448
      %s4061 = scalar_lea.vmem %s150, 9040
      %v4062 = vld [vmem:[%s4061] sm:$0xff]
      %s4063 = scalar_lea.vmem %s176, 4520
      %s4064 = scalar_lea.vmem %s150, 2896
      %v4065 = vld [vmem:[%s4064] sm:$0xff]
      %s4066 = scalar_lea.vmem %s176, 7592
      %s4067 = scalar_lea.vmem %s150, 13136
      %v4068 = vld [vmem:[%s4067] sm:$0xff]
      %s4069 = scalar_lea.vmem %s176, 2472
      %s4070 = scalar_lea.vmem %s150, 6992
      %v4071 = vld [vmem:[%s4070] sm:$0xff]
      %s4072 = scalar_lea.vmem %s176, 5544
      %s4073 = scalar_lea.vmem %s150, 848
      %v4074 = vld [vmem:[%s4073] sm:$0xff]
      %s4075 = scalar_lea.vmem %s176, 8616
      %s4076 = scalar_lea.vmem %s150, 17264
      %v4077 = vld [vmem:[%s4076] sm:$0xff]
      %s4078 = scalar_lea.vmem %s176, 440
      %s4079 = scalar_lea.vmem %s150, 11120
      %v4080 = vld [vmem:[%s4079] sm:$0xff]
      %s4081 = scalar_lea.vmem %s176, 3512
      %s4082 = scalar_lea.vmem %s150, 4976
      %v4083 = vld [vmem:[%s4082] sm:$0xff]
      %s4084 = scalar_lea.vmem %s176, 6584
      %s4085 = scalar_lea.vmem %s150, 15216
      %v4086 = vld [vmem:[%s4085] sm:$0xff]
      %s4087 = scalar_lea.vmem %s176, 1464
      %s4088 = scalar_lea.vmem %s150, 9072
      %v4089 = vld [vmem:[%s4088] sm:$0xff]
      %s4090 = scalar_lea.vmem %s176, 4536
      %s4091 = scalar_lea.vmem %s150, 2928
      %v4092 = vld [vmem:[%s4091] sm:$0xff]
      %s4093 = scalar_lea.vmem %s176, 7608
      %s4094 = scalar_lea.vmem %s150, 13168
      %v4095 = vld [vmem:[%s4094] sm:$0xff]
      %s4096 = scalar_lea.vmem %s176, 2488
      %s4097 = scalar_lea.vmem %s150, 7024
      %v4098 = vld [vmem:[%s4097] sm:$0xff]
      %s4099 = scalar_lea.vmem %s176, 5560
      %s4100 = scalar_lea.vmem %s150, 880
      %v4101 = vld [vmem:[%s4100] sm:$0xff]
      %s4102 = scalar_lea.vmem %s176, 8632
      %s4103 = scalar_lea.vmem %s150, 17296
      %v4104 = vld [vmem:[%s4103] sm:$0xff]
      %s4105 = scalar_lea.vmem %s176, 456
      %s4106 = scalar_lea.vmem %s150, 11152
      %v4107 = vld [vmem:[%s4106] sm:$0xff]
      %s4108 = scalar_lea.vmem %s176, 3528
      %s4109 = scalar_lea.vmem %s150, 5008
      %v4110 = vld [vmem:[%s4109] sm:$0xff]
      %s4111 = scalar_lea.vmem %s176, 6600
      %s4112 = scalar_lea.vmem %s150, 15248
      %v4113 = vld [vmem:[%s4112] sm:$0xff]
      %s4114 = scalar_lea.vmem %s176, 1480
      %s4115 = scalar_lea.vmem %s150, 9104
      %v4116 = vld [vmem:[%s4115] sm:$0xff]
      %s4117 = scalar_lea.vmem %s176, 4552
      %s4118 = scalar_lea.vmem %s150, 2960
      %v4119 = vld [vmem:[%s4118] sm:$0xff]
      %s4120 = scalar_lea.vmem %s176, 7624
      %s4121 = scalar_lea.vmem %s150, 13200
      %v4122 = vld [vmem:[%s4121] sm:$0xff]
      %s4123 = scalar_lea.vmem %s176, 2504
      %s4124 = scalar_lea.vmem %s150, 7056
      %v4125 = vld [vmem:[%s4124] sm:$0xff]
      %s4126 = scalar_lea.vmem %s176, 5576
      %s4127 = scalar_lea.vmem %s150, 912
      %v4128 = vld [vmem:[%s4127] sm:$0xff]
      %s4129 = scalar_lea.vmem %s176, 8648
      %s4130 = scalar_lea.vmem %s150, 17328
      %v4131 = vld [vmem:[%s4130] sm:$0xff]
      %s4132 = scalar_lea.vmem %s176, 472
      %s4133 = scalar_lea.vmem %s150, 11184
      %v4134 = vld [vmem:[%s4133] sm:$0xff]
      %s4135 = scalar_lea.vmem %s176, 3544
      %s4136 = scalar_lea.vmem %s150, 5040
      %v4137 = vld [vmem:[%s4136] sm:$0xff]
      %s4138 = scalar_lea.vmem %s176, 6616
      %s4139 = scalar_lea.vmem %s150, 15280
      %v4140 = vld [vmem:[%s4139] sm:$0xff]
      %s4141 = scalar_lea.vmem %s176, 1496
      %s4142 = scalar_lea.vmem %s150, 9136
      %v4143 = vld [vmem:[%s4142] sm:$0xff]
      %s4144 = scalar_lea.vmem %s176, 4568
      %s4145 = scalar_lea.vmem %s150, 2992
      %v4146 = vld [vmem:[%s4145] sm:$0xff]
      %s4147 = scalar_lea.vmem %s176, 7640
      %s4148 = scalar_lea.vmem %s150, 13232
      %v4149 = vld [vmem:[%s4148] sm:$0xff]
      %s4150 = scalar_lea.vmem %s176, 2520
      %s4151 = scalar_lea.vmem %s150, 7088
      %v4152 = vld [vmem:[%s4151] sm:$0xff]
      %s4153 = scalar_lea.vmem %s176, 5592
      %s4154 = scalar_lea.vmem %s150, 944
      %v4155 = vld [vmem:[%s4154] sm:$0xff]
      %s4156 = scalar_lea.vmem %s176, 8664
      %s4157 = scalar_lea.vmem %s150, 17360
      %v4158 = vld [vmem:[%s4157] sm:$0xff]
      %s4159 = scalar_lea.vmem %s176, 488
      %s4160 = scalar_lea.vmem %s150, 11216
      %v4161 = vld [vmem:[%s4160] sm:$0xff]
      %s4162 = scalar_lea.vmem %s176, 3560
      %s4163 = scalar_lea.vmem %s150, 5072
      %v4164 = vld [vmem:[%s4163] sm:$0xff]
      %s4165 = scalar_lea.vmem %s176, 6632
      %s4166 = scalar_lea.vmem %s150, 15312
      %v4167 = vld [vmem:[%s4166] sm:$0xff]
      %s4168 = scalar_lea.vmem %s176, 1512
      %s4169 = scalar_lea.vmem %s150, 9168
      %v4170 = vld [vmem:[%s4169] sm:$0xff]
      %s4171 = scalar_lea.vmem %s176, 4584
      %s4172 = scalar_lea.vmem %s150, 3024
      %v4173 = vld [vmem:[%s4172] sm:$0xff]
      %s4174 = scalar_lea.vmem %s176, 7656
      %s4175 = scalar_lea.vmem %s150, 13264
      %v4176 = vld [vmem:[%s4175] sm:$0xff]
      %s4177 = scalar_lea.vmem %s176, 2536
      %s4178 = scalar_lea.vmem %s150, 7120
      %v4179 = vld [vmem:[%s4178] sm:$0xff]
      %s4180 = scalar_lea.vmem %s176, 5608
      %s4181 = scalar_lea.vmem %s150, 976
      %v4182 = vld [vmem:[%s4181] sm:$0xff]
      %s4183 = scalar_lea.vmem %s176, 8680
      %s4184 = scalar_lea.vmem %s150, 17392
      %v4185 = vld [vmem:[%s4184] sm:$0xff]
      %s4186 = scalar_lea.vmem %s176, 504
      %s4187 = scalar_lea.vmem %s150, 11248
      %v4188 = vld [vmem:[%s4187] sm:$0xff]
      %s4189 = scalar_lea.vmem %s176, 3576
      %s4190 = scalar_lea.vmem %s150, 5104
      %v4191 = vld [vmem:[%s4190] sm:$0xff]
      %s4192 = scalar_lea.vmem %s176, 6648
      %s4193 = scalar_lea.vmem %s150, 15344
      %v4194 = vld [vmem:[%s4193] sm:$0xff]
      %s4195 = scalar_lea.vmem %s176, 1528
      %s4196 = scalar_lea.vmem %s150, 9200
      %v4197 = vld [vmem:[%s4196] sm:$0xff]
      %s4198 = scalar_lea.vmem %s176, 4600
      %s4199 = scalar_lea.vmem %s150, 3056
      %v4200 = vld [vmem:[%s4199] sm:$0xff]
      %s4201 = scalar_lea.vmem %s176, 7672
      %s4202 = scalar_lea.vmem %s150, 13296
      %v4203 = vld [vmem:[%s4202] sm:$0xff]
      %s4204 = scalar_lea.vmem %s176, 2552
      %s4205 = scalar_lea.vmem %s150, 7152
      %v4206 = vld [vmem:[%s4205] sm:$0xff]
      %s4207 = scalar_lea.vmem %s176, 5624
      %s4208 = scalar_lea.vmem %s150, 1008
      %v4209 = vld [vmem:[%s4208] sm:$0xff]
      %s4210 = scalar_lea.vmem %s176, 8696
      %s4211 = scalar_lea.vmem %s150, 16408
      %v4212 = vld [vmem:[%s4211] sm:$0xff]
      %s4213 = scalar_lea.vmem %s176, 12
      %s4215 = ssub.s32 0, 4
      %s4216 = scalar_lea.vmem %s4213, %s4215
      %v4217 = vpack.c.bf16 %v4212, %v3348
      %4218 = vst [vmem:[%s4216] sm:$0xff] %v4217
      %s4219 = scalar_lea.vmem %s150, 10264
      %v4220 = vld [vmem:[%s4219] sm:$0xff]
      %s4221 = scalar_lea.vmem %s176, 3084
      %s4223 = ssub.s32 0, 4
      %s4224 = scalar_lea.vmem %s4221, %s4223
      %v4225 = vpack.c.bf16 %v4220, %v3351
      %4226 = vst [vmem:[%s4224] sm:$0xff] %v4225
      %s4227 = scalar_lea.vmem %s150, 4120
      %v4228 = vld [vmem:[%s4227] sm:$0xff]
      %s4229 = scalar_lea.vmem %s176, 6156
      %s4231 = ssub.s32 0, 4
      %s4232 = scalar_lea.vmem %s4229, %s4231
      %v4233 = vpack.c.bf16 %v4228, %v3354
      %4234 = vst [vmem:[%s4232] sm:$0xff] %v4233
      %s4235 = scalar_lea.vmem %s150, 14360
      %v4236 = vld [vmem:[%s4235] sm:$0xff]
      %s4237 = scalar_lea.vmem %s176, 1036
      %s4239 = ssub.s32 0, 4
      %s4240 = scalar_lea.vmem %s4237, %s4239
      %v4241 = vpack.c.bf16 %v4236, %v3357
      %4242 = vst [vmem:[%s4240] sm:$0xff] %v4241
      %s4243 = scalar_lea.vmem %s150, 8216
      %v4244 = vld [vmem:[%s4243] sm:$0xff]
      %s4245 = scalar_lea.vmem %s176, 4108
      %s4247 = ssub.s32 0, 4
      %s4248 = scalar_lea.vmem %s4245, %s4247
      %v4249 = vpack.c.bf16 %v4244, %v3360
      %4250 = vst [vmem:[%s4248] sm:$0xff] %v4249
      %s4251 = scalar_lea.vmem %s150, 2072
      %v4252 = vld [vmem:[%s4251] sm:$0xff]
      %s4253 = scalar_lea.vmem %s176, 7180
      %s4255 = ssub.s32 0, 4
      %s4256 = scalar_lea.vmem %s4253, %s4255
      %v4257 = vpack.c.bf16 %v4252, %v3363
      %4258 = vst [vmem:[%s4256] sm:$0xff] %v4257
      %s4259 = scalar_lea.vmem %s150, 12312
      %v4260 = vld [vmem:[%s4259] sm:$0xff]
      %s4261 = scalar_lea.vmem %s176, 2060
      %s4263 = ssub.s32 0, 4
      %s4264 = scalar_lea.vmem %s4261, %s4263
      %v4265 = vpack.c.bf16 %v4260, %v3366
      %4266 = vst [vmem:[%s4264] sm:$0xff] %v4265
      %s4267 = scalar_lea.vmem %s150, 6168
      %v4268 = vld [vmem:[%s4267] sm:$0xff]
      %s4269 = scalar_lea.vmem %s176, 5132
      %s4271 = ssub.s32 0, 4
      %s4272 = scalar_lea.vmem %s4269, %s4271
      %v4273 = vpack.c.bf16 %v4268, %v3369
      %4274 = vst [vmem:[%s4272] sm:$0xff] %v4273
      %s4275 = scalar_lea.vmem %s150, 24
      %v4276 = vld [vmem:[%s4275] sm:$0xff]
      %s4277 = scalar_lea.vmem %s176, 8204
      %s4279 = ssub.s32 0, 4
      %s4280 = scalar_lea.vmem %s4277, %s4279
      %v4281 = vpack.c.bf16 %v4276, %v3372
      %4282 = vst [vmem:[%s4280] sm:$0xff] %v4281
      %s4283 = scalar_lea.vmem %s150, 16440
      %v4284 = vld [vmem:[%s4283] sm:$0xff]
      %s4285 = scalar_lea.vmem %s176, 28
      %s4287 = ssub.s32 0, 4
      %s4288 = scalar_lea.vmem %s4285, %s4287
      %v4289 = vpack.c.bf16 %v4284, %v3375
      %4290 = vst [vmem:[%s4288] sm:$0xff] %v4289
      %s4291 = scalar_lea.vmem %s150, 10296
      %v4292 = vld [vmem:[%s4291] sm:$0xff]
      %s4293 = scalar_lea.vmem %s176, 3100
      %s4295 = ssub.s32 0, 4
      %s4296 = scalar_lea.vmem %s4293, %s4295
      %v4297 = vpack.c.bf16 %v4292, %v3378
      %4298 = vst [vmem:[%s4296] sm:$0xff] %v4297
      %s4299 = scalar_lea.vmem %s150, 4152
      %v4300 = vld [vmem:[%s4299] sm:$0xff]
      %s4301 = scalar_lea.vmem %s176, 6172
      %s4303 = ssub.s32 0, 4
      %s4304 = scalar_lea.vmem %s4301, %s4303
      %v4305 = vpack.c.bf16 %v4300, %v3381
      %4306 = vst [vmem:[%s4304] sm:$0xff] %v4305
      %s4307 = scalar_lea.vmem %s150, 14392
      %v4308 = vld [vmem:[%s4307] sm:$0xff]
      %s4309 = scalar_lea.vmem %s176, 1052
      %s4311 = ssub.s32 0, 4
      %s4312 = scalar_lea.vmem %s4309, %s4311
      %v4313 = vpack.c.bf16 %v4308, %v3384
      %4314 = vst [vmem:[%s4312] sm:$0xff] %v4313
      %s4315 = scalar_lea.vmem %s150, 8248
      %v4316 = vld [vmem:[%s4315] sm:$0xff]
      %s4317 = scalar_lea.vmem %s176, 4124
      %s4319 = ssub.s32 0, 4
      %s4320 = scalar_lea.vmem %s4317, %s4319
      %v4321 = vpack.c.bf16 %v4316, %v3387
      %4322 = vst [vmem:[%s4320] sm:$0xff] %v4321
      %s4323 = scalar_lea.vmem %s150, 2104
      %v4324 = vld [vmem:[%s4323] sm:$0xff]
      %s4325 = scalar_lea.vmem %s176, 7196
      %s4327 = ssub.s32 0, 4
      %s4328 = scalar_lea.vmem %s4325, %s4327
      %v4329 = vpack.c.bf16 %v4324, %v3390
      %4330 = vst [vmem:[%s4328] sm:$0xff] %v4329
      %s4331 = scalar_lea.vmem %s150, 12344
      %v4332 = vld [vmem:[%s4331] sm:$0xff]
      %s4333 = scalar_lea.vmem %s176, 2076
      %s4335 = ssub.s32 0, 4
      %s4336 = scalar_lea.vmem %s4333, %s4335
      %v4337 = vpack.c.bf16 %v4332, %v3393
      %4338 = vst [vmem:[%s4336] sm:$0xff] %v4337
      %s4339 = scalar_lea.vmem %s150, 6200
      %v4340 = vld [vmem:[%s4339] sm:$0xff]
      %s4341 = scalar_lea.vmem %s176, 5148
      %s4343 = ssub.s32 0, 4
      %s4344 = scalar_lea.vmem %s4341, %s4343
      %v4345 = vpack.c.bf16 %v4340, %v3396
      %4346 = vst [vmem:[%s4344] sm:$0xff] %v4345
      %s4347 = scalar_lea.vmem %s150, 56
      %v4348 = vld [vmem:[%s4347] sm:$0xff]
      %s4349 = scalar_lea.vmem %s176, 8220
      %s4351 = ssub.s32 0, 4
      %s4352 = scalar_lea.vmem %s4349, %s4351
      %v4353 = vpack.c.bf16 %v4348, %v3399
      %4354 = vst [vmem:[%s4352] sm:$0xff] %v4353
      %s4355 = scalar_lea.vmem %s150, 16472
      %v4356 = vld [vmem:[%s4355] sm:$0xff]
      %s4357 = scalar_lea.vmem %s176, 44
      %s4359 = ssub.s32 0, 4
      %s4360 = scalar_lea.vmem %s4357, %s4359
      %v4361 = vpack.c.bf16 %v4356, %v3402
      %4362 = vst [vmem:[%s4360] sm:$0xff] %v4361
      %s4363 = scalar_lea.vmem %s150, 10328
      %v4364 = vld [vmem:[%s4363] sm:$0xff]
      %s4365 = scalar_lea.vmem %s176, 3116
      %s4367 = ssub.s32 0, 4
      %s4368 = scalar_lea.vmem %s4365, %s4367
      %v4369 = vpack.c.bf16 %v4364, %v3405
      %4370 = vst [vmem:[%s4368] sm:$0xff] %v4369
      %s4371 = scalar_lea.vmem %s150, 4184
      %v4372 = vld [vmem:[%s4371] sm:$0xff]
      %s4373 = scalar_lea.vmem %s176, 6188
      %s4375 = ssub.s32 0, 4
      %s4376 = scalar_lea.vmem %s4373, %s4375
      %v4377 = vpack.c.bf16 %v4372, %v3408
      %4378 = vst [vmem:[%s4376] sm:$0xff] %v4377
      %s4379 = scalar_lea.vmem %s150, 14424
      %v4380 = vld [vmem:[%s4379] sm:$0xff]
      %s4381 = scalar_lea.vmem %s176, 1068
      %s4383 = ssub.s32 0, 4
      %s4384 = scalar_lea.vmem %s4381, %s4383
      %v4385 = vpack.c.bf16 %v4380, %v3411
      %4386 = vst [vmem:[%s4384] sm:$0xff] %v4385
      %s4387 = scalar_lea.vmem %s150, 8280
      %v4388 = vld [vmem:[%s4387] sm:$0xff]
      %s4389 = scalar_lea.vmem %s176, 4140
      %s4391 = ssub.s32 0, 4
      %s4392 = scalar_lea.vmem %s4389, %s4391
      %v4393 = vpack.c.bf16 %v4388, %v3414
      %4394 = vst [vmem:[%s4392] sm:$0xff] %v4393
      %s4395 = scalar_lea.vmem %s150, 2136
      %v4396 = vld [vmem:[%s4395] sm:$0xff]
      %s4397 = scalar_lea.vmem %s176, 7212
      %s4399 = ssub.s32 0, 4
      %s4400 = scalar_lea.vmem %s4397, %s4399
      %v4401 = vpack.c.bf16 %v4396, %v3417
      %4402 = vst [vmem:[%s4400] sm:$0xff] %v4401
      %s4403 = scalar_lea.vmem %s150, 12376
      %v4404 = vld [vmem:[%s4403] sm:$0xff]
      %s4405 = scalar_lea.vmem %s176, 2092
      %s4407 = ssub.s32 0, 4
      %s4408 = scalar_lea.vmem %s4405, %s4407
      %v4409 = vpack.c.bf16 %v4404, %v3420
      %4410 = vst [vmem:[%s4408] sm:$0xff] %v4409
      %s4411 = scalar_lea.vmem %s150, 6232
      %v4412 = vld [vmem:[%s4411] sm:$0xff]
      %s4413 = scalar_lea.vmem %s176, 5164
      %s4415 = ssub.s32 0, 4
      %s4416 = scalar_lea.vmem %s4413, %s4415
      %v4417 = vpack.c.bf16 %v4412, %v3423
      %4418 = vst [vmem:[%s4416] sm:$0xff] %v4417
      %s4419 = scalar_lea.vmem %s150, 88
      %v4420 = vld [vmem:[%s4419] sm:$0xff]
      %s4421 = scalar_lea.vmem %s176, 8236
      %s4423 = ssub.s32 0, 4
      %s4424 = scalar_lea.vmem %s4421, %s4423
      %v4425 = vpack.c.bf16 %v4420, %v3426
      %4426 = vst [vmem:[%s4424] sm:$0xff] %v4425
      %s4427 = scalar_lea.vmem %s150, 16504
      %v4428 = vld [vmem:[%s4427] sm:$0xff]
      %s4429 = scalar_lea.vmem %s176, 60
      %s4431 = ssub.s32 0, 4
      %s4432 = scalar_lea.vmem %s4429, %s4431
      %v4433 = vpack.c.bf16 %v4428, %v3429
      %4434 = vst [vmem:[%s4432] sm:$0xff] %v4433
      %s4435 = scalar_lea.vmem %s150, 10360
      %v4436 = vld [vmem:[%s4435] sm:$0xff]
      %s4437 = scalar_lea.vmem %s176, 3132
      %s4439 = ssub.s32 0, 4
      %s4440 = scalar_lea.vmem %s4437, %s4439
      %v4441 = vpack.c.bf16 %v4436, %v3432
      %4442 = vst [vmem:[%s4440] sm:$0xff] %v4441
      %s4443 = scalar_lea.vmem %s150, 4216
      %v4444 = vld [vmem:[%s4443] sm:$0xff]
      %s4445 = scalar_lea.vmem %s176, 6204
      %s4447 = ssub.s32 0, 4
      %s4448 = scalar_lea.vmem %s4445, %s4447
      %v4449 = vpack.c.bf16 %v4444, %v3435
      %4450 = vst [vmem:[%s4448] sm:$0xff] %v4449
      %s4451 = scalar_lea.vmem %s150, 14456
      %v4452 = vld [vmem:[%s4451] sm:$0xff]
      %s4453 = scalar_lea.vmem %s176, 1084
      %s4455 = ssub.s32 0, 4
      %s4456 = scalar_lea.vmem %s4453, %s4455
      %v4457 = vpack.c.bf16 %v4452, %v3438
      %4458 = vst [vmem:[%s4456] sm:$0xff] %v4457
      %s4459 = scalar_lea.vmem %s150, 8312
      %v4460 = vld [vmem:[%s4459] sm:$0xff]
      %s4461 = scalar_lea.vmem %s176, 4156
      %s4463 = ssub.s32 0, 4
      %s4464 = scalar_lea.vmem %s4461, %s4463
      %v4465 = vpack.c.bf16 %v4460, %v3441
      %4466 = vst [vmem:[%s4464] sm:$0xff] %v4465
      %s4467 = scalar_lea.vmem %s150, 2168
      %v4468 = vld [vmem:[%s4467] sm:$0xff]
      %s4469 = scalar_lea.vmem %s176, 7228
      %s4471 = ssub.s32 0, 4
      %s4472 = scalar_lea.vmem %s4469, %s4471
      %v4473 = vpack.c.bf16 %v4468, %v3444
      %4474 = vst [vmem:[%s4472] sm:$0xff] %v4473
      %s4475 = scalar_lea.vmem %s150, 12408
      %v4476 = vld [vmem:[%s4475] sm:$0xff]
      %s4477 = scalar_lea.vmem %s176, 2108
      %s4479 = ssub.s32 0, 4
      %s4480 = scalar_lea.vmem %s4477, %s4479
      %v4481 = vpack.c.bf16 %v4476, %v3447
      %4482 = vst [vmem:[%s4480] sm:$0xff] %v4481
      %s4483 = scalar_lea.vmem %s150, 6264
      %v4484 = vld [vmem:[%s4483] sm:$0xff]
      %s4485 = scalar_lea.vmem %s176, 5180
      %s4487 = ssub.s32 0, 4
      %s4488 = scalar_lea.vmem %s4485, %s4487
      %v4489 = vpack.c.bf16 %v4484, %v3450
      %4490 = vst [vmem:[%s4488] sm:$0xff] %v4489
      %s4491 = scalar_lea.vmem %s150, 120
      %v4492 = vld [vmem:[%s4491] sm:$0xff]
      %s4493 = scalar_lea.vmem %s176, 8252
      %s4495 = ssub.s32 0, 4
      %s4496 = scalar_lea.vmem %s4493, %s4495
      %v4497 = vpack.c.bf16 %v4492, %v3453
      %4498 = vst [vmem:[%s4496] sm:$0xff] %v4497
      %s4499 = scalar_lea.vmem %s150, 16536
      %v4500 = vld [vmem:[%s4499] sm:$0xff]
      %s4501 = scalar_lea.vmem %s176, 76
      %s4503 = ssub.s32 0, 4
      %s4504 = scalar_lea.vmem %s4501, %s4503
      %v4505 = vpack.c.bf16 %v4500, %v3456
      %4506 = vst [vmem:[%s4504] sm:$0xff] %v4505
      %s4507 = scalar_lea.vmem %s150, 10392
      %v4508 = vld [vmem:[%s4507] sm:$0xff]
      %s4509 = scalar_lea.vmem %s176, 3148
      %s4511 = ssub.s32 0, 4
      %s4512 = scalar_lea.vmem %s4509, %s4511
      %v4513 = vpack.c.bf16 %v4508, %v3459
      %4514 = vst [vmem:[%s4512] sm:$0xff] %v4513
      %s4515 = scalar_lea.vmem %s150, 4248
      %v4516 = vld [vmem:[%s4515] sm:$0xff]
      %s4517 = scalar_lea.vmem %s176, 6220
      %s4519 = ssub.s32 0, 4
      %s4520 = scalar_lea.vmem %s4517, %s4519
      %v4521 = vpack.c.bf16 %v4516, %v3462
      %4522 = vst [vmem:[%s4520] sm:$0xff] %v4521
      %s4523 = scalar_lea.vmem %s150, 14488
      %v4524 = vld [vmem:[%s4523] sm:$0xff]
      %s4525 = scalar_lea.vmem %s176, 1100
      %s4527 = ssub.s32 0, 4
      %s4528 = scalar_lea.vmem %s4525, %s4527
      %v4529 = vpack.c.bf16 %v4524, %v3465
      %4530 = vst [vmem:[%s4528] sm:$0xff] %v4529
      %s4531 = scalar_lea.vmem %s150, 8344
      %v4532 = vld [vmem:[%s4531] sm:$0xff]
      %s4533 = scalar_lea.vmem %s176, 4172
      %s4535 = ssub.s32 0, 4
      %s4536 = scalar_lea.vmem %s4533, %s4535
      %v4537 = vpack.c.bf16 %v4532, %v3468
      %4538 = vst [vmem:[%s4536] sm:$0xff] %v4537
      %s4539 = scalar_lea.vmem %s150, 2200
      %v4540 = vld [vmem:[%s4539] sm:$0xff]
      %s4541 = scalar_lea.vmem %s176, 7244
      %s4543 = ssub.s32 0, 4
      %s4544 = scalar_lea.vmem %s4541, %s4543
      %v4545 = vpack.c.bf16 %v4540, %v3471
      %4546 = vst [vmem:[%s4544] sm:$0xff] %v4545
      %s4547 = scalar_lea.vmem %s150, 12440
      %v4548 = vld [vmem:[%s4547] sm:$0xff]
      %s4549 = scalar_lea.vmem %s176, 2124
      %s4551 = ssub.s32 0, 4
      %s4552 = scalar_lea.vmem %s4549, %s4551
      %v4553 = vpack.c.bf16 %v4548, %v3474
      %4554 = vst [vmem:[%s4552] sm:$0xff] %v4553
      %s4555 = scalar_lea.vmem %s150, 6296
      %v4556 = vld [vmem:[%s4555] sm:$0xff]
      %s4557 = scalar_lea.vmem %s176, 5196
      %s4559 = ssub.s32 0, 4
      %s4560 = scalar_lea.vmem %s4557, %s4559
      %v4561 = vpack.c.bf16 %v4556, %v3477
      %4562 = vst [vmem:[%s4560] sm:$0xff] %v4561
      %s4563 = scalar_lea.vmem %s150, 152
      %v4564 = vld [vmem:[%s4563] sm:$0xff]
      %s4565 = scalar_lea.vmem %s176, 8268
      %s4567 = ssub.s32 0, 4
      %s4568 = scalar_lea.vmem %s4565, %s4567
      %v4569 = vpack.c.bf16 %v4564, %v3480
      %4570 = vst [vmem:[%s4568] sm:$0xff] %v4569
      %s4571 = scalar_lea.vmem %s150, 16568
      %v4572 = vld [vmem:[%s4571] sm:$0xff]
      %s4573 = scalar_lea.vmem %s176, 92
      %s4575 = ssub.s32 0, 4
      %s4576 = scalar_lea.vmem %s4573, %s4575
      %v4577 = vpack.c.bf16 %v4572, %v3483
      %4578 = vst [vmem:[%s4576] sm:$0xff] %v4577
      %s4579 = scalar_lea.vmem %s150, 10424
      %v4580 = vld [vmem:[%s4579] sm:$0xff]
      %s4581 = scalar_lea.vmem %s176, 3164
      %s4583 = ssub.s32 0, 4
      %s4584 = scalar_lea.vmem %s4581, %s4583
      %v4585 = vpack.c.bf16 %v4580, %v3486
      %4586 = vst [vmem:[%s4584] sm:$0xff] %v4585
      %s4587 = scalar_lea.vmem %s150, 4280
      %v4588 = vld [vmem:[%s4587] sm:$0xff]
      %s4589 = scalar_lea.vmem %s176, 6236
      %s4591 = ssub.s32 0, 4
      %s4592 = scalar_lea.vmem %s4589, %s4591
      %v4593 = vpack.c.bf16 %v4588, %v3489
      %4594 = vst [vmem:[%s4592] sm:$0xff] %v4593
      %s4595 = scalar_lea.vmem %s150, 14520
      %v4596 = vld [vmem:[%s4595] sm:$0xff]
      %s4597 = scalar_lea.vmem %s176, 1116
      %s4599 = ssub.s32 0, 4
      %s4600 = scalar_lea.vmem %s4597, %s4599
      %v4601 = vpack.c.bf16 %v4596, %v3492
      %4602 = vst [vmem:[%s4600] sm:$0xff] %v4601
      %s4603 = scalar_lea.vmem %s150, 8376
      %v4604 = vld [vmem:[%s4603] sm:$0xff]
      %s4605 = scalar_lea.vmem %s176, 4188
      %s4607 = ssub.s32 0, 4
      %s4608 = scalar_lea.vmem %s4605, %s4607
      %v4609 = vpack.c.bf16 %v4604, %v3495
      %4610 = vst [vmem:[%s4608] sm:$0xff] %v4609
      %s4611 = scalar_lea.vmem %s150, 2232
      %v4612 = vld [vmem:[%s4611] sm:$0xff]
      %s4613 = scalar_lea.vmem %s176, 7260
      %s4615 = ssub.s32 0, 4
      %s4616 = scalar_lea.vmem %s4613, %s4615
      %v4617 = vpack.c.bf16 %v4612, %v3498
      %4618 = vst [vmem:[%s4616] sm:$0xff] %v4617
      %s4619 = scalar_lea.vmem %s150, 12472
      %v4620 = vld [vmem:[%s4619] sm:$0xff]
      %s4621 = scalar_lea.vmem %s176, 2140
      %s4623 = ssub.s32 0, 4
      %s4624 = scalar_lea.vmem %s4621, %s4623
      %v4625 = vpack.c.bf16 %v4620, %v3501
      %4626 = vst [vmem:[%s4624] sm:$0xff] %v4625
      %s4627 = scalar_lea.vmem %s150, 6328
      %v4628 = vld [vmem:[%s4627] sm:$0xff]
      %s4629 = scalar_lea.vmem %s176, 5212
      %s4631 = ssub.s32 0, 4
      %s4632 = scalar_lea.vmem %s4629, %s4631
      %v4633 = vpack.c.bf16 %v4628, %v3504
      %4634 = vst [vmem:[%s4632] sm:$0xff] %v4633
      %s4635 = scalar_lea.vmem %s150, 184
      %v4636 = vld [vmem:[%s4635] sm:$0xff]
      %s4637 = scalar_lea.vmem %s176, 8284
      %s4639 = ssub.s32 0, 4
      %s4640 = scalar_lea.vmem %s4637, %s4639
      %v4641 = vpack.c.bf16 %v4636, %v3507
      %4642 = vst [vmem:[%s4640] sm:$0xff] %v4641
      %s4643 = scalar_lea.vmem %s150, 16600
      %v4644 = vld [vmem:[%s4643] sm:$0xff]
      %s4645 = scalar_lea.vmem %s176, 108
      %s4647 = ssub.s32 0, 4
      %s4648 = scalar_lea.vmem %s4645, %s4647
      %v4649 = vpack.c.bf16 %v4644, %v3510
      %4650 = vst [vmem:[%s4648] sm:$0xff] %v4649
      %s4651 = scalar_lea.vmem %s150, 10456
      %v4652 = vld [vmem:[%s4651] sm:$0xff]
      %s4653 = scalar_lea.vmem %s176, 3180
      %s4655 = ssub.s32 0, 4
      %s4656 = scalar_lea.vmem %s4653, %s4655
      %v4657 = vpack.c.bf16 %v4652, %v3513
      %4658 = vst [vmem:[%s4656] sm:$0xff] %v4657
      %s4659 = scalar_lea.vmem %s150, 4312
      %v4660 = vld [vmem:[%s4659] sm:$0xff]
      %s4661 = scalar_lea.vmem %s176, 6252
      %s4663 = ssub.s32 0, 4
      %s4664 = scalar_lea.vmem %s4661, %s4663
      %v4665 = vpack.c.bf16 %v4660, %v3516
      %4666 = vst [vmem:[%s4664] sm:$0xff] %v4665
      %s4667 = scalar_lea.vmem %s150, 14552
      %v4668 = vld [vmem:[%s4667] sm:$0xff]
      %s4669 = scalar_lea.vmem %s176, 1132
      %s4671 = ssub.s32 0, 4
      %s4672 = scalar_lea.vmem %s4669, %s4671
      %v4673 = vpack.c.bf16 %v4668, %v3519
      %4674 = vst [vmem:[%s4672] sm:$0xff] %v4673
      %s4675 = scalar_lea.vmem %s150, 8408
      %v4676 = vld [vmem:[%s4675] sm:$0xff]
      %s4677 = scalar_lea.vmem %s176, 4204
      %s4679 = ssub.s32 0, 4
      %s4680 = scalar_lea.vmem %s4677, %s4679
      %v4681 = vpack.c.bf16 %v4676, %v3522
      %4682 = vst [vmem:[%s4680] sm:$0xff] %v4681
      %s4683 = scalar_lea.vmem %s150, 2264
      %v4684 = vld [vmem:[%s4683] sm:$0xff]
      %s4685 = scalar_lea.vmem %s176, 7276
      %s4687 = ssub.s32 0, 4
      %s4688 = scalar_lea.vmem %s4685, %s4687
      %v4689 = vpack.c.bf16 %v4684, %v3525
      %4690 = vst [vmem:[%s4688] sm:$0xff] %v4689
      %s4691 = scalar_lea.vmem %s150, 12504
      %v4692 = vld [vmem:[%s4691] sm:$0xff]
      %s4693 = scalar_lea.vmem %s176, 2156
      %s4695 = ssub.s32 0, 4
      %s4696 = scalar_lea.vmem %s4693, %s4695
      %v4697 = vpack.c.bf16 %v4692, %v3528
      %4698 = vst [vmem:[%s4696] sm:$0xff] %v4697
      %s4699 = scalar_lea.vmem %s150, 6360
      %v4700 = vld [vmem:[%s4699] sm:$0xff]
      %s4701 = scalar_lea.vmem %s176, 5228
      %s4703 = ssub.s32 0, 4
      %s4704 = scalar_lea.vmem %s4701, %s4703
      %v4705 = vpack.c.bf16 %v4700, %v3531
      %4706 = vst [vmem:[%s4704] sm:$0xff] %v4705
      %s4707 = scalar_lea.vmem %s150, 216
      %v4708 = vld [vmem:[%s4707] sm:$0xff]
      %s4709 = scalar_lea.vmem %s176, 8300
      %s4711 = ssub.s32 0, 4
      %s4712 = scalar_lea.vmem %s4709, %s4711
      %v4713 = vpack.c.bf16 %v4708, %v3534
      %4714 = vst [vmem:[%s4712] sm:$0xff] %v4713
      %s4715 = scalar_lea.vmem %s150, 16632
      %v4716 = vld [vmem:[%s4715] sm:$0xff]
      %s4717 = scalar_lea.vmem %s176, 124
      %s4719 = ssub.s32 0, 4
      %s4720 = scalar_lea.vmem %s4717, %s4719
      %v4721 = vpack.c.bf16 %v4716, %v3537
      %4722 = vst [vmem:[%s4720] sm:$0xff] %v4721
      %s4723 = scalar_lea.vmem %s150, 10488
      %v4724 = vld [vmem:[%s4723] sm:$0xff]
      %s4725 = scalar_lea.vmem %s176, 3196
      %s4727 = ssub.s32 0, 4
      %s4728 = scalar_lea.vmem %s4725, %s4727
      %v4729 = vpack.c.bf16 %v4724, %v3540
      %4730 = vst [vmem:[%s4728] sm:$0xff] %v4729
      %s4731 = scalar_lea.vmem %s150, 4344
      %v4732 = vld [vmem:[%s4731] sm:$0xff]
      %s4733 = scalar_lea.vmem %s176, 6268
      %s4735 = ssub.s32 0, 4
      %s4736 = scalar_lea.vmem %s4733, %s4735
      %v4737 = vpack.c.bf16 %v4732, %v3543
      %4738 = vst [vmem:[%s4736] sm:$0xff] %v4737
      %s4739 = scalar_lea.vmem %s150, 14584
      %v4740 = vld [vmem:[%s4739] sm:$0xff]
      %s4741 = scalar_lea.vmem %s176, 1148
      %s4743 = ssub.s32 0, 4
      %s4744 = scalar_lea.vmem %s4741, %s4743
      %v4745 = vpack.c.bf16 %v4740, %v3546
      %4746 = vst [vmem:[%s4744] sm:$0xff] %v4745
      %s4747 = scalar_lea.vmem %s150, 8440
      %v4748 = vld [vmem:[%s4747] sm:$0xff]
      %s4749 = scalar_lea.vmem %s176, 4220
      %s4751 = ssub.s32 0, 4
      %s4752 = scalar_lea.vmem %s4749, %s4751
      %v4753 = vpack.c.bf16 %v4748, %v3549
      %4754 = vst [vmem:[%s4752] sm:$0xff] %v4753
      %s4755 = scalar_lea.vmem %s150, 2296
      %v4756 = vld [vmem:[%s4755] sm:$0xff]
      %s4757 = scalar_lea.vmem %s176, 7292
      %s4759 = ssub.s32 0, 4
      %s4760 = scalar_lea.vmem %s4757, %s4759
      %v4761 = vpack.c.bf16 %v4756, %v3552
      %4762 = vst [vmem:[%s4760] sm:$0xff] %v4761
      %s4763 = scalar_lea.vmem %s150, 12536
      %v4764 = vld [vmem:[%s4763] sm:$0xff]
      %s4765 = scalar_lea.vmem %s176, 2172
      %s4767 = ssub.s32 0, 4
      %s4768 = scalar_lea.vmem %s4765, %s4767
      %v4769 = vpack.c.bf16 %v4764, %v3555
      %4770 = vst [vmem:[%s4768] sm:$0xff] %v4769
      %s4771 = scalar_lea.vmem %s150, 6392
      %v4772 = vld [vmem:[%s4771] sm:$0xff]
      %s4773 = scalar_lea.vmem %s176, 5244
      %s4775 = ssub.s32 0, 4
      %s4776 = scalar_lea.vmem %s4773, %s4775
      %v4777 = vpack.c.bf16 %v4772, %v3558
      %4778 = vst [vmem:[%s4776] sm:$0xff] %v4777
      %s4779 = scalar_lea.vmem %s150, 248
      %v4780 = vld [vmem:[%s4779] sm:$0xff]
      %s4781 = scalar_lea.vmem %s176, 8316
      %s4783 = ssub.s32 0, 4
      %s4784 = scalar_lea.vmem %s4781, %s4783
      %v4785 = vpack.c.bf16 %v4780, %v3561
      %4786 = vst [vmem:[%s4784] sm:$0xff] %v4785
      %s4787 = scalar_lea.vmem %s150, 16664
      %v4788 = vld [vmem:[%s4787] sm:$0xff]
      %s4789 = scalar_lea.vmem %s176, 140
      %s4791 = ssub.s32 0, 4
      %s4792 = scalar_lea.vmem %s4789, %s4791
      %v4793 = vpack.c.bf16 %v4788, %v3564
      %4794 = vst [vmem:[%s4792] sm:$0xff] %v4793
      %s4795 = scalar_lea.vmem %s150, 10520
      %v4796 = vld [vmem:[%s4795] sm:$0xff]
      %s4797 = scalar_lea.vmem %s176, 3212
      %s4799 = ssub.s32 0, 4
      %s4800 = scalar_lea.vmem %s4797, %s4799
      %v4801 = vpack.c.bf16 %v4796, %v3567
      %4802 = vst [vmem:[%s4800] sm:$0xff] %v4801
      %s4803 = scalar_lea.vmem %s150, 4376
      %v4804 = vld [vmem:[%s4803] sm:$0xff]
      %s4805 = scalar_lea.vmem %s176, 6284
      %s4807 = ssub.s32 0, 4
      %s4808 = scalar_lea.vmem %s4805, %s4807
      %v4809 = vpack.c.bf16 %v4804, %v3570
      %4810 = vst [vmem:[%s4808] sm:$0xff] %v4809
      %s4811 = scalar_lea.vmem %s150, 14616
      %v4812 = vld [vmem:[%s4811] sm:$0xff]
      %s4813 = scalar_lea.vmem %s176, 1164
      %s4815 = ssub.s32 0, 4
      %s4816 = scalar_lea.vmem %s4813, %s4815
      %v4817 = vpack.c.bf16 %v4812, %v3573
      %4818 = vst [vmem:[%s4816] sm:$0xff] %v4817
      %s4819 = scalar_lea.vmem %s150, 8472
      %v4820 = vld [vmem:[%s4819] sm:$0xff]
      %s4821 = scalar_lea.vmem %s176, 4236
      %s4823 = ssub.s32 0, 4
      %s4824 = scalar_lea.vmem %s4821, %s4823
      %v4825 = vpack.c.bf16 %v4820, %v3576
      %4826 = vst [vmem:[%s4824] sm:$0xff] %v4825
      %s4827 = scalar_lea.vmem %s150, 2328
      %v4828 = vld [vmem:[%s4827] sm:$0xff]
      %s4829 = scalar_lea.vmem %s176, 7308
      %s4831 = ssub.s32 0, 4
      %s4832 = scalar_lea.vmem %s4829, %s4831
      %v4833 = vpack.c.bf16 %v4828, %v3579
      %4834 = vst [vmem:[%s4832] sm:$0xff] %v4833
      %s4835 = scalar_lea.vmem %s150, 12568
      %v4836 = vld [vmem:[%s4835] sm:$0xff]
      %s4837 = scalar_lea.vmem %s176, 2188
      %s4839 = ssub.s32 0, 4
      %s4840 = scalar_lea.vmem %s4837, %s4839
      %v4841 = vpack.c.bf16 %v4836, %v3582
      %4842 = vst [vmem:[%s4840] sm:$0xff] %v4841
      %s4843 = scalar_lea.vmem %s150, 6424
      %v4844 = vld [vmem:[%s4843] sm:$0xff]
      %s4845 = scalar_lea.vmem %s176, 5260
      %s4847 = ssub.s32 0, 4
      %s4848 = scalar_lea.vmem %s4845, %s4847
      %v4849 = vpack.c.bf16 %v4844, %v3585
      %4850 = vst [vmem:[%s4848] sm:$0xff] %v4849
      %s4851 = scalar_lea.vmem %s150, 280
      %v4852 = vld [vmem:[%s4851] sm:$0xff]
      %s4853 = scalar_lea.vmem %s176, 8332
      %s4855 = ssub.s32 0, 4
      %s4856 = scalar_lea.vmem %s4853, %s4855
      %v4857 = vpack.c.bf16 %v4852, %v3588
      %4858 = vst [vmem:[%s4856] sm:$0xff] %v4857
      %s4859 = scalar_lea.vmem %s150, 16696
      %v4860 = vld [vmem:[%s4859] sm:$0xff]
      %s4861 = scalar_lea.vmem %s176, 156
      %s4863 = ssub.s32 0, 4
      %s4864 = scalar_lea.vmem %s4861, %s4863
      %v4865 = vpack.c.bf16 %v4860, %v3591
      %4866 = vst [vmem:[%s4864] sm:$0xff] %v4865
      %s4867 = scalar_lea.vmem %s150, 10552
      %v4868 = vld [vmem:[%s4867] sm:$0xff]
      %s4869 = scalar_lea.vmem %s176, 3228
      %s4871 = ssub.s32 0, 4
      %s4872 = scalar_lea.vmem %s4869, %s4871
      %v4873 = vpack.c.bf16 %v4868, %v3594
      %4874 = vst [vmem:[%s4872] sm:$0xff] %v4873
      %s4875 = scalar_lea.vmem %s150, 4408
      %v4876 = vld [vmem:[%s4875] sm:$0xff]
      %s4877 = scalar_lea.vmem %s176, 6300
      %s4879 = ssub.s32 0, 4
      %s4880 = scalar_lea.vmem %s4877, %s4879
      %v4881 = vpack.c.bf16 %v4876, %v3597
      %4882 = vst [vmem:[%s4880] sm:$0xff] %v4881
      %s4883 = scalar_lea.vmem %s150, 14648
      %v4884 = vld [vmem:[%s4883] sm:$0xff]
      %s4885 = scalar_lea.vmem %s176, 1180
      %s4887 = ssub.s32 0, 4
      %s4888 = scalar_lea.vmem %s4885, %s4887
      %v4889 = vpack.c.bf16 %v4884, %v3600
      %4890 = vst [vmem:[%s4888] sm:$0xff] %v4889
      %s4891 = scalar_lea.vmem %s150, 8504
      %v4892 = vld [vmem:[%s4891] sm:$0xff]
      %s4893 = scalar_lea.vmem %s176, 4252
      %s4895 = ssub.s32 0, 4
      %s4896 = scalar_lea.vmem %s4893, %s4895
      %v4897 = vpack.c.bf16 %v4892, %v3603
      %4898 = vst [vmem:[%s4896] sm:$0xff] %v4897
      %s4899 = scalar_lea.vmem %s150, 2360
      %v4900 = vld [vmem:[%s4899] sm:$0xff]
      %s4901 = scalar_lea.vmem %s176, 7324
      %s4903 = ssub.s32 0, 4
      %s4904 = scalar_lea.vmem %s4901, %s4903
      %v4905 = vpack.c.bf16 %v4900, %v3606
      %4906 = vst [vmem:[%s4904] sm:$0xff] %v4905
      %s4907 = scalar_lea.vmem %s150, 12600
      %v4908 = vld [vmem:[%s4907] sm:$0xff]
      %s4909 = scalar_lea.vmem %s176, 2204
      %s4911 = ssub.s32 0, 4
      %s4912 = scalar_lea.vmem %s4909, %s4911
      %v4913 = vpack.c.bf16 %v4908, %v3609
      %4914 = vst [vmem:[%s4912] sm:$0xff] %v4913
      %s4915 = scalar_lea.vmem %s150, 6456
      %v4916 = vld [vmem:[%s4915] sm:$0xff]
      %s4917 = scalar_lea.vmem %s176, 5276
      %s4919 = ssub.s32 0, 4
      %s4920 = scalar_lea.vmem %s4917, %s4919
      %v4921 = vpack.c.bf16 %v4916, %v3612
      %4922 = vst [vmem:[%s4920] sm:$0xff] %v4921
      %s4923 = scalar_lea.vmem %s150, 312
      %v4924 = vld [vmem:[%s4923] sm:$0xff]
      %s4925 = scalar_lea.vmem %s176, 8348
      %s4927 = ssub.s32 0, 4
      %s4928 = scalar_lea.vmem %s4925, %s4927
      %v4929 = vpack.c.bf16 %v4924, %v3615
      %4930 = vst [vmem:[%s4928] sm:$0xff] %v4929
      %s4931 = scalar_lea.vmem %s150, 16728
      %v4932 = vld [vmem:[%s4931] sm:$0xff]
      %s4933 = scalar_lea.vmem %s176, 172
      %s4935 = ssub.s32 0, 4
      %s4936 = scalar_lea.vmem %s4933, %s4935
      %v4937 = vpack.c.bf16 %v4932, %v3618
      %4938 = vst [vmem:[%s4936] sm:$0xff] %v4937
      %s4939 = scalar_lea.vmem %s150, 10584
      %v4940 = vld [vmem:[%s4939] sm:$0xff]
      %s4941 = scalar_lea.vmem %s176, 3244
      %s4943 = ssub.s32 0, 4
      %s4944 = scalar_lea.vmem %s4941, %s4943
      %v4945 = vpack.c.bf16 %v4940, %v3621
      %4946 = vst [vmem:[%s4944] sm:$0xff] %v4945
      %s4947 = scalar_lea.vmem %s150, 4440
      %v4948 = vld [vmem:[%s4947] sm:$0xff]
      %s4949 = scalar_lea.vmem %s176, 6316
      %s4951 = ssub.s32 0, 4
      %s4952 = scalar_lea.vmem %s4949, %s4951
      %v4953 = vpack.c.bf16 %v4948, %v3624
      %4954 = vst [vmem:[%s4952] sm:$0xff] %v4953
      %s4955 = scalar_lea.vmem %s150, 14680
      %v4956 = vld [vmem:[%s4955] sm:$0xff]
      %s4957 = scalar_lea.vmem %s176, 1196
      %s4959 = ssub.s32 0, 4
      %s4960 = scalar_lea.vmem %s4957, %s4959
      %v4961 = vpack.c.bf16 %v4956, %v3627
      %4962 = vst [vmem:[%s4960] sm:$0xff] %v4961
      %s4963 = scalar_lea.vmem %s150, 8536
      %v4964 = vld [vmem:[%s4963] sm:$0xff]
      %s4965 = scalar_lea.vmem %s176, 4268
      %s4967 = ssub.s32 0, 4
      %s4968 = scalar_lea.vmem %s4965, %s4967
      %v4969 = vpack.c.bf16 %v4964, %v3630
      %4970 = vst [vmem:[%s4968] sm:$0xff] %v4969
      %s4971 = scalar_lea.vmem %s150, 2392
      %v4972 = vld [vmem:[%s4971] sm:$0xff]
      %s4973 = scalar_lea.vmem %s176, 7340
      %s4975 = ssub.s32 0, 4
      %s4976 = scalar_lea.vmem %s4973, %s4975
      %v4977 = vpack.c.bf16 %v4972, %v3633
      %4978 = vst [vmem:[%s4976] sm:$0xff] %v4977
      %s4979 = scalar_lea.vmem %s150, 12632
      %v4980 = vld [vmem:[%s4979] sm:$0xff]
      %s4981 = scalar_lea.vmem %s176, 2220
      %s4983 = ssub.s32 0, 4
      %s4984 = scalar_lea.vmem %s4981, %s4983
      %v4985 = vpack.c.bf16 %v4980, %v3636
      %4986 = vst [vmem:[%s4984] sm:$0xff] %v4985
      %s4987 = scalar_lea.vmem %s150, 6488
      %v4988 = vld [vmem:[%s4987] sm:$0xff]
      %s4989 = scalar_lea.vmem %s176, 5292
      %s4991 = ssub.s32 0, 4
      %s4992 = scalar_lea.vmem %s4989, %s4991
      %v4993 = vpack.c.bf16 %v4988, %v3639
      %4994 = vst [vmem:[%s4992] sm:$0xff] %v4993
      %s4995 = scalar_lea.vmem %s150, 344
      %v4996 = vld [vmem:[%s4995] sm:$0xff]
      %s4997 = scalar_lea.vmem %s176, 8364
      %s4999 = ssub.s32 0, 4
      %s5000 = scalar_lea.vmem %s4997, %s4999
      %v5001 = vpack.c.bf16 %v4996, %v3642
      %5002 = vst [vmem:[%s5000] sm:$0xff] %v5001
      %s5003 = scalar_lea.vmem %s150, 16760
      %v5004 = vld [vmem:[%s5003] sm:$0xff]
      %s5005 = scalar_lea.vmem %s176, 188
      %s5007 = ssub.s32 0, 4
      %s5008 = scalar_lea.vmem %s5005, %s5007
      %v5009 = vpack.c.bf16 %v5004, %v3645
      %5010 = vst [vmem:[%s5008] sm:$0xff] %v5009
      %s5011 = scalar_lea.vmem %s150, 10616
      %v5012 = vld [vmem:[%s5011] sm:$0xff]
      %s5013 = scalar_lea.vmem %s176, 3260
      %s5015 = ssub.s32 0, 4
      %s5016 = scalar_lea.vmem %s5013, %s5015
      %v5017 = vpack.c.bf16 %v5012, %v3648
      %5018 = vst [vmem:[%s5016] sm:$0xff] %v5017
      %s5019 = scalar_lea.vmem %s150, 4472
      %v5020 = vld [vmem:[%s5019] sm:$0xff]
      %s5021 = scalar_lea.vmem %s176, 6332
      %s5023 = ssub.s32 0, 4
      %s5024 = scalar_lea.vmem %s5021, %s5023
      %v5025 = vpack.c.bf16 %v5020, %v3651
      %5026 = vst [vmem:[%s5024] sm:$0xff] %v5025
      %s5027 = scalar_lea.vmem %s150, 14712
      %v5028 = vld [vmem:[%s5027] sm:$0xff]
      %s5029 = scalar_lea.vmem %s176, 1212
      %s5031 = ssub.s32 0, 4
      %s5032 = scalar_lea.vmem %s5029, %s5031
      %v5033 = vpack.c.bf16 %v5028, %v3654
      %5034 = vst [vmem:[%s5032] sm:$0xff] %v5033
      %s5035 = scalar_lea.vmem %s150, 8568
      %v5036 = vld [vmem:[%s5035] sm:$0xff]
      %s5037 = scalar_lea.vmem %s176, 4284
      %s5039 = ssub.s32 0, 4
      %s5040 = scalar_lea.vmem %s5037, %s5039
      %v5041 = vpack.c.bf16 %v5036, %v3657
      %5042 = vst [vmem:[%s5040] sm:$0xff] %v5041
      %s5043 = scalar_lea.vmem %s150, 2424
      %v5044 = vld [vmem:[%s5043] sm:$0xff]
      %s5045 = scalar_lea.vmem %s176, 7356
      %s5047 = ssub.s32 0, 4
      %s5048 = scalar_lea.vmem %s5045, %s5047
      %v5049 = vpack.c.bf16 %v5044, %v3660
      %5050 = vst [vmem:[%s5048] sm:$0xff] %v5049
      %s5051 = scalar_lea.vmem %s150, 12664
      %v5052 = vld [vmem:[%s5051] sm:$0xff]
      %s5053 = scalar_lea.vmem %s176, 2236
      %s5055 = ssub.s32 0, 4
      %s5056 = scalar_lea.vmem %s5053, %s5055
      %v5057 = vpack.c.bf16 %v5052, %v3663
      %5058 = vst [vmem:[%s5056] sm:$0xff] %v5057
      %s5059 = scalar_lea.vmem %s150, 6520
      %v5060 = vld [vmem:[%s5059] sm:$0xff]
      %s5061 = scalar_lea.vmem %s176, 5308
      %s5063 = ssub.s32 0, 4
      %s5064 = scalar_lea.vmem %s5061, %s5063
      %v5065 = vpack.c.bf16 %v5060, %v3666
      %5066 = vst [vmem:[%s5064] sm:$0xff] %v5065
      %s5067 = scalar_lea.vmem %s150, 376
      %v5068 = vld [vmem:[%s5067] sm:$0xff]
      %s5069 = scalar_lea.vmem %s176, 8380
      %s5071 = ssub.s32 0, 4
      %s5072 = scalar_lea.vmem %s5069, %s5071
      %v5073 = vpack.c.bf16 %v5068, %v3669
      %5074 = vst [vmem:[%s5072] sm:$0xff] %v5073
      %s5075 = scalar_lea.vmem %s150, 16792
      %v5076 = vld [vmem:[%s5075] sm:$0xff]
      %s5077 = scalar_lea.vmem %s176, 204
      %s5079 = ssub.s32 0, 4
      %s5080 = scalar_lea.vmem %s5077, %s5079
      %v5081 = vpack.c.bf16 %v5076, %v3672
      %5082 = vst [vmem:[%s5080] sm:$0xff] %v5081
      %s5083 = scalar_lea.vmem %s150, 10648
      %v5084 = vld [vmem:[%s5083] sm:$0xff]
      %s5085 = scalar_lea.vmem %s176, 3276
      %s5087 = ssub.s32 0, 4
      %s5088 = scalar_lea.vmem %s5085, %s5087
      %v5089 = vpack.c.bf16 %v5084, %v3675
      %5090 = vst [vmem:[%s5088] sm:$0xff] %v5089
      %s5091 = scalar_lea.vmem %s150, 4504
      %v5092 = vld [vmem:[%s5091] sm:$0xff]
      %s5093 = scalar_lea.vmem %s176, 6348
      %s5095 = ssub.s32 0, 4
      %s5096 = scalar_lea.vmem %s5093, %s5095
      %v5097 = vpack.c.bf16 %v5092, %v3678
      %5098 = vst [vmem:[%s5096] sm:$0xff] %v5097
      %s5099 = scalar_lea.vmem %s150, 14744
      %v5100 = vld [vmem:[%s5099] sm:$0xff]
      %s5101 = scalar_lea.vmem %s176, 1228
      %s5103 = ssub.s32 0, 4
      %s5104 = scalar_lea.vmem %s5101, %s5103
      %v5105 = vpack.c.bf16 %v5100, %v3681
      %5106 = vst [vmem:[%s5104] sm:$0xff] %v5105
      %s5107 = scalar_lea.vmem %s150, 8600
      %v5108 = vld [vmem:[%s5107] sm:$0xff]
      %s5109 = scalar_lea.vmem %s176, 4300
      %s5111 = ssub.s32 0, 4
      %s5112 = scalar_lea.vmem %s5109, %s5111
      %v5113 = vpack.c.bf16 %v5108, %v3684
      %5114 = vst [vmem:[%s5112] sm:$0xff] %v5113
      %s5115 = scalar_lea.vmem %s150, 2456
      %v5116 = vld [vmem:[%s5115] sm:$0xff]
      %s5117 = scalar_lea.vmem %s176, 7372
      %s5119 = ssub.s32 0, 4
      %s5120 = scalar_lea.vmem %s5117, %s5119
      %v5121 = vpack.c.bf16 %v5116, %v3687
      %5122 = vst [vmem:[%s5120] sm:$0xff] %v5121
      %s5123 = scalar_lea.vmem %s150, 12696
      %v5124 = vld [vmem:[%s5123] sm:$0xff]
      %s5125 = scalar_lea.vmem %s176, 2252
      %s5127 = ssub.s32 0, 4
      %s5128 = scalar_lea.vmem %s5125, %s5127
      %v5129 = vpack.c.bf16 %v5124, %v3690
      %5130 = vst [vmem:[%s5128] sm:$0xff] %v5129
      %s5131 = scalar_lea.vmem %s150, 6552
      %v5132 = vld [vmem:[%s5131] sm:$0xff]
      %s5133 = scalar_lea.vmem %s176, 5324
      %s5135 = ssub.s32 0, 4
      %s5136 = scalar_lea.vmem %s5133, %s5135
      %v5137 = vpack.c.bf16 %v5132, %v3693
      %5138 = vst [vmem:[%s5136] sm:$0xff] %v5137
      %s5139 = scalar_lea.vmem %s150, 408
      %v5140 = vld [vmem:[%s5139] sm:$0xff]
      %s5141 = scalar_lea.vmem %s176, 8396
      %s5143 = ssub.s32 0, 4
      %s5144 = scalar_lea.vmem %s5141, %s5143
      %v5145 = vpack.c.bf16 %v5140, %v3696
      %5146 = vst [vmem:[%s5144] sm:$0xff] %v5145
      %s5147 = scalar_lea.vmem %s150, 16824
      %v5148 = vld [vmem:[%s5147] sm:$0xff]
      %s5149 = scalar_lea.vmem %s176, 220
      %s5151 = ssub.s32 0, 4
      %s5152 = scalar_lea.vmem %s5149, %s5151
      %v5153 = vpack.c.bf16 %v5148, %v3699
      %5154 = vst [vmem:[%s5152] sm:$0xff] %v5153
      %s5155 = scalar_lea.vmem %s150, 10680
      %v5156 = vld [vmem:[%s5155] sm:$0xff]
      %s5157 = scalar_lea.vmem %s176, 3292
      %s5159 = ssub.s32 0, 4
      %s5160 = scalar_lea.vmem %s5157, %s5159
      %v5161 = vpack.c.bf16 %v5156, %v3702
      %5162 = vst [vmem:[%s5160] sm:$0xff] %v5161
      %s5163 = scalar_lea.vmem %s150, 4536
      %v5164 = vld [vmem:[%s5163] sm:$0xff]
      %s5165 = scalar_lea.vmem %s176, 6364
      %s5167 = ssub.s32 0, 4
      %s5168 = scalar_lea.vmem %s5165, %s5167
      %v5169 = vpack.c.bf16 %v5164, %v3705
      %5170 = vst [vmem:[%s5168] sm:$0xff] %v5169
      %s5171 = scalar_lea.vmem %s150, 14776
      %v5172 = vld [vmem:[%s5171] sm:$0xff]
      %s5173 = scalar_lea.vmem %s176, 1244
      %s5175 = ssub.s32 0, 4
      %s5176 = scalar_lea.vmem %s5173, %s5175
      %v5177 = vpack.c.bf16 %v5172, %v3708
      %5178 = vst [vmem:[%s5176] sm:$0xff] %v5177
      %s5179 = scalar_lea.vmem %s150, 8632
      %v5180 = vld [vmem:[%s5179] sm:$0xff]
      %s5181 = scalar_lea.vmem %s176, 4316
      %s5183 = ssub.s32 0, 4
      %s5184 = scalar_lea.vmem %s5181, %s5183
      %v5185 = vpack.c.bf16 %v5180, %v3711
      %5186 = vst [vmem:[%s5184] sm:$0xff] %v5185
      %s5187 = scalar_lea.vmem %s150, 2488
      %v5188 = vld [vmem:[%s5187] sm:$0xff]
      %s5189 = scalar_lea.vmem %s176, 7388
      %s5191 = ssub.s32 0, 4
      %s5192 = scalar_lea.vmem %s5189, %s5191
      %v5193 = vpack.c.bf16 %v5188, %v3714
      %5194 = vst [vmem:[%s5192] sm:$0xff] %v5193
      %s5195 = scalar_lea.vmem %s150, 12728
      %v5196 = vld [vmem:[%s5195] sm:$0xff]
      %s5197 = scalar_lea.vmem %s176, 2268
      %s5199 = ssub.s32 0, 4
      %s5200 = scalar_lea.vmem %s5197, %s5199
      %v5201 = vpack.c.bf16 %v5196, %v3717
      %5202 = vst [vmem:[%s5200] sm:$0xff] %v5201
      %s5203 = scalar_lea.vmem %s150, 6584
      %v5204 = vld [vmem:[%s5203] sm:$0xff]
      %s5205 = scalar_lea.vmem %s176, 5340
      %s5207 = ssub.s32 0, 4
      %s5208 = scalar_lea.vmem %s5205, %s5207
      %v5209 = vpack.c.bf16 %v5204, %v3720
      %5210 = vst [vmem:[%s5208] sm:$0xff] %v5209
      %s5211 = scalar_lea.vmem %s150, 440
      %v5212 = vld [vmem:[%s5211] sm:$0xff]
      %s5213 = scalar_lea.vmem %s176, 8412
      %s5215 = ssub.s32 0, 4
      %s5216 = scalar_lea.vmem %s5213, %s5215
      %v5217 = vpack.c.bf16 %v5212, %v3723
      %5218 = vst [vmem:[%s5216] sm:$0xff] %v5217
      %s5219 = scalar_lea.vmem %s150, 16856
      %v5220 = vld [vmem:[%s5219] sm:$0xff]
      %s5221 = scalar_lea.vmem %s176, 236
      %s5223 = ssub.s32 0, 4
      %s5224 = scalar_lea.vmem %s5221, %s5223
      %v5225 = vpack.c.bf16 %v5220, %v3726
      %5226 = vst [vmem:[%s5224] sm:$0xff] %v5225
      %s5227 = scalar_lea.vmem %s150, 10712
      %v5228 = vld [vmem:[%s5227] sm:$0xff]
      %s5229 = scalar_lea.vmem %s176, 3308
      %s5231 = ssub.s32 0, 4
      %s5232 = scalar_lea.vmem %s5229, %s5231
      %v5233 = vpack.c.bf16 %v5228, %v3729
      %5234 = vst [vmem:[%s5232] sm:$0xff] %v5233
      %s5235 = scalar_lea.vmem %s150, 4568
      %v5236 = vld [vmem:[%s5235] sm:$0xff]
      %s5237 = scalar_lea.vmem %s176, 6380
      %s5239 = ssub.s32 0, 4
      %s5240 = scalar_lea.vmem %s5237, %s5239
      %v5241 = vpack.c.bf16 %v5236, %v3732
      %5242 = vst [vmem:[%s5240] sm:$0xff] %v5241
      %s5243 = scalar_lea.vmem %s150, 14808
      %v5244 = vld [vmem:[%s5243] sm:$0xff]
      %s5245 = scalar_lea.vmem %s176, 1260
      %s5247 = ssub.s32 0, 4
      %s5248 = scalar_lea.vmem %s5245, %s5247
      %v5249 = vpack.c.bf16 %v5244, %v3735
      %5250 = vst [vmem:[%s5248] sm:$0xff] %v5249
      %s5251 = scalar_lea.vmem %s150, 8664
      %v5252 = vld [vmem:[%s5251] sm:$0xff]
      %s5253 = scalar_lea.vmem %s176, 4332
      %s5255 = ssub.s32 0, 4
      %s5256 = scalar_lea.vmem %s5253, %s5255
      %v5257 = vpack.c.bf16 %v5252, %v3738
      %5258 = vst [vmem:[%s5256] sm:$0xff] %v5257
      %s5259 = scalar_lea.vmem %s150, 2520
      %v5260 = vld [vmem:[%s5259] sm:$0xff]
      %s5261 = scalar_lea.vmem %s176, 7404
      %s5263 = ssub.s32 0, 4
      %s5264 = scalar_lea.vmem %s5261, %s5263
      %v5265 = vpack.c.bf16 %v5260, %v3741
      %5266 = vst [vmem:[%s5264] sm:$0xff] %v5265
      %s5267 = scalar_lea.vmem %s150, 12760
      %v5268 = vld [vmem:[%s5267] sm:$0xff]
      %s5269 = scalar_lea.vmem %s176, 2284
      %s5271 = ssub.s32 0, 4
      %s5272 = scalar_lea.vmem %s5269, %s5271
      %v5273 = vpack.c.bf16 %v5268, %v3744
      %5274 = vst [vmem:[%s5272] sm:$0xff] %v5273
      %s5275 = scalar_lea.vmem %s150, 6616
      %v5276 = vld [vmem:[%s5275] sm:$0xff]
      %s5277 = scalar_lea.vmem %s176, 5356
      %s5279 = ssub.s32 0, 4
      %s5280 = scalar_lea.vmem %s5277, %s5279
      %v5281 = vpack.c.bf16 %v5276, %v3747
      %5282 = vst [vmem:[%s5280] sm:$0xff] %v5281
      %s5283 = scalar_lea.vmem %s150, 472
      %v5284 = vld [vmem:[%s5283] sm:$0xff]
      %s5285 = scalar_lea.vmem %s176, 8428
      %s5287 = ssub.s32 0, 4
      %s5288 = scalar_lea.vmem %s5285, %s5287
      %v5289 = vpack.c.bf16 %v5284, %v3750
      %5290 = vst [vmem:[%s5288] sm:$0xff] %v5289
      %s5291 = scalar_lea.vmem %s150, 16888
      %v5292 = vld [vmem:[%s5291] sm:$0xff]
      %s5293 = scalar_lea.vmem %s176, 252
      %s5295 = ssub.s32 0, 4
      %s5296 = scalar_lea.vmem %s5293, %s5295
      %v5297 = vpack.c.bf16 %v5292, %v3753
      %5298 = vst [vmem:[%s5296] sm:$0xff] %v5297
      %s5299 = scalar_lea.vmem %s150, 10744
      %v5300 = vld [vmem:[%s5299] sm:$0xff]
      %s5301 = scalar_lea.vmem %s176, 3324
      %s5303 = ssub.s32 0, 4
      %s5304 = scalar_lea.vmem %s5301, %s5303
      %v5305 = vpack.c.bf16 %v5300, %v3756
      %5306 = vst [vmem:[%s5304] sm:$0xff] %v5305
      %s5307 = scalar_lea.vmem %s150, 4600
      %v5308 = vld [vmem:[%s5307] sm:$0xff]
      %s5309 = scalar_lea.vmem %s176, 6396
      %s5311 = ssub.s32 0, 4
      %s5312 = scalar_lea.vmem %s5309, %s5311
      %v5313 = vpack.c.bf16 %v5308, %v3759
      %5314 = vst [vmem:[%s5312] sm:$0xff] %v5313
      %s5315 = scalar_lea.vmem %s150, 14840
      %v5316 = vld [vmem:[%s5315] sm:$0xff]
      %s5317 = scalar_lea.vmem %s176, 1276
      %s5319 = ssub.s32 0, 4
      %s5320 = scalar_lea.vmem %s5317, %s5319
      %v5321 = vpack.c.bf16 %v5316, %v3762
      %5322 = vst [vmem:[%s5320] sm:$0xff] %v5321
      %s5323 = scalar_lea.vmem %s150, 8696
      %v5324 = vld [vmem:[%s5323] sm:$0xff]
      %s5325 = scalar_lea.vmem %s176, 4348
      %s5327 = ssub.s32 0, 4
      %s5328 = scalar_lea.vmem %s5325, %s5327
      %v5329 = vpack.c.bf16 %v5324, %v3765
      %5330 = vst [vmem:[%s5328] sm:$0xff] %v5329
      %s5331 = scalar_lea.vmem %s150, 2552
      %v5332 = vld [vmem:[%s5331] sm:$0xff]
      %s5333 = scalar_lea.vmem %s176, 7420
      %s5335 = ssub.s32 0, 4
      %s5336 = scalar_lea.vmem %s5333, %s5335
      %v5337 = vpack.c.bf16 %v5332, %v3768
      %5338 = vst [vmem:[%s5336] sm:$0xff] %v5337
      %s5339 = scalar_lea.vmem %s150, 12792
      %v5340 = vld [vmem:[%s5339] sm:$0xff]
      %s5341 = scalar_lea.vmem %s176, 2300
      %s5343 = ssub.s32 0, 4
      %s5344 = scalar_lea.vmem %s5341, %s5343
      %v5345 = vpack.c.bf16 %v5340, %v3771
      %5346 = vst [vmem:[%s5344] sm:$0xff] %v5345
      %s5347 = scalar_lea.vmem %s150, 6648
      %v5348 = vld [vmem:[%s5347] sm:$0xff]
      %s5349 = scalar_lea.vmem %s176, 5372
      %s5351 = ssub.s32 0, 4
      %s5352 = scalar_lea.vmem %s5349, %s5351
      %v5353 = vpack.c.bf16 %v5348, %v3774
      %5354 = vst [vmem:[%s5352] sm:$0xff] %v5353
      %s5355 = scalar_lea.vmem %s150, 504
      %v5356 = vld [vmem:[%s5355] sm:$0xff]
      %s5357 = scalar_lea.vmem %s176, 8444
      %s5359 = ssub.s32 0, 4
      %s5360 = scalar_lea.vmem %s5357, %s5359
      %v5361 = vpack.c.bf16 %v5356, %v3777
      %5362 = vst [vmem:[%s5360] sm:$0xff] %v5361
      %s5363 = scalar_lea.vmem %s150, 16920
      %v5364 = vld [vmem:[%s5363] sm:$0xff]
      %s5365 = scalar_lea.vmem %s176, 268
      %s5367 = ssub.s32 0, 4
      %s5368 = scalar_lea.vmem %s5365, %s5367
      %v5369 = vpack.c.bf16 %v5364, %v3780
      %5370 = vst [vmem:[%s5368] sm:$0xff] %v5369
      %s5371 = scalar_lea.vmem %s150, 10776
      %v5372 = vld [vmem:[%s5371] sm:$0xff]
      %s5373 = scalar_lea.vmem %s176, 3340
      %s5375 = ssub.s32 0, 4
      %s5376 = scalar_lea.vmem %s5373, %s5375
      %v5377 = vpack.c.bf16 %v5372, %v3783
      %5378 = vst [vmem:[%s5376] sm:$0xff] %v5377
      %s5379 = scalar_lea.vmem %s150, 4632
      %v5380 = vld [vmem:[%s5379] sm:$0xff]
      %s5381 = scalar_lea.vmem %s176, 6412
      %s5383 = ssub.s32 0, 4
      %s5384 = scalar_lea.vmem %s5381, %s5383
      %v5385 = vpack.c.bf16 %v5380, %v3786
      %5386 = vst [vmem:[%s5384] sm:$0xff] %v5385
      %s5387 = scalar_lea.vmem %s150, 14872
      %v5388 = vld [vmem:[%s5387] sm:$0xff]
      %s5389 = scalar_lea.vmem %s176, 1292
      %s5391 = ssub.s32 0, 4
      %s5392 = scalar_lea.vmem %s5389, %s5391
      %v5393 = vpack.c.bf16 %v5388, %v3789
      %5394 = vst [vmem:[%s5392] sm:$0xff] %v5393
      %s5395 = scalar_lea.vmem %s150, 8728
      %v5396 = vld [vmem:[%s5395] sm:$0xff]
      %s5397 = scalar_lea.vmem %s176, 4364
      %s5399 = ssub.s32 0, 4
      %s5400 = scalar_lea.vmem %s5397, %s5399
      %v5401 = vpack.c.bf16 %v5396, %v3792
      %5402 = vst [vmem:[%s5400] sm:$0xff] %v5401
      %s5403 = scalar_lea.vmem %s150, 2584
      %v5404 = vld [vmem:[%s5403] sm:$0xff]
      %s5405 = scalar_lea.vmem %s176, 7436
      %s5407 = ssub.s32 0, 4
      %s5408 = scalar_lea.vmem %s5405, %s5407
      %v5409 = vpack.c.bf16 %v5404, %v3795
      %5410 = vst [vmem:[%s5408] sm:$0xff] %v5409
      %s5411 = scalar_lea.vmem %s150, 12824
      %v5412 = vld [vmem:[%s5411] sm:$0xff]
      %s5413 = scalar_lea.vmem %s176, 2316
      %s5415 = ssub.s32 0, 4
      %s5416 = scalar_lea.vmem %s5413, %s5415
      %v5417 = vpack.c.bf16 %v5412, %v3798
      %5418 = vst [vmem:[%s5416] sm:$0xff] %v5417
      %s5419 = scalar_lea.vmem %s150, 6680
      %v5420 = vld [vmem:[%s5419] sm:$0xff]
      %s5421 = scalar_lea.vmem %s176, 5388
      %s5423 = ssub.s32 0, 4
      %s5424 = scalar_lea.vmem %s5421, %s5423
      %v5425 = vpack.c.bf16 %v5420, %v3801
      %5426 = vst [vmem:[%s5424] sm:$0xff] %v5425
      %s5427 = scalar_lea.vmem %s150, 536
      %v5428 = vld [vmem:[%s5427] sm:$0xff]
      %s5429 = scalar_lea.vmem %s176, 8460
      %s5431 = ssub.s32 0, 4
      %s5432 = scalar_lea.vmem %s5429, %s5431
      %v5433 = vpack.c.bf16 %v5428, %v3804
      %5434 = vst [vmem:[%s5432] sm:$0xff] %v5433
      %s5435 = scalar_lea.vmem %s150, 16952
      %v5436 = vld [vmem:[%s5435] sm:$0xff]
      %s5437 = scalar_lea.vmem %s176, 284
      %s5439 = ssub.s32 0, 4
      %s5440 = scalar_lea.vmem %s5437, %s5439
      %v5441 = vpack.c.bf16 %v5436, %v3807
      %5442 = vst [vmem:[%s5440] sm:$0xff] %v5441
      %s5443 = scalar_lea.vmem %s150, 10808
      %v5444 = vld [vmem:[%s5443] sm:$0xff]
      %s5445 = scalar_lea.vmem %s176, 3356
      %s5447 = ssub.s32 0, 4
      %s5448 = scalar_lea.vmem %s5445, %s5447
      %v5449 = vpack.c.bf16 %v5444, %v3810
      %5450 = vst [vmem:[%s5448] sm:$0xff] %v5449
      %s5451 = scalar_lea.vmem %s150, 4664
      %v5452 = vld [vmem:[%s5451] sm:$0xff]
      %s5453 = scalar_lea.vmem %s176, 6428
      %s5455 = ssub.s32 0, 4
      %s5456 = scalar_lea.vmem %s5453, %s5455
      %v5457 = vpack.c.bf16 %v5452, %v3813
      %5458 = vst [vmem:[%s5456] sm:$0xff] %v5457
      %s5459 = scalar_lea.vmem %s150, 14904
      %v5460 = vld [vmem:[%s5459] sm:$0xff]
      %s5461 = scalar_lea.vmem %s176, 1308
      %s5463 = ssub.s32 0, 4
      %s5464 = scalar_lea.vmem %s5461, %s5463
      %v5465 = vpack.c.bf16 %v5460, %v3816
      %5466 = vst [vmem:[%s5464] sm:$0xff] %v5465
      %s5467 = scalar_lea.vmem %s150, 8760
      %v5468 = vld [vmem:[%s5467] sm:$0xff]
      %s5469 = scalar_lea.vmem %s176, 4380
      %s5471 = ssub.s32 0, 4
      %s5472 = scalar_lea.vmem %s5469, %s5471
      %v5473 = vpack.c.bf16 %v5468, %v3819
      %5474 = vst [vmem:[%s5472] sm:$0xff] %v5473
      %s5475 = scalar_lea.vmem %s150, 2616
      %v5476 = vld [vmem:[%s5475] sm:$0xff]
      %s5477 = scalar_lea.vmem %s176, 7452
      %s5479 = ssub.s32 0, 4
      %s5480 = scalar_lea.vmem %s5477, %s5479
      %v5481 = vpack.c.bf16 %v5476, %v3822
      %5482 = vst [vmem:[%s5480] sm:$0xff] %v5481
      %s5483 = scalar_lea.vmem %s150, 12856
      %v5484 = vld [vmem:[%s5483] sm:$0xff]
      %s5485 = scalar_lea.vmem %s176, 2332
      %s5487 = ssub.s32 0, 4
      %s5488 = scalar_lea.vmem %s5485, %s5487
      %v5489 = vpack.c.bf16 %v5484, %v3825
      %5490 = vst [vmem:[%s5488] sm:$0xff] %v5489
      %s5491 = scalar_lea.vmem %s150, 6712
      %v5492 = vld [vmem:[%s5491] sm:$0xff]
      %s5493 = scalar_lea.vmem %s176, 5404
      %s5495 = ssub.s32 0, 4
      %s5496 = scalar_lea.vmem %s5493, %s5495
      %v5497 = vpack.c.bf16 %v5492, %v3828
      %5498 = vst [vmem:[%s5496] sm:$0xff] %v5497
      %s5499 = scalar_lea.vmem %s150, 568
      %v5500 = vld [vmem:[%s5499] sm:$0xff]
      %s5501 = scalar_lea.vmem %s176, 8476
      %s5503 = ssub.s32 0, 4
      %s5504 = scalar_lea.vmem %s5501, %s5503
      %v5505 = vpack.c.bf16 %v5500, %v3831
      %5506 = vst [vmem:[%s5504] sm:$0xff] %v5505
      %s5507 = scalar_lea.vmem %s150, 16984
      %v5508 = vld [vmem:[%s5507] sm:$0xff]
      %s5509 = scalar_lea.vmem %s176, 300
      %s5511 = ssub.s32 0, 4
      %s5512 = scalar_lea.vmem %s5509, %s5511
      %v5513 = vpack.c.bf16 %v5508, %v3834
      %5514 = vst [vmem:[%s5512] sm:$0xff] %v5513
      %s5515 = scalar_lea.vmem %s150, 10840
      %v5516 = vld [vmem:[%s5515] sm:$0xff]
      %s5517 = scalar_lea.vmem %s176, 3372
      %s5519 = ssub.s32 0, 4
      %s5520 = scalar_lea.vmem %s5517, %s5519
      %v5521 = vpack.c.bf16 %v5516, %v3837
      %5522 = vst [vmem:[%s5520] sm:$0xff] %v5521
      %s5523 = scalar_lea.vmem %s150, 4696
      %v5524 = vld [vmem:[%s5523] sm:$0xff]
      %s5525 = scalar_lea.vmem %s176, 6444
      %s5527 = ssub.s32 0, 4
      %s5528 = scalar_lea.vmem %s5525, %s5527
      %v5529 = vpack.c.bf16 %v5524, %v3840
      %5530 = vst [vmem:[%s5528] sm:$0xff] %v5529
      %s5531 = scalar_lea.vmem %s150, 14936
      %v5532 = vld [vmem:[%s5531] sm:$0xff]
      %s5533 = scalar_lea.vmem %s176, 1324
      %s5535 = ssub.s32 0, 4
      %s5536 = scalar_lea.vmem %s5533, %s5535
      %v5537 = vpack.c.bf16 %v5532, %v3843
      %5538 = vst [vmem:[%s5536] sm:$0xff] %v5537
      %s5539 = scalar_lea.vmem %s150, 8792
      %v5540 = vld [vmem:[%s5539] sm:$0xff]
      %s5541 = scalar_lea.vmem %s176, 4396
      %s5543 = ssub.s32 0, 4
      %s5544 = scalar_lea.vmem %s5541, %s5543
      %v5545 = vpack.c.bf16 %v5540, %v3846
      %5546 = vst [vmem:[%s5544] sm:$0xff] %v5545
      %s5547 = scalar_lea.vmem %s150, 2648
      %v5548 = vld [vmem:[%s5547] sm:$0xff]
      %s5549 = scalar_lea.vmem %s176, 7468
      %s5551 = ssub.s32 0, 4
      %s5552 = scalar_lea.vmem %s5549, %s5551
      %v5553 = vpack.c.bf16 %v5548, %v3849
      %5554 = vst [vmem:[%s5552] sm:$0xff] %v5553
      %s5555 = scalar_lea.vmem %s150, 12888
      %v5556 = vld [vmem:[%s5555] sm:$0xff]
      %s5557 = scalar_lea.vmem %s176, 2348
      %s5559 = ssub.s32 0, 4
      %s5560 = scalar_lea.vmem %s5557, %s5559
      %v5561 = vpack.c.bf16 %v5556, %v3852
      %5562 = vst [vmem:[%s5560] sm:$0xff] %v5561
      %s5563 = scalar_lea.vmem %s150, 6744
      %v5564 = vld [vmem:[%s5563] sm:$0xff]
      %s5565 = scalar_lea.vmem %s176, 5420
      %s5567 = ssub.s32 0, 4
      %s5568 = scalar_lea.vmem %s5565, %s5567
      %v5569 = vpack.c.bf16 %v5564, %v3855
      %5570 = vst [vmem:[%s5568] sm:$0xff] %v5569
      %s5571 = scalar_lea.vmem %s150, 600
      %v5572 = vld [vmem:[%s5571] sm:$0xff]
      %s5573 = scalar_lea.vmem %s176, 8492
      %s5575 = ssub.s32 0, 4
      %s5576 = scalar_lea.vmem %s5573, %s5575
      %v5577 = vpack.c.bf16 %v5572, %v3858
      %5578 = vst [vmem:[%s5576] sm:$0xff] %v5577
      %s5579 = scalar_lea.vmem %s150, 17016
      %v5580 = vld [vmem:[%s5579] sm:$0xff]
      %s5581 = scalar_lea.vmem %s176, 316
      %s5583 = ssub.s32 0, 4
      %s5584 = scalar_lea.vmem %s5581, %s5583
      %v5585 = vpack.c.bf16 %v5580, %v3861
      %5586 = vst [vmem:[%s5584] sm:$0xff] %v5585
      %s5587 = scalar_lea.vmem %s150, 10872
      %v5588 = vld [vmem:[%s5587] sm:$0xff]
      %s5589 = scalar_lea.vmem %s176, 3388
      %s5591 = ssub.s32 0, 4
      %s5592 = scalar_lea.vmem %s5589, %s5591
      %v5593 = vpack.c.bf16 %v5588, %v3864
      %5594 = vst [vmem:[%s5592] sm:$0xff] %v5593
      %s5595 = scalar_lea.vmem %s150, 4728
      %v5596 = vld [vmem:[%s5595] sm:$0xff]
      %s5597 = scalar_lea.vmem %s176, 6460
      %s5599 = ssub.s32 0, 4
      %s5600 = scalar_lea.vmem %s5597, %s5599
      %v5601 = vpack.c.bf16 %v5596, %v3867
      %5602 = vst [vmem:[%s5600] sm:$0xff] %v5601
      %s5603 = scalar_lea.vmem %s150, 14968
      %v5604 = vld [vmem:[%s5603] sm:$0xff]
      %s5605 = scalar_lea.vmem %s176, 1340
      %s5607 = ssub.s32 0, 4
      %s5608 = scalar_lea.vmem %s5605, %s5607
      %v5609 = vpack.c.bf16 %v5604, %v3870
      %5610 = vst [vmem:[%s5608] sm:$0xff] %v5609
      %s5611 = scalar_lea.vmem %s150, 8824
      %v5612 = vld [vmem:[%s5611] sm:$0xff]
      %s5613 = scalar_lea.vmem %s176, 4412
      %s5615 = ssub.s32 0, 4
      %s5616 = scalar_lea.vmem %s5613, %s5615
      %v5617 = vpack.c.bf16 %v5612, %v3873
      %5618 = vst [vmem:[%s5616] sm:$0xff] %v5617
      %s5619 = scalar_lea.vmem %s150, 2680
      %v5620 = vld [vmem:[%s5619] sm:$0xff]
      %s5621 = scalar_lea.vmem %s176, 7484
      %s5623 = ssub.s32 0, 4
      %s5624 = scalar_lea.vmem %s5621, %s5623
      %v5625 = vpack.c.bf16 %v5620, %v3876
      %5626 = vst [vmem:[%s5624] sm:$0xff] %v5625
      %s5627 = scalar_lea.vmem %s150, 12920
      %v5628 = vld [vmem:[%s5627] sm:$0xff]
      %s5629 = scalar_lea.vmem %s176, 2364
      %s5631 = ssub.s32 0, 4
      %s5632 = scalar_lea.vmem %s5629, %s5631
      %v5633 = vpack.c.bf16 %v5628, %v3879
      %5634 = vst [vmem:[%s5632] sm:$0xff] %v5633
      %s5635 = scalar_lea.vmem %s150, 6776
      %v5636 = vld [vmem:[%s5635] sm:$0xff]
      %s5637 = scalar_lea.vmem %s176, 5436
      %s5639 = ssub.s32 0, 4
      %s5640 = scalar_lea.vmem %s5637, %s5639
      %v5641 = vpack.c.bf16 %v5636, %v3882
      %5642 = vst [vmem:[%s5640] sm:$0xff] %v5641
      %s5643 = scalar_lea.vmem %s150, 632
      %v5644 = vld [vmem:[%s5643] sm:$0xff]
      %s5645 = scalar_lea.vmem %s176, 8508
      %s5647 = ssub.s32 0, 4
      %s5648 = scalar_lea.vmem %s5645, %s5647
      %v5649 = vpack.c.bf16 %v5644, %v3885
      %5650 = vst [vmem:[%s5648] sm:$0xff] %v5649
      %s5651 = scalar_lea.vmem %s150, 17048
      %v5652 = vld [vmem:[%s5651] sm:$0xff]
      %s5653 = scalar_lea.vmem %s176, 332
      %s5655 = ssub.s32 0, 4
      %s5656 = scalar_lea.vmem %s5653, %s5655
      %v5657 = vpack.c.bf16 %v5652, %v3888
      %5658 = vst [vmem:[%s5656] sm:$0xff] %v5657
      %s5659 = scalar_lea.vmem %s150, 10904
      %v5660 = vld [vmem:[%s5659] sm:$0xff]
      %s5661 = scalar_lea.vmem %s176, 3404
      %s5663 = ssub.s32 0, 4
      %s5664 = scalar_lea.vmem %s5661, %s5663
      %v5665 = vpack.c.bf16 %v5660, %v3891
      %5666 = vst [vmem:[%s5664] sm:$0xff] %v5665
      %s5667 = scalar_lea.vmem %s150, 4760
      %v5668 = vld [vmem:[%s5667] sm:$0xff]
      %s5669 = scalar_lea.vmem %s176, 6476
      %s5671 = ssub.s32 0, 4
      %s5672 = scalar_lea.vmem %s5669, %s5671
      %v5673 = vpack.c.bf16 %v5668, %v3894
      %5674 = vst [vmem:[%s5672] sm:$0xff] %v5673
      %s5675 = scalar_lea.vmem %s150, 15000
      %v5676 = vld [vmem:[%s5675] sm:$0xff]
      %s5677 = scalar_lea.vmem %s176, 1356
      %s5679 = ssub.s32 0, 4
      %s5680 = scalar_lea.vmem %s5677, %s5679
      %v5681 = vpack.c.bf16 %v5676, %v3897
      %5682 = vst [vmem:[%s5680] sm:$0xff] %v5681
      %s5683 = scalar_lea.vmem %s150, 8856
      %v5684 = vld [vmem:[%s5683] sm:$0xff]
      %s5685 = scalar_lea.vmem %s176, 4428
      %s5687 = ssub.s32 0, 4
      %s5688 = scalar_lea.vmem %s5685, %s5687
      %v5689 = vpack.c.bf16 %v5684, %v3900
      %5690 = vst [vmem:[%s5688] sm:$0xff] %v5689
      %s5691 = scalar_lea.vmem %s150, 2712
      %v5692 = vld [vmem:[%s5691] sm:$0xff]
      %s5693 = scalar_lea.vmem %s176, 7500
      %s5695 = ssub.s32 0, 4
      %s5696 = scalar_lea.vmem %s5693, %s5695
      %v5697 = vpack.c.bf16 %v5692, %v3903
      %5698 = vst [vmem:[%s5696] sm:$0xff] %v5697
      %s5699 = scalar_lea.vmem %s150, 12952
      %v5700 = vld [vmem:[%s5699] sm:$0xff]
      %s5701 = scalar_lea.vmem %s176, 2380
      %s5703 = ssub.s32 0, 4
      %s5704 = scalar_lea.vmem %s5701, %s5703
      %v5705 = vpack.c.bf16 %v5700, %v3906
      %5706 = vst [vmem:[%s5704] sm:$0xff] %v5705
      %s5707 = scalar_lea.vmem %s150, 6808
      %v5708 = vld [vmem:[%s5707] sm:$0xff]
      %s5709 = scalar_lea.vmem %s176, 5452
      %s5711 = ssub.s32 0, 4
      %s5712 = scalar_lea.vmem %s5709, %s5711
      %v5713 = vpack.c.bf16 %v5708, %v3909
      %5714 = vst [vmem:[%s5712] sm:$0xff] %v5713
      %s5715 = scalar_lea.vmem %s150, 664
      %v5716 = vld [vmem:[%s5715] sm:$0xff]
      %s5717 = scalar_lea.vmem %s176, 8524
      %s5719 = ssub.s32 0, 4
      %s5720 = scalar_lea.vmem %s5717, %s5719
      %v5721 = vpack.c.bf16 %v5716, %v3912
      %5722 = vst [vmem:[%s5720] sm:$0xff] %v5721
      %s5723 = scalar_lea.vmem %s150, 17080
      %v5724 = vld [vmem:[%s5723] sm:$0xff]
      %s5725 = scalar_lea.vmem %s176, 348
      %s5727 = ssub.s32 0, 4
      %s5728 = scalar_lea.vmem %s5725, %s5727
      %v5729 = vpack.c.bf16 %v5724, %v3915
      %5730 = vst [vmem:[%s5728] sm:$0xff] %v5729
      %s5731 = scalar_lea.vmem %s150, 10936
      %v5732 = vld [vmem:[%s5731] sm:$0xff]
      %s5733 = scalar_lea.vmem %s176, 3420
      %s5735 = ssub.s32 0, 4
      %s5736 = scalar_lea.vmem %s5733, %s5735
      %v5737 = vpack.c.bf16 %v5732, %v3918
      %5738 = vst [vmem:[%s5736] sm:$0xff] %v5737
      %s5739 = scalar_lea.vmem %s150, 4792
      %v5740 = vld [vmem:[%s5739] sm:$0xff]
      %s5741 = scalar_lea.vmem %s176, 6492
      %s5743 = ssub.s32 0, 4
      %s5744 = scalar_lea.vmem %s5741, %s5743
      %v5745 = vpack.c.bf16 %v5740, %v3921
      %5746 = vst [vmem:[%s5744] sm:$0xff] %v5745
      %s5747 = scalar_lea.vmem %s150, 15032
      %v5748 = vld [vmem:[%s5747] sm:$0xff]
      %s5749 = scalar_lea.vmem %s176, 1372
      %s5751 = ssub.s32 0, 4
      %s5752 = scalar_lea.vmem %s5749, %s5751
      %v5753 = vpack.c.bf16 %v5748, %v3924
      %5754 = vst [vmem:[%s5752] sm:$0xff] %v5753
      %s5755 = scalar_lea.vmem %s150, 8888
      %v5756 = vld [vmem:[%s5755] sm:$0xff]
      %s5757 = scalar_lea.vmem %s176, 4444
      %s5759 = ssub.s32 0, 4
      %s5760 = scalar_lea.vmem %s5757, %s5759
      %v5761 = vpack.c.bf16 %v5756, %v3927
      %5762 = vst [vmem:[%s5760] sm:$0xff] %v5761
      %s5763 = scalar_lea.vmem %s150, 2744
      %v5764 = vld [vmem:[%s5763] sm:$0xff]
      %s5765 = scalar_lea.vmem %s176, 7516
      %s5767 = ssub.s32 0, 4
      %s5768 = scalar_lea.vmem %s5765, %s5767
      %v5769 = vpack.c.bf16 %v5764, %v3930
      %5770 = vst [vmem:[%s5768] sm:$0xff] %v5769
      %s5771 = scalar_lea.vmem %s150, 12984
      %v5772 = vld [vmem:[%s5771] sm:$0xff]
      %s5773 = scalar_lea.vmem %s176, 2396
      %s5775 = ssub.s32 0, 4
      %s5776 = scalar_lea.vmem %s5773, %s5775
      %v5777 = vpack.c.bf16 %v5772, %v3933
      %5778 = vst [vmem:[%s5776] sm:$0xff] %v5777
      %s5779 = scalar_lea.vmem %s150, 6840
      %v5780 = vld [vmem:[%s5779] sm:$0xff]
      %s5781 = scalar_lea.vmem %s176, 5468
      %s5783 = ssub.s32 0, 4
      %s5784 = scalar_lea.vmem %s5781, %s5783
      %v5785 = vpack.c.bf16 %v5780, %v3936
      %5786 = vst [vmem:[%s5784] sm:$0xff] %v5785
      %s5787 = scalar_lea.vmem %s150, 696
      %v5788 = vld [vmem:[%s5787] sm:$0xff]
      %s5789 = scalar_lea.vmem %s176, 8540
      %s5791 = ssub.s32 0, 4
      %s5792 = scalar_lea.vmem %s5789, %s5791
      %v5793 = vpack.c.bf16 %v5788, %v3939
      %5794 = vst [vmem:[%s5792] sm:$0xff] %v5793
      %s5795 = scalar_lea.vmem %s150, 17112
      %v5796 = vld [vmem:[%s5795] sm:$0xff]
      %s5797 = scalar_lea.vmem %s176, 364
      %s5799 = ssub.s32 0, 4
      %s5800 = scalar_lea.vmem %s5797, %s5799
      %v5801 = vpack.c.bf16 %v5796, %v3942
      %5802 = vst [vmem:[%s5800] sm:$0xff] %v5801
      %s5803 = scalar_lea.vmem %s150, 10968
      %v5804 = vld [vmem:[%s5803] sm:$0xff]
      %s5805 = scalar_lea.vmem %s176, 3436
      %s5807 = ssub.s32 0, 4
      %s5808 = scalar_lea.vmem %s5805, %s5807
      %v5809 = vpack.c.bf16 %v5804, %v3945
      %5810 = vst [vmem:[%s5808] sm:$0xff] %v5809
      %s5811 = scalar_lea.vmem %s150, 4824
      %v5812 = vld [vmem:[%s5811] sm:$0xff]
      %s5813 = scalar_lea.vmem %s176, 6508
      %s5815 = ssub.s32 0, 4
      %s5816 = scalar_lea.vmem %s5813, %s5815
      %v5817 = vpack.c.bf16 %v5812, %v3948
      %5818 = vst [vmem:[%s5816] sm:$0xff] %v5817
      %s5819 = scalar_lea.vmem %s150, 15064
      %v5820 = vld [vmem:[%s5819] sm:$0xff]
      %s5821 = scalar_lea.vmem %s176, 1388
      %s5823 = ssub.s32 0, 4
      %s5824 = scalar_lea.vmem %s5821, %s5823
      %v5825 = vpack.c.bf16 %v5820, %v3951
      %5826 = vst [vmem:[%s5824] sm:$0xff] %v5825
      %s5827 = scalar_lea.vmem %s150, 8920
      %v5828 = vld [vmem:[%s5827] sm:$0xff]
      %s5829 = scalar_lea.vmem %s176, 4460
      %s5831 = ssub.s32 0, 4
      %s5832 = scalar_lea.vmem %s5829, %s5831
      %v5833 = vpack.c.bf16 %v5828, %v3954
      %5834 = vst [vmem:[%s5832] sm:$0xff] %v5833
      %s5835 = scalar_lea.vmem %s150, 2776
      %v5836 = vld [vmem:[%s5835] sm:$0xff]
      %s5837 = scalar_lea.vmem %s176, 7532
      %s5839 = ssub.s32 0, 4
      %s5840 = scalar_lea.vmem %s5837, %s5839
      %v5841 = vpack.c.bf16 %v5836, %v3957
      %5842 = vst [vmem:[%s5840] sm:$0xff] %v5841
      %s5843 = scalar_lea.vmem %s150, 13016
      %v5844 = vld [vmem:[%s5843] sm:$0xff]
      %s5845 = scalar_lea.vmem %s176, 2412
      %s5847 = ssub.s32 0, 4
      %s5848 = scalar_lea.vmem %s5845, %s5847
      %v5849 = vpack.c.bf16 %v5844, %v3960
      %5850 = vst [vmem:[%s5848] sm:$0xff] %v5849
      %s5851 = scalar_lea.vmem %s150, 6872
      %v5852 = vld [vmem:[%s5851] sm:$0xff]
      %s5853 = scalar_lea.vmem %s176, 5484
      %s5855 = ssub.s32 0, 4
      %s5856 = scalar_lea.vmem %s5853, %s5855
      %v5857 = vpack.c.bf16 %v5852, %v3963
      %5858 = vst [vmem:[%s5856] sm:$0xff] %v5857
      %s5859 = scalar_lea.vmem %s150, 728
      %v5860 = vld [vmem:[%s5859] sm:$0xff]
      %s5861 = scalar_lea.vmem %s176, 8556
      %s5863 = ssub.s32 0, 4
      %s5864 = scalar_lea.vmem %s5861, %s5863
      %v5865 = vpack.c.bf16 %v5860, %v3966
      %5866 = vst [vmem:[%s5864] sm:$0xff] %v5865
      %s5867 = scalar_lea.vmem %s150, 17144
      %v5868 = vld [vmem:[%s5867] sm:$0xff]
      %s5869 = scalar_lea.vmem %s176, 380
      %s5871 = ssub.s32 0, 4
      %s5872 = scalar_lea.vmem %s5869, %s5871
      %v5873 = vpack.c.bf16 %v5868, %v3969
      %5874 = vst [vmem:[%s5872] sm:$0xff] %v5873
      %s5875 = scalar_lea.vmem %s150, 11000
      %v5876 = vld [vmem:[%s5875] sm:$0xff]
      %s5877 = scalar_lea.vmem %s176, 3452
      %s5879 = ssub.s32 0, 4
      %s5880 = scalar_lea.vmem %s5877, %s5879
      %v5881 = vpack.c.bf16 %v5876, %v3972
      %5882 = vst [vmem:[%s5880] sm:$0xff] %v5881
      %s5883 = scalar_lea.vmem %s150, 4856
      %v5884 = vld [vmem:[%s5883] sm:$0xff]
      %s5885 = scalar_lea.vmem %s176, 6524
      %s5887 = ssub.s32 0, 4
      %s5888 = scalar_lea.vmem %s5885, %s5887
      %v5889 = vpack.c.bf16 %v5884, %v3975
      %5890 = vst [vmem:[%s5888] sm:$0xff] %v5889
      %s5891 = scalar_lea.vmem %s150, 15096
      %v5892 = vld [vmem:[%s5891] sm:$0xff]
      %s5893 = scalar_lea.vmem %s176, 1404
      %s5895 = ssub.s32 0, 4
      %s5896 = scalar_lea.vmem %s5893, %s5895
      %v5897 = vpack.c.bf16 %v5892, %v3978
      %5898 = vst [vmem:[%s5896] sm:$0xff] %v5897
      %s5899 = scalar_lea.vmem %s150, 8952
      %v5900 = vld [vmem:[%s5899] sm:$0xff]
      %s5901 = scalar_lea.vmem %s176, 4476
      %s5903 = ssub.s32 0, 4
      %s5904 = scalar_lea.vmem %s5901, %s5903
      %v5905 = vpack.c.bf16 %v5900, %v3981
      %5906 = vst [vmem:[%s5904] sm:$0xff] %v5905
      %s5907 = scalar_lea.vmem %s150, 2808
      %v5908 = vld [vmem:[%s5907] sm:$0xff]
      %s5909 = scalar_lea.vmem %s176, 7548
      %s5911 = ssub.s32 0, 4
      %s5912 = scalar_lea.vmem %s5909, %s5911
      %v5913 = vpack.c.bf16 %v5908, %v3984
      %5914 = vst [vmem:[%s5912] sm:$0xff] %v5913
      %s5915 = scalar_lea.vmem %s150, 13048
      %v5916 = vld [vmem:[%s5915] sm:$0xff]
      %s5917 = scalar_lea.vmem %s176, 2428
      %s5919 = ssub.s32 0, 4
      %s5920 = scalar_lea.vmem %s5917, %s5919
      %v5921 = vpack.c.bf16 %v5916, %v3987
      %5922 = vst [vmem:[%s5920] sm:$0xff] %v5921
      %s5923 = scalar_lea.vmem %s150, 6904
      %v5924 = vld [vmem:[%s5923] sm:$0xff]
      %s5925 = scalar_lea.vmem %s176, 5500
      %s5927 = ssub.s32 0, 4
      %s5928 = scalar_lea.vmem %s5925, %s5927
      %v5929 = vpack.c.bf16 %v5924, %v3990
      %5930 = vst [vmem:[%s5928] sm:$0xff] %v5929
      %s5931 = scalar_lea.vmem %s150, 760
      %v5932 = vld [vmem:[%s5931] sm:$0xff]
      %s5933 = scalar_lea.vmem %s176, 8572
      %s5935 = ssub.s32 0, 4
      %s5936 = scalar_lea.vmem %s5933, %s5935
      %v5937 = vpack.c.bf16 %v5932, %v3993
      %5938 = vst [vmem:[%s5936] sm:$0xff] %v5937
      %s5939 = scalar_lea.vmem %s150, 17176
      %v5940 = vld [vmem:[%s5939] sm:$0xff]
      %s5941 = scalar_lea.vmem %s176, 396
      %s5943 = ssub.s32 0, 4
      %s5944 = scalar_lea.vmem %s5941, %s5943
      %v5945 = vpack.c.bf16 %v5940, %v3996
      %5946 = vst [vmem:[%s5944] sm:$0xff] %v5945
      %s5947 = scalar_lea.vmem %s150, 11032
      %v5948 = vld [vmem:[%s5947] sm:$0xff]
      %s5949 = scalar_lea.vmem %s176, 3468
      %s5951 = ssub.s32 0, 4
      %s5952 = scalar_lea.vmem %s5949, %s5951
      %v5953 = vpack.c.bf16 %v5948, %v3999
      %5954 = vst [vmem:[%s5952] sm:$0xff] %v5953
      %s5955 = scalar_lea.vmem %s150, 4888
      %v5956 = vld [vmem:[%s5955] sm:$0xff]
      %s5957 = scalar_lea.vmem %s176, 6540
      %s5959 = ssub.s32 0, 4
      %s5960 = scalar_lea.vmem %s5957, %s5959
      %v5961 = vpack.c.bf16 %v5956, %v4002
      %5962 = vst [vmem:[%s5960] sm:$0xff] %v5961
      %s5963 = scalar_lea.vmem %s150, 15128
      %v5964 = vld [vmem:[%s5963] sm:$0xff]
      %s5965 = scalar_lea.vmem %s176, 1420
      %s5967 = ssub.s32 0, 4
      %s5968 = scalar_lea.vmem %s5965, %s5967
      %v5969 = vpack.c.bf16 %v5964, %v4005
      %5970 = vst [vmem:[%s5968] sm:$0xff] %v5969
      %s5971 = scalar_lea.vmem %s150, 8984
      %v5972 = vld [vmem:[%s5971] sm:$0xff]
      %s5973 = scalar_lea.vmem %s176, 4492
      %s5975 = ssub.s32 0, 4
      %s5976 = scalar_lea.vmem %s5973, %s5975
      %v5977 = vpack.c.bf16 %v5972, %v4008
      %5978 = vst [vmem:[%s5976] sm:$0xff] %v5977
      %s5979 = scalar_lea.vmem %s150, 2840
      %v5980 = vld [vmem:[%s5979] sm:$0xff]
      %s5981 = scalar_lea.vmem %s176, 7564
      %s5983 = ssub.s32 0, 4
      %s5984 = scalar_lea.vmem %s5981, %s5983
      %v5985 = vpack.c.bf16 %v5980, %v4011
      %5986 = vst [vmem:[%s5984] sm:$0xff] %v5985
      %s5987 = scalar_lea.vmem %s150, 13080
      %v5988 = vld [vmem:[%s5987] sm:$0xff]
      %s5989 = scalar_lea.vmem %s176, 2444
      %s5991 = ssub.s32 0, 4
      %s5992 = scalar_lea.vmem %s5989, %s5991
      %v5993 = vpack.c.bf16 %v5988, %v4014
      %5994 = vst [vmem:[%s5992] sm:$0xff] %v5993
      %s5995 = scalar_lea.vmem %s150, 6936
      %v5996 = vld [vmem:[%s5995] sm:$0xff]
      %s5997 = scalar_lea.vmem %s176, 5516
      %s5999 = ssub.s32 0, 4
      %s6000 = scalar_lea.vmem %s5997, %s5999
      %v6001 = vpack.c.bf16 %v5996, %v4017
      %6002 = vst [vmem:[%s6000] sm:$0xff] %v6001
      %s6003 = scalar_lea.vmem %s150, 792
      %v6004 = vld [vmem:[%s6003] sm:$0xff]
      %s6005 = scalar_lea.vmem %s176, 8588
      %s6007 = ssub.s32 0, 4
      %s6008 = scalar_lea.vmem %s6005, %s6007
      %v6009 = vpack.c.bf16 %v6004, %v4020
      %6010 = vst [vmem:[%s6008] sm:$0xff] %v6009
      %s6011 = scalar_lea.vmem %s150, 17208
      %v6012 = vld [vmem:[%s6011] sm:$0xff]
      %s6013 = scalar_lea.vmem %s176, 412
      %s6015 = ssub.s32 0, 4
      %s6016 = scalar_lea.vmem %s6013, %s6015
      %v6017 = vpack.c.bf16 %v6012, %v4023
      %6018 = vst [vmem:[%s6016] sm:$0xff] %v6017
      %s6019 = scalar_lea.vmem %s150, 11064
      %v6020 = vld [vmem:[%s6019] sm:$0xff]
      %s6021 = scalar_lea.vmem %s176, 3484
      %s6023 = ssub.s32 0, 4
      %s6024 = scalar_lea.vmem %s6021, %s6023
      %v6025 = vpack.c.bf16 %v6020, %v4026
      %6026 = vst [vmem:[%s6024] sm:$0xff] %v6025
      %s6027 = scalar_lea.vmem %s150, 4920
      %v6028 = vld [vmem:[%s6027] sm:$0xff]
      %s6029 = scalar_lea.vmem %s176, 6556
      %s6031 = ssub.s32 0, 4
      %s6032 = scalar_lea.vmem %s6029, %s6031
      %v6033 = vpack.c.bf16 %v6028, %v4029
      %6034 = vst [vmem:[%s6032] sm:$0xff] %v6033
      %s6035 = scalar_lea.vmem %s150, 15160
      %v6036 = vld [vmem:[%s6035] sm:$0xff]
      %s6037 = scalar_lea.vmem %s176, 1436
      %s6039 = ssub.s32 0, 4
      %s6040 = scalar_lea.vmem %s6037, %s6039
      %v6041 = vpack.c.bf16 %v6036, %v4032
      %6042 = vst [vmem:[%s6040] sm:$0xff] %v6041
      %s6043 = scalar_lea.vmem %s150, 9016
      %v6044 = vld [vmem:[%s6043] sm:$0xff]
      %s6045 = scalar_lea.vmem %s176, 4508
      %s6047 = ssub.s32 0, 4
      %s6048 = scalar_lea.vmem %s6045, %s6047
      %v6049 = vpack.c.bf16 %v6044, %v4035
      %6050 = vst [vmem:[%s6048] sm:$0xff] %v6049
      %s6051 = scalar_lea.vmem %s150, 2872
      %v6052 = vld [vmem:[%s6051] sm:$0xff]
      %s6053 = scalar_lea.vmem %s176, 7580
      %s6055 = ssub.s32 0, 4
      %s6056 = scalar_lea.vmem %s6053, %s6055
      %v6057 = vpack.c.bf16 %v6052, %v4038
      %6058 = vst [vmem:[%s6056] sm:$0xff] %v6057
      %s6059 = scalar_lea.vmem %s150, 13112
      %v6060 = vld [vmem:[%s6059] sm:$0xff]
      %s6061 = scalar_lea.vmem %s176, 2460
      %s6063 = ssub.s32 0, 4
      %s6064 = scalar_lea.vmem %s6061, %s6063
      %v6065 = vpack.c.bf16 %v6060, %v4041
      %6066 = vst [vmem:[%s6064] sm:$0xff] %v6065
      %s6067 = scalar_lea.vmem %s150, 6968
      %v6068 = vld [vmem:[%s6067] sm:$0xff]
      %s6069 = scalar_lea.vmem %s176, 5532
      %s6071 = ssub.s32 0, 4
      %s6072 = scalar_lea.vmem %s6069, %s6071
      %v6073 = vpack.c.bf16 %v6068, %v4044
      %6074 = vst [vmem:[%s6072] sm:$0xff] %v6073
      %s6075 = scalar_lea.vmem %s150, 824
      %v6076 = vld [vmem:[%s6075] sm:$0xff]
      %s6077 = scalar_lea.vmem %s176, 8604
      %s6079 = ssub.s32 0, 4
      %s6080 = scalar_lea.vmem %s6077, %s6079
      %v6081 = vpack.c.bf16 %v6076, %v4047
      %6082 = vst [vmem:[%s6080] sm:$0xff] %v6081
      %s6083 = scalar_lea.vmem %s150, 17240
      %v6084 = vld [vmem:[%s6083] sm:$0xff]
      %s6085 = scalar_lea.vmem %s176, 428
      %s6087 = ssub.s32 0, 4
      %s6088 = scalar_lea.vmem %s6085, %s6087
      %v6089 = vpack.c.bf16 %v6084, %v4050
      %6090 = vst [vmem:[%s6088] sm:$0xff] %v6089
      %s6091 = scalar_lea.vmem %s150, 11096
      %v6092 = vld [vmem:[%s6091] sm:$0xff]
      %s6093 = scalar_lea.vmem %s176, 3500
      %s6095 = ssub.s32 0, 4
      %s6096 = scalar_lea.vmem %s6093, %s6095
      %v6097 = vpack.c.bf16 %v6092, %v4053
      %6098 = vst [vmem:[%s6096] sm:$0xff] %v6097
      %s6099 = scalar_lea.vmem %s150, 4952
      %v6100 = vld [vmem:[%s6099] sm:$0xff]
      %s6101 = scalar_lea.vmem %s176, 6572
      %s6103 = ssub.s32 0, 4
      %s6104 = scalar_lea.vmem %s6101, %s6103
      %v6105 = vpack.c.bf16 %v6100, %v4056
      %6106 = vst [vmem:[%s6104] sm:$0xff] %v6105
      %s6107 = scalar_lea.vmem %s150, 15192
      %v6108 = vld [vmem:[%s6107] sm:$0xff]
      %s6109 = scalar_lea.vmem %s176, 1452
      %s6111 = ssub.s32 0, 4
      %s6112 = scalar_lea.vmem %s6109, %s6111
      %v6113 = vpack.c.bf16 %v6108, %v4059
      %6114 = vst [vmem:[%s6112] sm:$0xff] %v6113
      %s6115 = scalar_lea.vmem %s150, 9048
      %v6116 = vld [vmem:[%s6115] sm:$0xff]
      %s6117 = scalar_lea.vmem %s176, 4524
      %s6119 = ssub.s32 0, 4
      %s6120 = scalar_lea.vmem %s6117, %s6119
      %v6121 = vpack.c.bf16 %v6116, %v4062
      %6122 = vst [vmem:[%s6120] sm:$0xff] %v6121
      %s6123 = scalar_lea.vmem %s150, 2904
      %v6124 = vld [vmem:[%s6123] sm:$0xff]
      %s6125 = scalar_lea.vmem %s176, 7596
      %s6127 = ssub.s32 0, 4
      %s6128 = scalar_lea.vmem %s6125, %s6127
      %v6129 = vpack.c.bf16 %v6124, %v4065
      %6130 = vst [vmem:[%s6128] sm:$0xff] %v6129
      %s6131 = scalar_lea.vmem %s150, 13144
      %v6132 = vld [vmem:[%s6131] sm:$0xff]
      %s6133 = scalar_lea.vmem %s176, 2476
      %s6135 = ssub.s32 0, 4
      %s6136 = scalar_lea.vmem %s6133, %s6135
      %v6137 = vpack.c.bf16 %v6132, %v4068
      %6138 = vst [vmem:[%s6136] sm:$0xff] %v6137
      %s6139 = scalar_lea.vmem %s150, 7000
      %v6140 = vld [vmem:[%s6139] sm:$0xff]
      %s6141 = scalar_lea.vmem %s176, 5548
      %s6143 = ssub.s32 0, 4
      %s6144 = scalar_lea.vmem %s6141, %s6143
      %v6145 = vpack.c.bf16 %v6140, %v4071
      %6146 = vst [vmem:[%s6144] sm:$0xff] %v6145
      %s6147 = scalar_lea.vmem %s150, 856
      %v6148 = vld [vmem:[%s6147] sm:$0xff]
      %s6149 = scalar_lea.vmem %s176, 8620
      %s6151 = ssub.s32 0, 4
      %s6152 = scalar_lea.vmem %s6149, %s6151
      %v6153 = vpack.c.bf16 %v6148, %v4074
      %6154 = vst [vmem:[%s6152] sm:$0xff] %v6153
      %s6155 = scalar_lea.vmem %s150, 17272
      %v6156 = vld [vmem:[%s6155] sm:$0xff]
      %s6157 = scalar_lea.vmem %s176, 444
      %s6159 = ssub.s32 0, 4
      %s6160 = scalar_lea.vmem %s6157, %s6159
      %v6161 = vpack.c.bf16 %v6156, %v4077
      %6162 = vst [vmem:[%s6160] sm:$0xff] %v6161
      %s6163 = scalar_lea.vmem %s150, 11128
      %v6164 = vld [vmem:[%s6163] sm:$0xff]
      %s6165 = scalar_lea.vmem %s176, 3516
      %s6167 = ssub.s32 0, 4
      %s6168 = scalar_lea.vmem %s6165, %s6167
      %v6169 = vpack.c.bf16 %v6164, %v4080
      %6170 = vst [vmem:[%s6168] sm:$0xff] %v6169
      %s6171 = scalar_lea.vmem %s150, 4984
      %v6172 = vld [vmem:[%s6171] sm:$0xff]
      %s6173 = scalar_lea.vmem %s176, 6588
      %s6175 = ssub.s32 0, 4
      %s6176 = scalar_lea.vmem %s6173, %s6175
      %v6177 = vpack.c.bf16 %v6172, %v4083
      %6178 = vst [vmem:[%s6176] sm:$0xff] %v6177
      %s6179 = scalar_lea.vmem %s150, 15224
      %v6180 = vld [vmem:[%s6179] sm:$0xff]
      %s6181 = scalar_lea.vmem %s176, 1468
      %s6183 = ssub.s32 0, 4
      %s6184 = scalar_lea.vmem %s6181, %s6183
      %v6185 = vpack.c.bf16 %v6180, %v4086
      %6186 = vst [vmem:[%s6184] sm:$0xff] %v6185
      %s6187 = scalar_lea.vmem %s150, 9080
      %v6188 = vld [vmem:[%s6187] sm:$0xff]
      %s6189 = scalar_lea.vmem %s176, 4540
      %s6191 = ssub.s32 0, 4
      %s6192 = scalar_lea.vmem %s6189, %s6191
      %v6193 = vpack.c.bf16 %v6188, %v4089
      %6194 = vst [vmem:[%s6192] sm:$0xff] %v6193
      %s6195 = scalar_lea.vmem %s150, 2936
      %v6196 = vld [vmem:[%s6195] sm:$0xff]
      %s6197 = scalar_lea.vmem %s176, 7612
      %s6199 = ssub.s32 0, 4
      %s6200 = scalar_lea.vmem %s6197, %s6199
      %v6201 = vpack.c.bf16 %v6196, %v4092
      %6202 = vst [vmem:[%s6200] sm:$0xff] %v6201
      %s6203 = scalar_lea.vmem %s150, 13176
      %v6204 = vld [vmem:[%s6203] sm:$0xff]
      %s6205 = scalar_lea.vmem %s176, 2492
      %s6207 = ssub.s32 0, 4
      %s6208 = scalar_lea.vmem %s6205, %s6207
      %v6209 = vpack.c.bf16 %v6204, %v4095
      %6210 = vst [vmem:[%s6208] sm:$0xff] %v6209
      %s6211 = scalar_lea.vmem %s150, 7032
      %v6212 = vld [vmem:[%s6211] sm:$0xff]
      %s6213 = scalar_lea.vmem %s176, 5564
      %s6215 = ssub.s32 0, 4
      %s6216 = scalar_lea.vmem %s6213, %s6215
      %v6217 = vpack.c.bf16 %v6212, %v4098
      %6218 = vst [vmem:[%s6216] sm:$0xff] %v6217
      %s6219 = scalar_lea.vmem %s150, 888
      %v6220 = vld [vmem:[%s6219] sm:$0xff]
      %s6221 = scalar_lea.vmem %s176, 8636
      %s6223 = ssub.s32 0, 4
      %s6224 = scalar_lea.vmem %s6221, %s6223
      %v6225 = vpack.c.bf16 %v6220, %v4101
      %6226 = vst [vmem:[%s6224] sm:$0xff] %v6225
      %s6227 = scalar_lea.vmem %s150, 17304
      %v6228 = vld [vmem:[%s6227] sm:$0xff]
      %s6229 = scalar_lea.vmem %s176, 460
      %s6231 = ssub.s32 0, 4
      %s6232 = scalar_lea.vmem %s6229, %s6231
      %v6233 = vpack.c.bf16 %v6228, %v4104
      %6234 = vst [vmem:[%s6232] sm:$0xff] %v6233
      %s6235 = scalar_lea.vmem %s150, 11160
      %v6236 = vld [vmem:[%s6235] sm:$0xff]
      %s6237 = scalar_lea.vmem %s176, 3532
      %s6239 = ssub.s32 0, 4
      %s6240 = scalar_lea.vmem %s6237, %s6239
      %v6241 = vpack.c.bf16 %v6236, %v4107
      %6242 = vst [vmem:[%s6240] sm:$0xff] %v6241
      %s6243 = scalar_lea.vmem %s150, 5016
      %v6244 = vld [vmem:[%s6243] sm:$0xff]
      %s6245 = scalar_lea.vmem %s176, 6604
      %s6247 = ssub.s32 0, 4
      %s6248 = scalar_lea.vmem %s6245, %s6247
      %v6249 = vpack.c.bf16 %v6244, %v4110
      %6250 = vst [vmem:[%s6248] sm:$0xff] %v6249
      %s6251 = scalar_lea.vmem %s150, 15256
      %v6252 = vld [vmem:[%s6251] sm:$0xff]
      %s6253 = scalar_lea.vmem %s176, 1484
      %s6255 = ssub.s32 0, 4
      %s6256 = scalar_lea.vmem %s6253, %s6255
      %v6257 = vpack.c.bf16 %v6252, %v4113
      %6258 = vst [vmem:[%s6256] sm:$0xff] %v6257
      %s6259 = scalar_lea.vmem %s150, 9112
      %v6260 = vld [vmem:[%s6259] sm:$0xff]
      %s6261 = scalar_lea.vmem %s176, 4556
      %s6263 = ssub.s32 0, 4
      %s6264 = scalar_lea.vmem %s6261, %s6263
      %v6265 = vpack.c.bf16 %v6260, %v4116
      %6266 = vst [vmem:[%s6264] sm:$0xff] %v6265
      %s6267 = scalar_lea.vmem %s150, 2968
      %v6268 = vld [vmem:[%s6267] sm:$0xff]
      %s6269 = scalar_lea.vmem %s176, 7628
      %s6271 = ssub.s32 0, 4
      %s6272 = scalar_lea.vmem %s6269, %s6271
      %v6273 = vpack.c.bf16 %v6268, %v4119
      %6274 = vst [vmem:[%s6272] sm:$0xff] %v6273
      %s6275 = scalar_lea.vmem %s150, 13208
      %v6276 = vld [vmem:[%s6275] sm:$0xff]
      %s6277 = scalar_lea.vmem %s176, 2508
      %s6279 = ssub.s32 0, 4
      %s6280 = scalar_lea.vmem %s6277, %s6279
      %v6281 = vpack.c.bf16 %v6276, %v4122
      %6282 = vst [vmem:[%s6280] sm:$0xff] %v6281
      %s6283 = scalar_lea.vmem %s150, 7064
      %v6284 = vld [vmem:[%s6283] sm:$0xff]
      %s6285 = scalar_lea.vmem %s176, 5580
      %s6287 = ssub.s32 0, 4
      %s6288 = scalar_lea.vmem %s6285, %s6287
      %v6289 = vpack.c.bf16 %v6284, %v4125
      %6290 = vst [vmem:[%s6288] sm:$0xff] %v6289
      %s6291 = scalar_lea.vmem %s150, 920
      %v6292 = vld [vmem:[%s6291] sm:$0xff]
      %s6293 = scalar_lea.vmem %s176, 8652
      %s6295 = ssub.s32 0, 4
      %s6296 = scalar_lea.vmem %s6293, %s6295
      %v6297 = vpack.c.bf16 %v6292, %v4128
      %6298 = vst [vmem:[%s6296] sm:$0xff] %v6297
      %s6299 = scalar_lea.vmem %s150, 17336
      %v6300 = vld [vmem:[%s6299] sm:$0xff]
      %s6301 = scalar_lea.vmem %s176, 476
      %s6303 = ssub.s32 0, 4
      %s6304 = scalar_lea.vmem %s6301, %s6303
      %v6305 = vpack.c.bf16 %v6300, %v4131
      %6306 = vst [vmem:[%s6304] sm:$0xff] %v6305
      %s6307 = scalar_lea.vmem %s150, 11192
      %v6308 = vld [vmem:[%s6307] sm:$0xff]
      %s6309 = scalar_lea.vmem %s176, 3548
      %s6311 = ssub.s32 0, 4
      %s6312 = scalar_lea.vmem %s6309, %s6311
      %v6313 = vpack.c.bf16 %v6308, %v4134
      %6314 = vst [vmem:[%s6312] sm:$0xff] %v6313
      %s6315 = scalar_lea.vmem %s150, 5048
      %v6316 = vld [vmem:[%s6315] sm:$0xff]
      %s6317 = scalar_lea.vmem %s176, 6620
      %s6319 = ssub.s32 0, 4
      %s6320 = scalar_lea.vmem %s6317, %s6319
      %v6321 = vpack.c.bf16 %v6316, %v4137
      %6322 = vst [vmem:[%s6320] sm:$0xff] %v6321
      %s6323 = scalar_lea.vmem %s150, 15288
      %v6324 = vld [vmem:[%s6323] sm:$0xff]
      %s6325 = scalar_lea.vmem %s176, 1500
      %s6327 = ssub.s32 0, 4
      %s6328 = scalar_lea.vmem %s6325, %s6327
      %v6329 = vpack.c.bf16 %v6324, %v4140
      %6330 = vst [vmem:[%s6328] sm:$0xff] %v6329
      %s6331 = scalar_lea.vmem %s150, 9144
      %v6332 = vld [vmem:[%s6331] sm:$0xff]
      %s6333 = scalar_lea.vmem %s176, 4572
      %s6335 = ssub.s32 0, 4
      %s6336 = scalar_lea.vmem %s6333, %s6335
      %v6337 = vpack.c.bf16 %v6332, %v4143
      %6338 = vst [vmem:[%s6336] sm:$0xff] %v6337
      %s6339 = scalar_lea.vmem %s150, 3000
      %v6340 = vld [vmem:[%s6339] sm:$0xff]
      %s6341 = scalar_lea.vmem %s176, 7644
      %s6343 = ssub.s32 0, 4
      %s6344 = scalar_lea.vmem %s6341, %s6343
      %v6345 = vpack.c.bf16 %v6340, %v4146
      %6346 = vst [vmem:[%s6344] sm:$0xff] %v6345
      %s6347 = scalar_lea.vmem %s150, 13240
      %v6348 = vld [vmem:[%s6347] sm:$0xff]
      %s6349 = scalar_lea.vmem %s176, 2524
      %s6351 = ssub.s32 0, 4
      %s6352 = scalar_lea.vmem %s6349, %s6351
      %v6353 = vpack.c.bf16 %v6348, %v4149
      %6354 = vst [vmem:[%s6352] sm:$0xff] %v6353
      %s6355 = scalar_lea.vmem %s150, 7096
      %v6356 = vld [vmem:[%s6355] sm:$0xff]
      %s6357 = scalar_lea.vmem %s176, 5596
      %s6359 = ssub.s32 0, 4
      %s6360 = scalar_lea.vmem %s6357, %s6359
      %v6361 = vpack.c.bf16 %v6356, %v4152
      %6362 = vst [vmem:[%s6360] sm:$0xff] %v6361
      %s6363 = scalar_lea.vmem %s150, 952
      %v6364 = vld [vmem:[%s6363] sm:$0xff]
      %s6365 = scalar_lea.vmem %s176, 8668
      %s6367 = ssub.s32 0, 4
      %s6368 = scalar_lea.vmem %s6365, %s6367
      %v6369 = vpack.c.bf16 %v6364, %v4155
      %6370 = vst [vmem:[%s6368] sm:$0xff] %v6369
      %s6371 = scalar_lea.vmem %s150, 17368
      %v6372 = vld [vmem:[%s6371] sm:$0xff]
      %s6373 = scalar_lea.vmem %s176, 492
      %s6375 = ssub.s32 0, 4
      %s6376 = scalar_lea.vmem %s6373, %s6375
      %v6377 = vpack.c.bf16 %v6372, %v4158
      %6378 = vst [vmem:[%s6376] sm:$0xff] %v6377
      %s6379 = scalar_lea.vmem %s150, 11224
      %v6380 = vld [vmem:[%s6379] sm:$0xff]
      %s6381 = scalar_lea.vmem %s176, 3564
      %s6383 = ssub.s32 0, 4
      %s6384 = scalar_lea.vmem %s6381, %s6383
      %v6385 = vpack.c.bf16 %v6380, %v4161
      %6386 = vst [vmem:[%s6384] sm:$0xff] %v6385
      %s6387 = scalar_lea.vmem %s150, 5080
      %v6388 = vld [vmem:[%s6387] sm:$0xff]
      %s6389 = scalar_lea.vmem %s176, 6636
      %s6391 = ssub.s32 0, 4
      %s6392 = scalar_lea.vmem %s6389, %s6391
      %v6393 = vpack.c.bf16 %v6388, %v4164
      %6394 = vst [vmem:[%s6392] sm:$0xff] %v6393
      %s6395 = scalar_lea.vmem %s150, 15320
      %v6396 = vld [vmem:[%s6395] sm:$0xff]
      %s6397 = scalar_lea.vmem %s176, 1516
      %s6399 = ssub.s32 0, 4
      %s6400 = scalar_lea.vmem %s6397, %s6399
      %v6401 = vpack.c.bf16 %v6396, %v4167
      %6402 = vst [vmem:[%s6400] sm:$0xff] %v6401
      %s6403 = scalar_lea.vmem %s150, 9176
      %v6404 = vld [vmem:[%s6403] sm:$0xff]
      %s6405 = scalar_lea.vmem %s176, 4588
      %s6407 = ssub.s32 0, 4
      %s6408 = scalar_lea.vmem %s6405, %s6407
      %v6409 = vpack.c.bf16 %v6404, %v4170
      %6410 = vst [vmem:[%s6408] sm:$0xff] %v6409
      %s6411 = scalar_lea.vmem %s150, 3032
      %v6412 = vld [vmem:[%s6411] sm:$0xff]
      %s6413 = scalar_lea.vmem %s176, 7660
      %s6415 = ssub.s32 0, 4
      %s6416 = scalar_lea.vmem %s6413, %s6415
      %v6417 = vpack.c.bf16 %v6412, %v4173
      %6418 = vst [vmem:[%s6416] sm:$0xff] %v6417
      %s6419 = scalar_lea.vmem %s150, 13272
      %v6420 = vld [vmem:[%s6419] sm:$0xff]
      %s6421 = scalar_lea.vmem %s176, 2540
      %s6423 = ssub.s32 0, 4
      %s6424 = scalar_lea.vmem %s6421, %s6423
      %v6425 = vpack.c.bf16 %v6420, %v4176
      %6426 = vst [vmem:[%s6424] sm:$0xff] %v6425
      %s6427 = scalar_lea.vmem %s150, 7128
      %v6428 = vld [vmem:[%s6427] sm:$0xff]
      %s6429 = scalar_lea.vmem %s176, 5612
      %s6431 = ssub.s32 0, 4
      %s6432 = scalar_lea.vmem %s6429, %s6431
      %v6433 = vpack.c.bf16 %v6428, %v4179
      %6434 = vst [vmem:[%s6432] sm:$0xff] %v6433
      %s6435 = scalar_lea.vmem %s150, 984
      %v6436 = vld [vmem:[%s6435] sm:$0xff]
      %s6437 = scalar_lea.vmem %s176, 8684
      %s6439 = ssub.s32 0, 4
      %s6440 = scalar_lea.vmem %s6437, %s6439
      %v6441 = vpack.c.bf16 %v6436, %v4182
      %6442 = vst [vmem:[%s6440] sm:$0xff] %v6441
      %s6443 = scalar_lea.vmem %s150, 17400
      %v6444 = vld [vmem:[%s6443] sm:$0xff]
      %s6445 = scalar_lea.vmem %s176, 508
      %s6447 = ssub.s32 0, 4
      %s6448 = scalar_lea.vmem %s6445, %s6447
      %v6449 = vpack.c.bf16 %v6444, %v4185
      %6450 = vst [vmem:[%s6448] sm:$0xff] %v6449
      %s6451 = scalar_lea.vmem %s150, 11256
      %v6452 = vld [vmem:[%s6451] sm:$0xff]
      %s6453 = scalar_lea.vmem %s176, 3580
      %s6455 = ssub.s32 0, 4
      %s6456 = scalar_lea.vmem %s6453, %s6455
      %v6457 = vpack.c.bf16 %v6452, %v4188
      %6458 = vst [vmem:[%s6456] sm:$0xff] %v6457
      %s6459 = scalar_lea.vmem %s150, 5112
      %v6460 = vld [vmem:[%s6459] sm:$0xff]
      %s6461 = scalar_lea.vmem %s176, 6652
      %s6463 = ssub.s32 0, 4
      %s6464 = scalar_lea.vmem %s6461, %s6463
      %v6465 = vpack.c.bf16 %v6460, %v4191
      %6466 = vst [vmem:[%s6464] sm:$0xff] %v6465
      %s6467 = scalar_lea.vmem %s150, 15352
      %v6468 = vld [vmem:[%s6467] sm:$0xff]
      %s6469 = scalar_lea.vmem %s176, 1532
      %s6471 = ssub.s32 0, 4
      %s6472 = scalar_lea.vmem %s6469, %s6471
      %v6473 = vpack.c.bf16 %v6468, %v4194
      %6474 = vst [vmem:[%s6472] sm:$0xff] %v6473
      %s6475 = scalar_lea.vmem %s150, 9208
      %v6476 = vld [vmem:[%s6475] sm:$0xff]
      %s6477 = scalar_lea.vmem %s176, 4604
      %s6479 = ssub.s32 0, 4
      %s6480 = scalar_lea.vmem %s6477, %s6479
      %v6481 = vpack.c.bf16 %v6476, %v4197
      %6482 = vst [vmem:[%s6480] sm:$0xff] %v6481
      %s6483 = scalar_lea.vmem %s150, 3064
      %v6484 = vld [vmem:[%s6483] sm:$0xff]
      %s6485 = scalar_lea.vmem %s176, 7676
      %s6487 = ssub.s32 0, 4
      %s6488 = scalar_lea.vmem %s6485, %s6487
      %v6489 = vpack.c.bf16 %v6484, %v4200
      %6490 = vst [vmem:[%s6488] sm:$0xff] %v6489
      %s6491 = scalar_lea.vmem %s150, 13304
      %v6492 = vld [vmem:[%s6491] sm:$0xff]
      %s6493 = scalar_lea.vmem %s176, 2556
      %s6495 = ssub.s32 0, 4
      %s6496 = scalar_lea.vmem %s6493, %s6495
      %v6497 = vpack.c.bf16 %v6492, %v4203
      %6498 = vst [vmem:[%s6496] sm:$0xff] %v6497
      %s6499 = scalar_lea.vmem %s150, 7160
      %v6500 = vld [vmem:[%s6499] sm:$0xff]
      %s6501 = scalar_lea.vmem %s176, 5628
      %s6503 = ssub.s32 0, 4
      %s6504 = scalar_lea.vmem %s6501, %s6503
      %v6505 = vpack.c.bf16 %v6500, %v4206
      %6506 = vst [vmem:[%s6504] sm:$0xff] %v6505
      %s6507 = scalar_lea.vmem %s150, 1016
      %v6508 = vld [vmem:[%s6507] sm:$0xff]
      %s6509 = scalar_lea.vmem %s176, 8700
      %s6511 = ssub.s32 0, 4
      %s6512 = scalar_lea.vmem %s6509, %s6511
      %v6513 = vpack.c.bf16 %v6508, %v4209
      %6514 = vst [vmem:[%s6512] sm:$0xff] %v6513
      %s6515 = smul.u32 3, %s14
      %s6516 = smul.u32 3, %s15
      %s6517 = smul.u32 32, %s16
      %s6518 = smul.u32 4, %s17
      %p6519 = scmp.lt.s32.totalorder %s6515, 2
      %s6520 = scalar_select %p6519, %s6515, 2
      %p6521 = scmp.lt.s32.totalorder %s6516, 2
      %s6522 = scalar_select %p6521, %s6516, 2
      %p6523 = scmp.lt.s32.totalorder %s6517, 63
      %s6524 = scalar_select %p6523, %s6517, 63
      %p6525 = scmp.lt.s32.totalorder %s6518, 3
      %s6526 = scalar_select %p6525, %s6518, 3
      %s6527 = smul.addr %s6524, 4
      %s6528 = sadd.s32 %s6526, %s6527
      %s6529 = smul.addr %s6522, 256
      %s6530 = sadd.s32 %s6528, %s6529
      %s6531 = smul.addr %s6520, 768
      %s6532 = sadd.s32 %s6530, %s6531
      %s6533 = smul.addr %s6532, 4
      %s6534 = scalar_lea.vmem %s1, %s6533
      %s6535 = smul.u32 3, %s14
      %s6536 = smul.u32 3, %s15
      %s6537 = smul.u32 32, %s16
      %s6538 = smul.u32 4, %s17
    $region20: #{reverse} parent=5 // pred_fallthru
      _
    %p6539 = scmp.le.s32.totalorder 2, %s3
    // Predicated region
    $region21: #{reverse} parent=5 // pred_check
      %p6540 = pneg %p6539
    $region22: #{reverse} parent=5 // pred_check_branch
      %6542 = sbr.rel (%p6540) target = $region24
    $region23: #{reverse} parent=5 // pred_region
      %s6543 = ssub.s32 %s3, 2
      %s6544 = smul.u32 3, %s18
      %s6545 = smul.u32 3, %s19
      %s6546 = smul.u32 32, %s20
      %s6547 = smul.u32 4, %s21
      %p6548 = scmp.lt.s32.totalorder %s6544, 2
      %s6549 = scalar_select %p6548, %s6544, 2
      %p6550 = scmp.lt.s32.totalorder %s6545, 2
      %s6551 = scalar_select %p6550, %s6545, 2
      %p6552 = scmp.lt.s32.totalorder %s6546, 63
      %s6553 = scalar_select %p6552, %s6546, 63
      %p6554 = scmp.lt.s32.totalorder %s6547, 3
      %s6555 = scalar_select %p6554, %s6547, 3
      %s6556 = smul.addr %s6553, 4
      %s6557 = sadd.s32 %s6555, %s6556
      %s6558 = smul.addr %s6551, 256
      %s6559 = sadd.s32 %s6557, %s6558
      %s6560 = smul.addr %s6549, 768
      %s6561 = sadd.s32 %s6559, %s6560
      %s6562 = smul.addr %s6561, 4
      %s6563 = scalar_lea.vmem %s1, %s6562
    $region24: #{reverse} parent=5 // pred_fallthru
      _
  $region6: #{reverse} parent=0 // loop_footer
    %s7 = sadd.s32 1, %s3
  $region7: #{reverse} parent=0 // loop_footer_branch
    %2 = sbr.rel target = $region3
  $region8: #{reverse} parent=0 // loop_exit
    _

// kernel: encoder_cnn_forward.1
$region0: #{encoder_cnn_forward.1}
  #allocation0 [shape = 'u32[]', space=smem, size = 0x4, offset = 0x4, fixed_abs, tag = 'smem constant byte address 0x4 - core index']
  #allocation1 [shape = 'u32[144,128]{1,0:T(1,128)}', space=vmem, size = 0x12000, scoped, tag = 'internal scratch']
  %s0 = inlined_call_operand.vmem [shape: bf16[2,8192], index: 0, kind: input, shape index: {}]
  %s1 = inlined_call_operand.vmem [shape: f32[2048,256], index: 1, kind: input, shape index: {}]
  %s2 = inlined_call_operand.vmem [shape: f32[1,256], index: 2, kind: input, shape index: {}]
  %s3 = inlined_call_operand.vmem [shape: u32[2,256], index: 3, kind: input, shape index: {}]
  %s4 = inlined_call_operand.hbm [shape: f32[2,256], index: 4, kind: output, shape index: {}]
  %s5 = sld [smem:[#allocation0]]
  $region26: #{encoder_cnn_forward.1} parent=0
    _
  %s7 = ssub.s32 1, %s5
  %s8 = scalar_select 0, %s7, %s5
  $region1: #{encoder_cnn_forward.1} parent=0
    #allocation2 [shape = 'u8[2048]{0}', space=vmem, size = 0x800, scoped, tag = 'output window, operand 0, single buffered']
    #allocation3 [shape = 's32[1]{0}', space=sflag, size = 0x4, scoped, tag = 'scoped memory for encoder_cnn_forward.1']
    %9 = vsyncpa [#allocation3], 0
    // Predicated region
    $region2: #{encoder_cnn_forward.1} parent=1 // pred_check
      _
    $region3: #{encoder_cnn_forward.1} parent=1 // pred_check_branch
      %11 = sbr.rel (0) target = $region5
    $region4: #{encoder_cnn_forward.1} parent=1 // pred_region
      _
    $region5: #{encoder_cnn_forward.1} parent=1 // pred_fallthru
      _
    // Predicated region
    $region6: #{encoder_cnn_forward.1} parent=1 // pred_check
      _
    $region7: #{encoder_cnn_forward.1} parent=1 // pred_check_branch
      %13 = sbr.rel (0) target = $region9
    $region8: #{encoder_cnn_forward.1} parent=1 // pred_region
      _
    $region9: #{encoder_cnn_forward.1} parent=1 // pred_fallthru
      _
    // Predicated region
    $region10: #{encoder_cnn_forward.1} parent=1 // pred_check
      _
    $region11: #{encoder_cnn_forward.1} parent=1 // pred_check_branch
      %15 = sbr.rel (0) target = $region13
    $region12: #{encoder_cnn_forward.1} parent=1 // pred_region
      _
    $region13: #{encoder_cnn_forward.1} parent=1 // pred_fallthru
      _
    // Predicated region
    $region14: #{encoder_cnn_forward.1} parent=1 // pred_check
      _
    $region15: #{encoder_cnn_forward.1} parent=1 // pred_check_branch
      %17 = sbr.rel (0) target = $region17
    $region16: #{encoder_cnn_forward.1} parent=1 // pred_region
      _
    $region17: #{encoder_cnn_forward.1} parent=1 // pred_fallthru
      _
    %v18 = vld [vmem:[%s0] sm:$0xff]
    %v19 = vld [vmem:[%s0 + $0x8] sm:$0xff]
    %v20 = vunpack.c.l.bf16 %v18
    %v21 = vunpack.c.h.bf16 %v18
    %v22 = vunpack.c.l.bf16 %v19
    %v23 = vunpack.c.h.bf16 %v19
    %v24 = vld [vmem:[%s0 + $0x10] sm:$0xff]
    %v25 = vld [vmem:[%s0 + $0x18] sm:$0xff]
    %v26 = vunpack.c.l.bf16 %v24
    %v27 = vunpack.c.h.bf16 %v24
    %v28 = vunpack.c.l.bf16 %v25
    %v29 = vunpack.c.h.bf16 %v25
    %v30 = vadd.f32 %v20, %v26
    %v31 = vadd.f32 %v21, %v27
    %v32 = vadd.f32 %v22, %v28
    %v33 = vadd.f32 %v23, %v29
    %v34 = vld [vmem:[%s0 + $0x20] sm:$0xff]
    %v35 = vld [vmem:[%s0 + $0x28] sm:$0xff]
    %v36 = vunpack.c.l.bf16 %v34
    %v37 = vunpack.c.h.bf16 %v34
    %v38 = vunpack.c.l.bf16 %v35
    %v39 = vunpack.c.h.bf16 %v35
    %v40 = vadd.f32 %v30, %v36
    %v41 = vadd.f32 %v31, %v37
    %v42 = vadd.f32 %v32, %v38
    %v43 = vadd.f32 %v33, %v39
    %v44 = vld [vmem:[%s0 + $0x30] sm:$0xff]
    %v45 = vld [vmem:[%s0 + $0x38] sm:$0xff]
    %v46 = vunpack.c.l.bf16 %v44
    %v47 = vunpack.c.h.bf16 %v44
    %v48 = vunpack.c.l.bf16 %v45
    %v49 = vunpack.c.h.bf16 %v45
    %v50 = vadd.f32 %v40, %v46
    %v51 = vadd.f32 %v41, %v47
    %v52 = vadd.f32 %v42, %v48
    %v53 = vadd.f32 %v43, %v49
    %v54 = vmul.f32 %v50, 0.25
    %v55 = vmul.f32 %v51, 0.25
    %v56 = vmul.f32 %v52, 0.25
    %v57 = vmul.f32 %v53, 0.25
    %v58 = vld [vmem:[%s1] sm:$0xff]
    %v59 = vld [vmem:[%s1 + $0x8] sm:$0xff]
    %v60 = vld [vmem:[%s1 + $0x10] sm:$0xff]
    %v61 = vld [vmem:[%s1 + $0x18] sm:$0xff]
    %v62 = vld [vmem:[%s1 + $0x20] sm:$0xff]
    %v63 = vld [vmem:[%s1 + $0x28] sm:$0xff]
    %v64 = vld [vmem:[%s1 + $0x30] sm:$0xff]
    %v65 = vld [vmem:[%s1 + $0x38] sm:$0xff]
    %v66 = vld [vmem:[%s1 + $0x40] sm:$0xff]
    %v67 = vld [vmem:[%s1 + $0x48] sm:$0xff]
    %v68 = vld [vmem:[%s1 + $0x50] sm:$0xff]
    %v69 = vld [vmem:[%s1 + $0x58] sm:$0xff]
    %v70 = vld [vmem:[%s1 + $0x60] sm:$0xff]
    %v71 = vld [vmem:[%s1 + $0x68] sm:$0xff]
    %v72 = vld [vmem:[%s1 + $0x70] sm:$0xff]
    %v73 = vld [vmem:[%s1 + $0x78] sm:$0xff]
    %v74 = vld [vmem:[%s1 + $0x80] sm:$0xff]
    %v75 = vld [vmem:[%s1 + $0x88] sm:$0xff]
    %v76 = vld [vmem:[%s1 + $0x90] sm:$0xff]
    %v77 = vld [vmem:[%s1 + $0x98] sm:$0xff]
    %v78 = vld [vmem:[%s1 + $0xa0] sm:$0xff]
    %v79 = vld [vmem:[%s1 + $0xa8] sm:$0xff]
    %v80 = vld [vmem:[%s1 + $0xb0] sm:$0xff]
    %v81 = vld [vmem:[%s1 + $0xb8] sm:$0xff]
    %v82 = vld [vmem:[%s1 + $0xc0] sm:$0xff]
    %v83 = vld [vmem:[%s1 + $0xc8] sm:$0xff]
    %v84 = vld [vmem:[%s1 + $0xd0] sm:$0xff]
    %v85 = vld [vmem:[%s1 + $0xd8] sm:$0xff]
    %v86 = vld [vmem:[%s1 + $0xe0] sm:$0xff]
    %v87 = vld [vmem:[%s1 + $0xe8] sm:$0xff]
    %v88 = vld [vmem:[%s1 + $0xf0] sm:$0xff]
    %v89 = vld [vmem:[%s1 + $0xf8] sm:$0xff]
    %v90 = vld [vmem:[%s1 + $0x100] sm:$0xff]
    %v91 = vld [vmem:[%s1 + $0x108] sm:$0xff]
    %v92 = vld [vmem:[%s1 + $0x110] sm:$0xff]
    %v93 = vld [vmem:[%s1 + $0x118] sm:$0xff]
    %v94 = vld [vmem:[%s1 + $0x120] sm:$0xff]
    %v95 = vld [vmem:[%s1 + $0x128] sm:$0xff]
    %v96 = vld [vmem:[%s1 + $0x130] sm:$0xff]
    %v97 = vld [vmem:[%s1 + $0x138] sm:$0xff]
    %v98 = vld [vmem:[%s1 + $0x140] sm:$0xff]
    %v99 = vld [vmem:[%s1 + $0x148] sm:$0xff]
    %v100 = vld [vmem:[%s1 + $0x150] sm:$0xff]
    %v101 = vld [vmem:[%s1 + $0x158] sm:$0xff]
    %v102 = vld [vmem:[%s1 + $0x160] sm:$0xff]
    %v103 = vld [vmem:[%s1 + $0x168] sm:$0xff]
    %v104 = vld [vmem:[%s1 + $0x170] sm:$0xff]
    %v105 = vld [vmem:[%s1 + $0x178] sm:$0xff]
    %v106 = vld [vmem:[%s1 + $0x180] sm:$0xff]
    %v107 = vld [vmem:[%s1 + $0x188] sm:$0xff]
    %v108 = vld [vmem:[%s1 + $0x190] sm:$0xff]
    %v109 = vld [vmem:[%s1 + $0x198] sm:$0xff]
    %v110 = vld [vmem:[%s1 + $0x1a0] sm:$0xff]
    %v111 = vld [vmem:[%s1 + $0x1a8] sm:$0xff]
    %v112 = vld [vmem:[%s1 + $0x1b0] sm:$0xff]
    %v113 = vld [vmem:[%s1 + $0x1b8] sm:$0xff]
    %v114 = vld [vmem:[%s1 + $0x1c0] sm:$0xff]
    %v115 = vld [vmem:[%s1 + $0x1c8] sm:$0xff]
    %v116 = vld [vmem:[%s1 + $0x1d0] sm:$0xff]
    %v117 = vld [vmem:[%s1 + $0x1d8] sm:$0xff]
    %v118 = vld [vmem:[%s1 + $0x1e0] sm:$0xff]
    %v119 = vld [vmem:[%s1 + $0x1e8] sm:$0xff]
    %v120 = vld [vmem:[%s1 + $0x1f0] sm:$0xff]
    %v121 = vld [vmem:[%s1 + $0x1f8] sm:$0xff]
    %v122 = vld [vmem:[%s1 + $0x200] sm:$0xff]
    %v123 = vld [vmem:[%s1 + $0x208] sm:$0xff]
    %v124 = vld [vmem:[%s1 + $0x210] sm:$0xff]
    %v125 = vld [vmem:[%s1 + $0x218] sm:$0xff]
    %v126 = vld [vmem:[%s1 + $0x220] sm:$0xff]
    %v127 = vld [vmem:[%s1 + $0x228] sm:$0xff]
    %v128 = vld [vmem:[%s1 + $0x230] sm:$0xff]
    %v129 = vld [vmem:[%s1 + $0x238] sm:$0xff]
    %v130 = vld [vmem:[%s1 + $0x240] sm:$0xff]
    %v131 = vld [vmem:[%s1 + $0x248] sm:$0xff]
    %v132 = vld [vmem:[%s1 + $0x250] sm:$0xff]
    %v133 = vld [vmem:[%s1 + $0x258] sm:$0xff]
    %v134 = vld [vmem:[%s1 + $0x260] sm:$0xff]
    %v135 = vld [vmem:[%s1 + $0x268] sm:$0xff]
    %v136 = vld [vmem:[%s1 + $0x270] sm:$0xff]
    %v137 = vld [vmem:[%s1 + $0x278] sm:$0xff]
    %v138 = vld [vmem:[%s1 + $0x280] sm:$0xff]
    %v139 = vld [vmem:[%s1 + $0x288] sm:$0xff]
    %v140 = vld [vmem:[%s1 + $0x290] sm:$0xff]
    %v141 = vld [vmem:[%s1 + $0x298] sm:$0xff]
    %v142 = vld [vmem:[%s1 + $0x2a0] sm:$0xff]
    %v143 = vld [vmem:[%s1 + $0x2a8] sm:$0xff]
    %v144 = vld [vmem:[%s1 + $0x2b0] sm:$0xff]
    %v145 = vld [vmem:[%s1 + $0x2b8] sm:$0xff]
    %v146 = vld [vmem:[%s1 + $0x2c0] sm:$0xff]
    %v147 = vld [vmem:[%s1 + $0x2c8] sm:$0xff]
    %v148 = vld [vmem:[%s1 + $0x2d0] sm:$0xff]
    %v149 = vld [vmem:[%s1 + $0x2d8] sm:$0xff]
    %v150 = vld [vmem:[%s1 + $0x2e0] sm:$0xff]
    %v151 = vld [vmem:[%s1 + $0x2e8] sm:$0xff]
    %v152 = vld [vmem:[%s1 + $0x2f0] sm:$0xff]
    %v153 = vld [vmem:[%s1 + $0x2f8] sm:$0xff]
    %v154 = vld [vmem:[%s1 + $0x300] sm:$0xff]
    %v155 = vld [vmem:[%s1 + $0x308] sm:$0xff]
    %v156 = vld [vmem:[%s1 + $0x310] sm:$0xff]
    %v157 = vld [vmem:[%s1 + $0x318] sm:$0xff]
    %v158 = vld [vmem:[%s1 + $0x320] sm:$0xff]
    %v159 = vld [vmem:[%s1 + $0x328] sm:$0xff]
    %v160 = vld [vmem:[%s1 + $0x330] sm:$0xff]
    %v161 = vld [vmem:[%s1 + $0x338] sm:$0xff]
    %v162 = vld [vmem:[%s1 + $0x340] sm:$0xff]
    %v163 = vld [vmem:[%s1 + $0x348] sm:$0xff]
    %v164 = vld [vmem:[%s1 + $0x350] sm:$0xff]
    %v165 = vld [vmem:[%s1 + $0x358] sm:$0xff]
    %v166 = vld [vmem:[%s1 + $0x360] sm:$0xff]
    %v167 = vld [vmem:[%s1 + $0x368] sm:$0xff]
    %v168 = vld [vmem:[%s1 + $0x370] sm:$0xff]
    %v169 = vld [vmem:[%s1 + $0x378] sm:$0xff]
    %v170 = vld [vmem:[%s1 + $0x380] sm:$0xff]
    %v171 = vld [vmem:[%s1 + $0x388] sm:$0xff]
    %v172 = vld [vmem:[%s1 + $0x390] sm:$0xff]
    %v173 = vld [vmem:[%s1 + $0x398] sm:$0xff]
    %v174 = vld [vmem:[%s1 + $0x3a0] sm:$0xff]
    %v175 = vld [vmem:[%s1 + $0x3a8] sm:$0xff]
    %v176 = vld [vmem:[%s1 + $0x3b0] sm:$0xff]
    %v177 = vld [vmem:[%s1 + $0x3b8] sm:$0xff]
    %v178 = vld [vmem:[%s1 + $0x3c0] sm:$0xff]
    %v179 = vld [vmem:[%s1 + $0x3c8] sm:$0xff]
    %v180 = vld [vmem:[%s1 + $0x3d0] sm:$0xff]
    %v181 = vld [vmem:[%s1 + $0x3d8] sm:$0xff]
    %v182 = vld [vmem:[%s1 + $0x3e0] sm:$0xff]
    %v183 = vld [vmem:[%s1 + $0x3e8] sm:$0xff]
    %v184 = vld [vmem:[%s1 + $0x3f0] sm:$0xff]
    %v185 = vld [vmem:[%s1 + $0x3f8] sm:$0xff]
    %v186 = vld [vmem:[%s1 + $0x400] sm:$0xff]
    %v187 = vld [vmem:[%s1 + $0x408] sm:$0xff]
    %v188 = vld [vmem:[%s1 + $0x410] sm:$0xff]
    %v189 = vld [vmem:[%s1 + $0x418] sm:$0xff]
    %v190 = vld [vmem:[%s1 + $0x420] sm:$0xff]
    %v191 = vld [vmem:[%s1 + $0x428] sm:$0xff]
    %v192 = vld [vmem:[%s1 + $0x430] sm:$0xff]
    %v193 = vld [vmem:[%s1 + $0x438] sm:$0xff]
    %v194 = vld [vmem:[%s1 + $0x440] sm:$0xff]
    %v195 = vld [vmem:[%s1 + $0x448] sm:$0xff]
    %v196 = vld [vmem:[%s1 + $0x450] sm:$0xff]
    %v197 = vld [vmem:[%s1 + $0x458] sm:$0xff]
    %v198 = vld [vmem:[%s1 + $0x460] sm:$0xff]
    %v199 = vld [vmem:[%s1 + $0x468] sm:$0xff]
    %v200 = vld [vmem:[%s1 + $0x470] sm:$0xff]
    %v201 = vld [vmem:[%s1 + $0x478] sm:$0xff]
    %v202 = vld [vmem:[%s1 + $0x480] sm:$0xff]
    %v203 = vld [vmem:[%s1 + $0x488] sm:$0xff]
    %v204 = vld [vmem:[%s1 + $0x490] sm:$0xff]
    %v205 = vld [vmem:[%s1 + $0x498] sm:$0xff]
    %v206 = vld [vmem:[%s1 + $0x4a0] sm:$0xff]
    %v207 = vld [vmem:[%s1 + $0x4a8] sm:$0xff]
    %v208 = vld [vmem:[%s1 + $0x4b0] sm:$0xff]
    %v209 = vld [vmem:[%s1 + $0x4b8] sm:$0xff]
    %v210 = vld [vmem:[%s1 + $0x4c0] sm:$0xff]
    %v211 = vld [vmem:[%s1 + $0x4c8] sm:$0xff]
    %v212 = vld [vmem:[%s1 + $0x4d0] sm:$0xff]
    %v213 = vld [vmem:[%s1 + $0x4d8] sm:$0xff]
    %v214 = vld [vmem:[%s1 + $0x4e0] sm:$0xff]
    %v215 = vld [vmem:[%s1 + $0x4e8] sm:$0xff]
    %v216 = vld [vmem:[%s1 + $0x4f0] sm:$0xff]
    %v217 = vld [vmem:[%s1 + $0x4f8] sm:$0xff]
    %v218 = vld [vmem:[%s1 + $0x500] sm:$0xff]
    %v219 = vld [vmem:[%s1 + $0x508] sm:$0xff]
    %v220 = vld [vmem:[%s1 + $0x510] sm:$0xff]
    %v221 = vld [vmem:[%s1 + $0x518] sm:$0xff]
    %v222 = vld [vmem:[%s1 + $0x520] sm:$0xff]
    %v223 = vld [vmem:[%s1 + $0x528] sm:$0xff]
    %v224 = vld [vmem:[%s1 + $0x530] sm:$0xff]
    %v225 = vld [vmem:[%s1 + $0x538] sm:$0xff]
    %v226 = vld [vmem:[%s1 + $0x540] sm:$0xff]
    %v227 = vld [vmem:[%s1 + $0x548] sm:$0xff]
    %v228 = vld [vmem:[%s1 + $0x550] sm:$0xff]
    %v229 = vld [vmem:[%s1 + $0x558] sm:$0xff]
    %v230 = vld [vmem:[%s1 + $0x560] sm:$0xff]
    %v231 = vld [vmem:[%s1 + $0x568] sm:$0xff]
    %v232 = vld [vmem:[%s1 + $0x570] sm:$0xff]
    %v233 = vld [vmem:[%s1 + $0x578] sm:$0xff]
    %v234 = vld [vmem:[%s1 + $0x580] sm:$0xff]
    %v235 = vld [vmem:[%s1 + $0x588] sm:$0xff]
    %v236 = vld [vmem:[%s1 + $0x590] sm:$0xff]
    %v237 = vld [vmem:[%s1 + $0x598] sm:$0xff]
    %v238 = vld [vmem:[%s1 + $0x5a0] sm:$0xff]
    %v239 = vld [vmem:[%s1 + $0x5a8] sm:$0xff]
    %v240 = vld [vmem:[%s1 + $0x5b0] sm:$0xff]
    %v241 = vld [vmem:[%s1 + $0x5b8] sm:$0xff]
    %v242 = vld [vmem:[%s1 + $0x5c0] sm:$0xff]
    %v243 = vld [vmem:[%s1 + $0x5c8] sm:$0xff]
    %v244 = vld [vmem:[%s1 + $0x5d0] sm:$0xff]
    %v245 = vld [vmem:[%s1 + $0x5d8] sm:$0xff]
    %v246 = vld [vmem:[%s1 + $0x5e0] sm:$0xff]
    %v247 = vld [vmem:[%s1 + $0x5e8] sm:$0xff]
    %v248 = vld [vmem:[%s1 + $0x5f0] sm:$0xff]
    %v249 = vld [vmem:[%s1 + $0x5f8] sm:$0xff]
    %v250 = vld [vmem:[%s1 + $0x600] sm:$0xff]
    %v251 = vld [vmem:[%s1 + $0x608] sm:$0xff]
    %v252 = vld [vmem:[%s1 + $0x610] sm:$0xff]
    %v253 = vld [vmem:[%s1 + $0x618] sm:$0xff]
    %v254 = vld [vmem:[%s1 + $0x620] sm:$0xff]
    %v255 = vld [vmem:[%s1 + $0x628] sm:$0xff]
    %v256 = vld [vmem:[%s1 + $0x630] sm:$0xff]
    %v257 = vld [vmem:[%s1 + $0x638] sm:$0xff]
    %v258 = vld [vmem:[%s1 + $0x640] sm:$0xff]
    %v259 = vld [vmem:[%s1 + $0x648] sm:$0xff]
    %v260 = vld [vmem:[%s1 + $0x650] sm:$0xff]
    %v261 = vld [vmem:[%s1 + $0x658] sm:$0xff]
    %v262 = vld [vmem:[%s1 + $0x660] sm:$0xff]
    %v263 = vld [vmem:[%s1 + $0x668] sm:$0xff]
    %v264 = vld [vmem:[%s1 + $0x670] sm:$0xff]
    %v265 = vld [vmem:[%s1 + $0x678] sm:$0xff]
    %v266 = vld [vmem:[%s1 + $0x680] sm:$0xff]
    %v267 = vld [vmem:[%s1 + $0x688] sm:$0xff]
    %v268 = vld [vmem:[%s1 + $0x690] sm:$0xff]
    %v269 = vld [vmem:[%s1 + $0x698] sm:$0xff]
    %v270 = vld [vmem:[%s1 + $0x6a0] sm:$0xff]
    %v271 = vld [vmem:[%s1 + $0x6a8] sm:$0xff]
    %v272 = vld [vmem:[%s1 + $0x6b0] sm:$0xff]
    %v273 = vld [vmem:[%s1 + $0x6b8] sm:$0xff]
    %v274 = vld [vmem:[%s1 + $0x6c0] sm:$0xff]
    %v275 = vld [vmem:[%s1 + $0x6c8] sm:$0xff]
    %v276 = vld [vmem:[%s1 + $0x6d0] sm:$0xff]
    %v277 = vld [vmem:[%s1 + $0x6d8] sm:$0xff]
    %v278 = vld [vmem:[%s1 + $0x6e0] sm:$0xff]
    %v279 = vld [vmem:[%s1 + $0x6e8] sm:$0xff]
    %v280 = vld [vmem:[%s1 + $0x6f0] sm:$0xff]
    %v281 = vld [vmem:[%s1 + $0x6f8] sm:$0xff]
    %v282 = vld [vmem:[%s1 + $0x700] sm:$0xff]
    %v283 = vld [vmem:[%s1 + $0x708] sm:$0xff]
    %v284 = vld [vmem:[%s1 + $0x710] sm:$0xff]
    %v285 = vld [vmem:[%s1 + $0x718] sm:$0xff]
    %v286 = vld [vmem:[%s1 + $0x720] sm:$0xff]
    %v287 = vld [vmem:[%s1 + $0x728] sm:$0xff]
    %v288 = vld [vmem:[%s1 + $0x730] sm:$0xff]
    %v289 = vld [vmem:[%s1 + $0x738] sm:$0xff]
    %v290 = vld [vmem:[%s1 + $0x740] sm:$0xff]
    %v291 = vld [vmem:[%s1 + $0x748] sm:$0xff]
    %v292 = vld [vmem:[%s1 + $0x750] sm:$0xff]
    %v293 = vld [vmem:[%s1 + $0x758] sm:$0xff]
    %v294 = vld [vmem:[%s1 + $0x760] sm:$0xff]
    %v295 = vld [vmem:[%s1 + $0x768] sm:$0xff]
    %v296 = vld [vmem:[%s1 + $0x770] sm:$0xff]
    %v297 = vld [vmem:[%s1 + $0x778] sm:$0xff]
    %v298 = vld [vmem:[%s1 + $0x780] sm:$0xff]
    %v299 = vld [vmem:[%s1 + $0x788] sm:$0xff]
    %v300 = vld [vmem:[%s1 + $0x790] sm:$0xff]
    %v301 = vld [vmem:[%s1 + $0x798] sm:$0xff]
    %v302 = vld [vmem:[%s1 + $0x7a0] sm:$0xff]
    %v303 = vld [vmem:[%s1 + $0x7a8] sm:$0xff]
    %v304 = vld [vmem:[%s1 + $0x7b0] sm:$0xff]
    %v305 = vld [vmem:[%s1 + $0x7b8] sm:$0xff]
    %v306 = vld [vmem:[%s1 + $0x7c0] sm:$0xff]
    %v307 = vld [vmem:[%s1 + $0x7c8] sm:$0xff]
    %v308 = vld [vmem:[%s1 + $0x7d0] sm:$0xff]
    %v309 = vld [vmem:[%s1 + $0x7d8] sm:$0xff]
    %v310 = vld [vmem:[%s1 + $0x7e0] sm:$0xff]
    %v311 = vld [vmem:[%s1 + $0x7e8] sm:$0xff]
    %v312 = vld [vmem:[%s1 + $0x7f0] sm:$0xff]
    %v313 = vld [vmem:[%s1 + $0x7f8] sm:$0xff]
    %v314 = vld [vmem:[%s1 + $0x800] sm:$0xff]
    %v315 = vld [vmem:[%s1 + $0x808] sm:$0xff]
    %v316 = vld [vmem:[%s1 + $0x810] sm:$0xff]
    %v317 = vld [vmem:[%s1 + $0x818] sm:$0xff]
    %v318 = vld [vmem:[%s1 + $0x820] sm:$0xff]
    %v319 = vld [vmem:[%s1 + $0x828] sm:$0xff]
    %v320 = vld [vmem:[%s1 + $0x830] sm:$0xff]
    %v321 = vld [vmem:[%s1 + $0x838] sm:$0xff]
    %v322 = vld [vmem:[%s1 + $0x840] sm:$0xff]
    %v323 = vld [vmem:[%s1 + $0x848] sm:$0xff]
    %v324 = vld [vmem:[%s1 + $0x850] sm:$0xff]
    %v325 = vld [vmem:[%s1 + $0x858] sm:$0xff]
    %v326 = vld [vmem:[%s1 + $0x860] sm:$0xff]
    %v327 = vld [vmem:[%s1 + $0x868] sm:$0xff]
    %v328 = vld [vmem:[%s1 + $0x870] sm:$0xff]
    %v329 = vld [vmem:[%s1 + $0x878] sm:$0xff]
    %v330 = vld [vmem:[%s1 + $0x880] sm:$0xff]
    %v331 = vld [vmem:[%s1 + $0x888] sm:$0xff]
    %v332 = vld [vmem:[%s1 + $0x890] sm:$0xff]
    %v333 = vld [vmem:[%s1 + $0x898] sm:$0xff]
    %v334 = vld [vmem:[%s1 + $0x8a0] sm:$0xff]
    %v335 = vld [vmem:[%s1 + $0x8a8] sm:$0xff]
    %v336 = vld [vmem:[%s1 + $0x8b0] sm:$0xff]
    %v337 = vld [vmem:[%s1 + $0x8b8] sm:$0xff]
    %v338 = vld [vmem:[%s1 + $0x8c0] sm:$0xff]
    %v339 = vld [vmem:[%s1 + $0x8c8] sm:$0xff]
    %v340 = vld [vmem:[%s1 + $0x8d0] sm:$0xff]
    %v341 = vld [vmem:[%s1 + $0x8d8] sm:$0xff]
    %v342 = vld [vmem:[%s1 + $0x8e0] sm:$0xff]
    %v343 = vld [vmem:[%s1 + $0x8e8] sm:$0xff]
    %v344 = vld [vmem:[%s1 + $0x8f0] sm:$0xff]
    %v345 = vld [vmem:[%s1 + $0x8f8] sm:$0xff]
    %v346 = vld [vmem:[%s1 + $0x900] sm:$0xff]
    %v347 = vld [vmem:[%s1 + $0x908] sm:$0xff]
    %v348 = vld [vmem:[%s1 + $0x910] sm:$0xff]
    %v349 = vld [vmem:[%s1 + $0x918] sm:$0xff]
    %v350 = vld [vmem:[%s1 + $0x920] sm:$0xff]
    %v351 = vld [vmem:[%s1 + $0x928] sm:$0xff]
    %v352 = vld [vmem:[%s1 + $0x930] sm:$0xff]
    %v353 = vld [vmem:[%s1 + $0x938] sm:$0xff]
    %v354 = vld [vmem:[%s1 + $0x940] sm:$0xff]
    %v355 = vld [vmem:[%s1 + $0x948] sm:$0xff]
    %v356 = vld [vmem:[%s1 + $0x950] sm:$0xff]
    %v357 = vld [vmem:[%s1 + $0x958] sm:$0xff]
    %v358 = vld [vmem:[%s1 + $0x960] sm:$0xff]
    %v359 = vld [vmem:[%s1 + $0x968] sm:$0xff]
    %v360 = vld [vmem:[%s1 + $0x970] sm:$0xff]
    %v361 = vld [vmem:[%s1 + $0x978] sm:$0xff]
    %v362 = vld [vmem:[%s1 + $0x980] sm:$0xff]
    %v363 = vld [vmem:[%s1 + $0x988] sm:$0xff]
    %v364 = vld [vmem:[%s1 + $0x990] sm:$0xff]
    %v365 = vld [vmem:[%s1 + $0x998] sm:$0xff]
    %v366 = vld [vmem:[%s1 + $0x9a0] sm:$0xff]
    %v367 = vld [vmem:[%s1 + $0x9a8] sm:$0xff]
    %v368 = vld [vmem:[%s1 + $0x9b0] sm:$0xff]
    %v369 = vld [vmem:[%s1 + $0x9b8] sm:$0xff]
    %v370 = vld [vmem:[%s1 + $0x9c0] sm:$0xff]
    %v371 = vld [vmem:[%s1 + $0x9c8] sm:$0xff]
    %v372 = vld [vmem:[%s1 + $0x9d0] sm:$0xff]
    %v373 = vld [vmem:[%s1 + $0x9d8] sm:$0xff]
    %v374 = vld [vmem:[%s1 + $0x9e0] sm:$0xff]
    %v375 = vld [vmem:[%s1 + $0x9e8] sm:$0xff]
    %v376 = vld [vmem:[%s1 + $0x9f0] sm:$0xff]
    %v377 = vld [vmem:[%s1 + $0x9f8] sm:$0xff]
    %v378 = vld [vmem:[%s1 + $0xa00] sm:$0xff]
    %v379 = vld [vmem:[%s1 + $0xa08] sm:$0xff]
    %v380 = vld [vmem:[%s1 + $0xa10] sm:$0xff]
    %v381 = vld [vmem:[%s1 + $0xa18] sm:$0xff]
    %v382 = vld [vmem:[%s1 + $0xa20] sm:$0xff]
    %v383 = vld [vmem:[%s1 + $0xa28] sm:$0xff]
    %v384 = vld [vmem:[%s1 + $0xa30] sm:$0xff]
    %v385 = vld [vmem:[%s1 + $0xa38] sm:$0xff]
    %v386 = vld [vmem:[%s1 + $0xa40] sm:$0xff]
    %v387 = vld [vmem:[%s1 + $0xa48] sm:$0xff]
    %v388 = vld [vmem:[%s1 + $0xa50] sm:$0xff]
    %v389 = vld [vmem:[%s1 + $0xa58] sm:$0xff]
    %v390 = vld [vmem:[%s1 + $0xa60] sm:$0xff]
    %v391 = vld [vmem:[%s1 + $0xa68] sm:$0xff]
    %v392 = vld [vmem:[%s1 + $0xa70] sm:$0xff]
    %v393 = vld [vmem:[%s1 + $0xa78] sm:$0xff]
    %v394 = vld [vmem:[%s1 + $0xa80] sm:$0xff]
    %v395 = vld [vmem:[%s1 + $0xa88] sm:$0xff]
    %v396 = vld [vmem:[%s1 + $0xa90] sm:$0xff]
    %v397 = vld [vmem:[%s1 + $0xa98] sm:$0xff]
    %v398 = vld [vmem:[%s1 + $0xaa0] sm:$0xff]
    %v399 = vld [vmem:[%s1 + $0xaa8] sm:$0xff]
    %v400 = vld [vmem:[%s1 + $0xab0] sm:$0xff]
    %v401 = vld [vmem:[%s1 + $0xab8] sm:$0xff]
    %v402 = vld [vmem:[%s1 + $0xac0] sm:$0xff]
    %v403 = vld [vmem:[%s1 + $0xac8] sm:$0xff]
    %v404 = vld [vmem:[%s1 + $0xad0] sm:$0xff]
    %v405 = vld [vmem:[%s1 + $0xad8] sm:$0xff]
    %v406 = vld [vmem:[%s1 + $0xae0] sm:$0xff]
    %v407 = vld [vmem:[%s1 + $0xae8] sm:$0xff]
    %v408 = vld [vmem:[%s1 + $0xaf0] sm:$0xff]
    %v409 = vld [vmem:[%s1 + $0xaf8] sm:$0xff]
    %v410 = vld [vmem:[%s1 + $0xb00] sm:$0xff]
    %v411 = vld [vmem:[%s1 + $0xb08] sm:$0xff]
    %v412 = vld [vmem:[%s1 + $0xb10] sm:$0xff]
    %v413 = vld [vmem:[%s1 + $0xb18] sm:$0xff]
    %v414 = vld [vmem:[%s1 + $0xb20] sm:$0xff]
    %v415 = vld [vmem:[%s1 + $0xb28] sm:$0xff]
    %v416 = vld [vmem:[%s1 + $0xb30] sm:$0xff]
    %v417 = vld [vmem:[%s1 + $0xb38] sm:$0xff]
    %v418 = vld [vmem:[%s1 + $0xb40] sm:$0xff]
    %v419 = vld [vmem:[%s1 + $0xb48] sm:$0xff]
    %v420 = vld [vmem:[%s1 + $0xb50] sm:$0xff]
    %v421 = vld [vmem:[%s1 + $0xb58] sm:$0xff]
    %v422 = vld [vmem:[%s1 + $0xb60] sm:$0xff]
    %v423 = vld [vmem:[%s1 + $0xb68] sm:$0xff]
    %v424 = vld [vmem:[%s1 + $0xb70] sm:$0xff]
    %v425 = vld [vmem:[%s1 + $0xb78] sm:$0xff]
    %v426 = vld [vmem:[%s1 + $0xb80] sm:$0xff]
    %v427 = vld [vmem:[%s1 + $0xb88] sm:$0xff]
    %v428 = vld [vmem:[%s1 + $0xb90] sm:$0xff]
    %v429 = vld [vmem:[%s1 + $0xb98] sm:$0xff]
    %v430 = vld [vmem:[%s1 + $0xba0] sm:$0xff]
    %v431 = vld [vmem:[%s1 + $0xba8] sm:$0xff]
    %v432 = vld [vmem:[%s1 + $0xbb0] sm:$0xff]
    %v433 = vld [vmem:[%s1 + $0xbb8] sm:$0xff]
    %v434 = vld [vmem:[%s1 + $0xbc0] sm:$0xff]
    %v435 = vld [vmem:[%s1 + $0xbc8] sm:$0xff]
    %v436 = vld [vmem:[%s1 + $0xbd0] sm:$0xff]
    %v437 = vld [vmem:[%s1 + $0xbd8] sm:$0xff]
    %v438 = vld [vmem:[%s1 + $0xbe0] sm:$0xff]
    %v439 = vld [vmem:[%s1 + $0xbe8] sm:$0xff]
    %v440 = vld [vmem:[%s1 + $0xbf0] sm:$0xff]
    %v441 = vld [vmem:[%s1 + $0xbf8] sm:$0xff]
    %v442 = vld [vmem:[%s1 + $0xc00] sm:$0xff]
    %v443 = vld [vmem:[%s1 + $0xc08] sm:$0xff]
    %v444 = vld [vmem:[%s1 + $0xc10] sm:$0xff]
    %v445 = vld [vmem:[%s1 + $0xc18] sm:$0xff]
    %v446 = vld [vmem:[%s1 + $0xc20] sm:$0xff]
    %v447 = vld [vmem:[%s1 + $0xc28] sm:$0xff]
    %v448 = vld [vmem:[%s1 + $0xc30] sm:$0xff]
    %v449 = vld [vmem:[%s1 + $0xc38] sm:$0xff]
    %v450 = vld [vmem:[%s1 + $0xc40] sm:$0xff]
    %v451 = vld [vmem:[%s1 + $0xc48] sm:$0xff]
    %v452 = vld [vmem:[%s1 + $0xc50] sm:$0xff]
    %v453 = vld [vmem:[%s1 + $0xc58] sm:$0xff]
    %v454 = vld [vmem:[%s1 + $0xc60] sm:$0xff]
    %v455 = vld [vmem:[%s1 + $0xc68] sm:$0xff]
    %v456 = vld [vmem:[%s1 + $0xc70] sm:$0xff]
    %v457 = vld [vmem:[%s1 + $0xc78] sm:$0xff]
    %v458 = vld [vmem:[%s1 + $0xc80] sm:$0xff]
    %v459 = vld [vmem:[%s1 + $0xc88] sm:$0xff]
    %v460 = vld [vmem:[%s1 + $0xc90] sm:$0xff]
    %v461 = vld [vmem:[%s1 + $0xc98] sm:$0xff]
    %v462 = vld [vmem:[%s1 + $0xca0] sm:$0xff]
    %v463 = vld [vmem:[%s1 + $0xca8] sm:$0xff]
    %v464 = vld [vmem:[%s1 + $0xcb0] sm:$0xff]
    %v465 = vld [vmem:[%s1 + $0xcb8] sm:$0xff]
    %v466 = vld [vmem:[%s1 + $0xcc0] sm:$0xff]
    %v467 = vld [vmem:[%s1 + $0xcc8] sm:$0xff]
    %v468 = vld [vmem:[%s1 + $0xcd0] sm:$0xff]
    %v469 = vld [vmem:[%s1 + $0xcd8] sm:$0xff]
    %v470 = vld [vmem:[%s1 + $0xce0] sm:$0xff]
    %v471 = vld [vmem:[%s1 + $0xce8] sm:$0xff]
    %v472 = vld [vmem:[%s1 + $0xcf0] sm:$0xff]
    %v473 = vld [vmem:[%s1 + $0xcf8] sm:$0xff]
    %v474 = vld [vmem:[%s1 + $0xd00] sm:$0xff]
    %v475 = vld [vmem:[%s1 + $0xd08] sm:$0xff]
    %v476 = vld [vmem:[%s1 + $0xd10] sm:$0xff]
    %v477 = vld [vmem:[%s1 + $0xd18] sm:$0xff]
    %v478 = vld [vmem:[%s1 + $0xd20] sm:$0xff]
    %v479 = vld [vmem:[%s1 + $0xd28] sm:$0xff]
    %v480 = vld [vmem:[%s1 + $0xd30] sm:$0xff]
    %v481 = vld [vmem:[%s1 + $0xd38] sm:$0xff]
    %v482 = vld [vmem:[%s1 + $0xd40] sm:$0xff]
    %v483 = vld [vmem:[%s1 + $0xd48] sm:$0xff]
    %v484 = vld [vmem:[%s1 + $0xd50] sm:$0xff]
    %v485 = vld [vmem:[%s1 + $0xd58] sm:$0xff]
    %v486 = vld [vmem:[%s1 + $0xd60] sm:$0xff]
    %v487 = vld [vmem:[%s1 + $0xd68] sm:$0xff]
    %v488 = vld [vmem:[%s1 + $0xd70] sm:$0xff]
    %v489 = vld [vmem:[%s1 + $0xd78] sm:$0xff]
    %v490 = vld [vmem:[%s1 + $0xd80] sm:$0xff]
    %v491 = vld [vmem:[%s1 + $0xd88] sm:$0xff]
    %v492 = vld [vmem:[%s1 + $0xd90] sm:$0xff]
    %v493 = vld [vmem:[%s1 + $0xd98] sm:$0xff]
    %v494 = vld [vmem:[%s1 + $0xda0] sm:$0xff]
    %v495 = vld [vmem:[%s1 + $0xda8] sm:$0xff]
    %v496 = vld [vmem:[%s1 + $0xdb0] sm:$0xff]
    %v497 = vld [vmem:[%s1 + $0xdb8] sm:$0xff]
    %v498 = vld [vmem:[%s1 + $0xdc0] sm:$0xff]
    %v499 = vld [vmem:[%s1 + $0xdc8] sm:$0xff]
    %v500 = vld [vmem:[%s1 + $0xdd0] sm:$0xff]
    %v501 = vld [vmem:[%s1 + $0xdd8] sm:$0xff]
    %v502 = vld [vmem:[%s1 + $0xde0] sm:$0xff]
    %v503 = vld [vmem:[%s1 + $0xde8] sm:$0xff]
    %v504 = vld [vmem:[%s1 + $0xdf0] sm:$0xff]
    %v505 = vld [vmem:[%s1 + $0xdf8] sm:$0xff]
    %v506 = vld [vmem:[%s1 + $0xe00] sm:$0xff]
    %v507 = vld [vmem:[%s1 + $0xe08] sm:$0xff]
    %v508 = vld [vmem:[%s1 + $0xe10] sm:$0xff]
    %v509 = vld [vmem:[%s1 + $0xe18] sm:$0xff]
    %v510 = vld [vmem:[%s1 + $0xe20] sm:$0xff]
    %v511 = vld [vmem:[%s1 + $0xe28] sm:$0xff]
    %v512 = vld [vmem:[%s1 + $0xe30] sm:$0xff]
    %v513 = vld [vmem:[%s1 + $0xe38] sm:$0xff]
    %v514 = vld [vmem:[%s1 + $0xe40] sm:$0xff]
    %v515 = vld [vmem:[%s1 + $0xe48] sm:$0xff]
    %v516 = vld [vmem:[%s1 + $0xe50] sm:$0xff]
    %v517 = vld [vmem:[%s1 + $0xe58] sm:$0xff]
    %v518 = vld [vmem:[%s1 + $0xe60] sm:$0xff]
    %v519 = vld [vmem:[%s1 + $0xe68] sm:$0xff]
    %v520 = vld [vmem:[%s1 + $0xe70] sm:$0xff]
    %v521 = vld [vmem:[%s1 + $0xe78] sm:$0xff]
    %v522 = vld [vmem:[%s1 + $0xe80] sm:$0xff]
    %v523 = vld [vmem:[%s1 + $0xe88] sm:$0xff]
    %v524 = vld [vmem:[%s1 + $0xe90] sm:$0xff]
    %v525 = vld [vmem:[%s1 + $0xe98] sm:$0xff]
    %v526 = vld [vmem:[%s1 + $0xea0] sm:$0xff]
    %v527 = vld [vmem:[%s1 + $0xea8] sm:$0xff]
    %v528 = vld [vmem:[%s1 + $0xeb0] sm:$0xff]
    %v529 = vld [vmem:[%s1 + $0xeb8] sm:$0xff]
    %v530 = vld [vmem:[%s1 + $0xec0] sm:$0xff]
    %v531 = vld [vmem:[%s1 + $0xec8] sm:$0xff]
    %v532 = vld [vmem:[%s1 + $0xed0] sm:$0xff]
    %v533 = vld [vmem:[%s1 + $0xed8] sm:$0xff]
    %v534 = vld [vmem:[%s1 + $0xee0] sm:$0xff]
    %v535 = vld [vmem:[%s1 + $0xee8] sm:$0xff]
    %v536 = vld [vmem:[%s1 + $0xef0] sm:$0xff]
    %v537 = vld [vmem:[%s1 + $0xef8] sm:$0xff]
    %v538 = vld [vmem:[%s1 + $0xf00] sm:$0xff]
    %v539 = vld [vmem:[%s1 + $0xf08] sm:$0xff]
    %v540 = vld [vmem:[%s1 + $0xf10] sm:$0xff]
    %v541 = vld [vmem:[%s1 + $0xf18] sm:$0xff]
    %v542 = vld [vmem:[%s1 + $0xf20] sm:$0xff]
    %v543 = vld [vmem:[%s1 + $0xf28] sm:$0xff]
    %v544 = vld [vmem:[%s1 + $0xf30] sm:$0xff]
    %v545 = vld [vmem:[%s1 + $0xf38] sm:$0xff]
    %v546 = vld [vmem:[%s1 + $0xf40] sm:$0xff]
    %v547 = vld [vmem:[%s1 + $0xf48] sm:$0xff]
    %v548 = vld [vmem:[%s1 + $0xf50] sm:$0xff]
    %v549 = vld [vmem:[%s1 + $0xf58] sm:$0xff]
    %v550 = vld [vmem:[%s1 + $0xf60] sm:$0xff]
    %v551 = vld [vmem:[%s1 + $0xf68] sm:$0xff]
    %v552 = vld [vmem:[%s1 + $0xf70] sm:$0xff]
    %v553 = vld [vmem:[%s1 + $0xf78] sm:$0xff]
    %v554 = vld [vmem:[%s1 + $0xf80] sm:$0xff]
    %v555 = vld [vmem:[%s1 + $0xf88] sm:$0xff]
    %v556 = vld [vmem:[%s1 + $0xf90] sm:$0xff]
    %v557 = vld [vmem:[%s1 + $0xf98] sm:$0xff]
    %v558 = vld [vmem:[%s1 + $0xfa0] sm:$0xff]
    %v559 = vld [vmem:[%s1 + $0xfa8] sm:$0xff]
    %v560 = vld [vmem:[%s1 + $0xfb0] sm:$0xff]
    %v561 = vld [vmem:[%s1 + $0xfb8] sm:$0xff]
    %v562 = vld [vmem:[%s1 + $0xfc0] sm:$0xff]
    %v563 = vld [vmem:[%s1 + $0xfc8] sm:$0xff]
    %v564 = vld [vmem:[%s1 + $0xfd0] sm:$0xff]
    %v565 = vld [vmem:[%s1 + $0xfd8] sm:$0xff]
    %v566 = vld [vmem:[%s1 + $0xfe0] sm:$0xff]
    %v567 = vld [vmem:[%s1 + $0xfe8] sm:$0xff]
    %v568 = vld [vmem:[%s1 + $0xff0] sm:$0xff]
    %v569 = vld [vmem:[%s1 + $0xff8] sm:$0xff]
    %v570 = vld [vmem:[%s2] sm:$0x3]
    %v572 = vlaneseq
    %v573 = vshrl.u32 %v572, 7
    %v574 = vsub.s32 0, %v573
    %v575 = vrot.slane %v570, %v574
    %v576 = vlaneseq
    %v577 = vshrl.u32 %v576, 7
    %v578 = vsub.s32 1, %v577
    %v579 = vrot.slane %v570, %v578
    %v586 = vcombine.high %v54, %v54
    %v588 = vunpack.c.l.s4 1983009808
    %v589 = vunpack.c.0.s8 %v588
    %v590 = vlaneseq
    %v591 = vshrl.u32 %v590, 7
    %v592 = vsub.s32 %v589, %v591
    %v593 = vrot.slane %v54, %v592
    %v595 = vunpack.c.l.s4 1983009808
    %v596 = vunpack.c.0.s8 %v595
    %v597 = vlaneseq
    %v598 = vshrl.u32 %v597, 7
    %v599 = vsub.s32 %v596, %v598
    %v600 = vrot.slane %v586, %v599
    %v601 = vcombine.high %v593, %v593
    %v602 = vcombine.high %v600, %v600
    %v603 = vcombine.high %v55, %v55
    %v605 = vunpack.c.l.s4 1983009808
    %v606 = vunpack.c.0.s8 %v605
    %v607 = vlaneseq
    %v608 = vshrl.u32 %v607, 7
    %v609 = vsub.s32 %v606, %v608
    %v610 = vrot.slane %v55, %v609
    %v612 = vunpack.c.l.s4 1983009808
    %v613 = vunpack.c.0.s8 %v612
    %v614 = vlaneseq
    %v615 = vshrl.u32 %v614, 7
    %v616 = vsub.s32 %v613, %v615
    %v617 = vrot.slane %v603, %v616
    %v618 = vcombine.high %v610, %v610
    %v619 = vcombine.high %v617, %v617
    %v620 = vcombine.high %v56, %v56
    %v622 = vunpack.c.l.s4 1983009808
    %v623 = vunpack.c.0.s8 %v622
    %v624 = vlaneseq
    %v625 = vshrl.u32 %v624, 7
    %v626 = vsub.s32 %v623, %v625
    %v627 = vrot.slane %v56, %v626
    %v629 = vunpack.c.l.s4 1983009808
    %v630 = vunpack.c.0.s8 %v629
    %v631 = vlaneseq
    %v632 = vshrl.u32 %v631, 7
    %v633 = vsub.s32 %v630, %v632
    %v634 = vrot.slane %v620, %v633
    %v635 = vcombine.high %v627, %v627
    %v636 = vcombine.high %v634, %v634
    %v637 = vcombine.high %v57, %v57
    %v639 = vunpack.c.l.s4 1983009808
    %v640 = vunpack.c.0.s8 %v639
    %v641 = vlaneseq
    %v642 = vshrl.u32 %v641, 7
    %v643 = vsub.s32 %v640, %v642
    %v644 = vrot.slane %v57, %v643
    %v646 = vunpack.c.l.s4 1983009808
    %v647 = vunpack.c.0.s8 %v646
    %v648 = vlaneseq
    %v649 = vshrl.u32 %v648, 7
    %v650 = vsub.s32 %v647, %v649
    %v651 = vrot.slane %v637, %v650
    %v652 = vcombine.high %v644, %v644
    %v653 = vcombine.high %v651, %v651
    %670 = vmatprep.subr.mxu0 %v59
    %671 = vmatpush1.msra.mxu0 %v58
    %672 = vmatprep.subr.mxu0 %v61
    %673 = vmatpush1.msra.mxu0 %v60
    %674 = vmatprep.subr.mxu0 %v63
    %675 = vmatpush1.msra.mxu0 %v62
    %676 = vmatprep.subr.mxu0 %v65
    %677 = vmatpush1.msra.mxu0 %v64
    %678 = vmatprep.subr.mxu0 %v67
    %679 = vmatpush1.msra.mxu0 %v66
    %680 = vmatprep.subr.mxu0 %v69
    %681 = vmatpush1.msra.mxu0 %v68
    %682 = vmatprep.subr.mxu0 %v71
    %683 = vmatpush1.msra.mxu0 %v70
    %684 = vmatprep.subr.mxu0 %v73
    %685 = vmatpush1.msra.mxu0 %v72
    %686 = vmatprep.subr.mxu0 %v75
    %687 = vmatpush1.msra.mxu0 %v74
    %688 = vmatprep.subr.mxu0 %v77
    %689 = vmatpush1.msra.mxu0 %v76
    %690 = vmatprep.subr.mxu0 %v79
    %691 = vmatpush1.msra.mxu0 %v78
    %692 = vmatprep.subr.mxu0 %v81
    %693 = vmatpush1.msra.mxu0 %v80
    %694 = vmatprep.subr.mxu0 %v83
    %695 = vmatpush1.msra.mxu0 %v82
    %696 = vmatprep.subr.mxu0 %v85
    %697 = vmatpush1.msra.mxu0 %v84
    %698 = vmatprep.subr.mxu0 %v87
    %699 = vmatpush1.msra.mxu0 %v86
    %700 = vmatprep.subr.mxu0 %v89
    %701 = vmatpush1.msra.mxu0 %v88
    %702 = vmatprep.subr.mxu0 %v91
    %703 = vmatpush1.msra.mxu0 %v90
    %704 = vmatprep.subr.mxu0 %v93
    %705 = vmatpush1.msra.mxu0 %v92
    %706 = vmatprep.subr.mxu0 %v95
    %707 = vmatpush1.msra.mxu0 %v94
    %708 = vmatprep.subr.mxu0 %v97
    %709 = vmatpush1.msra.mxu0 %v96
    %710 = vmatprep.subr.mxu0 %v99
    %711 = vmatpush1.msra.mxu0 %v98
    %712 = vmatprep.subr.mxu0 %v101
    %713 = vmatpush1.msra.mxu0 %v100
    %714 = vmatprep.subr.mxu0 %v103
    %715 = vmatpush1.msra.mxu0 %v102
    %716 = vmatprep.subr.mxu0 %v105
    %717 = vmatpush1.msra.mxu0 %v104
    %718 = vmatprep.subr.mxu0 %v107
    %719 = vmatpush1.msra.mxu0 %v106
    %720 = vmatprep.subr.mxu0 %v109
    %721 = vmatpush1.msra.mxu0 %v108
    %722 = vmatprep.subr.mxu0 %v111
    %723 = vmatpush1.msra.mxu0 %v110
    %724 = vmatprep.subr.mxu0 %v113
    %725 = vmatpush1.msra.mxu0 %v112
    %726 = vmatprep.subr.mxu0 %v115
    %727 = vmatpush1.msra.mxu0 %v114
    %728 = vmatprep.subr.mxu0 %v117
    %729 = vmatpush1.msra.mxu0 %v116
    %730 = vmatprep.subr.mxu0 %v119
    %731 = vmatpush1.msra.mxu0 %v118
    %732 = vmatprep.subr.mxu0 %v121
    %733 = vmatpush1.msra.mxu0 %v120
    %734 = vmatprep.mubr.f32.mxu0 %v601
    %735 = vmatmul.mubr.f32.gmra.mrb[0].mxu0 %v593
    %v736 = vpop.f32.mrb[0].mxu0
    %v737 = vadd.f32 %v575, %v736
    %v738 = vpop.f32.mrb[0].mxu0
    %v739 = vadd.f32 %v579, %v738
    %740 = vdwg.mxu0
    %741 = vmatprep.subr.mxu0 %v123
    %742 = vmatpush1.msra.mxu0 %v122
    %743 = vmatprep.subr.mxu0 %v125
    %744 = vmatpush1.msra.mxu0 %v124
    %745 = vmatprep.subr.mxu0 %v127
    %746 = vmatpush1.msra.mxu0 %v126
    %747 = vmatprep.subr.mxu0 %v129
    %748 = vmatpush1.msra.mxu0 %v128
    %749 = vmatprep.subr.mxu0 %v131
    %750 = vmatpush1.msra.mxu0 %v130
    %751 = vmatprep.subr.mxu0 %v133
    %752 = vmatpush1.msra.mxu0 %v132
    %753 = vmatprep.subr.mxu0 %v135
    %754 = vmatpush1.msra.mxu0 %v134
    %755 = vmatprep.subr.mxu0 %v137
    %756 = vmatpush1.msra.mxu0 %v136
    %757 = vmatprep.subr.mxu0 %v139
    %758 = vmatpush1.msra.mxu0 %v138
    %759 = vmatprep.subr.mxu0 %v141
    %760 = vmatpush1.msra.mxu0 %v140
    %761 = vmatprep.subr.mxu0 %v143
    %762 = vmatpush1.msra.mxu0 %v142
    %763 = vmatprep.subr.mxu0 %v145
    %764 = vmatpush1.msra.mxu0 %v144
    %765 = vmatprep.subr.mxu0 %v147
    %766 = vmatpush1.msra.mxu0 %v146
    %767 = vmatprep.subr.mxu0 %v149
    %768 = vmatpush1.msra.mxu0 %v148
    %769 = vmatprep.subr.mxu0 %v151
    %770 = vmatpush1.msra.mxu0 %v150
    %771 = vmatprep.subr.mxu0 %v153
    %772 = vmatpush1.msra.mxu0 %v152
    %773 = vmatprep.subr.mxu0 %v155
    %774 = vmatpush1.msra.mxu0 %v154
    %775 = vmatprep.subr.mxu0 %v157
    %776 = vmatpush1.msra.mxu0 %v156
    %777 = vmatprep.subr.mxu0 %v159
    %778 = vmatpush1.msra.mxu0 %v158
    %779 = vmatprep.subr.mxu0 %v161
    %780 = vmatpush1.msra.mxu0 %v160
    %781 = vmatprep.subr.mxu0 %v163
    %782 = vmatpush1.msra.mxu0 %v162
    %783 = vmatprep.subr.mxu0 %v165
    %784 = vmatpush1.msra.mxu0 %v164
    %785 = vmatprep.subr.mxu0 %v167
    %786 = vmatpush1.msra.mxu0 %v166
    %787 = vmatprep.subr.mxu0 %v169
    %788 = vmatpush1.msra.mxu0 %v168
    %789 = vmatprep.subr.mxu0 %v171
    %790 = vmatpush1.msra.mxu0 %v170
    %791 = vmatprep.subr.mxu0 %v173
    %792 = vmatpush1.msra.mxu0 %v172
    %793 = vmatprep.subr.mxu0 %v175
    %794 = vmatpush1.msra.mxu0 %v174
    %795 = vmatprep.subr.mxu0 %v177
    %796 = vmatpush1.msra.mxu0 %v176
    %797 = vmatprep.subr.mxu0 %v179
    %798 = vmatpush1.msra.mxu0 %v178
    %799 = vmatprep.subr.mxu0 %v181
    %800 = vmatpush1.msra.mxu0 %v180
    %801 = vmatprep.subr.mxu0 %v183
    %802 = vmatpush1.msra.mxu0 %v182
    %803 = vmatprep.subr.mxu0 %v185
    %804 = vmatpush1.msra.mxu0 %v184
    %805 = vmatprep.mubr.f32.mxu0 %v602
    %806 = vmatmul.mubr.f32.gmra.mrb[0].mxu0 %v600
    %v807 = vpop.f32.mrb[0].mxu0
    %v808 = vadd.f32 %v737, %v807
    %v809 = vpop.f32.mrb[0].mxu0
    %v810 = vadd.f32 %v739, %v809
    %811 = vdwg.mxu0
    %812 = vmatprep.subr.mxu0 %v187
    %813 = vmatpush1.msra.mxu0 %v186
    %814 = vmatprep.subr.mxu0 %v189
    %815 = vmatpush1.msra.mxu0 %v188
    %816 = vmatprep.subr.mxu0 %v191
    %817 = vmatpush1.msra.mxu0 %v190
    %818 = vmatprep.subr.mxu0 %v193
    %819 = vmatpush1.msra.mxu0 %v192
    %820 = vmatprep.subr.mxu0 %v195
    %821 = vmatpush1.msra.mxu0 %v194
    %822 = vmatprep.subr.mxu0 %v197
    %823 = vmatpush1.msra.mxu0 %v196
    %824 = vmatprep.subr.mxu0 %v199
    %825 = vmatpush1.msra.mxu0 %v198
    %826 = vmatprep.subr.mxu0 %v201
    %827 = vmatpush1.msra.mxu0 %v200
    %828 = vmatprep.subr.mxu0 %v203
    %829 = vmatpush1.msra.mxu0 %v202
    %830 = vmatprep.subr.mxu0 %v205
    %831 = vmatpush1.msra.mxu0 %v204
    %832 = vmatprep.subr.mxu0 %v207
    %833 = vmatpush1.msra.mxu0 %v206
    %834 = vmatprep.subr.mxu0 %v209
    %835 = vmatpush1.msra.mxu0 %v208
    %836 = vmatprep.subr.mxu0 %v211
    %837 = vmatpush1.msra.mxu0 %v210
    %838 = vmatprep.subr.mxu0 %v213
    %839 = vmatpush1.msra.mxu0 %v212
    %840 = vmatprep.subr.mxu0 %v215
    %841 = vmatpush1.msra.mxu0 %v214
    %842 = vmatprep.subr.mxu0 %v217
    %843 = vmatpush1.msra.mxu0 %v216
    %844 = vmatprep.subr.mxu0 %v219
    %845 = vmatpush1.msra.mxu0 %v218
    %846 = vmatprep.subr.mxu0 %v221
    %847 = vmatpush1.msra.mxu0 %v220
    %848 = vmatprep.subr.mxu0 %v223
    %849 = vmatpush1.msra.mxu0 %v222
    %850 = vmatprep.subr.mxu0 %v225
    %851 = vmatpush1.msra.mxu0 %v224
    %852 = vmatprep.subr.mxu0 %v227
    %853 = vmatpush1.msra.mxu0 %v226
    %854 = vmatprep.subr.mxu0 %v229
    %855 = vmatpush1.msra.mxu0 %v228
    %856 = vmatprep.subr.mxu0 %v231
    %857 = vmatpush1.msra.mxu0 %v230
    %858 = vmatprep.subr.mxu0 %v233
    %859 = vmatpush1.msra.mxu0 %v232
    %860 = vmatprep.subr.mxu0 %v235
    %861 = vmatpush1.msra.mxu0 %v234
    %862 = vmatprep.subr.mxu0 %v237
    %863 = vmatpush1.msra.mxu0 %v236
    %864 = vmatprep.subr.mxu0 %v239
    %865 = vmatpush1.msra.mxu0 %v238
    %866 = vmatprep.subr.mxu0 %v241
    %867 = vmatpush1.msra.mxu0 %v240
    %868 = vmatprep.subr.mxu0 %v243
    %869 = vmatpush1.msra.mxu0 %v242
    %870 = vmatprep.subr.mxu0 %v245
    %871 = vmatpush1.msra.mxu0 %v244
    %872 = vmatprep.subr.mxu0 %v247
    %873 = vmatpush1.msra.mxu0 %v246
    %874 = vmatprep.subr.mxu0 %v249
    %875 = vmatpush1.msra.mxu0 %v248
    %876 = vmatprep.mubr.f32.mxu0 %v618
    %877 = vmatmul.mubr.f32.gmra.mrb[0].mxu0 %v610
    %v878 = vpop.f32.mrb[0].mxu0
    %v879 = vadd.f32 %v808, %v878
    %v880 = vpop.f32.mrb[0].mxu0
    %v881 = vadd.f32 %v810, %v880
    %882 = vdwg.mxu0
    %883 = vmatprep.subr.mxu0 %v251
    %884 = vmatpush1.msra.mxu0 %v250
    %885 = vmatprep.subr.mxu0 %v253
    %886 = vmatpush1.msra.mxu0 %v252
    %887 = vmatprep.subr.mxu0 %v255
    %888 = vmatpush1.msra.mxu0 %v254
    %889 = vmatprep.subr.mxu0 %v257
    %890 = vmatpush1.msra.mxu0 %v256
    %891 = vmatprep.subr.mxu0 %v259
    %892 = vmatpush1.msra.mxu0 %v258
    %893 = vmatprep.subr.mxu0 %v261
    %894 = vmatpush1.msra.mxu0 %v260
    %895 = vmatprep.subr.mxu0 %v263
    %896 = vmatpush1.msra.mxu0 %v262
    %897 = vmatprep.subr.mxu0 %v265
    %898 = vmatpush1.msra.mxu0 %v264
    %899 = vmatprep.subr.mxu0 %v267
    %900 = vmatpush1.msra.mxu0 %v266
    %901 = vmatprep.subr.mxu0 %v269
    %902 = vmatpush1.msra.mxu0 %v268
    %903 = vmatprep.subr.mxu0 %v271
    %904 = vmatpush1.msra.mxu0 %v270
    %905 = vmatprep.subr.mxu0 %v273
    %906 = vmatpush1.msra.mxu0 %v272
    %907 = vmatprep.subr.mxu0 %v275
    %908 = vmatpush1.msra.mxu0 %v274
    %909 = vmatprep.subr.mxu0 %v277
    %910 = vmatpush1.msra.mxu0 %v276
    %911 = vmatprep.subr.mxu0 %v279
    %912 = vmatpush1.msra.mxu0 %v278
    %913 = vmatprep.subr.mxu0 %v281
    %914 = vmatpush1.msra.mxu0 %v280
    %915 = vmatprep.subr.mxu0 %v283
    %916 = vmatpush1.msra.mxu0 %v282
    %917 = vmatprep.subr.mxu0 %v285
    %918 = vmatpush1.msra.mxu0 %v284
    %919 = vmatprep.subr.mxu0 %v287
    %920 = vmatpush1.msra.mxu0 %v286
    %921 = vmatprep.subr.mxu0 %v289
    %922 = vmatpush1.msra.mxu0 %v288
    %923 = vmatprep.subr.mxu0 %v291
    %924 = vmatpush1.msra.mxu0 %v290
    %925 = vmatprep.subr.mxu0 %v293
    %926 = vmatpush1.msra.mxu0 %v292
    %927 = vmatprep.subr.mxu0 %v295
    %928 = vmatpush1.msra.mxu0 %v294
    %929 = vmatprep.subr.mxu0 %v297
    %930 = vmatpush1.msra.mxu0 %v296
    %931 = vmatprep.subr.mxu0 %v299
    %932 = vmatpush1.msra.mxu0 %v298
    %933 = vmatprep.subr.mxu0 %v301
    %934 = vmatpush1.msra.mxu0 %v300
    %935 = vmatprep.subr.mxu0 %v303
    %936 = vmatpush1.msra.mxu0 %v302
    %937 = vmatprep.subr.mxu0 %v305
    %938 = vmatpush1.msra.mxu0 %v304
    %939 = vmatprep.subr.mxu0 %v307
    %940 = vmatpush1.msra.mxu0 %v306
    %941 = vmatprep.subr.mxu0 %v309
    %942 = vmatpush1.msra.mxu0 %v308
    %943 = vmatprep.subr.mxu0 %v311
    %944 = vmatpush1.msra.mxu0 %v310
    %945 = vmatprep.subr.mxu0 %v313
    %946 = vmatpush1.msra.mxu0 %v312
    %947 = vmatprep.mubr.f32.mxu0 %v619
    %948 = vmatmul.mubr.f32.gmra.mrb[0].mxu0 %v617
    %v949 = vpop.f32.mrb[0].mxu0
    %v950 = vadd.f32 %v879, %v949
    %v951 = vpop.f32.mrb[0].mxu0
    %v952 = vadd.f32 %v881, %v951
    %953 = vdwg.mxu0
    %954 = vmatprep.subr.mxu0 %v315
    %955 = vmatpush1.msra.mxu0 %v314
    %956 = vmatprep.subr.mxu0 %v317
    %957 = vmatpush1.msra.mxu0 %v316
    %958 = vmatprep.subr.mxu0 %v319
    %959 = vmatpush1.msra.mxu0 %v318
    %960 = vmatprep.subr.mxu0 %v321
    %961 = vmatpush1.msra.mxu0 %v320
    %962 = vmatprep.subr.mxu0 %v323
    %963 = vmatpush1.msra.mxu0 %v322
    %964 = vmatprep.subr.mxu0 %v325
    %965 = vmatpush1.msra.mxu0 %v324
    %966 = vmatprep.subr.mxu0 %v327
    %967 = vmatpush1.msra.mxu0 %v326
    %968 = vmatprep.subr.mxu0 %v329
    %969 = vmatpush1.msra.mxu0 %v328
    %970 = vmatprep.subr.mxu0 %v331
    %971 = vmatpush1.msra.mxu0 %v330
    %972 = vmatprep.subr.mxu0 %v333
    %973 = vmatpush1.msra.mxu0 %v332
    %974 = vmatprep.subr.mxu0 %v335
    %975 = vmatpush1.msra.mxu0 %v334
    %976 = vmatprep.subr.mxu0 %v337
    %977 = vmatpush1.msra.mxu0 %v336
    %978 = vmatprep.subr.mxu0 %v339
    %979 = vmatpush1.msra.mxu0 %v338
    %980 = vmatprep.subr.mxu0 %v341
    %981 = vmatpush1.msra.mxu0 %v340
    %982 = vmatprep.subr.mxu0 %v343
    %983 = vmatpush1.msra.mxu0 %v342
    %984 = vmatprep.subr.mxu0 %v345
    %985 = vmatpush1.msra.mxu0 %v344
    %986 = vmatprep.subr.mxu0 %v347
    %987 = vmatpush1.msra.mxu0 %v346
    %988 = vmatprep.subr.mxu0 %v349
    %989 = vmatpush1.msra.mxu0 %v348
    %990 = vmatprep.subr.mxu0 %v351
    %991 = vmatpush1.msra.mxu0 %v350
    %992 = vmatprep.subr.mxu0 %v353
    %993 = vmatpush1.msra.mxu0 %v352
    %994 = vmatprep.subr.mxu0 %v355
    %995 = vmatpush1.msra.mxu0 %v354
    %996 = vmatprep.subr.mxu0 %v357
    %997 = vmatpush1.msra.mxu0 %v356
    %998 = vmatprep.subr.mxu0 %v359
    %999 = vmatpush1.msra.mxu0 %v358
    %1000 = vmatprep.subr.mxu0 %v361
    %1001 = vmatpush1.msra.mxu0 %v360
    %1002 = vmatprep.subr.mxu0 %v363
    %1003 = vmatpush1.msra.mxu0 %v362
    %1004 = vmatprep.subr.mxu0 %v365
    %1005 = vmatpush1.msra.mxu0 %v364
    %1006 = vmatprep.subr.mxu0 %v367
    %1007 = vmatpush1.msra.mxu0 %v366
    %1008 = vmatprep.subr.mxu0 %v369
    %1009 = vmatpush1.msra.mxu0 %v368
    %1010 = vmatprep.subr.mxu0 %v371
    %1011 = vmatpush1.msra.mxu0 %v370
    %1012 = vmatprep.subr.mxu0 %v373
    %1013 = vmatpush1.msra.mxu0 %v372
    %1014 = vmatprep.subr.mxu0 %v375
    %1015 = vmatpush1.msra.mxu0 %v374
    %1016 = vmatprep.subr.mxu0 %v377
    %1017 = vmatpush1.msra.mxu0 %v376
    %1018 = vmatprep.mubr.f32.mxu0 %v635
    %1019 = vmatmul.mubr.f32.gmra.mrb[0].mxu0 %v627
    %v1020 = vpop.f32.mrb[0].mxu0
    %v1021 = vadd.f32 %v950, %v1020
    %v1022 = vpop.f32.mrb[0].mxu0
    %v1023 = vadd.f32 %v952, %v1022
    %1024 = vdwg.mxu0
    %1025 = vmatprep.subr.mxu0 %v379
    %1026 = vmatpush1.msra.mxu0 %v378
    %1027 = vmatprep.subr.mxu0 %v381
    %1028 = vmatpush1.msra.mxu0 %v380
    %1029 = vmatprep.subr.mxu0 %v383
    %1030 = vmatpush1.msra.mxu0 %v382
    %1031 = vmatprep.subr.mxu0 %v385
    %1032 = vmatpush1.msra.mxu0 %v384
    %1033 = vmatprep.subr.mxu0 %v387
    %1034 = vmatpush1.msra.mxu0 %v386
    %1035 = vmatprep.subr.mxu0 %v389
    %1036 = vmatpush1.msra.mxu0 %v388
    %1037 = vmatprep.subr.mxu0 %v391
    %1038 = vmatpush1.msra.mxu0 %v390
    %1039 = vmatprep.subr.mxu0 %v393
    %1040 = vmatpush1.msra.mxu0 %v392
    %1041 = vmatprep.subr.mxu0 %v395
    %1042 = vmatpush1.msra.mxu0 %v394
    %1043 = vmatprep.subr.mxu0 %v397
    %1044 = vmatpush1.msra.mxu0 %v396
    %1045 = vmatprep.subr.mxu0 %v399
    %1046 = vmatpush1.msra.mxu0 %v398
    %1047 = vmatprep.subr.mxu0 %v401
    %1048 = vmatpush1.msra.mxu0 %v400
    %1049 = vmatprep.subr.mxu0 %v403
    %1050 = vmatpush1.msra.mxu0 %v402
    %1051 = vmatprep.subr.mxu0 %v405
    %1052 = vmatpush1.msra.mxu0 %v404
    %1053 = vmatprep.subr.mxu0 %v407
    %1054 = vmatpush1.msra.mxu0 %v406
    %1055 = vmatprep.subr.mxu0 %v409
    %1056 = vmatpush1.msra.mxu0 %v408
    %1057 = vmatprep.subr.mxu0 %v411
    %1058 = vmatpush1.msra.mxu0 %v410
    %1059 = vmatprep.subr.mxu0 %v413
    %1060 = vmatpush1.msra.mxu0 %v412
    %1061 = vmatprep.subr.mxu0 %v415
    %1062 = vmatpush1.msra.mxu0 %v414
    %1063 = vmatprep.subr.mxu0 %v417
    %1064 = vmatpush1.msra.mxu0 %v416
    %1065 = vmatprep.subr.mxu0 %v419
    %1066 = vmatpush1.msra.mxu0 %v418
    %1067 = vmatprep.subr.mxu0 %v421
    %1068 = vmatpush1.msra.mxu0 %v420
    %1069 = vmatprep.subr.mxu0 %v423
    %1070 = vmatpush1.msra.mxu0 %v422
    %1071 = vmatprep.subr.mxu0 %v425
    %1072 = vmatpush1.msra.mxu0 %v424
    %1073 = vmatprep.subr.mxu0 %v427
    %1074 = vmatpush1.msra.mxu0 %v426
    %1075 = vmatprep.subr.mxu0 %v429
    %1076 = vmatpush1.msra.mxu0 %v428
    %1077 = vmatprep.subr.mxu0 %v431
    %1078 = vmatpush1.msra.mxu0 %v430
    %1079 = vmatprep.subr.mxu0 %v433
    %1080 = vmatpush1.msra.mxu0 %v432
    %1081 = vmatprep.subr.mxu0 %v435
    %1082 = vmatpush1.msra.mxu0 %v434
    %1083 = vmatprep.subr.mxu0 %v437
    %1084 = vmatpush1.msra.mxu0 %v436
    %1085 = vmatprep.subr.mxu0 %v439
    %1086 = vmatpush1.msra.mxu0 %v438
    %1087 = vmatprep.subr.mxu0 %v441
    %1088 = vmatpush1.msra.mxu0 %v440
    %1089 = vmatprep.mubr.f32.mxu0 %v636
    %1090 = vmatmul.mubr.f32.gmra.mrb[0].mxu0 %v634
    %v1091 = vpop.f32.mrb[0].mxu0
    %v1092 = vadd.f32 %v1021, %v1091
    %v1093 = vpop.f32.mrb[0].mxu0
    %v1094 = vadd.f32 %v1023, %v1093
    %1095 = vdwg.mxu0
    %1096 = vmatprep.subr.mxu0 %v443
    %1097 = vmatpush1.msra.mxu0 %v442
    %1098 = vmatprep.subr.mxu0 %v445
    %1099 = vmatpush1.msra.mxu0 %v444
    %1100 = vmatprep.subr.mxu0 %v447
    %1101 = vmatpush1.msra.mxu0 %v446
    %1102 = vmatprep.subr.mxu0 %v449
    %1103 = vmatpush1.msra.mxu0 %v448
    %1104 = vmatprep.subr.mxu0 %v451
    %1105 = vmatpush1.msra.mxu0 %v450
    %1106 = vmatprep.subr.mxu0 %v453
    %1107 = vmatpush1.msra.mxu0 %v452
    %1108 = vmatprep.subr.mxu0 %v455
    %1109 = vmatpush1.msra.mxu0 %v454
    %1110 = vmatprep.subr.mxu0 %v457
    %1111 = vmatpush1.msra.mxu0 %v456
    %1112 = vmatprep.subr.mxu0 %v459
    %1113 = vmatpush1.msra.mxu0 %v458
    %1114 = vmatprep.subr.mxu0 %v461
    %1115 = vmatpush1.msra.mxu0 %v460
    %1116 = vmatprep.subr.mxu0 %v463
    %1117 = vmatpush1.msra.mxu0 %v462
    %1118 = vmatprep.subr.mxu0 %v465
    %1119 = vmatpush1.msra.mxu0 %v464
    %1120 = vmatprep.subr.mxu0 %v467
    %1121 = vmatpush1.msra.mxu0 %v466
    %1122 = vmatprep.subr.mxu0 %v469
    %1123 = vmatpush1.msra.mxu0 %v468
    %1124 = vmatprep.subr.mxu0 %v471
    %1125 = vmatpush1.msra.mxu0 %v470
    %1126 = vmatprep.subr.mxu0 %v473
    %1127 = vmatpush1.msra.mxu0 %v472
    %1128 = vmatprep.subr.mxu0 %v475
    %1129 = vmatpush1.msra.mxu0 %v474
    %1130 = vmatprep.subr.mxu0 %v477
    %1131 = vmatpush1.msra.mxu0 %v476
    %1132 = vmatprep.subr.mxu0 %v479
    %1133 = vmatpush1.msra.mxu0 %v478
    %1134 = vmatprep.subr.mxu0 %v481
    %1135 = vmatpush1.msra.mxu0 %v480
    %1136 = vmatprep.subr.mxu0 %v483
    %1137 = vmatpush1.msra.mxu0 %v482
    %1138 = vmatprep.subr.mxu0 %v485
    %1139 = vmatpush1.msra.mxu0 %v484
    %1140 = vmatprep.subr.mxu0 %v487
    %1141 = vmatpush1.msra.mxu0 %v486
    %1142 = vmatprep.subr.mxu0 %v489
    %1143 = vmatpush1.msra.mxu0 %v488
    %1144 = vmatprep.subr.mxu0 %v491
    %1145 = vmatpush1.msra.mxu0 %v490
    %1146 = vmatprep.subr.mxu0 %v493
    %1147 = vmatpush1.msra.mxu0 %v492
    %1148 = vmatprep.subr.mxu0 %v495
    %1149 = vmatpush1.msra.mxu0 %v494
    %1150 = vmatprep.subr.mxu0 %v497
    %1151 = vmatpush1.msra.mxu0 %v496
    %1152 = vmatprep.subr.mxu0 %v499
    %1153 = vmatpush1.msra.mxu0 %v498
    %1154 = vmatprep.subr.mxu0 %v501
    %1155 = vmatpush1.msra.mxu0 %v500
    %1156 = vmatprep.subr.mxu0 %v503
    %1157 = vmatpush1.msra.mxu0 %v502
    %1158 = vmatprep.subr.mxu0 %v505
    %1159 = vmatpush1.msra.mxu0 %v504
    %1160 = vmatprep.mubr.f32.mxu0 %v652
    %1161 = vmatmul.mubr.f32.gmra.mrb[0].mxu0 %v644
    %v1162 = vpop.f32.mrb[0].mxu0
    %v1163 = vadd.f32 %v1092, %v1162
    %v1164 = vpop.f32.mrb[0].mxu0
    %v1165 = vadd.f32 %v1094, %v1164
    %1166 = vdwg.mxu0
    %1167 = vmatprep.subr.mxu0 %v507
    %1168 = vmatpush1.msra.mxu0 %v506
    %1169 = vmatprep.subr.mxu0 %v509
    %1170 = vmatpush1.msra.mxu0 %v508
    %1171 = vmatprep.subr.mxu0 %v511
    %1172 = vmatpush1.msra.mxu0 %v510
    %1173 = vmatprep.subr.mxu0 %v513
    %1174 = vmatpush1.msra.mxu0 %v512
    %1175 = vmatprep.subr.mxu0 %v515
    %1176 = vmatpush1.msra.mxu0 %v514
    %1177 = vmatprep.subr.mxu0 %v517
    %1178 = vmatpush1.msra.mxu0 %v516
    %1179 = vmatprep.subr.mxu0 %v519
    %1180 = vmatpush1.msra.mxu0 %v518
    %1181 = vmatprep.subr.mxu0 %v521
    %1182 = vmatpush1.msra.mxu0 %v520
    %1183 = vmatprep.subr.mxu0 %v523
    %1184 = vmatpush1.msra.mxu0 %v522
    %1185 = vmatprep.subr.mxu0 %v525
    %1186 = vmatpush1.msra.mxu0 %v524
    %1187 = vmatprep.subr.mxu0 %v527
    %1188 = vmatpush1.msra.mxu0 %v526
    %1189 = vmatprep.subr.mxu0 %v529
    %1190 = vmatpush1.msra.mxu0 %v528
    %1191 = vmatprep.subr.mxu0 %v531
    %1192 = vmatpush1.msra.mxu0 %v530
    %1193 = vmatprep.subr.mxu0 %v533
    %1194 = vmatpush1.msra.mxu0 %v532
    %1195 = vmatprep.subr.mxu0 %v535
    %1196 = vmatpush1.msra.mxu0 %v534
    %1197 = vmatprep.subr.mxu0 %v537
    %1198 = vmatpush1.msra.mxu0 %v536
    %1199 = vmatprep.subr.mxu0 %v539
    %1200 = vmatpush1.msra.mxu0 %v538
    %1201 = vmatprep.subr.mxu0 %v541
    %1202 = vmatpush1.msra.mxu0 %v540
    %1203 = vmatprep.subr.mxu0 %v543
    %1204 = vmatpush1.msra.mxu0 %v542
    %1205 = vmatprep.subr.mxu0 %v545
    %1206 = vmatpush1.msra.mxu0 %v544
    %1207 = vmatprep.subr.mxu0 %v547
    %1208 = vmatpush1.msra.mxu0 %v546
    %1209 = vmatprep.subr.mxu0 %v549
    %1210 = vmatpush1.msra.mxu0 %v548
    %1211 = vmatprep.subr.mxu0 %v551
    %1212 = vmatpush1.msra.mxu0 %v550
    %1213 = vmatprep.subr.mxu0 %v553
    %1214 = vmatpush1.msra.mxu0 %v552
    %1215 = vmatprep.subr.mxu0 %v555
    %1216 = vmatpush1.msra.mxu0 %v554
    %1217 = vmatprep.subr.mxu0 %v557
    %1218 = vmatpush1.msra.mxu0 %v556
    %1219 = vmatprep.subr.mxu0 %v559
    %1220 = vmatpush1.msra.mxu0 %v558
    %1221 = vmatprep.subr.mxu0 %v561
    %1222 = vmatpush1.msra.mxu0 %v560
    %1223 = vmatprep.subr.mxu0 %v563
    %1224 = vmatpush1.msra.mxu0 %v562
    %1225 = vmatprep.subr.mxu0 %v565
    %1226 = vmatpush1.msra.mxu0 %v564
    %1227 = vmatprep.subr.mxu0 %v567
    %1228 = vmatpush1.msra.mxu0 %v566
    %1229 = vmatprep.subr.mxu0 %v569
    %1230 = vmatpush1.msra.mxu0 %v568
    %1231 = vmatprep.mubr.f32.mxu0 %v653
    %1232 = vmatmul.mubr.f32.gmra.mrb[0].mxu0 %v651
    %v1233 = vpop.f32.mrb[0].mxu0
    %v1234 = vadd.f32 %v1163, %v1233
    %v1235 = vpop.f32.mrb[0].mxu0
    %v1236 = vadd.f32 %v1165, %v1235
    %1237 = vdwg.mxu0
    %v1238 = vmax.f32 %v1234, 0.0
    %v1239 = vmax.f32 %v1236, 0.0
    %v1240 = vld [vmem:[%s3] sm:$0xf]
    %vm1241 = vcmp.ge.u32.totalorder %v1240, 2147483648
    %v1242 = vmul.f32 %v1238, 2.0
    %v1243 = vmul.f32 %v1239, 2.0
    %v1246 = vcombine.low %v1242, %v1243
    %v1248 = vunpack.c.l.s4 1983009808
    %v1249 = vunpack.c.0.s8 %v1248
    %v1250 = vlaneseq
    %v1251 = vshrl.u32 %v1250, 7
    %v1252 = vsub.s32 %v1249, %v1251
    %v1253 = vrot.slane %v1246, %v1252
    %v1255 = vsel %vm1241, %v1253, 0.0
    %1256 = vst [vmem:[#allocation2] sm:$0xf] %v1255
    // Predicated region
    $region18: #{encoder_cnn_forward.1} parent=1 // pred_check
      _
    $region19: #{encoder_cnn_forward.1} parent=1 // pred_check_branch
      %1258 = sbr.rel (0) target = $region21
    $region20: #{encoder_cnn_forward.1} parent=1 // pred_region
      %s1260 = ssub.s32 64, 64
      %1261 = vsyncadd [#allocation3], %s1260
      %s1263 = sshll.u32 [#allocation2], 4
      %s1264 = int_to_ptr.vmem [resolvable:$true] %s1263
      %1266 = dma.vmem_to_hbm [thread:$0]  %s1264, 64, %s4, [#allocation3]
    $region21: #{encoder_cnn_forward.1} parent=1 // pred_fallthru
      _
    // Predicated region
    $region22: #{encoder_cnn_forward.1} parent=1 // pred_check
      _
    $region23: #{encoder_cnn_forward.1} parent=1 // pred_check_branch
      %1268 = sbr.rel (0) target = $region25
    $region24: #{encoder_cnn_forward.1} parent=1 // pred_region
      %1269 = dma.done [#allocation3], 64
    $region25: #{encoder_cnn_forward.1} parent=1 // pred_fallthru
      _
    %1270 = vsyncpa [#allocation3], 1

</llo_original>
